<compile_context>
chip_gen: v5e
topology: v5e:2x2
jax: 0.10.0
libtpu: 0.0.40
codegen_flags: <defaults>
</compile_context>

<pallas_src>
import functools

import jax
import jax.numpy as jnp
from jax.experimental import pallas as pl
from jax.experimental.pallas import tpu as pltpu

SOS_token = 1


def _vmem():
    return pl.BlockSpec(memory_space=pltpu.MemorySpace.VMEM)


def _gru_step(h, whh_ref, bhh_ref, gi_r, gi_z, gi_n):
    """One PyTorch-semantics GRU recurrence step; input projection gi_* precomputed."""
    gh_r = jnp.dot(h, whh_ref[0], preferred_element_type=jnp.float32) + bhh_ref[0]
    gh_z = jnp.dot(h, whh_ref[1], preferred_element_type=jnp.float32) + bhh_ref[1]
    gh_n = jnp.dot(h, whh_ref[2], preferred_element_type=jnp.float32) + bhh_ref[2]
    r = jax.nn.sigmoid(gi_r + gh_r)
    z = jax.nn.sigmoid(gi_z + gh_z)
    n = jnp.tanh(gi_n + r * gh_n)
    return (1.0 - z) * n + z * h


# ----------------------------------------------------------------------------
# Encoder kernel: bidirectional GRU over the whole sequence in ONE launch
# ----------------------------------------------------------------------------

def encoder_kernel(emb_ref,
                   wih_f_ref, whh_f_ref, bih_f_ref, bhh_f_ref,
                   wih_b_ref, whh_b_ref, bih_b_ref, bhh_b_ref,
                   enc_out_ref, hf_ref):
    emb = emb_ref[...]                                   # (S, H)
    S, H = emb.shape

    # Hoisted, non-recurrent input projections: one (S,H)@(H,H) MXU call per gate/dir.
    def proj(wih_ref, bih_ref):
        return [jnp.dot(emb, wih_ref[g], preferred_element_type=jnp.float32)
                + bih_ref[g] for g in range(3)]

    gi_f = proj(wih_f_ref, bih_f_ref)                    # 3 x (S, H)
    gi_b = proj(wih_b_ref, bih_b_ref)                    # 3 x (S, H)

    h_f = jnp.zeros((1, H), jnp.float32)
    h_b = jnp.zeros((1, H), jnp.float32)
    fwd, bwd = [], []
    for t in range(S):                                   # static unroll, single launch
        h_f = _gru_step(h_f, whh_f_ref, bhh_f_ref,
                        gi_f[0][t:t + 1], gi_f[1][t:t + 1], gi_f[2][t:t + 1])
        fwd.append(h_f)

        tb = S - 1 - t
        h_b = _gru_step(h_b, whh_b_ref, bhh_b_ref,
                        gi_b[0][tb:tb + 1], gi_b[1][tb:tb + 1], gi_b[2][tb:tb + 1])
        bwd.append(h_b)

    # Bidirectional outputs summed (tutorial semantics); single full-tile store.
    out_f = jnp.concatenate(fwd, axis=0)                 # (S, H), time order
    out_b = jnp.concatenate(bwd[::-1], axis=0)           # (S, H), time order
    enc_out_ref[...] = out_f + out_b
    # encoder_hidden[:n_layers] for the 1-layer decoder == forward final hidden.
    hf_ref[...] = h_f


# ----------------------------------------------------------------------------
# Decoder kernel: full greedy decode loop fused into ONE launch
# ----------------------------------------------------------------------------

def decoder_kernel(emb_ref, enc_ref, enc_t_ref, h0_ref,
                   wih_ref, whh_ref, bih_ref, bhh_ref,
                   wc_ref, bc_ref, wo_ref, bo_ref,
                   tok_ref, score_ref, *, max_length, sos):
    emb = emb_ref[...]                                   # (V, H)
    enc = enc_ref[...]                                   # (S, H)
    enc_t = enc_t_ref[...]                               # (H, S)
    V, H = emb.shape

    wc_rnn = wc_ref[0]                                   # (H, H)
    wc_ctx = wc_ref[1]                                   # (H, H)
    bc = bc_ref[...]                                     # (1, H)
    wo = wo_ref[...]                                     # (H, V)
    bo = bo_ref[...]                                     # (1, V)

    # Fold the GRU input projection into the embedding table once (MXU):
    # emb_gi[g][v] = emb[v] @ Wih[g] + bih[g]; then per step gi = onehot @ emb_gi[g].
    emb_gi = [jnp.dot(emb, wih_ref[g], preferred_element_type=jnp.float32)
              + bih_ref[g] for g in range(3)]            # 3 x (V, H)

    h = h0_ref[...]                                      # (1, H)
    lane = jax.lax.broadcasted_iota(jnp.int32, (1, V), 1)
    onehot = (lane == sos).astype(jnp.float32)           # SOS one-hot, (1, V)

    tok_list, score_list = [], []
    for _ in range(max_length):                          # static unroll; feedback on-chip
        # GRU cell (input gates directly from the one-hot token, hidden per-gate).
        gi_r = jnp.dot(onehot, emb_gi[0], preferred_element_type=jnp.float32)
        gi_z = jnp.dot(onehot, emb_gi[1], preferred_element_type=jnp.float32)
        gi_n = jnp.dot(onehot, emb_gi[2], preferred_element_type=jnp.float32)
        h = _gru_step(h, whh_ref, bhh_ref, gi_r, gi_z, gi_n)

        # Luong dot attention: energies on the MXU, softmax along the lane axis.
        e = jnp.dot(h, enc_t, preferred_element_type=jnp.float32)          # (1, S)
        e = e - jnp.max(e, axis=1, keepdims=True)
        a = jnp.exp(e)
        a = a / jnp.sum(a, axis=1, keepdims=True)                          # (1, S)
        context = jnp.dot(a, enc, preferred_element_type=jnp.float32)      # (1, H)

        # concat_output = tanh(Wc @ [rnn ; context] + bc)   (split weights, no concat)
        cc = jnp.tanh(jnp.dot(h, wc_rnn, preferred_element_type=jnp.float32)
                      + jnp.dot(context, wc_ctx, preferred_element_type=jnp.float32)
                      + bc)                                                # (1, H)
        logits = jnp.dot(cc, wo, preferred_element_type=jnp.float32) + bo  # (1, V)

        # argmax(softmax(x)) == argmax(x); score == max softmax prob = exp(m - lse).
        m = jnp.max(logits, axis=1, keepdims=True)                         # (1, 1)
        psum = jnp.sum(jnp.exp(logits - m), axis=1, keepdims=True)         # (1, 1)
        score = 1.0 / psum
        tok = jnp.min(jnp.where(logits == m, lane, V),
                      axis=1, keepdims=True)                               # (1, 1) int32

        tok_list.append(tok)
        score_list.append(score)

        # Next-token feedback as an exact one-hot (no scalar extraction, no host trip).
        onehot = (lane == tok).astype(jnp.float32)                         # (1, V)

    # Single lane-major store each instead of max_length narrow masked stores.
    tok_ref[...] = jnp.concatenate(tok_list, axis=1)                       # (1, L) int32
    score_ref[...] = jnp.concatenate(score_list, axis=1)                   # (1, L) f32


# ----------------------------------------------------------------------------
# Parameters (deterministic, synthetic) — per-gate GRU weights in x @ W layout
# ----------------------------------------------------------------------------

def init_params(key, vocab, hidden):
    ks = jax.random.split(key, 17)
    s = 0.1

    def rnd(k, shape):
        return jax.random.normal(k, shape, jnp.float32) * s

    H, V = hidden, vocab
    return dict(
        embedding=rnd(ks[0], (V, H)),                    # shared encoder/decoder embedding
        # encoder bidirectional GRU (1 layer), per-gate (r, z, n) weights
        enc_f_wih=rnd(ks[1], (3, H, H)), enc_f_whh=rnd(ks[2], (3, H, H)),
        enc_f_bih=rnd(ks[3], (3, 1, H)), enc_f_bhh=rnd(ks[4], (3, 1, H)),
        enc_b_wih=rnd(ks[5], (3, H, H)), enc_b_whh=rnd(ks[6], (3, H, H)),
        enc_b_bih=rnd(ks[7], (3, 1, H)), enc_b_bhh=rnd(ks[8], (3, 1, H)),
        # decoder GRU (1 layer)
        dec_wih=rnd(ks[9], (3, H, H)), dec_whh=rnd(ks[10], (3, H, H)),
        dec_bih=rnd(ks[11], (3, 1, H)), dec_bhh=rnd(ks[12], (3, 1, H)),
        # concat linear split into [rnn-part ; context-part] and output linear
        wc=rnd(ks[13], (2, H, H)), bc=rnd(ks[14], (1, H)),
        wo=rnd(ks[15], (H, V)), bo=rnd(ks[16], (1, V)),
    )


# ----------------------------------------------------------------------------
# GreedySearchDecoder forward
# ----------------------------------------------------------------------------

@functools.partial(jax.jit, static_argnums=(2,))
def greedy_search_decoder(input_seq, input_length, max_length, params):
    # input_seq: (S, 1) int32, time-major, batch = 1
    # TODO(synk): pack_padded_sequence semantics (variable lengths) not implemented;
    #             full length S is encoded/attended (input_length accepted but unused).
    del input_length
    S = input_seq.shape[0]
    emb_table = params['embedding']
    V, H = emb_table.shape

    embedded = emb_table[input_seq[:, 0]]                # (S, H) tiny XLA gather

    # ---- Encoder: one fused pallas_call, both directions, weights resident ----
    enc_out, h_f = pl.pallas_call(
        encoder_kernel,
        out_shape=(jax.ShapeDtypeStruct((S, H), jnp.float32),
                   jax.ShapeDtypeStruct((1, H), jnp.float32)),
        in_specs=[_vmem()] * 9,
        out_specs=(_vmem(), _vmem()),
    )(embedded,
      params['enc_f_wih'], params['enc_f_whh'], params['enc_f_bih'], params['enc_f_bhh'],
      params['enc_b_wih'], params['enc_b_whh'], params['enc_b_bih'], params['enc_b_bhh'])

    # ---- Decoder: one fused pallas_call for the whole greedy loop ----
    kernel = functools.partial(decoder_kernel, max_length=max_length, sos=SOS_token)
    flops_step = 8 * V * H + 10 * H * H + 4 * S * H
    tokens, scores = pl.pallas_call(
        kernel,
        out_shape=(jax.ShapeDtypeStruct((1, max_length), jnp.int32),
                   jax.ShapeDtypeStruct((1, max_length), jnp.float32)),
        in_specs=[_vmem()] * 12,
        out_specs=(_vmem(), _vmem()),
        cost_estimate=pl.CostEstimate(
            flops=max_length * flops_step + 6 * V * H * H,
            transcendentals=max_length * (V + S + 5 * H),
            bytes_accessed=4 * (V * H + 2 * S * H + 8 * H * H + H * V)),
    )(emb_table, enc_out, enc_out.T, h_f,
      params['dec_wih'], params['dec_whh'], params['dec_bih'], params['dec_bhh'],
      params['wc'], params['bc'], params['wo'], params['bo'])

    return tokens[0], scores[0]


# ----------------------------------------------------------------------------
# Main
# ----------------------------------------------------------------------------

if __name__ == "__main__":
    VOCAB = 64
    HIDDEN = 32
    SEQ = 8
    MAX_LENGTH = 6

    key = jax.random.PRNGKey(0)
    k_param, k_seq = jax.random.split(key)

    params = init_params(k_param, VOCAB, HIDDEN)
    input_seq = jax.random.randint(k_seq, (SEQ, 1), 0, VOCAB, dtype=jnp.int32)
    input_length = jnp.array([SEQ], jnp.int32)

    tokens, scores = greedy_search_decoder(input_seq, input_length, MAX_LENGTH, params)
    tokens = jax.block_until_ready(tokens)
    scores = jax.block_until_ready(scores)

    assert tokens.shape == (MAX_LENGTH,) and tokens.dtype == jnp.int32
    assert scores.shape == (MAX_LENGTH,) and scores.dtype == jnp.float32

    print("KERNEL_OK")
</pallas_src>

<mosaic_0001>
module attributes {stable_mosaic.version = 11 : i64} {
  func.func @decoder_kernel(%arg0: memref<64x32xf32, #tpu.memory_space<vmem>>, %arg1: memref<8x32xf32, #tpu.memory_space<vmem>>, %arg2: memref<32x8xf32, #tpu.memory_space<vmem>>, %arg3: memref<1x32xf32, #tpu.memory_space<vmem>>, %arg4: memref<3x32x32xf32, #tpu.memory_space<vmem>>, %arg5: memref<3x32x32xf32, #tpu.memory_space<vmem>>, %arg6: memref<3x1x32xf32, #tpu.memory_space<vmem>>, %arg7: memref<3x1x32xf32, #tpu.memory_space<vmem>>, %arg8: memref<2x32x32xf32, #tpu.memory_space<vmem>>, %arg9: memref<1x32xf32, #tpu.memory_space<vmem>>, %arg10: memref<32x64xf32, #tpu.memory_space<vmem>>, %arg11: memref<1x64xf32, #tpu.memory_space<vmem>>, %arg12: memref<1x6xi32, #tpu.memory_space<vmem>>, %arg13: memref<1x6xf32, #tpu.memory_space<vmem>>) attributes {dimension_semantics = [], scalar_prefetch = 0 : i64, scratch_operands = 0 : i64, tpu.core_type = #tpu.core_type<tc>} {
    %c0 = arith.constant 0 : index
    %c0_0 = arith.constant 0 : index
    %0 = vector.load %arg0[%c0, %c0_0] : memref<64x32xf32, #tpu.memory_space<vmem>>, vector<64x32xf32>
    %c0_1 = arith.constant 0 : index
    %c0_2 = arith.constant 0 : index
    %1 = vector.load %arg1[%c0_1, %c0_2] : memref<8x32xf32, #tpu.memory_space<vmem>>, vector<8x32xf32>
    %c0_3 = arith.constant 0 : index
    %c0_4 = arith.constant 0 : index
    %2 = vector.load %arg2[%c0_3, %c0_4] : memref<32x8xf32, #tpu.memory_space<vmem>>, vector<32x8xf32>
    %c0_5 = arith.constant 0 : index
    %c0_6 = arith.constant 0 : index
    %c0_7 = arith.constant 0 : index
    %3 = vector.load %arg8[%c0_5, %c0_6, %c0_7] : memref<2x32x32xf32, #tpu.memory_space<vmem>>, vector<1x32x32xf32>
    %4 = vector.shape_cast %3 : vector<1x32x32xf32> to vector<32x32xf32>
    %c1 = arith.constant 1 : index
    %c0_8 = arith.constant 0 : index
    %c0_9 = arith.constant 0 : index
    %5 = vector.load %arg8[%c1, %c0_8, %c0_9] : memref<2x32x32xf32, #tpu.memory_space<vmem>>, vector<1x32x32xf32>
    %6 = vector.shape_cast %5 : vector<1x32x32xf32> to vector<32x32xf32>
    %c0_10 = arith.constant 0 : index
    %c0_11 = arith.constant 0 : index
    %7 = vector.load %arg9[%c0_10, %c0_11] : memref<1x32xf32, #tpu.memory_space<vmem>>, vector<1x32xf32>
    %c0_12 = arith.constant 0 : index
    %c0_13 = arith.constant 0 : index
    %8 = vector.load %arg10[%c0_12, %c0_13] : memref<32x64xf32, #tpu.memory_space<vmem>>, vector<32x64xf32>
    %c0_14 = arith.constant 0 : index
    %c0_15 = arith.constant 0 : index
    %9 = vector.load %arg11[%c0_14, %c0_15] : memref<1x64xf32, #tpu.memory_space<vmem>>, vector<1x64xf32>
    %c0_16 = arith.constant 0 : index
    %c0_17 = arith.constant 0 : index
    %c0_18 = arith.constant 0 : index
    %10 = vector.load %arg4[%c0_16, %c0_17, %c0_18] : memref<3x32x32xf32, #tpu.memory_space<vmem>>, vector<1x32x32xf32>
    %11 = vector.shape_cast %10 : vector<1x32x32xf32> to vector<32x32xf32>
    %cst = arith.constant dense<0.000000e+00> : vector<64x32xf32>
    %12 = tpu.matmul %0, %11, %cst {dimension_numbers = #tpu.dot_dimension_numbers<[1], [0], [0], [1], [0, 0, 1, 1], [], []>} : vector<64x32xf32>, vector<32x32xf32>, vector<64x32xf32> -> vector<64x32xf32>
    %c0_19 = arith.constant 0 : index
    %c0_20 = arith.constant 0 : index
    %c0_21 = arith.constant 0 : index
    %13 = vector.load %arg6[%c0_19, %c0_20, %c0_21] : memref<3x1x32xf32, #tpu.memory_space<vmem>>, vector<1x1x32xf32>
    %14 = vector.shape_cast %13 : vector<1x1x32xf32> to vector<1x32xf32>
    %15 = vector.broadcast %14 : vector<1x32xf32> to vector<64x32xf32>
    %16 = arith.addf %12, %15 : vector<64x32xf32>
    %c1_22 = arith.constant 1 : index
    %c0_23 = arith.constant 0 : index
    %c0_24 = arith.constant 0 : index
    %17 = vector.load %arg4[%c1_22, %c0_23, %c0_24] : memref<3x32x32xf32, #tpu.memory_space<vmem>>, vector<1x32x32xf32>
    %18 = vector.shape_cast %17 : vector<1x32x32xf32> to vector<32x32xf32>
    %cst_25 = arith.constant dense<0.000000e+00> : vector<64x32xf32>
    %19 = tpu.matmul %0, %18, %cst_25 {dimension_numbers = #tpu.dot_dimension_numbers<[1], [0], [0], [1], [0, 0, 1, 1], [], []>} : vector<64x32xf32>, vector<32x32xf32>, vector<64x32xf32> -> vector<64x32xf32>
    %c1_26 = arith.constant 1 : index
    %c0_27 = arith.constant 0 : index
    %c0_28 = arith.constant 0 : index
    %20 = vector.load %arg6[%c1_26, %c0_27, %c0_28] : memref<3x1x32xf32, #tpu.memory_space<vmem>>, vector<1x1x32xf32>
    %21 = vector.shape_cast %20 : vector<1x1x32xf32> to vector<1x32xf32>
    %22 = vector.broadcast %21 : vector<1x32xf32> to vector<64x32xf32>
    %23 = arith.addf %19, %22 : vector<64x32xf32>
    %c2 = arith.constant 2 : index
    %c0_29 = arith.constant 0 : index
    %c0_30 = arith.constant 0 : index
    %24 = vector.load %arg4[%c2, %c0_29, %c0_30] : memref<3x32x32xf32, #tpu.memory_space<vmem>>, vector<1x32x32xf32>
    %25 = vector.shape_cast %24 : vector<1x32x32xf32> to vector<32x32xf32>
    %cst_31 = arith.constant dense<0.000000e+00> : vector<64x32xf32>
    %26 = tpu.matmul %0, %25, %cst_31 {dimension_numbers = #tpu.dot_dimension_numbers<[1], [0], [0], [1], [0, 0, 1, 1], [], []>} : vector<64x32xf32>, vector<32x32xf32>, vector<64x32xf32> -> vector<64x32xf32>
    %c2_32 = arith.constant 2 : index
    %c0_33 = arith.constant 0 : index
    %c0_34 = arith.constant 0 : index
    %27 = vector.load %arg6[%c2_32, %c0_33, %c0_34] : memref<3x1x32xf32, #tpu.memory_space<vmem>>, vector<1x1x32xf32>
    %28 = vector.shape_cast %27 : vector<1x1x32xf32> to vector<1x32xf32>
    %29 = vector.broadcast %28 : vector<1x32xf32> to vector<64x32xf32>
    %30 = arith.addf %26, %29 : vector<64x32xf32>
    %c0_35 = arith.constant 0 : index
    %c0_36 = arith.constant 0 : index
    %31 = vector.load %arg3[%c0_35, %c0_36] : memref<1x32xf32, #tpu.memory_space<vmem>>, vector<1x32xf32>
    %32 = tpu.iota {dimensions = array<i32: 1>} : vector<1x64xi32>
    %c1_i32 = arith.constant 1 : i32
    %33 = vector.broadcast %c1_i32 : i32 to vector<1x64xi32>
    %34 = arith.cmpi eq, %32, %33 : vector<1x64xi32>
    %35 = arith.extui %34 : vector<1x64xi1> to vector<1x64xi32>
    %36 = arith.sitofp %35 : vector<1x64xi32> to vector<1x64xf32>
    %cst_37 = arith.constant dense<0.000000e+00> : vector<1x32xf32>
    %37 = tpu.matmul %36, %16, %cst_37 {dimension_numbers = #tpu.dot_dimension_numbers<[1], [0], [0], [1], [0, 0, 1, 1], [], []>} : vector<1x64xf32>, vector<64x32xf32>, vector<1x32xf32> -> vector<1x32xf32>
    %cst_38 = arith.constant dense<0.000000e+00> : vector<1x32xf32>
    %38 = tpu.matmul %36, %23, %cst_38 {dimension_numbers = #tpu.dot_dimension_numbers<[1], [0], [0], [1], [0, 0, 1, 1], [], []>} : vector<1x64xf32>, vector<64x32xf32>, vector<1x32xf32> -> vector<1x32xf32>
    %cst_39 = arith.constant dense<0.000000e+00> : vector<1x32xf32>
    %39 = tpu.matmul %36, %30, %cst_39 {dimension_numbers = #tpu.dot_dimension_numbers<[1], [0], [0], [1], [0, 0, 1, 1], [], []>} : vector<1x64xf32>, vector<64x32xf32>, vector<1x32xf32> -> vector<1x32xf32>
    %c0_40 = arith.constant 0 : index
    %c0_41 = arith.constant 0 : index
    %c0_42 = arith.constant 0 : index
    %40 = vector.load %arg5[%c0_40, %c0_41, %c0_42] : memref<3x32x32xf32, #tpu.memory_space<vmem>>, vector<1x32x32xf32>
    %41 = vector.shape_cast %40 : vector<1x32x32xf32> to vector<32x32xf32>
    %cst_43 = arith.constant dense<0.000000e+00> : vector<1x32xf32>
    %42 = tpu.matmul %31, %41, %cst_43 {dimension_numbers = #tpu.dot_dimension_numbers<[1], [0], [0], [1], [0, 0, 1, 1], [], []>} : vector<1x32xf32>, vector<32x32xf32>, vector<1x32xf32> -> vector<1x32xf32>
    %c0_44 = arith.constant 0 : index
    %c0_45 = arith.constant 0 : index
    %c0_46 = arith.constant 0 : index
    %43 = vector.load %arg7[%c0_44, %c0_45, %c0_46] : memref<3x1x32xf32, #tpu.memory_space<vmem>>, vector<1x1x32xf32>
    %44 = vector.shape_cast %43 : vector<1x1x32xf32> to vector<1x32xf32>
    %45 = arith.addf %42, %44 : vector<1x32xf32>
    %c1_47 = arith.constant 1 : index
    %c0_48 = arith.constant 0 : index
    %c0_49 = arith.constant 0 : index
    %46 = vector.load %arg5[%c1_47, %c0_48, %c0_49] : memref<3x32x32xf32, #tpu.memory_space<vmem>>, vector<1x32x32xf32>
    %47 = vector.shape_cast %46 : vector<1x32x32xf32> to vector<32x32xf32>
    %cst_50 = arith.constant dense<0.000000e+00> : vector<1x32xf32>
    %48 = tpu.matmul %31, %47, %cst_50 {dimension_numbers = #tpu.dot_dimension_numbers<[1], [0], [0], [1], [0, 0, 1, 1], [], []>} : vector<1x32xf32>, vector<32x32xf32>, vector<1x32xf32> -> vector<1x32xf32>
    %c1_51 = arith.constant 1 : index
    %c0_52 = arith.constant 0 : index
    %c0_53 = arith.constant 0 : index
    %49 = vector.load %arg7[%c1_51, %c0_52, %c0_53] : memref<3x1x32xf32, #tpu.memory_space<vmem>>, vector<1x1x32xf32>
    %50 = vector.shape_cast %49 : vector<1x1x32xf32> to vector<1x32xf32>
    %51 = arith.addf %48, %50 : vector<1x32xf32>
    %c2_54 = arith.constant 2 : index
    %c0_55 = arith.constant 0 : index
    %c0_56 = arith.constant 0 : index
    %52 = vector.load %arg5[%c2_54, %c0_55, %c0_56] : memref<3x32x32xf32, #tpu.memory_space<vmem>>, vector<1x32x32xf32>
    %53 = vector.shape_cast %52 : vector<1x32x32xf32> to vector<32x32xf32>
    %cst_57 = arith.constant dense<0.000000e+00> : vector<1x32xf32>
    %54 = tpu.matmul %31, %53, %cst_57 {dimension_numbers = #tpu.dot_dimension_numbers<[1], [0], [0], [1], [0, 0, 1, 1], [], []>} : vector<1x32xf32>, vector<32x32xf32>, vector<1x32xf32> -> vector<1x32xf32>
    %c2_58 = arith.constant 2 : index
    %c0_59 = arith.constant 0 : index
    %c0_60 = arith.constant 0 : index
    %55 = vector.load %arg7[%c2_58, %c0_59, %c0_60] : memref<3x1x32xf32, #tpu.memory_space<vmem>>, vector<1x1x32xf32>
    %56 = vector.shape_cast %55 : vector<1x1x32xf32> to vector<1x32xf32>
    %57 = arith.addf %54, %56 : vector<1x32xf32>
    %58 = arith.addf %37, %45 : vector<1x32xf32>
    %59 = arith.negf %58 : vector<1x32xf32>
    %60 = math.exp %59 : vector<1x32xf32>
    %cst_61 = arith.constant 1.000000e+00 : f32
    %61 = vector.broadcast %cst_61 : f32 to vector<1x32xf32>
    %62 = arith.addf %61, %60 : vector<1x32xf32>
    %63 = arith.divf %61, %62 : vector<1x32xf32>
    %64 = arith.addf %38, %51 : vector<1x32xf32>
    %65 = arith.negf %64 : vector<1x32xf32>
    %66 = math.exp %65 : vector<1x32xf32>
    %cst_62 = arith.constant 1.000000e+00 : f32
    %67 = vector.broadcast %cst_62 : f32 to vector<1x32xf32>
    %68 = arith.addf %67, %66 : vector<1x32xf32>
    %69 = arith.divf %67, %68 : vector<1x32xf32>
    %70 = arith.mulf %63, %57 : vector<1x32xf32>
    %71 = arith.addf %39, %70 : vector<1x32xf32>
    %72 = math.tanh %71 : vector<1x32xf32>
    %cst_63 = arith.constant 1.000000e+00 : f32
    %73 = vector.broadcast %cst_63 : f32 to vector<1x32xf32>
    %74 = arith.subf %73, %69 : vector<1x32xf32>
    %75 = arith.mulf %74, %72 : vector<1x32xf32>
    %76 = arith.mulf %69, %31 : vector<1x32xf32>
    %77 = arith.addf %75, %76 : vector<1x32xf32>
    %cst_64 = arith.constant dense<0.000000e+00> : vector<1x8xf32>
    %78 = tpu.matmul %77, %2, %cst_64 {dimension_numbers = #tpu.dot_dimension_numbers<[1], [0], [0], [1], [0, 0, 1, 1], [], []>} : vector<1x32xf32>, vector<32x8xf32>, vector<1x8xf32> -> vector<1x8xf32>
    %cst_65 = arith.constant dense<0xFF800000> : vector<1xf32>
    %79 = vector.multi_reduction <maximumf>, %78, %cst_65 [1] : vector<1x8xf32> to vector<1xf32>
    %80 = vector.shape_cast %79 : vector<1xf32> to vector<1x1xf32>
    %81 = vector.broadcast %80 : vector<1x1xf32> to vector<1x8xf32>
    %82 = arith.subf %78, %81 : vector<1x8xf32>
    %83 = math.exp %82 : vector<1x8xf32>
    %cst_66 = arith.constant dense<0.000000e+00> : vector<1xf32>
    %84 = vector.multi_reduction <add>, %83, %cst_66 [1] : vector<1x8xf32> to vector<1xf32>
    %85 = vector.shape_cast %84 : vector<1xf32> to vector<1x1xf32>
    %86 = vector.broadcast %85 : vector<1x1xf32> to vector<1x8xf32>
    %87 = arith.divf %83, %86 : vector<1x8xf32>
    %cst_67 = arith.constant dense<0.000000e+00> : vector<1x32xf32>
    %88 = tpu.matmul %87, %1, %cst_67 {dimension_numbers = #tpu.dot_dimension_numbers<[1], [0], [0], [1], [0, 0, 1, 1], [], []>} : vector<1x8xf32>, vector<8x32xf32>, vector<1x32xf32> -> vector<1x32xf32>
    %cst_68 = arith.constant dense<0.000000e+00> : vector<1x32xf32>
    %89 = tpu.matmul %77, %4, %cst_68 {dimension_numbers = #tpu.dot_dimension_numbers<[1], [0], [0], [1], [0, 0, 1, 1], [], []>} : vector<1x32xf32>, vector<32x32xf32>, vector<1x32xf32> -> vector<1x32xf32>
    %cst_69 = arith.constant dense<0.000000e+00> : vector<1x32xf32>
    %90 = tpu.matmul %88, %6, %cst_69 {dimension_numbers = #tpu.dot_dimension_numbers<[1], [0], [0], [1], [0, 0, 1, 1], [], []>} : vector<1x32xf32>, vector<32x32xf32>, vector<1x32xf32> -> vector<1x32xf32>
    %91 = arith.addf %89, %90 : vector<1x32xf32>
    %92 = arith.addf %91, %7 : vector<1x32xf32>
    %93 = math.tanh %92 : vector<1x32xf32>
    %cst_70 = arith.constant dense<0.000000e+00> : vector<1x64xf32>
    %94 = tpu.matmul %93, %8, %cst_70 {dimension_numbers = #tpu.dot_dimension_numbers<[1], [0], [0], [1], [0, 0, 1, 1], [], []>} : vector<1x32xf32>, vector<32x64xf32>, vector<1x64xf32> -> vector<1x64xf32>
    %95 = arith.addf %94, %9 : vector<1x64xf32>
    %cst_71 = arith.constant dense<0xFF800000> : vector<1xf32>
    %96 = vector.multi_reduction <maximumf>, %95, %cst_71 [1] : vector<1x64xf32> to vector<1xf32>
    %97 = vector.shape_cast %96 : vector<1xf32> to vector<1x1xf32>
    %98 = vector.broadcast %97 : vector<1x1xf32> to vector<1x64xf32>
    %99 = arith.subf %95, %98 : vector<1x64xf32>
    %100 = math.exp %99 : vector<1x64xf32>
    %cst_72 = arith.constant dense<0.000000e+00> : vector<1xf32>
    %101 = vector.multi_reduction <add>, %100, %cst_72 [1] : vector<1x64xf32> to vector<1xf32>
    %102 = vector.shape_cast %101 : vector<1xf32> to vector<1x1xf32>
    %cst_73 = arith.constant 1.000000e+00 : f32
    %103 = vector.broadcast %cst_73 : f32 to vector<1x1xf32>
    %104 = arith.divf %103, %102 : vector<1x1xf32>
    %105 = vector.broadcast %97 : vector<1x1xf32> to vector<1x64xf32>
    %106 = arith.cmpf oeq, %95, %105 : vector<1x64xf32>
    %c64_i32 = arith.constant 64 : i32
    %107 = vector.broadcast %c64_i32 : i32 to vector<1x64xi32>
    %108 = arith.select %106, %32, %107 : vector<1x64xi1>, vector<1x64xi32>
    %cst_74 = arith.constant dense<2147483647> : vector<1xi32>
    %109 = vector.multi_reduction <minsi>, %108, %cst_74 [1] : vector<1x64xi32> to vector<1xi32>
    %110 = vector.shape_cast %109 : vector<1xi32> to vector<1x1xi32>
    %111 = vector.broadcast %110 : vector<1x1xi32> to vector<1x64xi32>
    %112 = arith.cmpi eq, %32, %111 : vector<1x64xi32>
    %113 = arith.extui %112 : vector<1x64xi1> to vector<1x64xi32>
    %114 = arith.sitofp %113 : vector<1x64xi32> to vector<1x64xf32>
    %cst_75 = arith.constant dense<0.000000e+00> : vector<1x32xf32>
    %115 = tpu.matmul %114, %16, %cst_75 {dimension_numbers = #tpu.dot_dimension_numbers<[1], [0], [0], [1], [0, 0, 1, 1], [], []>} : vector<1x64xf32>, vector<64x32xf32>, vector<1x32xf32> -> vector<1x32xf32>
    %cst_76 = arith.constant dense<0.000000e+00> : vector<1x32xf32>
    %116 = tpu.matmul %114, %23, %cst_76 {dimension_numbers = #tpu.dot_dimension_numbers<[1], [0], [0], [1], [0, 0, 1, 1], [], []>} : vector<1x64xf32>, vector<64x32xf32>, vector<1x32xf32> -> vector<1x32xf32>
    %cst_77 = arith.constant dense<0.000000e+00> : vector<1x32xf32>
    %117 = tpu.matmul %114, %30, %cst_77 {dimension_numbers = #tpu.dot_dimension_numbers<[1], [0], [0], [1], [0, 0, 1, 1], [], []>} : vector<1x64xf32>, vector<64x32xf32>, vector<1x32xf32> -> vector<1x32xf32>
    %c0_78 = arith.constant 0 : index
    %c0_79 = arith.constant 0 : index
    %c0_80 = arith.constant 0 : index
    %118 = vector.load %arg5[%c0_78, %c0_79, %c0_80] : memref<3x32x32xf32, #tpu.memory_space<vmem>>, vector<1x32x32xf32>
    %119 = vector.shape_cast %118 : vector<1x32x32xf32> to vector<32x32xf32>
    %cst_81 = arith.constant dense<0.000000e+00> : vector<1x32xf32>
    %120 = tpu.matmul %77, %119, %cst_81 {dimension_numbers = #tpu.dot_dimension_numbers<[1], [0], [0], [1], [0, 0, 1, 1], [], []>} : vector<1x32xf32>, vector<32x32xf32>, vector<1x32xf32> -> vector<1x32xf32>
    %c0_82 = arith.constant 0 : index
    %c0_83 = arith.constant 0 : index
    %c0_84 = arith.constant 0 : index
    %121 = vector.load %arg7[%c0_82, %c0_83, %c0_84] : memref<3x1x32xf32, #tpu.memory_space<vmem>>, vector<1x1x32xf32>
    %122 = vector.shape_cast %121 : vector<1x1x32xf32> to vector<1x32xf32>
    %123 = arith.addf %120, %122 : vector<1x32xf32>
    %c1_85 = arith.constant 1 : index
    %c0_86 = arith.constant 0 : index
    %c0_87 = arith.constant 0 : index
    %124 = vector.load %arg5[%c1_85, %c0_86, %c0_87] : memref<3x32x32xf32, #tpu.memory_space<vmem>>, vector<1x32x32xf32>
    %125 = vector.shape_cast %124 : vector<1x32x32xf32> to vector<32x32xf32>
    %cst_88 = arith.constant dense<0.000000e+00> : vector<1x32xf32>
    %126 = tpu.matmul %77, %125, %cst_88 {dimension_numbers = #tpu.dot_dimension_numbers<[1], [0], [0], [1], [0, 0, 1, 1], [], []>} : vector<1x32xf32>, vector<32x32xf32>, vector<1x32xf32> -> vector<1x32xf32>
    %c1_89 = arith.constant 1 : index
    %c0_90 = arith.constant 0 : index
    %c0_91 = arith.constant 0 : index
    %127 = vector.load %arg7[%c1_89, %c0_90, %c0_91] : memref<3x1x32xf32, #tpu.memory_space<vmem>>, vector<1x1x32xf32>
    %128 = vector.shape_cast %127 : vector<1x1x32xf32> to vector<1x32xf32>
    %129 = arith.addf %126, %128 : vector<1x32xf32>
    %c2_92 = arith.constant 2 : index
    %c0_93 = arith.constant 0 : index
    %c0_94 = arith.constant 0 : index
    %130 = vector.load %arg5[%c2_92, %c0_93, %c0_94] : memref<3x32x32xf32, #tpu.memory_space<vmem>>, vector<1x32x32xf32>
    %131 = vector.shape_cast %130 : vector<1x32x32xf32> to vector<32x32xf32>
    %cst_95 = arith.constant dense<0.000000e+00> : vector<1x32xf32>
    %132 = tpu.matmul %77, %131, %cst_95 {dimension_numbers = #tpu.dot_dimension_numbers<[1], [0], [0], [1], [0, 0, 1, 1], [], []>} : vector<1x32xf32>, vector<32x32xf32>, vector<1x32xf32> -> vector<1x32xf32>
    %c2_96 = arith.constant 2 : index
    %c0_97 = arith.constant 0 : index
    %c0_98 = arith.constant 0 : index
    %133 = vector.load %arg7[%c2_96, %c0_97, %c0_98] : memref<3x1x32xf32, #tpu.memory_space<vmem>>, vector<1x1x32xf32>
    %134 = vector.shape_cast %133 : vector<1x1x32xf32> to vector<1x32xf32>
    %135 = arith.addf %132, %134 : vector<1x32xf32>
    %136 = arith.addf %115, %123 : vector<1x32xf32>
    %137 = arith.negf %136 : vector<1x32xf32>
    %138 = math.exp %137 : vector<1x32xf32>
    %cst_99 = arith.constant 1.000000e+00 : f32
    %139 = vector.broadcast %cst_99 : f32 to vector<1x32xf32>
    %140 = arith.addf %139, %138 : vector<1x32xf32>
    %141 = arith.divf %139, %140 : vector<1x32xf32>
    %142 = arith.addf %116, %129 : vector<1x32xf32>
    %143 = arith.negf %142 : vector<1x32xf32>
    %144 = math.exp %143 : vector<1x32xf32>
    %cst_100 = arith.constant 1.000000e+00 : f32
    %145 = vector.broadcast %cst_100 : f32 to vector<1x32xf32>
    %146 = arith.addf %145, %144 : vector<1x32xf32>
    %147 = arith.divf %145, %146 : vector<1x32xf32>
    %148 = arith.mulf %141, %135 : vector<1x32xf32>
    %149 = arith.addf %117, %148 : vector<1x32xf32>
    %150 = math.tanh %149 : vector<1x32xf32>
    %cst_101 = arith.constant 1.000000e+00 : f32
    %151 = vector.broadcast %cst_101 : f32 to vector<1x32xf32>
    %152 = arith.subf %151, %147 : vector<1x32xf32>
    %153 = arith.mulf %152, %150 : vector<1x32xf32>
    %154 = arith.mulf %147, %77 : vector<1x32xf32>
    %155 = arith.addf %153, %154 : vector<1x32xf32>
    %cst_102 = arith.constant dense<0.000000e+00> : vector<1x8xf32>
    %156 = tpu.matmul %155, %2, %cst_102 {dimension_numbers = #tpu.dot_dimension_numbers<[1], [0], [0], [1], [0, 0, 1, 1], [], []>} : vector<1x32xf32>, vector<32x8xf32>, vector<1x8xf32> -> vector<1x8xf32>
    %cst_103 = arith.constant dense<0xFF800000> : vector<1xf32>
    %157 = vector.multi_reduction <maximumf>, %156, %cst_103 [1] : vector<1x8xf32> to vector<1xf32>
    %158 = vector.shape_cast %157 : vector<1xf32> to vector<1x1xf32>
    %159 = vector.broadcast %158 : vector<1x1xf32> to vector<1x8xf32>
    %160 = arith.subf %156, %159 : vector<1x8xf32>
    %161 = math.exp %160 : vector<1x8xf32>
    %cst_104 = arith.constant dense<0.000000e+00> : vector<1xf32>
    %162 = vector.multi_reduction <add>, %161, %cst_104 [1] : vector<1x8xf32> to vector<1xf32>
    %163 = vector.shape_cast %162 : vector<1xf32> to vector<1x1xf32>
    %164 = vector.broadcast %163 : vector<1x1xf32> to vector<1x8xf32>
    %165 = arith.divf %161, %164 : vector<1x8xf32>
    %cst_105 = arith.constant dense<0.000000e+00> : vector<1x32xf32>
    %166 = tpu.matmul %165, %1, %cst_105 {dimension_numbers = #tpu.dot_dimension_numbers<[1], [0], [0], [1], [0, 0, 1, 1], [], []>} : vector<1x8xf32>, vector<8x32xf32>, vector<1x32xf32> -> vector<1x32xf32>
    %cst_106 = arith.constant dense<0.000000e+00> : vector<1x32xf32>
    %167 = tpu.matmul %155, %4, %cst_106 {dimension_numbers = #tpu.dot_dimension_numbers<[1], [0], [0], [1], [0, 0, 1, 1], [], []>} : vector<1x32xf32>, vector<32x32xf32>, vector<1x32xf32> -> vector<1x32xf32>
    %cst_107 = arith.constant dense<0.000000e+00> : vector<1x32xf32>
    %168 = tpu.matmul %166, %6, %cst_107 {dimension_numbers = #tpu.dot_dimension_numbers<[1], [0], [0], [1], [0, 0, 1, 1], [], []>} : vector<1x32xf32>, vector<32x32xf32>, vector<1x32xf32> -> vector<1x32xf32>
    %169 = arith.addf %167, %168 : vector<1x32xf32>
    %170 = arith.addf %169, %7 : vector<1x32xf32>
    %171 = math.tanh %170 : vector<1x32xf32>
    %cst_108 = arith.constant dense<0.000000e+00> : vector<1x64xf32>
    %172 = tpu.matmul %171, %8, %cst_108 {dimension_numbers = #tpu.dot_dimension_numbers<[1], [0], [0], [1], [0, 0, 1, 1], [], []>} : vector<1x32xf32>, vector<32x64xf32>, vector<1x64xf32> -> vector<1x64xf32>
    %173 = arith.addf %172, %9 : vector<1x64xf32>
    %cst_109 = arith.constant dense<0xFF800000> : vector<1xf32>
    %174 = vector.multi_reduction <maximumf>, %173, %cst_109 [1] : vector<1x64xf32> to vector<1xf32>
    %175 = vector.shape_cast %174 : vector<1xf32> to vector<1x1xf32>
    %176 = vector.broadcast %175 : vector<1x1xf32> to vector<1x64xf32>
    %177 = arith.subf %173, %176 : vector<1x64xf32>
    %178 = math.exp %177 : vector<1x64xf32>
    %cst_110 = arith.constant dense<0.000000e+00> : vector<1xf32>
    %179 = vector.multi_reduction <add>, %178, %cst_110 [1] : vector<1x64xf32> to vector<1xf32>
    %180 = vector.shape_cast %179 : vector<1xf32> to vector<1x1xf32>
    %cst_111 = arith.constant 1.000000e+00 : f32
    %181 = vector.broadcast %cst_111 : f32 to vector<1x1xf32>
    %182 = arith.divf %181, %180 : vector<1x1xf32>
    %183 = vector.broadcast %175 : vector<1x1xf32> to vector<1x64xf32>
    %184 = arith.cmpf oeq, %173, %183 : vector<1x64xf32>
    %c64_i32_112 = arith.constant 64 : i32
    %185 = vector.broadcast %c64_i32_112 : i32 to vector<1x64xi32>
    %186 = arith.select %184, %32, %185 : vector<1x64xi1>, vector<1x64xi32>
    %cst_113 = arith.constant dense<2147483647> : vector<1xi32>
    %187 = vector.multi_reduction <minsi>, %186, %cst_113 [1] : vector<1x64xi32> to vector<1xi32>
    %188 = vector.shape_cast %187 : vector<1xi32> to vector<1x1xi32>
    %189 = vector.broadcast %188 : vector<1x1xi32> to vector<1x64xi32>
    %190 = arith.cmpi eq, %32, %189 : vector<1x64xi32>
    %191 = arith.extui %190 : vector<1x64xi1> to vector<1x64xi32>
    %192 = arith.sitofp %191 : vector<1x64xi32> to vector<1x64xf32>
    %cst_114 = arith.constant dense<0.000000e+00> : vector<1x32xf32>
    %193 = tpu.matmul %192, %16, %cst_114 {dimension_numbers = #tpu.dot_dimension_numbers<[1], [0], [0], [1], [0, 0, 1, 1], [], []>} : vector<1x64xf32>, vector<64x32xf32>, vector<1x32xf32> -> vector<1x32xf32>
    %cst_115 = arith.constant dense<0.000000e+00> : vector<1x32xf32>
    %194 = tpu.matmul %192, %23, %cst_115 {dimension_numbers = #tpu.dot_dimension_numbers<[1], [0], [0], [1], [0, 0, 1, 1], [], []>} : vector<1x64xf32>, vector<64x32xf32>, vector<1x32xf32> -> vector<1x32xf32>
    %cst_116 = arith.constant dense<0.000000e+00> : vector<1x32xf32>
    %195 = tpu.matmul %192, %30, %cst_116 {dimension_numbers = #tpu.dot_dimension_numbers<[1], [0], [0], [1], [0, 0, 1, 1], [], []>} : vector<1x64xf32>, vector<64x32xf32>, vector<1x32xf32> -> vector<1x32xf32>
    %c0_117 = arith.constant 0 : index
    %c0_118 = arith.constant 0 : index
    %c0_119 = arith.constant 0 : index
    %196 = vector.load %arg5[%c0_117, %c0_118, %c0_119] : memref<3x32x32xf32, #tpu.memory_space<vmem>>, vector<1x32x32xf32>
    %197 = vector.shape_cast %196 : vector<1x32x32xf32> to vector<32x32xf32>
    %cst_120 = arith.constant dense<0.000000e+00> : vector<1x32xf32>
    %198 = tpu.matmul %155, %197, %cst_120 {dimension_numbers = #tpu.dot_dimension_numbers<[1], [0], [0], [1], [0, 0, 1, 1], [], []>} : vector<1x32xf32>, vector<32x32xf32>, vector<1x32xf32> -> vector<1x32xf32>
    %c0_121 = arith.constant 0 : index
    %c0_122 = arith.constant 0 : index
    %c0_123 = arith.constant 0 : index
    %199 = vector.load %arg7[%c0_121, %c0_122, %c0_123] : memref<3x1x32xf32, #tpu.memory_space<vmem>>, vector<1x1x32xf32>
    %200 = vector.shape_cast %199 : vector<1x1x32xf32> to vector<1x32xf32>
    %201 = arith.addf %198, %200 : vector<1x32xf32>
    %c1_124 = arith.constant 1 : index
    %c0_125 = arith.constant 0 : index
    %c0_126 = arith.constant 0 : index
    %202 = vector.load %arg5[%c1_124, %c0_125, %c0_126] : memref<3x32x32xf32, #tpu.memory_space<vmem>>, vector<1x32x32xf32>
    %203 = vector.shape_cast %202 : vector<1x32x32xf32> to vector<32x32xf32>
    %cst_127 = arith.constant dense<0.000000e+00> : vector<1x32xf32>
    %204 = tpu.matmul %155, %203, %cst_127 {dimension_numbers = #tpu.dot_dimension_numbers<[1], [0], [0], [1], [0, 0, 1, 1], [], []>} : vector<1x32xf32>, vector<32x32xf32>, vector<1x32xf32> -> vector<1x32xf32>
    %c1_128 = arith.constant 1 : index
    %c0_129 = arith.constant 0 : index
    %c0_130 = arith.constant 0 : index
    %205 = vector.load %arg7[%c1_128, %c0_129, %c0_130] : memref<3x1x32xf32, #tpu.memory_space<vmem>>, vector<1x1x32xf32>
    %206 = vector.shape_cast %205 : vector<1x1x32xf32> to vector<1x32xf32>
    %207 = arith.addf %204, %206 : vector<1x32xf32>
    %c2_131 = arith.constant 2 : index
    %c0_132 = arith.constant 0 : index
    %c0_133 = arith.constant 0 : index
    %208 = vector.load %arg5[%c2_131, %c0_132, %c0_133] : memref<3x32x32xf32, #tpu.memory_space<vmem>>, vector<1x32x32xf32>
    %209 = vector.shape_cast %208 : vector<1x32x32xf32> to vector<32x32xf32>
    %cst_134 = arith.constant dense<0.000000e+00> : vector<1x32xf32>
    %210 = tpu.matmul %155, %209, %cst_134 {dimension_numbers = #tpu.dot_dimension_numbers<[1], [0], [0], [1], [0, 0, 1, 1], [], []>} : vector<1x32xf32>, vector<32x32xf32>, vector<1x32xf32> -> vector<1x32xf32>
    %c2_135 = arith.constant 2 : index
    %c0_136 = arith.constant 0 : index
    %c0_137 = arith.constant 0 : index
    %211 = vector.load %arg7[%c2_135, %c0_136, %c0_137] : memref<3x1x32xf32, #tpu.memory_space<vmem>>, vector<1x1x32xf32>
    %212 = vector.shape_cast %211 : vector<1x1x32xf32> to vector<1x32xf32>
    %213 = arith.addf %210, %212 : vector<1x32xf32>
    %214 = arith.addf %193, %201 : vector<1x32xf32>
    %215 = arith.negf %214 : vector<1x32xf32>
    %216 = math.exp %215 : vector<1x32xf32>
    %cst_138 = arith.constant 1.000000e+00 : f32
    %217 = vector.broadcast %cst_138 : f32 to vector<1x32xf32>
    %218 = arith.addf %217, %216 : vector<1x32xf32>
    %219 = arith.divf %217, %218 : vector<1x32xf32>
    %220 = arith.addf %194, %207 : vector<1x32xf32>
    %221 = arith.negf %220 : vector<1x32xf32>
    %222 = math.exp %221 : vector<1x32xf32>
    %cst_139 = arith.constant 1.000000e+00 : f32
    %223 = vector.broadcast %cst_139 : f32 to vector<1x32xf32>
    %224 = arith.addf %223, %222 : vector<1x32xf32>
    %225 = arith.divf %223, %224 : vector<1x32xf32>
    %226 = arith.mulf %219, %213 : vector<1x32xf32>
    %227 = arith.addf %195, %226 : vector<1x32xf32>
    %228 = math.tanh %227 : vector<1x32xf32>
    %cst_140 = arith.constant 1.000000e+00 : f32
    %229 = vector.broadcast %cst_140 : f32 to vector<1x32xf32>
    %230 = arith.subf %229, %225 : vector<1x32xf32>
    %231 = arith.mulf %230, %228 : vector<1x32xf32>
    %232 = arith.mulf %225, %155 : vector<1x32xf32>
    %233 = arith.addf %231, %232 : vector<1x32xf32>
    %cst_141 = arith.constant dense<0.000000e+00> : vector<1x8xf32>
    %234 = tpu.matmul %233, %2, %cst_141 {dimension_numbers = #tpu.dot_dimension_numbers<[1], [0], [0], [1], [0, 0, 1, 1], [], []>} : vector<1x32xf32>, vector<32x8xf32>, vector<1x8xf32> -> vector<1x8xf32>
    %cst_142 = arith.constant dense<0xFF800000> : vector<1xf32>
    %235 = vector.multi_reduction <maximumf>, %234, %cst_142 [1] : vector<1x8xf32> to vector<1xf32>
    %236 = vector.shape_cast %235 : vector<1xf32> to vector<1x1xf32>
    %237 = vector.broadcast %236 : vector<1x1xf32> to vector<1x8xf32>
    %238 = arith.subf %234, %237 : vector<1x8xf32>
    %239 = math.exp %238 : vector<1x8xf32>
    %cst_143 = arith.constant dense<0.000000e+00> : vector<1xf32>
    %240 = vector.multi_reduction <add>, %239, %cst_143 [1] : vector<1x8xf32> to vector<1xf32>
    %241 = vector.shape_cast %240 : vector<1xf32> to vector<1x1xf32>
    %242 = vector.broadcast %241 : vector<1x1xf32> to vector<1x8xf32>
    %243 = arith.divf %239, %242 : vector<1x8xf32>
    %cst_144 = arith.constant dense<0.000000e+00> : vector<1x32xf32>
    %244 = tpu.matmul %243, %1, %cst_144 {dimension_numbers = #tpu.dot_dimension_numbers<[1], [0], [0], [1], [0, 0, 1, 1], [], []>} : vector<1x8xf32>, vector<8x32xf32>, vector<1x32xf32> -> vector<1x32xf32>
    %cst_145 = arith.constant dense<0.000000e+00> : vector<1x32xf32>
    %245 = tpu.matmul %233, %4, %cst_145 {dimension_numbers = #tpu.dot_dimension_numbers<[1], [0], [0], [1], [0, 0, 1, 1], [], []>} : vector<1x32xf32>, vector<32x32xf32>, vector<1x32xf32> -> vector<1x32xf32>
    %cst_146 = arith.constant dense<0.000000e+00> : vector<1x32xf32>
    %246 = tpu.matmul %244, %6, %cst_146 {dimension_numbers = #tpu.dot_dimension_numbers<[1], [0], [0], [1], [0, 0, 1, 1], [], []>} : vector<1x32xf32>, vector<32x32xf32>, vector<1x32xf32> -> vector<1x32xf32>
    %247 = arith.addf %245, %246 : vector<1x32xf32>
    %248 = arith.addf %247, %7 : vector<1x32xf32>
    %249 = math.tanh %248 : vector<1x32xf32>
    %cst_147 = arith.constant dense<0.000000e+00> : vector<1x64xf32>
    %250 = tpu.matmul %249, %8, %cst_147 {dimension_numbers = #tpu.dot_dimension_numbers<[1], [0], [0], [1], [0, 0, 1, 1], [], []>} : vector<1x32xf32>, vector<32x64xf32>, vector<1x64xf32> -> vector<1x64xf32>
    %251 = arith.addf %250, %9 : vector<1x64xf32>
    %cst_148 = arith.constant dense<0xFF800000> : vector<1xf32>
    %252 = vector.multi_reduction <maximumf>, %251, %cst_148 [1] : vector<1x64xf32> to vector<1xf32>
    %253 = vector.shape_cast %252 : vector<1xf32> to vector<1x1xf32>
    %254 = vector.broadcast %253 : vector<1x1xf32> to vector<1x64xf32>
    %255 = arith.subf %251, %254 : vector<1x64xf32>
    %256 = math.exp %255 : vector<1x64xf32>
    %cst_149 = arith.constant dense<0.000000e+00> : vector<1xf32>
    %257 = vector.multi_reduction <add>, %256, %cst_149 [1] : vector<1x64xf32> to vector<1xf32>
    %258 = vector.shape_cast %257 : vector<1xf32> to vector<1x1xf32>
    %cst_150 = arith.constant 1.000000e+00 : f32
    %259 = vector.broadcast %cst_150 : f32 to vector<1x1xf32>
    %260 = arith.divf %259, %258 : vector<1x1xf32>
    %261 = vector.broadcast %253 : vector<1x1xf32> to vector<1x64xf32>
    %262 = arith.cmpf oeq, %251, %261 : vector<1x64xf32>
    %c64_i32_151 = arith.constant 64 : i32
    %263 = vector.broadcast %c64_i32_151 : i32 to vector<1x64xi32>
    %264 = arith.select %262, %32, %263 : vector<1x64xi1>, vector<1x64xi32>
    %cst_152 = arith.constant dense<2147483647> : vector<1xi32>
    %265 = vector.multi_reduction <minsi>, %264, %cst_152 [1] : vector<1x64xi32> to vector<1xi32>
    %266 = vector.shape_cast %265 : vector<1xi32> to vector<1x1xi32>
    %267 = vector.broadcast %266 : vector<1x1xi32> to vector<1x64xi32>
    %268 = arith.cmpi eq, %32, %267 : vector<1x64xi32>
    %269 = arith.extui %268 : vector<1x64xi1> to vector<1x64xi32>
    %270 = arith.sitofp %269 : vector<1x64xi32> to vector<1x64xf32>
    %cst_153 = arith.constant dense<0.000000e+00> : vector<1x32xf32>
    %271 = tpu.matmul %270, %16, %cst_153 {dimension_numbers = #tpu.dot_dimension_numbers<[1], [0], [0], [1], [0, 0, 1, 1], [], []>} : vector<1x64xf32>, vector<64x32xf32>, vector<1x32xf32> -> vector<1x32xf32>
    %cst_154 = arith.constant dense<0.000000e+00> : vector<1x32xf32>
    %272 = tpu.matmul %270, %23, %cst_154 {dimension_numbers = #tpu.dot_dimension_numbers<[1], [0], [0], [1], [0, 0, 1, 1], [], []>} : vector<1x64xf32>, vector<64x32xf32>, vector<1x32xf32> -> vector<1x32xf32>
    %cst_155 = arith.constant dense<0.000000e+00> : vector<1x32xf32>
    %273 = tpu.matmul %270, %30, %cst_155 {dimension_numbers = #tpu.dot_dimension_numbers<[1], [0], [0], [1], [0, 0, 1, 1], [], []>} : vector<1x64xf32>, vector<64x32xf32>, vector<1x32xf32> -> vector<1x32xf32>
    %c0_156 = arith.constant 0 : index
    %c0_157 = arith.constant 0 : index
    %c0_158 = arith.constant 0 : index
    %274 = vector.load %arg5[%c0_156, %c0_157, %c0_158] : memref<3x32x32xf32, #tpu.memory_space<vmem>>, vector<1x32x32xf32>
    %275 = vector.shape_cast %274 : vector<1x32x32xf32> to vector<32x32xf32>
    %cst_159 = arith.constant dense<0.000000e+00> : vector<1x32xf32>
    %276 = tpu.matmul %233, %275, %cst_159 {dimension_numbers = #tpu.dot_dimension_numbers<[1], [0], [0], [1], [0, 0, 1, 1], [], []>} : vector<1x32xf32>, vector<32x32xf32>, vector<1x32xf32> -> vector<1x32xf32>
    %c0_160 = arith.constant 0 : index
    %c0_161 = arith.constant 0 : index
    %c0_162 = arith.constant 0 : index
    %277 = vector.load %arg7[%c0_160, %c0_161, %c0_162] : memref<3x1x32xf32, #tpu.memory_space<vmem>>, vector<1x1x32xf32>
    %278 = vector.shape_cast %277 : vector<1x1x32xf32> to vector<1x32xf32>
    %279 = arith.addf %276, %278 : vector<1x32xf32>
    %c1_163 = arith.constant 1 : index
    %c0_164 = arith.constant 0 : index
    %c0_165 = arith.constant 0 : index
    %280 = vector.load %arg5[%c1_163, %c0_164, %c0_165] : memref<3x32x32xf32, #tpu.memory_space<vmem>>, vector<1x32x32xf32>
    %281 = vector.shape_cast %280 : vector<1x32x32xf32> to vector<32x32xf32>
    %cst_166 = arith.constant dense<0.000000e+00> : vector<1x32xf32>
    %282 = tpu.matmul %233, %281, %cst_166 {dimension_numbers = #tpu.dot_dimension_numbers<[1], [0], [0], [1], [0, 0, 1, 1], [], []>} : vector<1x32xf32>, vector<32x32xf32>, vector<1x32xf32> -> vector<1x32xf32>
    %c1_167 = arith.constant 1 : index
    %c0_168 = arith.constant 0 : index
    %c0_169 = arith.constant 0 : index
    %283 = vector.load %arg7[%c1_167, %c0_168, %c0_169] : memref<3x1x32xf32, #tpu.memory_space<vmem>>, vector<1x1x32xf32>
    %284 = vector.shape_cast %283 : vector<1x1x32xf32> to vector<1x32xf32>
    %285 = arith.addf %282, %284 : vector<1x32xf32>
    %c2_170 = arith.constant 2 : index
    %c0_171 = arith.constant 0 : index
    %c0_172 = arith.constant 0 : index
    %286 = vector.load %arg5[%c2_170, %c0_171, %c0_172] : memref<3x32x32xf32, #tpu.memory_space<vmem>>, vector<1x32x32xf32>
    %287 = vector.shape_cast %286 : vector<1x32x32xf32> to vector<32x32xf32>
    %cst_173 = arith.constant dense<0.000000e+00> : vector<1x32xf32>
    %288 = tpu.matmul %233, %287, %cst_173 {dimension_numbers = #tpu.dot_dimension_numbers<[1], [0], [0], [1], [0, 0, 1, 1], [], []>} : vector<1x32xf32>, vector<32x32xf32>, vector<1x32xf32> -> vector<1x32xf32>
    %c2_174 = arith.constant 2 : index
    %c0_175 = arith.constant 0 : index
    %c0_176 = arith.constant 0 : index
    %289 = vector.load %arg7[%c2_174, %c0_175, %c0_176] : memref<3x1x32xf32, #tpu.memory_space<vmem>>, vector<1x1x32xf32>
    %290 = vector.shape_cast %289 : vector<1x1x32xf32> to vector<1x32xf32>
    %291 = arith.addf %288, %290 : vector<1x32xf32>
    %292 = arith.addf %271, %279 : vector<1x32xf32>
    %293 = arith.negf %292 : vector<1x32xf32>
    %294 = math.exp %293 : vector<1x32xf32>
    %cst_177 = arith.constant 1.000000e+00 : f32
    %295 = vector.broadcast %cst_177 : f32 to vector<1x32xf32>
    %296 = arith.addf %295, %294 : vector<1x32xf32>
    %297 = arith.divf %295, %296 : vector<1x32xf32>
    %298 = arith.addf %272, %285 : vector<1x32xf32>
    %299 = arith.negf %298 : vector<1x32xf32>
    %300 = math.exp %299 : vector<1x32xf32>
    %cst_178 = arith.constant 1.000000e+00 : f32
    %301 = vector.broadcast %cst_178 : f32 to vector<1x32xf32>
    %302 = arith.addf %301, %300 : vector<1x32xf32>
    %303 = arith.divf %301, %302 : vector<1x32xf32>
    %304 = arith.mulf %297, %291 : vector<1x32xf32>
    %305 = arith.addf %273, %304 : vector<1x32xf32>
    %306 = math.tanh %305 : vector<1x32xf32>
    %cst_179 = arith.constant 1.000000e+00 : f32
    %307 = vector.broadcast %cst_179 : f32 to vector<1x32xf32>
    %308 = arith.subf %307, %303 : vector<1x32xf32>
    %309 = arith.mulf %308, %306 : vector<1x32xf32>
    %310 = arith.mulf %303, %233 : vector<1x32xf32>
    %311 = arith.addf %309, %310 : vector<1x32xf32>
    %cst_180 = arith.constant dense<0.000000e+00> : vector<1x8xf32>
    %312 = tpu.matmul %311, %2, %cst_180 {dimension_numbers = #tpu.dot_dimension_numbers<[1], [0], [0], [1], [0, 0, 1, 1], [], []>} : vector<1x32xf32>, vector<32x8xf32>, vector<1x8xf32> -> vector<1x8xf32>
    %cst_181 = arith.constant dense<0xFF800000> : vector<1xf32>
    %313 = vector.multi_reduction <maximumf>, %312, %cst_181 [1] : vector<1x8xf32> to vector<1xf32>
    %314 = vector.shape_cast %313 : vector<1xf32> to vector<1x1xf32>
    %315 = vector.broadcast %314 : vector<1x1xf32> to vector<1x8xf32>
    %316 = arith.subf %312, %315 : vector<1x8xf32>
    %317 = math.exp %316 : vector<1x8xf32>
    %cst_182 = arith.constant dense<0.000000e+00> : vector<1xf32>
    %318 = vector.multi_reduction <add>, %317, %cst_182 [1] : vector<1x8xf32> to vector<1xf32>
    %319 = vector.shape_cast %318 : vector<1xf32> to vector<1x1xf32>
    %320 = vector.broadcast %319 : vector<1x1xf32> to vector<1x8xf32>
    %321 = arith.divf %317, %320 : vector<1x8xf32>
    %cst_183 = arith.constant dense<0.000000e+00> : vector<1x32xf32>
    %322 = tpu.matmul %321, %1, %cst_183 {dimension_numbers = #tpu.dot_dimension_numbers<[1], [0], [0], [1], [0, 0, 1, 1], [], []>} : vector<1x8xf32>, vector<8x32xf32>, vector<1x32xf32> -> vector<1x32xf32>
    %cst_184 = arith.constant dense<0.000000e+00> : vector<1x32xf32>
    %323 = tpu.matmul %311, %4, %cst_184 {dimension_numbers = #tpu.dot_dimension_numbers<[1], [0], [0], [1], [0, 0, 1, 1], [], []>} : vector<1x32xf32>, vector<32x32xf32>, vector<1x32xf32> -> vector<1x32xf32>
    %cst_185 = arith.constant dense<0.000000e+00> : vector<1x32xf32>
    %324 = tpu.matmul %322, %6, %cst_185 {dimension_numbers = #tpu.dot_dimension_numbers<[1], [0], [0], [1], [0, 0, 1, 1], [], []>} : vector<1x32xf32>, vector<32x32xf32>, vector<1x32xf32> -> vector<1x32xf32>
    %325 = arith.addf %323, %324 : vector<1x32xf32>
    %326 = arith.addf %325, %7 : vector<1x32xf32>
    %327 = math.tanh %326 : vector<1x32xf32>
    %cst_186 = arith.constant dense<0.000000e+00> : vector<1x64xf32>
    %328 = tpu.matmul %327, %8, %cst_186 {dimension_numbers = #tpu.dot_dimension_numbers<[1], [0], [0], [1], [0, 0, 1, 1], [], []>} : vector<1x32xf32>, vector<32x64xf32>, vector<1x64xf32> -> vector<1x64xf32>
    %329 = arith.addf %328, %9 : vector<1x64xf32>
    %cst_187 = arith.constant dense<0xFF800000> : vector<1xf32>
    %330 = vector.multi_reduction <maximumf>, %329, %cst_187 [1] : vector<1x64xf32> to vector<1xf32>
    %331 = vector.shape_cast %330 : vector<1xf32> to vector<1x1xf32>
    %332 = vector.broadcast %331 : vector<1x1xf32> to vector<1x64xf32>
    %333 = arith.subf %329, %332 : vector<1x64xf32>
    %334 = math.exp %333 : vector<1x64xf32>
    %cst_188 = arith.constant dense<0.000000e+00> : vector<1xf32>
    %335 = vector.multi_reduction <add>, %334, %cst_188 [1] : vector<1x64xf32> to vector<1xf32>
    %336 = vector.shape_cast %335 : vector<1xf32> to vector<1x1xf32>
    %cst_189 = arith.constant 1.000000e+00 : f32
    %337 = vector.broadcast %cst_189 : f32 to vector<1x1xf32>
    %338 = arith.divf %337, %336 : vector<1x1xf32>
    %339 = vector.broadcast %331 : vector<1x1xf32> to vector<1x64xf32>
    %340 = arith.cmpf oeq, %329, %339 : vector<1x64xf32>
    %c64_i32_190 = arith.constant 64 : i32
    %341 = vector.broadcast %c64_i32_190 : i32 to vector<1x64xi32>
    %342 = arith.select %340, %32, %341 : vector<1x64xi1>, vector<1x64xi32>
    %cst_191 = arith.constant dense<2147483647> : vector<1xi32>
    %343 = vector.multi_reduction <minsi>, %342, %cst_191 [1] : vector<1x64xi32> to vector<1xi32>
    %344 = vector.shape_cast %343 : vector<1xi32> to vector<1x1xi32>
    %345 = vector.broadcast %344 : vector<1x1xi32> to vector<1x64xi32>
    %346 = arith.cmpi eq, %32, %345 : vector<1x64xi32>
    %347 = arith.extui %346 : vector<1x64xi1> to vector<1x64xi32>
    %348 = arith.sitofp %347 : vector<1x64xi32> to vector<1x64xf32>
    %cst_192 = arith.constant dense<0.000000e+00> : vector<1x32xf32>
    %349 = tpu.matmul %348, %16, %cst_192 {dimension_numbers = #tpu.dot_dimension_numbers<[1], [0], [0], [1], [0, 0, 1, 1], [], []>} : vector<1x64xf32>, vector<64x32xf32>, vector<1x32xf32> -> vector<1x32xf32>
    %cst_193 = arith.constant dense<0.000000e+00> : vector<1x32xf32>
    %350 = tpu.matmul %348, %23, %cst_193 {dimension_numbers = #tpu.dot_dimension_numbers<[1], [0], [0], [1], [0, 0, 1, 1], [], []>} : vector<1x64xf32>, vector<64x32xf32>, vector<1x32xf32> -> vector<1x32xf32>
    %cst_194 = arith.constant dense<0.000000e+00> : vector<1x32xf32>
    %351 = tpu.matmul %348, %30, %cst_194 {dimension_numbers = #tpu.dot_dimension_numbers<[1], [0], [0], [1], [0, 0, 1, 1], [], []>} : vector<1x64xf32>, vector<64x32xf32>, vector<1x32xf32> -> vector<1x32xf32>
    %c0_195 = arith.constant 0 : index
    %c0_196 = arith.constant 0 : index
    %c0_197 = arith.constant 0 : index
    %352 = vector.load %arg5[%c0_195, %c0_196, %c0_197] : memref<3x32x32xf32, #tpu.memory_space<vmem>>, vector<1x32x32xf32>
    %353 = vector.shape_cast %352 : vector<1x32x32xf32> to vector<32x32xf32>
    %cst_198 = arith.constant dense<0.000000e+00> : vector<1x32xf32>
    %354 = tpu.matmul %311, %353, %cst_198 {dimension_numbers = #tpu.dot_dimension_numbers<[1], [0], [0], [1], [0, 0, 1, 1], [], []>} : vector<1x32xf32>, vector<32x32xf32>, vector<1x32xf32> -> vector<1x32xf32>
    %c0_199 = arith.constant 0 : index
    %c0_200 = arith.constant 0 : index
    %c0_201 = arith.constant 0 : index
    %355 = vector.load %arg7[%c0_199, %c0_200, %c0_201] : memref<3x1x32xf32, #tpu.memory_space<vmem>>, vector<1x1x32xf32>
    %356 = vector.shape_cast %355 : vector<1x1x32xf32> to vector<1x32xf32>
    %357 = arith.addf %354, %356 : vector<1x32xf32>
    %c1_202 = arith.constant 1 : index
    %c0_203 = arith.constant 0 : index
    %c0_204 = arith.constant 0 : index
    %358 = vector.load %arg5[%c1_202, %c0_203, %c0_204] : memref<3x32x32xf32, #tpu.memory_space<vmem>>, vector<1x32x32xf32>
    %359 = vector.shape_cast %358 : vector<1x32x32xf32> to vector<32x32xf32>
    %cst_205 = arith.constant dense<0.000000e+00> : vector<1x32xf32>
    %360 = tpu.matmul %311, %359, %cst_205 {dimension_numbers = #tpu.dot_dimension_numbers<[1], [0], [0], [1], [0, 0, 1, 1], [], []>} : vector<1x32xf32>, vector<32x32xf32>, vector<1x32xf32> -> vector<1x32xf32>
    %c1_206 = arith.constant 1 : index
    %c0_207 = arith.constant 0 : index
    %c0_208 = arith.constant 0 : index
    %361 = vector.load %arg7[%c1_206, %c0_207, %c0_208] : memref<3x1x32xf32, #tpu.memory_space<vmem>>, vector<1x1x32xf32>
    %362 = vector.shape_cast %361 : vector<1x1x32xf32> to vector<1x32xf32>
    %363 = arith.addf %360, %362 : vector<1x32xf32>
    %c2_209 = arith.constant 2 : index
    %c0_210 = arith.constant 0 : index
    %c0_211 = arith.constant 0 : index
    %364 = vector.load %arg5[%c2_209, %c0_210, %c0_211] : memref<3x32x32xf32, #tpu.memory_space<vmem>>, vector<1x32x32xf32>
    %365 = vector.shape_cast %364 : vector<1x32x32xf32> to vector<32x32xf32>
    %cst_212 = arith.constant dense<0.000000e+00> : vector<1x32xf32>
    %366 = tpu.matmul %311, %365, %cst_212 {dimension_numbers = #tpu.dot_dimension_numbers<[1], [0], [0], [1], [0, 0, 1, 1], [], []>} : vector<1x32xf32>, vector<32x32xf32>, vector<1x32xf32> -> vector<1x32xf32>
    %c2_213 = arith.constant 2 : index
    %c0_214 = arith.constant 0 : index
    %c0_215 = arith.constant 0 : index
    %367 = vector.load %arg7[%c2_213, %c0_214, %c0_215] : memref<3x1x32xf32, #tpu.memory_space<vmem>>, vector<1x1x32xf32>
    %368 = vector.shape_cast %367 : vector<1x1x32xf32> to vector<1x32xf32>
    %369 = arith.addf %366, %368 : vector<1x32xf32>
    %370 = arith.addf %349, %357 : vector<1x32xf32>
    %371 = arith.negf %370 : vector<1x32xf32>
    %372 = math.exp %371 : vector<1x32xf32>
    %cst_216 = arith.constant 1.000000e+00 : f32
    %373 = vector.broadcast %cst_216 : f32 to vector<1x32xf32>
    %374 = arith.addf %373, %372 : vector<1x32xf32>
    %375 = arith.divf %373, %374 : vector<1x32xf32>
    %376 = arith.addf %350, %363 : vector<1x32xf32>
    %377 = arith.negf %376 : vector<1x32xf32>
    %378 = math.exp %377 : vector<1x32xf32>
    %cst_217 = arith.constant 1.000000e+00 : f32
    %379 = vector.broadcast %cst_217 : f32 to vector<1x32xf32>
    %380 = arith.addf %379, %378 : vector<1x32xf32>
    %381 = arith.divf %379, %380 : vector<1x32xf32>
    %382 = arith.mulf %375, %369 : vector<1x32xf32>
    %383 = arith.addf %351, %382 : vector<1x32xf32>
    %384 = math.tanh %383 : vector<1x32xf32>
    %cst_218 = arith.constant 1.000000e+00 : f32
    %385 = vector.broadcast %cst_218 : f32 to vector<1x32xf32>
    %386 = arith.subf %385, %381 : vector<1x32xf32>
    %387 = arith.mulf %386, %384 : vector<1x32xf32>
    %388 = arith.mulf %381, %311 : vector<1x32xf32>
    %389 = arith.addf %387, %388 : vector<1x32xf32>
    %cst_219 = arith.constant dense<0.000000e+00> : vector<1x8xf32>
    %390 = tpu.matmul %389, %2, %cst_219 {dimension_numbers = #tpu.dot_dimension_numbers<[1], [0], [0], [1], [0, 0, 1, 1], [], []>} : vector<1x32xf32>, vector<32x8xf32>, vector<1x8xf32> -> vector<1x8xf32>
    %cst_220 = arith.constant dense<0xFF800000> : vector<1xf32>
    %391 = vector.multi_reduction <maximumf>, %390, %cst_220 [1] : vector<1x8xf32> to vector<1xf32>
    %392 = vector.shape_cast %391 : vector<1xf32> to vector<1x1xf32>
    %393 = vector.broadcast %392 : vector<1x1xf32> to vector<1x8xf32>
    %394 = arith.subf %390, %393 : vector<1x8xf32>
    %395 = math.exp %394 : vector<1x8xf32>
    %cst_221 = arith.constant dense<0.000000e+00> : vector<1xf32>
    %396 = vector.multi_reduction <add>, %395, %cst_221 [1] : vector<1x8xf32> to vector<1xf32>
    %397 = vector.shape_cast %396 : vector<1xf32> to vector<1x1xf32>
    %398 = vector.broadcast %397 : vector<1x1xf32> to vector<1x8xf32>
    %399 = arith.divf %395, %398 : vector<1x8xf32>
    %cst_222 = arith.constant dense<0.000000e+00> : vector<1x32xf32>
    %400 = tpu.matmul %399, %1, %cst_222 {dimension_numbers = #tpu.dot_dimension_numbers<[1], [0], [0], [1], [0, 0, 1, 1], [], []>} : vector<1x8xf32>, vector<8x32xf32>, vector<1x32xf32> -> vector<1x32xf32>
    %cst_223 = arith.constant dense<0.000000e+00> : vector<1x32xf32>
    %401 = tpu.matmul %389, %4, %cst_223 {dimension_numbers = #tpu.dot_dimension_numbers<[1], [0], [0], [1], [0, 0, 1, 1], [], []>} : vector<1x32xf32>, vector<32x32xf32>, vector<1x32xf32> -> vector<1x32xf32>
    %cst_224 = arith.constant dense<0.000000e+00> : vector<1x32xf32>
    %402 = tpu.matmul %400, %6, %cst_224 {dimension_numbers = #tpu.dot_dimension_numbers<[1], [0], [0], [1], [0, 0, 1, 1], [], []>} : vector<1x32xf32>, vector<32x32xf32>, vector<1x32xf32> -> vector<1x32xf32>
    %403 = arith.addf %401, %402 : vector<1x32xf32>
    %404 = arith.addf %403, %7 : vector<1x32xf32>
    %405 = math.tanh %404 : vector<1x32xf32>
    %cst_225 = arith.constant dense<0.000000e+00> : vector<1x64xf32>
    %406 = tpu.matmul %405, %8, %cst_225 {dimension_numbers = #tpu.dot_dimension_numbers<[1], [0], [0], [1], [0, 0, 1, 1], [], []>} : vector<1x32xf32>, vector<32x64xf32>, vector<1x64xf32> -> vector<1x64xf32>
    %407 = arith.addf %406, %9 : vector<1x64xf32>
    %cst_226 = arith.constant dense<0xFF800000> : vector<1xf32>
    %408 = vector.multi_reduction <maximumf>, %407, %cst_226 [1] : vector<1x64xf32> to vector<1xf32>
    %409 = vector.shape_cast %408 : vector<1xf32> to vector<1x1xf32>
    %410 = vector.broadcast %409 : vector<1x1xf32> to vector<1x64xf32>
    %411 = arith.subf %407, %410 : vector<1x64xf32>
    %412 = math.exp %411 : vector<1x64xf32>
    %cst_227 = arith.constant dense<0.000000e+00> : vector<1xf32>
    %413 = vector.multi_reduction <add>, %412, %cst_227 [1] : vector<1x64xf32> to vector<1xf32>
    %414 = vector.shape_cast %413 : vector<1xf32> to vector<1x1xf32>
    %cst_228 = arith.constant 1.000000e+00 : f32
    %415 = vector.broadcast %cst_228 : f32 to vector<1x1xf32>
    %416 = arith.divf %415, %414 : vector<1x1xf32>
    %417 = vector.broadcast %409 : vector<1x1xf32> to vector<1x64xf32>
    %418 = arith.cmpf oeq, %407, %417 : vector<1x64xf32>
    %c64_i32_229 = arith.constant 64 : i32
    %419 = vector.broadcast %c64_i32_229 : i32 to vector<1x64xi32>
    %420 = arith.select %418, %32, %419 : vector<1x64xi1>, vector<1x64xi32>
    %cst_230 = arith.constant dense<2147483647> : vector<1xi32>
    %421 = vector.multi_reduction <minsi>, %420, %cst_230 [1] : vector<1x64xi32> to vector<1xi32>
    %422 = vector.shape_cast %421 : vector<1xi32> to vector<1x1xi32>
    %423 = vector.broadcast %422 : vector<1x1xi32> to vector<1x64xi32>
    %424 = arith.cmpi eq, %32, %423 : vector<1x64xi32>
    %425 = arith.extui %424 : vector<1x64xi1> to vector<1x64xi32>
    %426 = arith.sitofp %425 : vector<1x64xi32> to vector<1x64xf32>
    %cst_231 = arith.constant dense<0.000000e+00> : vector<1x32xf32>
    %427 = tpu.matmul %426, %16, %cst_231 {dimension_numbers = #tpu.dot_dimension_numbers<[1], [0], [0], [1], [0, 0, 1, 1], [], []>} : vector<1x64xf32>, vector<64x32xf32>, vector<1x32xf32> -> vector<1x32xf32>
    %cst_232 = arith.constant dense<0.000000e+00> : vector<1x32xf32>
    %428 = tpu.matmul %426, %23, %cst_232 {dimension_numbers = #tpu.dot_dimension_numbers<[1], [0], [0], [1], [0, 0, 1, 1], [], []>} : vector<1x64xf32>, vector<64x32xf32>, vector<1x32xf32> -> vector<1x32xf32>
    %cst_233 = arith.constant dense<0.000000e+00> : vector<1x32xf32>
    %429 = tpu.matmul %426, %30, %cst_233 {dimension_numbers = #tpu.dot_dimension_numbers<[1], [0], [0], [1], [0, 0, 1, 1], [], []>} : vector<1x64xf32>, vector<64x32xf32>, vector<1x32xf32> -> vector<1x32xf32>
    %c0_234 = arith.constant 0 : index
    %c0_235 = arith.constant 0 : index
    %c0_236 = arith.constant 0 : index
    %430 = vector.load %arg5[%c0_234, %c0_235, %c0_236] : memref<3x32x32xf32, #tpu.memory_space<vmem>>, vector<1x32x32xf32>
    %431 = vector.shape_cast %430 : vector<1x32x32xf32> to vector<32x32xf32>
    %cst_237 = arith.constant dense<0.000000e+00> : vector<1x32xf32>
    %432 = tpu.matmul %389, %431, %cst_237 {dimension_numbers = #tpu.dot_dimension_numbers<[1], [0], [0], [1], [0, 0, 1, 1], [], []>} : vector<1x32xf32>, vector<32x32xf32>, vector<1x32xf32> -> vector<1x32xf32>
    %c0_238 = arith.constant 0 : index
    %c0_239 = arith.constant 0 : index
    %c0_240 = arith.constant 0 : index
    %433 = vector.load %arg7[%c0_238, %c0_239, %c0_240] : memref<3x1x32xf32, #tpu.memory_space<vmem>>, vector<1x1x32xf32>
    %434 = vector.shape_cast %433 : vector<1x1x32xf32> to vector<1x32xf32>
    %435 = arith.addf %432, %434 : vector<1x32xf32>
    %c1_241 = arith.constant 1 : index
    %c0_242 = arith.constant 0 : index
    %c0_243 = arith.constant 0 : index
    %436 = vector.load %arg5[%c1_241, %c0_242, %c0_243] : memref<3x32x32xf32, #tpu.memory_space<vmem>>, vector<1x32x32xf32>
    %437 = vector.shape_cast %436 : vector<1x32x32xf32> to vector<32x32xf32>
    %cst_244 = arith.constant dense<0.000000e+00> : vector<1x32xf32>
    %438 = tpu.matmul %389, %437, %cst_244 {dimension_numbers = #tpu.dot_dimension_numbers<[1], [0], [0], [1], [0, 0, 1, 1], [], []>} : vector<1x32xf32>, vector<32x32xf32>, vector<1x32xf32> -> vector<1x32xf32>
    %c1_245 = arith.constant 1 : index
    %c0_246 = arith.constant 0 : index
    %c0_247 = arith.constant 0 : index
    %439 = vector.load %arg7[%c1_245, %c0_246, %c0_247] : memref<3x1x32xf32, #tpu.memory_space<vmem>>, vector<1x1x32xf32>
    %440 = vector.shape_cast %439 : vector<1x1x32xf32> to vector<1x32xf32>
    %441 = arith.addf %438, %440 : vector<1x32xf32>
    %c2_248 = arith.constant 2 : index
    %c0_249 = arith.constant 0 : index
    %c0_250 = arith.constant 0 : index
    %442 = vector.load %arg5[%c2_248, %c0_249, %c0_250] : memref<3x32x32xf32, #tpu.memory_space<vmem>>, vector<1x32x32xf32>
    %443 = vector.shape_cast %442 : vector<1x32x32xf32> to vector<32x32xf32>
    %cst_251 = arith.constant dense<0.000000e+00> : vector<1x32xf32>
    %444 = tpu.matmul %389, %443, %cst_251 {dimension_numbers = #tpu.dot_dimension_numbers<[1], [0], [0], [1], [0, 0, 1, 1], [], []>} : vector<1x32xf32>, vector<32x32xf32>, vector<1x32xf32> -> vector<1x32xf32>
    %c2_252 = arith.constant 2 : index
    %c0_253 = arith.constant 0 : index
    %c0_254 = arith.constant 0 : index
    %445 = vector.load %arg7[%c2_252, %c0_253, %c0_254] : memref<3x1x32xf32, #tpu.memory_space<vmem>>, vector<1x1x32xf32>
    %446 = vector.shape_cast %445 : vector<1x1x32xf32> to vector<1x32xf32>
    %447 = arith.addf %444, %446 : vector<1x32xf32>
    %448 = arith.addf %427, %435 : vector<1x32xf32>
    %449 = arith.negf %448 : vector<1x32xf32>
    %450 = math.exp %449 : vector<1x32xf32>
    %cst_255 = arith.constant 1.000000e+00 : f32
    %451 = vector.broadcast %cst_255 : f32 to vector<1x32xf32>
    %452 = arith.addf %451, %450 : vector<1x32xf32>
    %453 = arith.divf %451, %452 : vector<1x32xf32>
    %454 = arith.addf %428, %441 : vector<1x32xf32>
    %455 = arith.negf %454 : vector<1x32xf32>
    %456 = math.exp %455 : vector<1x32xf32>
    %cst_256 = arith.constant 1.000000e+00 : f32
    %457 = vector.broadcast %cst_256 : f32 to vector<1x32xf32>
    %458 = arith.addf %457, %456 : vector<1x32xf32>
    %459 = arith.divf %457, %458 : vector<1x32xf32>
    %460 = arith.mulf %453, %447 : vector<1x32xf32>
    %461 = arith.addf %429, %460 : vector<1x32xf32>
    %462 = math.tanh %461 : vector<1x32xf32>
    %cst_257 = arith.constant 1.000000e+00 : f32
    %463 = vector.broadcast %cst_257 : f32 to vector<1x32xf32>
    %464 = arith.subf %463, %459 : vector<1x32xf32>
    %465 = arith.mulf %464, %462 : vector<1x32xf32>
    %466 = arith.mulf %459, %389 : vector<1x32xf32>
    %467 = arith.addf %465, %466 : vector<1x32xf32>
    %cst_258 = arith.constant dense<0.000000e+00> : vector<1x8xf32>
    %468 = tpu.matmul %467, %2, %cst_258 {dimension_numbers = #tpu.dot_dimension_numbers<[1], [0], [0], [1], [0, 0, 1, 1], [], []>} : vector<1x32xf32>, vector<32x8xf32>, vector<1x8xf32> -> vector<1x8xf32>
    %cst_259 = arith.constant dense<0xFF800000> : vector<1xf32>
    %469 = vector.multi_reduction <maximumf>, %468, %cst_259 [1] : vector<1x8xf32> to vector<1xf32>
    %470 = vector.shape_cast %469 : vector<1xf32> to vector<1x1xf32>
    %471 = vector.broadcast %470 : vector<1x1xf32> to vector<1x8xf32>
    %472 = arith.subf %468, %471 : vector<1x8xf32>
    %473 = math.exp %472 : vector<1x8xf32>
    %cst_260 = arith.constant dense<0.000000e+00> : vector<1xf32>
    %474 = vector.multi_reduction <add>, %473, %cst_260 [1] : vector<1x8xf32> to vector<1xf32>
    %475 = vector.shape_cast %474 : vector<1xf32> to vector<1x1xf32>
    %476 = vector.broadcast %475 : vector<1x1xf32> to vector<1x8xf32>
    %477 = arith.divf %473, %476 : vector<1x8xf32>
    %cst_261 = arith.constant dense<0.000000e+00> : vector<1x32xf32>
    %478 = tpu.matmul %477, %1, %cst_261 {dimension_numbers = #tpu.dot_dimension_numbers<[1], [0], [0], [1], [0, 0, 1, 1], [], []>} : vector<1x8xf32>, vector<8x32xf32>, vector<1x32xf32> -> vector<1x32xf32>
    %cst_262 = arith.constant dense<0.000000e+00> : vector<1x32xf32>
    %479 = tpu.matmul %467, %4, %cst_262 {dimension_numbers = #tpu.dot_dimension_numbers<[1], [0], [0], [1], [0, 0, 1, 1], [], []>} : vector<1x32xf32>, vector<32x32xf32>, vector<1x32xf32> -> vector<1x32xf32>
    %cst_263 = arith.constant dense<0.000000e+00> : vector<1x32xf32>
    %480 = tpu.matmul %478, %6, %cst_263 {dimension_numbers = #tpu.dot_dimension_numbers<[1], [0], [0], [1], [0, 0, 1, 1], [], []>} : vector<1x32xf32>, vector<32x32xf32>, vector<1x32xf32> -> vector<1x32xf32>
    %481 = arith.addf %479, %480 : vector<1x32xf32>
    %482 = arith.addf %481, %7 : vector<1x32xf32>
    %483 = math.tanh %482 : vector<1x32xf32>
    %cst_264 = arith.constant dense<0.000000e+00> : vector<1x64xf32>
    %484 = tpu.matmul %483, %8, %cst_264 {dimension_numbers = #tpu.dot_dimension_numbers<[1], [0], [0], [1], [0, 0, 1, 1], [], []>} : vector<1x32xf32>, vector<32x64xf32>, vector<1x64xf32> -> vector<1x64xf32>
    %485 = arith.addf %484, %9 : vector<1x64xf32>
    %cst_265 = arith.constant dense<0xFF800000> : vector<1xf32>
    %486 = vector.multi_reduction <maximumf>, %485, %cst_265 [1] : vector<1x64xf32> to vector<1xf32>
    %487 = vector.shape_cast %486 : vector<1xf32> to vector<1x1xf32>
    %488 = vector.broadcast %487 : vector<1x1xf32> to vector<1x64xf32>
    %489 = arith.subf %485, %488 : vector<1x64xf32>
    %490 = math.exp %489 : vector<1x64xf32>
    %cst_266 = arith.constant dense<0.000000e+00> : vector<1xf32>
    %491 = vector.multi_reduction <add>, %490, %cst_266 [1] : vector<1x64xf32> to vector<1xf32>
    %492 = vector.shape_cast %491 : vector<1xf32> to vector<1x1xf32>
    %cst_267 = arith.constant 1.000000e+00 : f32
    %493 = vector.broadcast %cst_267 : f32 to vector<1x1xf32>
    %494 = arith.divf %493, %492 : vector<1x1xf32>
    %495 = vector.broadcast %487 : vector<1x1xf32> to vector<1x64xf32>
    %496 = arith.cmpf oeq, %485, %495 : vector<1x64xf32>
    %c64_i32_268 = arith.constant 64 : i32
    %497 = vector.broadcast %c64_i32_268 : i32 to vector<1x64xi32>
    %498 = arith.select %496, %32, %497 : vector<1x64xi1>, vector<1x64xi32>
    %cst_269 = arith.constant dense<2147483647> : vector<1xi32>
    %499 = vector.multi_reduction <minsi>, %498, %cst_269 [1] : vector<1x64xi32> to vector<1xi32>
    %500 = vector.shape_cast %499 : vector<1xi32> to vector<1x1xi32>
    %501 = tpu.concatenate %110, %188, %266, %344, %422, %500 in 1 : vector<1x1xi32>, vector<1x1xi32>, vector<1x1xi32>, vector<1x1xi32>, vector<1x1xi32>, vector<1x1xi32> -> vector<1x6xi32>
    %c0_270 = arith.constant 0 : index
    %c0_271 = arith.constant 0 : index
    %502 = vector.load %arg12[%c0_270, %c0_271] : memref<1x6xi32, #tpu.memory_space<vmem>>, vector<1x6xi32>
    tpu.vector_store %arg12[%c0_270, %c0_271], %501 {strides = array<i32>} : memref<1x6xi32, #tpu.memory_space<vmem>>, vector<1x6xi32>,
    %503 = tpu.concatenate %104, %182, %260, %338, %416, %494 in 1 : vector<1x1xf32>, vector<1x1xf32>, vector<1x1xf32>, vector<1x1xf32>, vector<1x1xf32>, vector<1x1xf32> -> vector<1x6xf32>
    %c0_272 = arith.constant 0 : index
    %c0_273 = arith.constant 0 : index
    %504 = vector.load %arg13[%c0_272, %c0_273] : memref<1x6xf32, #tpu.memory_space<vmem>>, vector<1x6xf32>
    tpu.vector_store %arg13[%c0_272, %c0_273], %503 {strides = array<i32>} : memref<1x6xf32, #tpu.memory_space<vmem>>, vector<1x6xf32>,
    return
  }
}

module attributes {stable_mosaic.version = 11 : i64} {
  func.func @encoder_kernel(%arg0: memref<8x32xf32, #tpu.memory_space<vmem>>, %arg1: memref<3x32x32xf32, #tpu.memory_space<vmem>>, %arg2: memref<3x32x32xf32, #tpu.memory_space<vmem>>, %arg3: memref<3x1x32xf32, #tpu.memory_space<vmem>>, %arg4: memref<3x1x32xf32, #tpu.memory_space<vmem>>, %arg5: memref<3x32x32xf32, #tpu.memory_space<vmem>>, %arg6: memref<3x32x32xf32, #tpu.memory_space<vmem>>, %arg7: memref<3x1x32xf32, #tpu.memory_space<vmem>>, %arg8: memref<3x1x32xf32, #tpu.memory_space<vmem>>, %arg9: memref<8x32xf32, #tpu.memory_space<vmem>>, %arg10: memref<1x32xf32, #tpu.memory_space<vmem>>) attributes {dimension_semantics = [], scalar_prefetch = 0 : i64, scratch_operands = 0 : i64, tpu.core_type = #tpu.core_type<tc>} {
    %c0 = arith.constant 0 : index
    %c0_0 = arith.constant 0 : index
    %0 = vector.load %arg0[%c0, %c0_0] : memref<8x32xf32, #tpu.memory_space<vmem>>, vector<8x32xf32>
    %c0_1 = arith.constant 0 : index
    %c0_2 = arith.constant 0 : index
    %c0_3 = arith.constant 0 : index
    %1 = vector.load %arg1[%c0_1, %c0_2, %c0_3] : memref<3x32x32xf32, #tpu.memory_space<vmem>>, vector<1x32x32xf32>
    %2 = vector.shape_cast %1 : vector<1x32x32xf32> to vector<32x32xf32>
    %cst = arith.constant dense<0.000000e+00> : vector<8x32xf32>
    %3 = tpu.matmul %0, %2, %cst {dimension_numbers = #tpu.dot_dimension_numbers<[1], [0], [0], [1], [0, 0, 1, 1], [], []>} : vector<8x32xf32>, vector<32x32xf32>, vector<8x32xf32> -> vector<8x32xf32>
    %c0_4 = arith.constant 0 : index
    %c0_5 = arith.constant 0 : index
    %c0_6 = arith.constant 0 : index
    %4 = vector.load %arg3[%c0_4, %c0_5, %c0_6] : memref<3x1x32xf32, #tpu.memory_space<vmem>>, vector<1x1x32xf32>
    %5 = vector.shape_cast %4 : vector<1x1x32xf32> to vector<1x32xf32>
    %6 = vector.broadcast %5 : vector<1x32xf32> to vector<8x32xf32>
    %7 = arith.addf %3, %6 : vector<8x32xf32>
    %c1 = arith.constant 1 : index
    %c0_7 = arith.constant 0 : index
    %c0_8 = arith.constant 0 : index
    %8 = vector.load %arg1[%c1, %c0_7, %c0_8] : memref<3x32x32xf32, #tpu.memory_space<vmem>>, vector<1x32x32xf32>
    %9 = vector.shape_cast %8 : vector<1x32x32xf32> to vector<32x32xf32>
    %cst_9 = arith.constant dense<0.000000e+00> : vector<8x32xf32>
    %10 = tpu.matmul %0, %9, %cst_9 {dimension_numbers = #tpu.dot_dimension_numbers<[1], [0], [0], [1], [0, 0, 1, 1], [], []>} : vector<8x32xf32>, vector<32x32xf32>, vector<8x32xf32> -> vector<8x32xf32>
    %c1_10 = arith.constant 1 : index
    %c0_11 = arith.constant 0 : index
    %c0_12 = arith.constant 0 : index
    %11 = vector.load %arg3[%c1_10, %c0_11, %c0_12] : memref<3x1x32xf32, #tpu.memory_space<vmem>>, vector<1x1x32xf32>
    %12 = vector.shape_cast %11 : vector<1x1x32xf32> to vector<1x32xf32>
    %13 = vector.broadcast %12 : vector<1x32xf32> to vector<8x32xf32>
    %14 = arith.addf %10, %13 : vector<8x32xf32>
    %c2 = arith.constant 2 : index
    %c0_13 = arith.constant 0 : index
    %c0_14 = arith.constant 0 : index
    %15 = vector.load %arg1[%c2, %c0_13, %c0_14] : memref<3x32x32xf32, #tpu.memory_space<vmem>>, vector<1x32x32xf32>
    %16 = vector.shape_cast %15 : vector<1x32x32xf32> to vector<32x32xf32>
    %cst_15 = arith.constant dense<0.000000e+00> : vector<8x32xf32>
    %17 = tpu.matmul %0, %16, %cst_15 {dimension_numbers = #tpu.dot_dimension_numbers<[1], [0], [0], [1], [0, 0, 1, 1], [], []>} : vector<8x32xf32>, vector<32x32xf32>, vector<8x32xf32> -> vector<8x32xf32>
    %c2_16 = arith.constant 2 : index
    %c0_17 = arith.constant 0 : index
    %c0_18 = arith.constant 0 : index
    %18 = vector.load %arg3[%c2_16, %c0_17, %c0_18] : memref<3x1x32xf32, #tpu.memory_space<vmem>>, vector<1x1x32xf32>
    %19 = vector.shape_cast %18 : vector<1x1x32xf32> to vector<1x32xf32>
    %20 = vector.broadcast %19 : vector<1x32xf32> to vector<8x32xf32>
    %21 = arith.addf %17, %20 : vector<8x32xf32>
    %c0_19 = arith.constant 0 : index
    %c0_20 = arith.constant 0 : index
    %c0_21 = arith.constant 0 : index
    %22 = vector.load %arg5[%c0_19, %c0_20, %c0_21] : memref<3x32x32xf32, #tpu.memory_space<vmem>>, vector<1x32x32xf32>
    %23 = vector.shape_cast %22 : vector<1x32x32xf32> to vector<32x32xf32>
    %cst_22 = arith.constant dense<0.000000e+00> : vector<8x32xf32>
    %24 = tpu.matmul %0, %23, %cst_22 {dimension_numbers = #tpu.dot_dimension_numbers<[1], [0], [0], [1], [0, 0, 1, 1], [], []>} : vector<8x32xf32>, vector<32x32xf32>, vector<8x32xf32> -> vector<8x32xf32>
    %c0_23 = arith.constant 0 : index
    %c0_24 = arith.constant 0 : index
    %c0_25 = arith.constant 0 : index
    %25 = vector.load %arg7[%c0_23, %c0_24, %c0_25] : memref<3x1x32xf32, #tpu.memory_space<vmem>>, vector<1x1x32xf32>
    %26 = vector.shape_cast %25 : vector<1x1x32xf32> to vector<1x32xf32>
    %27 = vector.broadcast %26 : vector<1x32xf32> to vector<8x32xf32>
    %28 = arith.addf %24, %27 : vector<8x32xf32>
    %c1_26 = arith.constant 1 : index
    %c0_27 = arith.constant 0 : index
    %c0_28 = arith.constant 0 : index
    %29 = vector.load %arg5[%c1_26, %c0_27, %c0_28] : memref<3x32x32xf32, #tpu.memory_space<vmem>>, vector<1x32x32xf32>
    %30 = vector.shape_cast %29 : vector<1x32x32xf32> to vector<32x32xf32>
    %cst_29 = arith.constant dense<0.000000e+00> : vector<8x32xf32>
    %31 = tpu.matmul %0, %30, %cst_29 {dimension_numbers = #tpu.dot_dimension_numbers<[1], [0], [0], [1], [0, 0, 1, 1], [], []>} : vector<8x32xf32>, vector<32x32xf32>, vector<8x32xf32> -> vector<8x32xf32>
    %c1_30 = arith.constant 1 : index
    %c0_31 = arith.constant 0 : index
    %c0_32 = arith.constant 0 : index
    %32 = vector.load %arg7[%c1_30, %c0_31, %c0_32] : memref<3x1x32xf32, #tpu.memory_space<vmem>>, vector<1x1x32xf32>
    %33 = vector.shape_cast %32 : vector<1x1x32xf32> to vector<1x32xf32>
    %34 = vector.broadcast %33 : vector<1x32xf32> to vector<8x32xf32>
    %35 = arith.addf %31, %34 : vector<8x32xf32>
    %c2_33 = arith.constant 2 : index
    %c0_34 = arith.constant 0 : index
    %c0_35 = arith.constant 0 : index
    %36 = vector.load %arg5[%c2_33, %c0_34, %c0_35] : memref<3x32x32xf32, #tpu.memory_space<vmem>>, vector<1x32x32xf32>
    %37 = vector.shape_cast %36 : vector<1x32x32xf32> to vector<32x32xf32>
    %cst_36 = arith.constant dense<0.000000e+00> : vector<8x32xf32>
    %38 = tpu.matmul %0, %37, %cst_36 {dimension_numbers = #tpu.dot_dimension_numbers<[1], [0], [0], [1], [0, 0, 1, 1], [], []>} : vector<8x32xf32>, vector<32x32xf32>, vector<8x32xf32> -> vector<8x32xf32>
    %c2_37 = arith.constant 2 : index
    %c0_38 = arith.constant 0 : index
    %c0_39 = arith.constant 0 : index
    %39 = vector.load %arg7[%c2_37, %c0_38, %c0_39] : memref<3x1x32xf32, #tpu.memory_space<vmem>>, vector<1x1x32xf32>
    %40 = vector.shape_cast %39 : vector<1x1x32xf32> to vector<1x32xf32>
    %41 = vector.broadcast %40 : vector<1x32xf32> to vector<8x32xf32>
    %42 = arith.addf %38, %41 : vector<8x32xf32>
    %cst_40 = arith.constant 0.000000e+00 : f32
    %43 = vector.broadcast %cst_40 : f32 to vector<1x32xf32>
    %cst_41 = arith.constant 0.000000e+00 : f32
    %44 = vector.broadcast %cst_41 : f32 to vector<1x32xf32>
    %45 = vector.extract_strided_slice %7 {offsets = [0, 0], sizes = [1, 32], strides = [1, 1]} : vector<8x32xf32> to vector<1x32xf32>
    %46 = vector.extract_strided_slice %14 {offsets = [0, 0], sizes = [1, 32], strides = [1, 1]} : vector<8x32xf32> to vector<1x32xf32>
    %47 = vector.extract_strided_slice %21 {offsets = [0, 0], sizes = [1, 32], strides = [1, 1]} : vector<8x32xf32> to vector<1x32xf32>
    %c0_42 = arith.constant 0 : index
    %c0_43 = arith.constant 0 : index
    %c0_44 = arith.constant 0 : index
    %48 = vector.load %arg2[%c0_42, %c0_43, %c0_44] : memref<3x32x32xf32, #tpu.memory_space<vmem>>, vector<1x32x32xf32>
    %49 = vector.shape_cast %48 : vector<1x32x32xf32> to vector<32x32xf32>
    %cst_45 = arith.constant dense<0.000000e+00> : vector<1x32xf32>
    %50 = tpu.matmul %43, %49, %cst_45 {dimension_numbers = #tpu.dot_dimension_numbers<[1], [0], [0], [1], [0, 0, 1, 1], [], []>} : vector<1x32xf32>, vector<32x32xf32>, vector<1x32xf32> -> vector<1x32xf32>
    %c0_46 = arith.constant 0 : index
    %c0_47 = arith.constant 0 : index
    %c0_48 = arith.constant 0 : index
    %51 = vector.load %arg4[%c0_46, %c0_47, %c0_48] : memref<3x1x32xf32, #tpu.memory_space<vmem>>, vector<1x1x32xf32>
    %52 = vector.shape_cast %51 : vector<1x1x32xf32> to vector<1x32xf32>
    %53 = arith.addf %50, %52 : vector<1x32xf32>
    %c1_49 = arith.constant 1 : index
    %c0_50 = arith.constant 0 : index
    %c0_51 = arith.constant 0 : index
    %54 = vector.load %arg2[%c1_49, %c0_50, %c0_51] : memref<3x32x32xf32, #tpu.memory_space<vmem>>, vector<1x32x32xf32>
    %55 = vector.shape_cast %54 : vector<1x32x32xf32> to vector<32x32xf32>
    %cst_52 = arith.constant dense<0.000000e+00> : vector<1x32xf32>
    %56 = tpu.matmul %43, %55, %cst_52 {dimension_numbers = #tpu.dot_dimension_numbers<[1], [0], [0], [1], [0, 0, 1, 1], [], []>} : vector<1x32xf32>, vector<32x32xf32>, vector<1x32xf32> -> vector<1x32xf32>
    %c1_53 = arith.constant 1 : index
    %c0_54 = arith.constant 0 : index
    %c0_55 = arith.constant 0 : index
    %57 = vector.load %arg4[%c1_53, %c0_54, %c0_55] : memref<3x1x32xf32, #tpu.memory_space<vmem>>, vector<1x1x32xf32>
    %58 = vector.shape_cast %57 : vector<1x1x32xf32> to vector<1x32xf32>
    %59 = arith.addf %56, %58 : vector<1x32xf32>
    %c2_56 = arith.constant 2 : index
    %c0_57 = arith.constant 0 : index
    %c0_58 = arith.constant 0 : index
    %60 = vector.load %arg2[%c2_56, %c0_57, %c0_58] : memref<3x32x32xf32, #tpu.memory_space<vmem>>, vector<1x32x32xf32>
    %61 = vector.shape_cast %60 : vector<1x32x32xf32> to vector<32x32xf32>
    %cst_59 = arith.constant dense<0.000000e+00> : vector<1x32xf32>
    %62 = tpu.matmul %43, %61, %cst_59 {dimension_numbers = #tpu.dot_dimension_numbers<[1], [0], [0], [1], [0, 0, 1, 1], [], []>} : vector<1x32xf32>, vector<32x32xf32>, vector<1x32xf32> -> vector<1x32xf32>
    %c2_60 = arith.constant 2 : index
    %c0_61 = arith.constant 0 : index
    %c0_62 = arith.constant 0 : index
    %63 = vector.load %arg4[%c2_60, %c0_61, %c0_62] : memref<3x1x32xf32, #tpu.memory_space<vmem>>, vector<1x1x32xf32>
    %64 = vector.shape_cast %63 : vector<1x1x32xf32> to vector<1x32xf32>
    %65 = arith.addf %62, %64 : vector<1x32xf32>
    %66 = arith.addf %45, %53 : vector<1x32xf32>
    %67 = arith.negf %66 : vector<1x32xf32>
    %68 = math.exp %67 : vector<1x32xf32>
    %cst_63 = arith.constant 1.000000e+00 : f32
    %69 = vector.broadcast %cst_63 : f32 to vector<1x32xf32>
    %70 = arith.addf %69, %68 : vector<1x32xf32>
    %71 = arith.divf %69, %70 : vector<1x32xf32>
    %72 = arith.addf %46, %59 : vector<1x32xf32>
    %73 = arith.negf %72 : vector<1x32xf32>
    %74 = math.exp %73 : vector<1x32xf32>
    %cst_64 = arith.constant 1.000000e+00 : f32
    %75 = vector.broadcast %cst_64 : f32 to vector<1x32xf32>
    %76 = arith.addf %75, %74 : vector<1x32xf32>
    %77 = arith.divf %75, %76 : vector<1x32xf32>
    %78 = arith.mulf %71, %65 : vector<1x32xf32>
    %79 = arith.addf %47, %78 : vector<1x32xf32>
    %80 = math.tanh %79 : vector<1x32xf32>
    %cst_65 = arith.constant 1.000000e+00 : f32
    %81 = vector.broadcast %cst_65 : f32 to vector<1x32xf32>
    %82 = arith.subf %81, %77 : vector<1x32xf32>
    %83 = arith.mulf %82, %80 : vector<1x32xf32>
    %84 = arith.mulf %77, %43 : vector<1x32xf32>
    %85 = arith.addf %83, %84 : vector<1x32xf32>
    %86 = vector.extract_strided_slice %28 {offsets = [7, 0], sizes = [1, 32], strides = [1, 1]} : vector<8x32xf32> to vector<1x32xf32>
    %87 = vector.extract_strided_slice %35 {offsets = [7, 0], sizes = [1, 32], strides = [1, 1]} : vector<8x32xf32> to vector<1x32xf32>
    %88 = vector.extract_strided_slice %42 {offsets = [7, 0], sizes = [1, 32], strides = [1, 1]} : vector<8x32xf32> to vector<1x32xf32>
    %c0_66 = arith.constant 0 : index
    %c0_67 = arith.constant 0 : index
    %c0_68 = arith.constant 0 : index
    %89 = vector.load %arg6[%c0_66, %c0_67, %c0_68] : memref<3x32x32xf32, #tpu.memory_space<vmem>>, vector<1x32x32xf32>
    %90 = vector.shape_cast %89 : vector<1x32x32xf32> to vector<32x32xf32>
    %cst_69 = arith.constant dense<0.000000e+00> : vector<1x32xf32>
    %91 = tpu.matmul %44, %90, %cst_69 {dimension_numbers = #tpu.dot_dimension_numbers<[1], [0], [0], [1], [0, 0, 1, 1], [], []>} : vector<1x32xf32>, vector<32x32xf32>, vector<1x32xf32> -> vector<1x32xf32>
    %c0_70 = arith.constant 0 : index
    %c0_71 = arith.constant 0 : index
    %c0_72 = arith.constant 0 : index
    %92 = vector.load %arg8[%c0_70, %c0_71, %c0_72] : memref<3x1x32xf32, #tpu.memory_space<vmem>>, vector<1x1x32xf32>
    %93 = vector.shape_cast %92 : vector<1x1x32xf32> to vector<1x32xf32>
    %94 = arith.addf %91, %93 : vector<1x32xf32>
    %c1_73 = arith.constant 1 : index
    %c0_74 = arith.constant 0 : index
    %c0_75 = arith.constant 0 : index
    %95 = vector.load %arg6[%c1_73, %c0_74, %c0_75] : memref<3x32x32xf32, #tpu.memory_space<vmem>>, vector<1x32x32xf32>
    %96 = vector.shape_cast %95 : vector<1x32x32xf32> to vector<32x32xf32>
    %cst_76 = arith.constant dense<0.000000e+00> : vector<1x32xf32>
    %97 = tpu.matmul %44, %96, %cst_76 {dimension_numbers = #tpu.dot_dimension_numbers<[1], [0], [0], [1], [0, 0, 1, 1], [], []>} : vector<1x32xf32>, vector<32x32xf32>, vector<1x32xf32> -> vector<1x32xf32>
    %c1_77 = arith.constant 1 : index
    %c0_78 = arith.constant 0 : index
    %c0_79 = arith.constant 0 : index
    %98 = vector.load %arg8[%c1_77, %c0_78, %c0_79] : memref<3x1x32xf32, #tpu.memory_space<vmem>>, vector<1x1x32xf32>
    %99 = vector.shape_cast %98 : vector<1x1x32xf32> to vector<1x32xf32>
    %100 = arith.addf %97, %99 : vector<1x32xf32>
    %c2_80 = arith.constant 2 : index
    %c0_81 = arith.constant 0 : index
    %c0_82 = arith.constant 0 : index
    %101 = vector.load %arg6[%c2_80, %c0_81, %c0_82] : memref<3x32x32xf32, #tpu.memory_space<vmem>>, vector<1x32x32xf32>
    %102 = vector.shape_cast %101 : vector<1x32x32xf32> to vector<32x32xf32>
    %cst_83 = arith.constant dense<0.000000e+00> : vector<1x32xf32>
    %103 = tpu.matmul %44, %102, %cst_83 {dimension_numbers = #tpu.dot_dimension_numbers<[1], [0], [0], [1], [0, 0, 1, 1], [], []>} : vector<1x32xf32>, vector<32x32xf32>, vector<1x32xf32> -> vector<1x32xf32>
    %c2_84 = arith.constant 2 : index
    %c0_85 = arith.constant 0 : index
    %c0_86 = arith.constant 0 : index
    %104 = vector.load %arg8[%c2_84, %c0_85, %c0_86] : memref<3x1x32xf32, #tpu.memory_space<vmem>>, vector<1x1x32xf32>
    %105 = vector.shape_cast %104 : vector<1x1x32xf32> to vector<1x32xf32>
    %106 = arith.addf %103, %105 : vector<1x32xf32>
    %107 = arith.addf %86, %94 : vector<1x32xf32>
    %108 = arith.negf %107 : vector<1x32xf32>
    %109 = math.exp %108 : vector<1x32xf32>
    %cst_87 = arith.constant 1.000000e+00 : f32
    %110 = vector.broadcast %cst_87 : f32 to vector<1x32xf32>
    %111 = arith.addf %110, %109 : vector<1x32xf32>
    %112 = arith.divf %110, %111 : vector<1x32xf32>
    %113 = arith.addf %87, %100 : vector<1x32xf32>
    %114 = arith.negf %113 : vector<1x32xf32>
    %115 = math.exp %114 : vector<1x32xf32>
    %cst_88 = arith.constant 1.000000e+00 : f32
    %116 = vector.broadcast %cst_88 : f32 to vector<1x32xf32>
    %117 = arith.addf %116, %115 : vector<1x32xf32>
    %118 = arith.divf %116, %117 : vector<1x32xf32>
    %119 = arith.mulf %112, %106 : vector<1x32xf32>
    %120 = arith.addf %88, %119 : vector<1x32xf32>
    %121 = math.tanh %120 : vector<1x32xf32>
    %cst_89 = arith.constant 1.000000e+00 : f32
    %122 = vector.broadcast %cst_89 : f32 to vector<1x32xf32>
    %123 = arith.subf %122, %118 : vector<1x32xf32>
    %124 = arith.mulf %123, %121 : vector<1x32xf32>
    %125 = arith.mulf %118, %44 : vector<1x32xf32>
    %126 = arith.addf %124, %125 : vector<1x32xf32>
    %127 = vector.extract_strided_slice %7 {offsets = [1, 0], sizes = [1, 32], strides = [1, 1]} : vector<8x32xf32> to vector<1x32xf32>
    %128 = vector.extract_strided_slice %14 {offsets = [1, 0], sizes = [1, 32], strides = [1, 1]} : vector<8x32xf32> to vector<1x32xf32>
    %129 = vector.extract_strided_slice %21 {offsets = [1, 0], sizes = [1, 32], strides = [1, 1]} : vector<8x32xf32> to vector<1x32xf32>
    %c0_90 = arith.constant 0 : index
    %c0_91 = arith.constant 0 : index
    %c0_92 = arith.constant 0 : index
    %130 = vector.load %arg2[%c0_90, %c0_91, %c0_92] : memref<3x32x32xf32, #tpu.memory_space<vmem>>, vector<1x32x32xf32>
    %131 = vector.shape_cast %130 : vector<1x32x32xf32> to vector<32x32xf32>
    %cst_93 = arith.constant dense<0.000000e+00> : vector<1x32xf32>
    %132 = tpu.matmul %85, %131, %cst_93 {dimension_numbers = #tpu.dot_dimension_numbers<[1], [0], [0], [1], [0, 0, 1, 1], [], []>} : vector<1x32xf32>, vector<32x32xf32>, vector<1x32xf32> -> vector<1x32xf32>
    %c0_94 = arith.constant 0 : index
    %c0_95 = arith.constant 0 : index
    %c0_96 = arith.constant 0 : index
    %133 = vector.load %arg4[%c0_94, %c0_95, %c0_96] : memref<3x1x32xf32, #tpu.memory_space<vmem>>, vector<1x1x32xf32>
    %134 = vector.shape_cast %133 : vector<1x1x32xf32> to vector<1x32xf32>
    %135 = arith.addf %132, %134 : vector<1x32xf32>
    %c1_97 = arith.constant 1 : index
    %c0_98 = arith.constant 0 : index
    %c0_99 = arith.constant 0 : index
    %136 = vector.load %arg2[%c1_97, %c0_98, %c0_99] : memref<3x32x32xf32, #tpu.memory_space<vmem>>, vector<1x32x32xf32>
    %137 = vector.shape_cast %136 : vector<1x32x32xf32> to vector<32x32xf32>
    %cst_100 = arith.constant dense<0.000000e+00> : vector<1x32xf32>
    %138 = tpu.matmul %85, %137, %cst_100 {dimension_numbers = #tpu.dot_dimension_numbers<[1], [0], [0], [1], [0, 0, 1, 1], [], []>} : vector<1x32xf32>, vector<32x32xf32>, vector<1x32xf32> -> vector<1x32xf32>
    %c1_101 = arith.constant 1 : index
    %c0_102 = arith.constant 0 : index
    %c0_103 = arith.constant 0 : index
    %139 = vector.load %arg4[%c1_101, %c0_102, %c0_103] : memref<3x1x32xf32, #tpu.memory_space<vmem>>, vector<1x1x32xf32>
    %140 = vector.shape_cast %139 : vector<1x1x32xf32> to vector<1x32xf32>
    %141 = arith.addf %138, %140 : vector<1x32xf32>
    %c2_104 = arith.constant 2 : index
    %c0_105 = arith.constant 0 : index
    %c0_106 = arith.constant 0 : index
    %142 = vector.load %arg2[%c2_104, %c0_105, %c0_106] : memref<3x32x32xf32, #tpu.memory_space<vmem>>, vector<1x32x32xf32>
    %143 = vector.shape_cast %142 : vector<1x32x32xf32> to vector<32x32xf32>
    %cst_107 = arith.constant dense<0.000000e+00> : vector<1x32xf32>
    %144 = tpu.matmul %85, %143, %cst_107 {dimension_numbers = #tpu.dot_dimension_numbers<[1], [0], [0], [1], [0, 0, 1, 1], [], []>} : vector<1x32xf32>, vector<32x32xf32>, vector<1x32xf32> -> vector<1x32xf32>
    %c2_108 = arith.constant 2 : index
    %c0_109 = arith.constant 0 : index
    %c0_110 = arith.constant 0 : index
    %145 = vector.load %arg4[%c2_108, %c0_109, %c0_110] : memref<3x1x32xf32, #tpu.memory_space<vmem>>, vector<1x1x32xf32>
    %146 = vector.shape_cast %145 : vector<1x1x32xf32> to vector<1x32xf32>
    %147 = arith.addf %144, %146 : vector<1x32xf32>
    %148 = arith.addf %127, %135 : vector<1x32xf32>
    %149 = arith.negf %148 : vector<1x32xf32>
    %150 = math.exp %149 : vector<1x32xf32>
    %cst_111 = arith.constant 1.000000e+00 : f32
    %151 = vector.broadcast %cst_111 : f32 to vector<1x32xf32>
    %152 = arith.addf %151, %150 : vector<1x32xf32>
    %153 = arith.divf %151, %152 : vector<1x32xf32>
    %154 = arith.addf %128, %141 : vector<1x32xf32>
    %155 = arith.negf %154 : vector<1x32xf32>
    %156 = math.exp %155 : vector<1x32xf32>
    %cst_112 = arith.constant 1.000000e+00 : f32
    %157 = vector.broadcast %cst_112 : f32 to vector<1x32xf32>
    %158 = arith.addf %157, %156 : vector<1x32xf32>
    %159 = arith.divf %157, %158 : vector<1x32xf32>
    %160 = arith.mulf %153, %147 : vector<1x32xf32>
    %161 = arith.addf %129, %160 : vector<1x32xf32>
    %162 = math.tanh %161 : vector<1x32xf32>
    %cst_113 = arith.constant 1.000000e+00 : f32
    %163 = vector.broadcast %cst_113 : f32 to vector<1x32xf32>
    %164 = arith.subf %163, %159 : vector<1x32xf32>
    %165 = arith.mulf %164, %162 : vector<1x32xf32>
    %166 = arith.mulf %159, %85 : vector<1x32xf32>
    %167 = arith.addf %165, %166 : vector<1x32xf32>
    %168 = vector.extract_strided_slice %28 {offsets = [6, 0], sizes = [1, 32], strides = [1, 1]} : vector<8x32xf32> to vector<1x32xf32>
    %169 = vector.extract_strided_slice %35 {offsets = [6, 0], sizes = [1, 32], strides = [1, 1]} : vector<8x32xf32> to vector<1x32xf32>
    %170 = vector.extract_strided_slice %42 {offsets = [6, 0], sizes = [1, 32], strides = [1, 1]} : vector<8x32xf32> to vector<1x32xf32>
    %c0_114 = arith.constant 0 : index
    %c0_115 = arith.constant 0 : index
    %c0_116 = arith.constant 0 : index
    %171 = vector.load %arg6[%c0_114, %c0_115, %c0_116] : memref<3x32x32xf32, #tpu.memory_space<vmem>>, vector<1x32x32xf32>
    %172 = vector.shape_cast %171 : vector<1x32x32xf32> to vector<32x32xf32>
    %cst_117 = arith.constant dense<0.000000e+00> : vector<1x32xf32>
    %173 = tpu.matmul %126, %172, %cst_117 {dimension_numbers = #tpu.dot_dimension_numbers<[1], [0], [0], [1], [0, 0, 1, 1], [], []>} : vector<1x32xf32>, vector<32x32xf32>, vector<1x32xf32> -> vector<1x32xf32>
    %c0_118 = arith.constant 0 : index
    %c0_119 = arith.constant 0 : index
    %c0_120 = arith.constant 0 : index
    %174 = vector.load %arg8[%c0_118, %c0_119, %c0_120] : memref<3x1x32xf32, #tpu.memory_space<vmem>>, vector<1x1x32xf32>
    %175 = vector.shape_cast %174 : vector<1x1x32xf32> to vector<1x32xf32>
    %176 = arith.addf %173, %175 : vector<1x32xf32>
    %c1_121 = arith.constant 1 : index
    %c0_122 = arith.constant 0 : index
    %c0_123 = arith.constant 0 : index
    %177 = vector.load %arg6[%c1_121, %c0_122, %c0_123] : memref<3x32x32xf32, #tpu.memory_space<vmem>>, vector<1x32x32xf32>
    %178 = vector.shape_cast %177 : vector<1x32x32xf32> to vector<32x32xf32>
    %cst_124 = arith.constant dense<0.000000e+00> : vector<1x32xf32>
    %179 = tpu.matmul %126, %178, %cst_124 {dimension_numbers = #tpu.dot_dimension_numbers<[1], [0], [0], [1], [0, 0, 1, 1], [], []>} : vector<1x32xf32>, vector<32x32xf32>, vector<1x32xf32> -> vector<1x32xf32>
    %c1_125 = arith.constant 1 : index
    %c0_126 = arith.constant 0 : index
    %c0_127 = arith.constant 0 : index
    %180 = vector.load %arg8[%c1_125, %c0_126, %c0_127] : memref<3x1x32xf32, #tpu.memory_space<vmem>>, vector<1x1x32xf32>
    %181 = vector.shape_cast %180 : vector<1x1x32xf32> to vector<1x32xf32>
    %182 = arith.addf %179, %181 : vector<1x32xf32>
    %c2_128 = arith.constant 2 : index
    %c0_129 = arith.constant 0 : index
    %c0_130 = arith.constant 0 : index
    %183 = vector.load %arg6[%c2_128, %c0_129, %c0_130] : memref<3x32x32xf32, #tpu.memory_space<vmem>>, vector<1x32x32xf32>
    %184 = vector.shape_cast %183 : vector<1x32x32xf32> to vector<32x32xf32>
    %cst_131 = arith.constant dense<0.000000e+00> : vector<1x32xf32>
    %185 = tpu.matmul %126, %184, %cst_131 {dimension_numbers = #tpu.dot_dimension_numbers<[1], [0], [0], [1], [0, 0, 1, 1], [], []>} : vector<1x32xf32>, vector<32x32xf32>, vector<1x32xf32> -> vector<1x32xf32>
    %c2_132 = arith.constant 2 : index
    %c0_133 = arith.constant 0 : index
    %c0_134 = arith.constant 0 : index
    %186 = vector.load %arg8[%c2_132, %c0_133, %c0_134] : memref<3x1x32xf32, #tpu.memory_space<vmem>>, vector<1x1x32xf32>
    %187 = vector.shape_cast %186 : vector<1x1x32xf32> to vector<1x32xf32>
    %188 = arith.addf %185, %187 : vector<1x32xf32>
    %189 = arith.addf %168, %176 : vector<1x32xf32>
    %190 = arith.negf %189 : vector<1x32xf32>
    %191 = math.exp %190 : vector<1x32xf32>
    %cst_135 = arith.constant 1.000000e+00 : f32
    %192 = vector.broadcast %cst_135 : f32 to vector<1x32xf32>
    %193 = arith.addf %192, %191 : vector<1x32xf32>
    %194 = arith.divf %192, %193 : vector<1x32xf32>
    %195 = arith.addf %169, %182 : vector<1x32xf32>
    %196 = arith.negf %195 : vector<1x32xf32>
    %197 = math.exp %196 : vector<1x32xf32>
    %cst_136 = arith.constant 1.000000e+00 : f32
    %198 = vector.broadcast %cst_136 : f32 to vector<1x32xf32>
    %199 = arith.addf %198, %197 : vector<1x32xf32>
    %200 = arith.divf %198, %199 : vector<1x32xf32>
    %201 = arith.mulf %194, %188 : vector<1x32xf32>
    %202 = arith.addf %170, %201 : vector<1x32xf32>
    %203 = math.tanh %202 : vector<1x32xf32>
    %cst_137 = arith.constant 1.000000e+00 : f32
    %204 = vector.broadcast %cst_137 : f32 to vector<1x32xf32>
    %205 = arith.subf %204, %200 : vector<1x32xf32>
    %206 = arith.mulf %205, %203 : vector<1x32xf32>
    %207 = arith.mulf %200, %126 : vector<1x32xf32>
    %208 = arith.addf %206, %207 : vector<1x32xf32>
    %209 = vector.extract_strided_slice %7 {offsets = [2, 0], sizes = [1, 32], strides = [1, 1]} : vector<8x32xf32> to vector<1x32xf32>
    %210 = vector.extract_strided_slice %14 {offsets = [2, 0], sizes = [1, 32], strides = [1, 1]} : vector<8x32xf32> to vector<1x32xf32>
    %211 = vector.extract_strided_slice %21 {offsets = [2, 0], sizes = [1, 32], strides = [1, 1]} : vector<8x32xf32> to vector<1x32xf32>
    %c0_138 = arith.constant 0 : index
    %c0_139 = arith.constant 0 : index
    %c0_140 = arith.constant 0 : index
    %212 = vector.load %arg2[%c0_138, %c0_139, %c0_140] : memref<3x32x32xf32, #tpu.memory_space<vmem>>, vector<1x32x32xf32>
    %213 = vector.shape_cast %212 : vector<1x32x32xf32> to vector<32x32xf32>
    %cst_141 = arith.constant dense<0.000000e+00> : vector<1x32xf32>
    %214 = tpu.matmul %167, %213, %cst_141 {dimension_numbers = #tpu.dot_dimension_numbers<[1], [0], [0], [1], [0, 0, 1, 1], [], []>} : vector<1x32xf32>, vector<32x32xf32>, vector<1x32xf32> -> vector<1x32xf32>
    %c0_142 = arith.constant 0 : index
    %c0_143 = arith.constant 0 : index
    %c0_144 = arith.constant 0 : index
    %215 = vector.load %arg4[%c0_142, %c0_143, %c0_144] : memref<3x1x32xf32, #tpu.memory_space<vmem>>, vector<1x1x32xf32>
    %216 = vector.shape_cast %215 : vector<1x1x32xf32> to vector<1x32xf32>
    %217 = arith.addf %214, %216 : vector<1x32xf32>
    %c1_145 = arith.constant 1 : index
    %c0_146 = arith.constant 0 : index
    %c0_147 = arith.constant 0 : index
    %218 = vector.load %arg2[%c1_145, %c0_146, %c0_147] : memref<3x32x32xf32, #tpu.memory_space<vmem>>, vector<1x32x32xf32>
    %219 = vector.shape_cast %218 : vector<1x32x32xf32> to vector<32x32xf32>
    %cst_148 = arith.constant dense<0.000000e+00> : vector<1x32xf32>
    %220 = tpu.matmul %167, %219, %cst_148 {dimension_numbers = #tpu.dot_dimension_numbers<[1], [0], [0], [1], [0, 0, 1, 1], [], []>} : vector<1x32xf32>, vector<32x32xf32>, vector<1x32xf32> -> vector<1x32xf32>
    %c1_149 = arith.constant 1 : index
    %c0_150 = arith.constant 0 : index
    %c0_151 = arith.constant 0 : index
    %221 = vector.load %arg4[%c1_149, %c0_150, %c0_151] : memref<3x1x32xf32, #tpu.memory_space<vmem>>, vector<1x1x32xf32>
    %222 = vector.shape_cast %221 : vector<1x1x32xf32> to vector<1x32xf32>
    %223 = arith.addf %220, %222 : vector<1x32xf32>
    %c2_152 = arith.constant 2 : index
    %c0_153 = arith.constant 0 : index
    %c0_154 = arith.constant 0 : index
    %224 = vector.load %arg2[%c2_152, %c0_153, %c0_154] : memref<3x32x32xf32, #tpu.memory_space<vmem>>, vector<1x32x32xf32>
    %225 = vector.shape_cast %224 : vector<1x32x32xf32> to vector<32x32xf32>
    %cst_155 = arith.constant dense<0.000000e+00> : vector<1x32xf32>
    %226 = tpu.matmul %167, %225, %cst_155 {dimension_numbers = #tpu.dot_dimension_numbers<[1], [0], [0], [1], [0, 0, 1, 1], [], []>} : vector<1x32xf32>, vector<32x32xf32>, vector<1x32xf32> -> vector<1x32xf32>
    %c2_156 = arith.constant 2 : index
    %c0_157 = arith.constant 0 : index
    %c0_158 = arith.constant 0 : index
    %227 = vector.load %arg4[%c2_156, %c0_157, %c0_158] : memref<3x1x32xf32, #tpu.memory_space<vmem>>, vector<1x1x32xf32>
    %228 = vector.shape_cast %227 : vector<1x1x32xf32> to vector<1x32xf32>
    %229 = arith.addf %226, %228 : vector<1x32xf32>
    %230 = arith.addf %209, %217 : vector<1x32xf32>
    %231 = arith.negf %230 : vector<1x32xf32>
    %232 = math.exp %231 : vector<1x32xf32>
    %cst_159 = arith.constant 1.000000e+00 : f32
    %233 = vector.broadcast %cst_159 : f32 to vector<1x32xf32>
    %234 = arith.addf %233, %232 : vector<1x32xf32>
    %235 = arith.divf %233, %234 : vector<1x32xf32>
    %236 = arith.addf %210, %223 : vector<1x32xf32>
    %237 = arith.negf %236 : vector<1x32xf32>
    %238 = math.exp %237 : vector<1x32xf32>
    %cst_160 = arith.constant 1.000000e+00 : f32
    %239 = vector.broadcast %cst_160 : f32 to vector<1x32xf32>
    %240 = arith.addf %239, %238 : vector<1x32xf32>
    %241 = arith.divf %239, %240 : vector<1x32xf32>
    %242 = arith.mulf %235, %229 : vector<1x32xf32>
    %243 = arith.addf %211, %242 : vector<1x32xf32>
    %244 = math.tanh %243 : vector<1x32xf32>
    %cst_161 = arith.constant 1.000000e+00 : f32
    %245 = vector.broadcast %cst_161 : f32 to vector<1x32xf32>
    %246 = arith.subf %245, %241 : vector<1x32xf32>
    %247 = arith.mulf %246, %244 : vector<1x32xf32>
    %248 = arith.mulf %241, %167 : vector<1x32xf32>
    %249 = arith.addf %247, %248 : vector<1x32xf32>
    %250 = vector.extract_strided_slice %28 {offsets = [5, 0], sizes = [1, 32], strides = [1, 1]} : vector<8x32xf32> to vector<1x32xf32>
    %251 = vector.extract_strided_slice %35 {offsets = [5, 0], sizes = [1, 32], strides = [1, 1]} : vector<8x32xf32> to vector<1x32xf32>
    %252 = vector.extract_strided_slice %42 {offsets = [5, 0], sizes = [1, 32], strides = [1, 1]} : vector<8x32xf32> to vector<1x32xf32>
    %c0_162 = arith.constant 0 : index
    %c0_163 = arith.constant 0 : index
    %c0_164 = arith.constant 0 : index
    %253 = vector.load %arg6[%c0_162, %c0_163, %c0_164] : memref<3x32x32xf32, #tpu.memory_space<vmem>>, vector<1x32x32xf32>
    %254 = vector.shape_cast %253 : vector<1x32x32xf32> to vector<32x32xf32>
    %cst_165 = arith.constant dense<0.000000e+00> : vector<1x32xf32>
    %255 = tpu.matmul %208, %254, %cst_165 {dimension_numbers = #tpu.dot_dimension_numbers<[1], [0], [0], [1], [0, 0, 1, 1], [], []>} : vector<1x32xf32>, vector<32x32xf32>, vector<1x32xf32> -> vector<1x32xf32>
    %c0_166 = arith.constant 0 : index
    %c0_167 = arith.constant 0 : index
    %c0_168 = arith.constant 0 : index
    %256 = vector.load %arg8[%c0_166, %c0_167, %c0_168] : memref<3x1x32xf32, #tpu.memory_space<vmem>>, vector<1x1x32xf32>
    %257 = vector.shape_cast %256 : vector<1x1x32xf32> to vector<1x32xf32>
    %258 = arith.addf %255, %257 : vector<1x32xf32>
    %c1_169 = arith.constant 1 : index
    %c0_170 = arith.constant 0 : index
    %c0_171 = arith.constant 0 : index
    %259 = vector.load %arg6[%c1_169, %c0_170, %c0_171] : memref<3x32x32xf32, #tpu.memory_space<vmem>>, vector<1x32x32xf32>
    %260 = vector.shape_cast %259 : vector<1x32x32xf32> to vector<32x32xf32>
    %cst_172 = arith.constant dense<0.000000e+00> : vector<1x32xf32>
    %261 = tpu.matmul %208, %260, %cst_172 {dimension_numbers = #tpu.dot_dimension_numbers<[1], [0], [0], [1], [0, 0, 1, 1], [], []>} : vector<1x32xf32>, vector<32x32xf32>, vector<1x32xf32> -> vector<1x32xf32>
    %c1_173 = arith.constant 1 : index
    %c0_174 = arith.constant 0 : index
    %c0_175 = arith.constant 0 : index
    %262 = vector.load %arg8[%c1_173, %c0_174, %c0_175] : memref<3x1x32xf32, #tpu.memory_space<vmem>>, vector<1x1x32xf32>
    %263 = vector.shape_cast %262 : vector<1x1x32xf32> to vector<1x32xf32>
    %264 = arith.addf %261, %263 : vector<1x32xf32>
    %c2_176 = arith.constant 2 : index
    %c0_177 = arith.constant 0 : index
    %c0_178 = arith.constant 0 : index
    %265 = vector.load %arg6[%c2_176, %c0_177, %c0_178] : memref<3x32x32xf32, #tpu.memory_space<vmem>>, vector<1x32x32xf32>
    %266 = vector.shape_cast %265 : vector<1x32x32xf32> to vector<32x32xf32>
    %cst_179 = arith.constant dense<0.000000e+00> : vector<1x32xf32>
    %267 = tpu.matmul %208, %266, %cst_179 {dimension_numbers = #tpu.dot_dimension_numbers<[1], [0], [0], [1], [0, 0, 1, 1], [], []>} : vector<1x32xf32>, vector<32x32xf32>, vector<1x32xf32> -> vector<1x32xf32>
    %c2_180 = arith.constant 2 : index
    %c0_181 = arith.constant 0 : index
    %c0_182 = arith.constant 0 : index
    %268 = vector.load %arg8[%c2_180, %c0_181, %c0_182] : memref<3x1x32xf32, #tpu.memory_space<vmem>>, vector<1x1x32xf32>
    %269 = vector.shape_cast %268 : vector<1x1x32xf32> to vector<1x32xf32>
    %270 = arith.addf %267, %269 : vector<1x32xf32>
    %271 = arith.addf %250, %258 : vector<1x32xf32>
    %272 = arith.negf %271 : vector<1x32xf32>
    %273 = math.exp %272 : vector<1x32xf32>
    %cst_183 = arith.constant 1.000000e+00 : f32
    %274 = vector.broadcast %cst_183 : f32 to vector<1x32xf32>
    %275 = arith.addf %274, %273 : vector<1x32xf32>
    %276 = arith.divf %274, %275 : vector<1x32xf32>
    %277 = arith.addf %251, %264 : vector<1x32xf32>
    %278 = arith.negf %277 : vector<1x32xf32>
    %279 = math.exp %278 : vector<1x32xf32>
    %cst_184 = arith.constant 1.000000e+00 : f32
    %280 = vector.broadcast %cst_184 : f32 to vector<1x32xf32>
    %281 = arith.addf %280, %279 : vector<1x32xf32>
    %282 = arith.divf %280, %281 : vector<1x32xf32>
    %283 = arith.mulf %276, %270 : vector<1x32xf32>
    %284 = arith.addf %252, %283 : vector<1x32xf32>
    %285 = math.tanh %284 : vector<1x32xf32>
    %cst_185 = arith.constant 1.000000e+00 : f32
    %286 = vector.broadcast %cst_185 : f32 to vector<1x32xf32>
    %287 = arith.subf %286, %282 : vector<1x32xf32>
    %288 = arith.mulf %287, %285 : vector<1x32xf32>
    %289 = arith.mulf %282, %208 : vector<1x32xf32>
    %290 = arith.addf %288, %289 : vector<1x32xf32>
    %291 = vector.extract_strided_slice %7 {offsets = [3, 0], sizes = [1, 32], strides = [1, 1]} : vector<8x32xf32> to vector<1x32xf32>
    %292 = vector.extract_strided_slice %14 {offsets = [3, 0], sizes = [1, 32], strides = [1, 1]} : vector<8x32xf32> to vector<1x32xf32>
    %293 = vector.extract_strided_slice %21 {offsets = [3, 0], sizes = [1, 32], strides = [1, 1]} : vector<8x32xf32> to vector<1x32xf32>
    %c0_186 = arith.constant 0 : index
    %c0_187 = arith.constant 0 : index
    %c0_188 = arith.constant 0 : index
    %294 = vector.load %arg2[%c0_186, %c0_187, %c0_188] : memref<3x32x32xf32, #tpu.memory_space<vmem>>, vector<1x32x32xf32>
    %295 = vector.shape_cast %294 : vector<1x32x32xf32> to vector<32x32xf32>
    %cst_189 = arith.constant dense<0.000000e+00> : vector<1x32xf32>
    %296 = tpu.matmul %249, %295, %cst_189 {dimension_numbers = #tpu.dot_dimension_numbers<[1], [0], [0], [1], [0, 0, 1, 1], [], []>} : vector<1x32xf32>, vector<32x32xf32>, vector<1x32xf32> -> vector<1x32xf32>
    %c0_190 = arith.constant 0 : index
    %c0_191 = arith.constant 0 : index
    %c0_192 = arith.constant 0 : index
    %297 = vector.load %arg4[%c0_190, %c0_191, %c0_192] : memref<3x1x32xf32, #tpu.memory_space<vmem>>, vector<1x1x32xf32>
    %298 = vector.shape_cast %297 : vector<1x1x32xf32> to vector<1x32xf32>
    %299 = arith.addf %296, %298 : vector<1x32xf32>
    %c1_193 = arith.constant 1 : index
    %c0_194 = arith.constant 0 : index
    %c0_195 = arith.constant 0 : index
    %300 = vector.load %arg2[%c1_193, %c0_194, %c0_195] : memref<3x32x32xf32, #tpu.memory_space<vmem>>, vector<1x32x32xf32>
    %301 = vector.shape_cast %300 : vector<1x32x32xf32> to vector<32x32xf32>
    %cst_196 = arith.constant dense<0.000000e+00> : vector<1x32xf32>
    %302 = tpu.matmul %249, %301, %cst_196 {dimension_numbers = #tpu.dot_dimension_numbers<[1], [0], [0], [1], [0, 0, 1, 1], [], []>} : vector<1x32xf32>, vector<32x32xf32>, vector<1x32xf32> -> vector<1x32xf32>
    %c1_197 = arith.constant 1 : index
    %c0_198 = arith.constant 0 : index
    %c0_199 = arith.constant 0 : index
    %303 = vector.load %arg4[%c1_197, %c0_198, %c0_199] : memref<3x1x32xf32, #tpu.memory_space<vmem>>, vector<1x1x32xf32>
    %304 = vector.shape_cast %303 : vector<1x1x32xf32> to vector<1x32xf32>
    %305 = arith.addf %302, %304 : vector<1x32xf32>
    %c2_200 = arith.constant 2 : index
    %c0_201 = arith.constant 0 : index
    %c0_202 = arith.constant 0 : index
    %306 = vector.load %arg2[%c2_200, %c0_201, %c0_202] : memref<3x32x32xf32, #tpu.memory_space<vmem>>, vector<1x32x32xf32>
    %307 = vector.shape_cast %306 : vector<1x32x32xf32> to vector<32x32xf32>
    %cst_203 = arith.constant dense<0.000000e+00> : vector<1x32xf32>
    %308 = tpu.matmul %249, %307, %cst_203 {dimension_numbers = #tpu.dot_dimension_numbers<[1], [0], [0], [1], [0, 0, 1, 1], [], []>} : vector<1x32xf32>, vector<32x32xf32>, vector<1x32xf32> -> vector<1x32xf32>
    %c2_204 = arith.constant 2 : index
    %c0_205 = arith.constant 0 : index
    %c0_206 = arith.constant 0 : index
    %309 = vector.load %arg4[%c2_204, %c0_205, %c0_206] : memref<3x1x32xf32, #tpu.memory_space<vmem>>, vector<1x1x32xf32>
    %310 = vector.shape_cast %309 : vector<1x1x32xf32> to vector<1x32xf32>
    %311 = arith.addf %308, %310 : vector<1x32xf32>
    %312 = arith.addf %291, %299 : vector<1x32xf32>
    %313 = arith.negf %312 : vector<1x32xf32>
    %314 = math.exp %313 : vector<1x32xf32>
    %cst_207 = arith.constant 1.000000e+00 : f32
    %315 = vector.broadcast %cst_207 : f32 to vector<1x32xf32>
    %316 = arith.addf %315, %314 : vector<1x32xf32>
    %317 = arith.divf %315, %316 : vector<1x32xf32>
    %318 = arith.addf %292, %305 : vector<1x32xf32>
    %319 = arith.negf %318 : vector<1x32xf32>
    %320 = math.exp %319 : vector<1x32xf32>
    %cst_208 = arith.constant 1.000000e+00 : f32
    %321 = vector.broadcast %cst_208 : f32 to vector<1x32xf32>
    %322 = arith.addf %321, %320 : vector<1x32xf32>
    %323 = arith.divf %321, %322 : vector<1x32xf32>
    %324 = arith.mulf %317, %311 : vector<1x32xf32>
    %325 = arith.addf %293, %324 : vector<1x32xf32>
    %326 = math.tanh %325 : vector<1x32xf32>
    %cst_209 = arith.constant 1.000000e+00 : f32
    %327 = vector.broadcast %cst_209 : f32 to vector<1x32xf32>
    %328 = arith.subf %327, %323 : vector<1x32xf32>
    %329 = arith.mulf %328, %326 : vector<1x32xf32>
    %330 = arith.mulf %323, %249 : vector<1x32xf32>
    %331 = arith.addf %329, %330 : vector<1x32xf32>
    %332 = vector.extract_strided_slice %28 {offsets = [4, 0], sizes = [1, 32], strides = [1, 1]} : vector<8x32xf32> to vector<1x32xf32>
    %333 = vector.extract_strided_slice %35 {offsets = [4, 0], sizes = [1, 32], strides = [1, 1]} : vector<8x32xf32> to vector<1x32xf32>
    %334 = vector.extract_strided_slice %42 {offsets = [4, 0], sizes = [1, 32], strides = [1, 1]} : vector<8x32xf32> to vector<1x32xf32>
    %c0_210 = arith.constant 0 : index
    %c0_211 = arith.constant 0 : index
    %c0_212 = arith.constant 0 : index
    %335 = vector.load %arg6[%c0_210, %c0_211, %c0_212] : memref<3x32x32xf32, #tpu.memory_space<vmem>>, vector<1x32x32xf32>
    %336 = vector.shape_cast %335 : vector<1x32x32xf32> to vector<32x32xf32>
    %cst_213 = arith.constant dense<0.000000e+00> : vector<1x32xf32>
    %337 = tpu.matmul %290, %336, %cst_213 {dimension_numbers = #tpu.dot_dimension_numbers<[1], [0], [0], [1], [0, 0, 1, 1], [], []>} : vector<1x32xf32>, vector<32x32xf32>, vector<1x32xf32> -> vector<1x32xf32>
    %c0_214 = arith.constant 0 : index
    %c0_215 = arith.constant 0 : index
    %c0_216 = arith.constant 0 : index
    %338 = vector.load %arg8[%c0_214, %c0_215, %c0_216] : memref<3x1x32xf32, #tpu.memory_space<vmem>>, vector<1x1x32xf32>
    %339 = vector.shape_cast %338 : vector<1x1x32xf32> to vector<1x32xf32>
    %340 = arith.addf %337, %339 : vector<1x32xf32>
    %c1_217 = arith.constant 1 : index
    %c0_218 = arith.constant 0 : index
    %c0_219 = arith.constant 0 : index
    %341 = vector.load %arg6[%c1_217, %c0_218, %c0_219] : memref<3x32x32xf32, #tpu.memory_space<vmem>>, vector<1x32x32xf32>
    %342 = vector.shape_cast %341 : vector<1x32x32xf32> to vector<32x32xf32>
    %cst_220 = arith.constant dense<0.000000e+00> : vector<1x32xf32>
    %343 = tpu.matmul %290, %342, %cst_220 {dimension_numbers = #tpu.dot_dimension_numbers<[1], [0], [0], [1], [0, 0, 1, 1], [], []>} : vector<1x32xf32>, vector<32x32xf32>, vector<1x32xf32> -> vector<1x32xf32>
    %c1_221 = arith.constant 1 : index
    %c0_222 = arith.constant 0 : index
    %c0_223 = arith.constant 0 : index
    %344 = vector.load %arg8[%c1_221, %c0_222, %c0_223] : memref<3x1x32xf32, #tpu.memory_space<vmem>>, vector<1x1x32xf32>
    %345 = vector.shape_cast %344 : vector<1x1x32xf32> to vector<1x32xf32>
    %346 = arith.addf %343, %345 : vector<1x32xf32>
    %c2_224 = arith.constant 2 : index
    %c0_225 = arith.constant 0 : index
    %c0_226 = arith.constant 0 : index
    %347 = vector.load %arg6[%c2_224, %c0_225, %c0_226] : memref<3x32x32xf32, #tpu.memory_space<vmem>>, vector<1x32x32xf32>
    %348 = vector.shape_cast %347 : vector<1x32x32xf32> to vector<32x32xf32>
    %cst_227 = arith.constant dense<0.000000e+00> : vector<1x32xf32>
    %349 = tpu.matmul %290, %348, %cst_227 {dimension_numbers = #tpu.dot_dimension_numbers<[1], [0], [0], [1], [0, 0, 1, 1], [], []>} : vector<1x32xf32>, vector<32x32xf32>, vector<1x32xf32> -> vector<1x32xf32>
    %c2_228 = arith.constant 2 : index
    %c0_229 = arith.constant 0 : index
    %c0_230 = arith.constant 0 : index
    %350 = vector.load %arg8[%c2_228, %c0_229, %c0_230] : memref<3x1x32xf32, #tpu.memory_space<vmem>>, vector<1x1x32xf32>
    %351 = vector.shape_cast %350 : vector<1x1x32xf32> to vector<1x32xf32>
    %352 = arith.addf %349, %351 : vector<1x32xf32>
    %353 = arith.addf %332, %340 : vector<1x32xf32>
    %354 = arith.negf %353 : vector<1x32xf32>
    %355 = math.exp %354 : vector<1x32xf32>
    %cst_231 = arith.constant 1.000000e+00 : f32
    %356 = vector.broadcast %cst_231 : f32 to vector<1x32xf32>
    %357 = arith.addf %356, %355 : vector<1x32xf32>
    %358 = arith.divf %356, %357 : vector<1x32xf32>
    %359 = arith.addf %333, %346 : vector<1x32xf32>
    %360 = arith.negf %359 : vector<1x32xf32>
    %361 = math.exp %360 : vector<1x32xf32>
    %cst_232 = arith.constant 1.000000e+00 : f32
    %362 = vector.broadcast %cst_232 : f32 to vector<1x32xf32>
    %363 = arith.addf %362, %361 : vector<1x32xf32>
    %364 = arith.divf %362, %363 : vector<1x32xf32>
    %365 = arith.mulf %358, %352 : vector<1x32xf32>
    %366 = arith.addf %334, %365 : vector<1x32xf32>
    %367 = math.tanh %366 : vector<1x32xf32>
    %cst_233 = arith.constant 1.000000e+00 : f32
    %368 = vector.broadcast %cst_233 : f32 to vector<1x32xf32>
    %369 = arith.subf %368, %364 : vector<1x32xf32>
    %370 = arith.mulf %369, %367 : vector<1x32xf32>
    %371 = arith.mulf %364, %290 : vector<1x32xf32>
    %372 = arith.addf %370, %371 : vector<1x32xf32>
    %373 = vector.extract_strided_slice %7 {offsets = [4, 0], sizes = [1, 32], strides = [1, 1]} : vector<8x32xf32> to vector<1x32xf32>
    %374 = vector.extract_strided_slice %14 {offsets = [4, 0], sizes = [1, 32], strides = [1, 1]} : vector<8x32xf32> to vector<1x32xf32>
    %375 = vector.extract_strided_slice %21 {offsets = [4, 0], sizes = [1, 32], strides = [1, 1]} : vector<8x32xf32> to vector<1x32xf32>
    %c0_234 = arith.constant 0 : index
    %c0_235 = arith.constant 0 : index
    %c0_236 = arith.constant 0 : index
    %376 = vector.load %arg2[%c0_234, %c0_235, %c0_236] : memref<3x32x32xf32, #tpu.memory_space<vmem>>, vector<1x32x32xf32>
    %377 = vector.shape_cast %376 : vector<1x32x32xf32> to vector<32x32xf32>
    %cst_237 = arith.constant dense<0.000000e+00> : vector<1x32xf32>
    %378 = tpu.matmul %331, %377, %cst_237 {dimension_numbers = #tpu.dot_dimension_numbers<[1], [0], [0], [1], [0, 0, 1, 1], [], []>} : vector<1x32xf32>, vector<32x32xf32>, vector<1x32xf32> -> vector<1x32xf32>
    %c0_238 = arith.constant 0 : index
    %c0_239 = arith.constant 0 : index
    %c0_240 = arith.constant 0 : index
    %379 = vector.load %arg4[%c0_238, %c0_239, %c0_240] : memref<3x1x32xf32, #tpu.memory_space<vmem>>, vector<1x1x32xf32>
    %380 = vector.shape_cast %379 : vector<1x1x32xf32> to vector<1x32xf32>
    %381 = arith.addf %378, %380 : vector<1x32xf32>
    %c1_241 = arith.constant 1 : index
    %c0_242 = arith.constant 0 : index
    %c0_243 = arith.constant 0 : index
    %382 = vector.load %arg2[%c1_241, %c0_242, %c0_243] : memref<3x32x32xf32, #tpu.memory_space<vmem>>, vector<1x32x32xf32>
    %383 = vector.shape_cast %382 : vector<1x32x32xf32> to vector<32x32xf32>
    %cst_244 = arith.constant dense<0.000000e+00> : vector<1x32xf32>
    %384 = tpu.matmul %331, %383, %cst_244 {dimension_numbers = #tpu.dot_dimension_numbers<[1], [0], [0], [1], [0, 0, 1, 1], [], []>} : vector<1x32xf32>, vector<32x32xf32>, vector<1x32xf32> -> vector<1x32xf32>
    %c1_245 = arith.constant 1 : index
    %c0_246 = arith.constant 0 : index
    %c0_247 = arith.constant 0 : index
    %385 = vector.load %arg4[%c1_245, %c0_246, %c0_247] : memref<3x1x32xf32, #tpu.memory_space<vmem>>, vector<1x1x32xf32>
    %386 = vector.shape_cast %385 : vector<1x1x32xf32> to vector<1x32xf32>
    %387 = arith.addf %384, %386 : vector<1x32xf32>
    %c2_248 = arith.constant 2 : index
    %c0_249 = arith.constant 0 : index
    %c0_250 = arith.constant 0 : index
    %388 = vector.load %arg2[%c2_248, %c0_249, %c0_250] : memref<3x32x32xf32, #tpu.memory_space<vmem>>, vector<1x32x32xf32>
    %389 = vector.shape_cast %388 : vector<1x32x32xf32> to vector<32x32xf32>
    %cst_251 = arith.constant dense<0.000000e+00> : vector<1x32xf32>
    %390 = tpu.matmul %331, %389, %cst_251 {dimension_numbers = #tpu.dot_dimension_numbers<[1], [0], [0], [1], [0, 0, 1, 1], [], []>} : vector<1x32xf32>, vector<32x32xf32>, vector<1x32xf32> -> vector<1x32xf32>
    %c2_252 = arith.constant 2 : index
    %c0_253 = arith.constant 0 : index
    %c0_254 = arith.constant 0 : index
    %391 = vector.load %arg4[%c2_252, %c0_253, %c0_254] : memref<3x1x32xf32, #tpu.memory_space<vmem>>, vector<1x1x32xf32>
    %392 = vector.shape_cast %391 : vector<1x1x32xf32> to vector<1x32xf32>
    %393 = arith.addf %390, %392 : vector<1x32xf32>
    %394 = arith.addf %373, %381 : vector<1x32xf32>
    %395 = arith.negf %394 : vector<1x32xf32>
    %396 = math.exp %395 : vector<1x32xf32>
    %cst_255 = arith.constant 1.000000e+00 : f32
    %397 = vector.broadcast %cst_255 : f32 to vector<1x32xf32>
    %398 = arith.addf %397, %396 : vector<1x32xf32>
    %399 = arith.divf %397, %398 : vector<1x32xf32>
    %400 = arith.addf %374, %387 : vector<1x32xf32>
    %401 = arith.negf %400 : vector<1x32xf32>
    %402 = math.exp %401 : vector<1x32xf32>
    %cst_256 = arith.constant 1.000000e+00 : f32
    %403 = vector.broadcast %cst_256 : f32 to vector<1x32xf32>
    %404 = arith.addf %403, %402 : vector<1x32xf32>
    %405 = arith.divf %403, %404 : vector<1x32xf32>
    %406 = arith.mulf %399, %393 : vector<1x32xf32>
    %407 = arith.addf %375, %406 : vector<1x32xf32>
    %408 = math.tanh %407 : vector<1x32xf32>
    %cst_257 = arith.constant 1.000000e+00 : f32
    %409 = vector.broadcast %cst_257 : f32 to vector<1x32xf32>
    %410 = arith.subf %409, %405 : vector<1x32xf32>
    %411 = arith.mulf %410, %408 : vector<1x32xf32>
    %412 = arith.mulf %405, %331 : vector<1x32xf32>
    %413 = arith.addf %411, %412 : vector<1x32xf32>
    %414 = vector.extract_strided_slice %28 {offsets = [3, 0], sizes = [1, 32], strides = [1, 1]} : vector<8x32xf32> to vector<1x32xf32>
    %415 = vector.extract_strided_slice %35 {offsets = [3, 0], sizes = [1, 32], strides = [1, 1]} : vector<8x32xf32> to vector<1x32xf32>
    %416 = vector.extract_strided_slice %42 {offsets = [3, 0], sizes = [1, 32], strides = [1, 1]} : vector<8x32xf32> to vector<1x32xf32>
    %c0_258 = arith.constant 0 : index
    %c0_259 = arith.constant 0 : index
    %c0_260 = arith.constant 0 : index
    %417 = vector.load %arg6[%c0_258, %c0_259, %c0_260] : memref<3x32x32xf32, #tpu.memory_space<vmem>>, vector<1x32x32xf32>
    %418 = vector.shape_cast %417 : vector<1x32x32xf32> to vector<32x32xf32>
    %cst_261 = arith.constant dense<0.000000e+00> : vector<1x32xf32>
    %419 = tpu.matmul %372, %418, %cst_261 {dimension_numbers = #tpu.dot_dimension_numbers<[1], [0], [0], [1], [0, 0, 1, 1], [], []>} : vector<1x32xf32>, vector<32x32xf32>, vector<1x32xf32> -> vector<1x32xf32>
    %c0_262 = arith.constant 0 : index
    %c0_263 = arith.constant 0 : index
    %c0_264 = arith.constant 0 : index
    %420 = vector.load %arg8[%c0_262, %c0_263, %c0_264] : memref<3x1x32xf32, #tpu.memory_space<vmem>>, vector<1x1x32xf32>
    %421 = vector.shape_cast %420 : vector<1x1x32xf32> to vector<1x32xf32>
    %422 = arith.addf %419, %421 : vector<1x32xf32>
    %c1_265 = arith.constant 1 : index
    %c0_266 = arith.constant 0 : index
    %c0_267 = arith.constant 0 : index
    %423 = vector.load %arg6[%c1_265, %c0_266, %c0_267] : memref<3x32x32xf32, #tpu.memory_space<vmem>>, vector<1x32x32xf32>
    %424 = vector.shape_cast %423 : vector<1x32x32xf32> to vector<32x32xf32>
    %cst_268 = arith.constant dense<0.000000e+00> : vector<1x32xf32>
    %425 = tpu.matmul %372, %424, %cst_268 {dimension_numbers = #tpu.dot_dimension_numbers<[1], [0], [0], [1], [0, 0, 1, 1], [], []>} : vector<1x32xf32>, vector<32x32xf32>, vector<1x32xf32> -> vector<1x32xf32>
    %c1_269 = arith.constant 1 : index
    %c0_270 = arith.constant 0 : index
    %c0_271 = arith.constant 0 : index
    %426 = vector.load %arg8[%c1_269, %c0_270, %c0_271] : memref<3x1x32xf32, #tpu.memory_space<vmem>>, vector<1x1x32xf32>
    %427 = vector.shape_cast %426 : vector<1x1x32xf32> to vector<1x32xf32>
    %428 = arith.addf %425, %427 : vector<1x32xf32>
    %c2_272 = arith.constant 2 : index
    %c0_273 = arith.constant 0 : index
    %c0_274 = arith.constant 0 : index
    %429 = vector.load %arg6[%c2_272, %c0_273, %c0_274] : memref<3x32x32xf32, #tpu.memory_space<vmem>>, vector<1x32x32xf32>
    %430 = vector.shape_cast %429 : vector<1x32x32xf32> to vector<32x32xf32>
    %cst_275 = arith.constant dense<0.000000e+00> : vector<1x32xf32>
    %431 = tpu.matmul %372, %430, %cst_275 {dimension_numbers = #tpu.dot_dimension_numbers<[1], [0], [0], [1], [0, 0, 1, 1], [], []>} : vector<1x32xf32>, vector<32x32xf32>, vector<1x32xf32> -> vector<1x32xf32>
    %c2_276 = arith.constant 2 : index
    %c0_277 = arith.constant 0 : index
    %c0_278 = arith.constant 0 : index
    %432 = vector.load %arg8[%c2_276, %c0_277, %c0_278] : memref<3x1x32xf32, #tpu.memory_space<vmem>>, vector<1x1x32xf32>
    %433 = vector.shape_cast %432 : vector<1x1x32xf32> to vector<1x32xf32>
    %434 = arith.addf %431, %433 : vector<1x32xf32>
    %435 = arith.addf %414, %422 : vector<1x32xf32>
    %436 = arith.negf %435 : vector<1x32xf32>
    %437 = math.exp %436 : vector<1x32xf32>
    %cst_279 = arith.constant 1.000000e+00 : f32
    %438 = vector.broadcast %cst_279 : f32 to vector<1x32xf32>
    %439 = arith.addf %438, %437 : vector<1x32xf32>
    %440 = arith.divf %438, %439 : vector<1x32xf32>
    %441 = arith.addf %415, %428 : vector<1x32xf32>
    %442 = arith.negf %441 : vector<1x32xf32>
    %443 = math.exp %442 : vector<1x32xf32>
    %cst_280 = arith.constant 1.000000e+00 : f32
    %444 = vector.broadcast %cst_280 : f32 to vector<1x32xf32>
    %445 = arith.addf %444, %443 : vector<1x32xf32>
    %446 = arith.divf %444, %445 : vector<1x32xf32>
    %447 = arith.mulf %440, %434 : vector<1x32xf32>
    %448 = arith.addf %416, %447 : vector<1x32xf32>
    %449 = math.tanh %448 : vector<1x32xf32>
    %cst_281 = arith.constant 1.000000e+00 : f32
    %450 = vector.broadcast %cst_281 : f32 to vector<1x32xf32>
    %451 = arith.subf %450, %446 : vector<1x32xf32>
    %452 = arith.mulf %451, %449 : vector<1x32xf32>
    %453 = arith.mulf %446, %372 : vector<1x32xf32>
    %454 = arith.addf %452, %453 : vector<1x32xf32>
    %455 = vector.extract_strided_slice %7 {offsets = [5, 0], sizes = [1, 32], strides = [1, 1]} : vector<8x32xf32> to vector<1x32xf32>
    %456 = vector.extract_strided_slice %14 {offsets = [5, 0], sizes = [1, 32], strides = [1, 1]} : vector<8x32xf32> to vector<1x32xf32>
    %457 = vector.extract_strided_slice %21 {offsets = [5, 0], sizes = [1, 32], strides = [1, 1]} : vector<8x32xf32> to vector<1x32xf32>
    %c0_282 = arith.constant 0 : index
    %c0_283 = arith.constant 0 : index
    %c0_284 = arith.constant 0 : index
    %458 = vector.load %arg2[%c0_282, %c0_283, %c0_284] : memref<3x32x32xf32, #tpu.memory_space<vmem>>, vector<1x32x32xf32>
    %459 = vector.shape_cast %458 : vector<1x32x32xf32> to vector<32x32xf32>
    %cst_285 = arith.constant dense<0.000000e+00> : vector<1x32xf32>
    %460 = tpu.matmul %413, %459, %cst_285 {dimension_numbers = #tpu.dot_dimension_numbers<[1], [0], [0], [1], [0, 0, 1, 1], [], []>} : vector<1x32xf32>, vector<32x32xf32>, vector<1x32xf32> -> vector<1x32xf32>
    %c0_286 = arith.constant 0 : index
    %c0_287 = arith.constant 0 : index
    %c0_288 = arith.constant 0 : index
    %461 = vector.load %arg4[%c0_286, %c0_287, %c0_288] : memref<3x1x32xf32, #tpu.memory_space<vmem>>, vector<1x1x32xf32>
    %462 = vector.shape_cast %461 : vector<1x1x32xf32> to vector<1x32xf32>
    %463 = arith.addf %460, %462 : vector<1x32xf32>
    %c1_289 = arith.constant 1 : index
    %c0_290 = arith.constant 0 : index
    %c0_291 = arith.constant 0 : index
    %464 = vector.load %arg2[%c1_289, %c0_290, %c0_291] : memref<3x32x32xf32, #tpu.memory_space<vmem>>, vector<1x32x32xf32>
    %465 = vector.shape_cast %464 : vector<1x32x32xf32> to vector<32x32xf32>
    %cst_292 = arith.constant dense<0.000000e+00> : vector<1x32xf32>
    %466 = tpu.matmul %413, %465, %cst_292 {dimension_numbers = #tpu.dot_dimension_numbers<[1], [0], [0], [1], [0, 0, 1, 1], [], []>} : vector<1x32xf32>, vector<32x32xf32>, vector<1x32xf32> -> vector<1x32xf32>
    %c1_293 = arith.constant 1 : index
    %c0_294 = arith.constant 0 : index
    %c0_295 = arith.constant 0 : index
    %467 = vector.load %arg4[%c1_293, %c0_294, %c0_295] : memref<3x1x32xf32, #tpu.memory_space<vmem>>, vector<1x1x32xf32>
    %468 = vector.shape_cast %467 : vector<1x1x32xf32> to vector<1x32xf32>
    %469 = arith.addf %466, %468 : vector<1x32xf32>
    %c2_296 = arith.constant 2 : index
    %c0_297 = arith.constant 0 : index
    %c0_298 = arith.constant 0 : index
    %470 = vector.load %arg2[%c2_296, %c0_297, %c0_298] : memref<3x32x32xf32, #tpu.memory_space<vmem>>, vector<1x32x32xf32>
    %471 = vector.shape_cast %470 : vector<1x32x32xf32> to vector<32x32xf32>
    %cst_299 = arith.constant dense<0.000000e+00> : vector<1x32xf32>
    %472 = tpu.matmul %413, %471, %cst_299 {dimension_numbers = #tpu.dot_dimension_numbers<[1], [0], [0], [1], [0, 0, 1, 1], [], []>} : vector<1x32xf32>, vector<32x32xf32>, vector<1x32xf32> -> vector<1x32xf32>
    %c2_300 = arith.constant 2 : index
    %c0_301 = arith.constant 0 : index
    %c0_302 = arith.constant 0 : index
    %473 = vector.load %arg4[%c2_300, %c0_301, %c0_302] : memref<3x1x32xf32, #tpu.memory_space<vmem>>, vector<1x1x32xf32>
    %474 = vector.shape_cast %473 : vector<1x1x32xf32> to vector<1x32xf32>
    %475 = arith.addf %472, %474 : vector<1x32xf32>
    %476 = arith.addf %455, %463 : vector<1x32xf32>
    %477 = arith.negf %476 : vector<1x32xf32>
    %478 = math.exp %477 : vector<1x32xf32>
    %cst_303 = arith.constant 1.000000e+00 : f32
    %479 = vector.broadcast %cst_303 : f32 to vector<1x32xf32>
    %480 = arith.addf %479, %478 : vector<1x32xf32>
    %481 = arith.divf %479, %480 : vector<1x32xf32>
    %482 = arith.addf %456, %469 : vector<1x32xf32>
    %483 = arith.negf %482 : vector<1x32xf32>
    %484 = math.exp %483 : vector<1x32xf32>
    %cst_304 = arith.constant 1.000000e+00 : f32
    %485 = vector.broadcast %cst_304 : f32 to vector<1x32xf32>
    %486 = arith.addf %485, %484 : vector<1x32xf32>
    %487 = arith.divf %485, %486 : vector<1x32xf32>
    %488 = arith.mulf %481, %475 : vector<1x32xf32>
    %489 = arith.addf %457, %488 : vector<1x32xf32>
    %490 = math.tanh %489 : vector<1x32xf32>
    %cst_305 = arith.constant 1.000000e+00 : f32
    %491 = vector.broadcast %cst_305 : f32 to vector<1x32xf32>
    %492 = arith.subf %491, %487 : vector<1x32xf32>
    %493 = arith.mulf %492, %490 : vector<1x32xf32>
    %494 = arith.mulf %487, %413 : vector<1x32xf32>
    %495 = arith.addf %493, %494 : vector<1x32xf32>
    %496 = vector.extract_strided_slice %28 {offsets = [2, 0], sizes = [1, 32], strides = [1, 1]} : vector<8x32xf32> to vector<1x32xf32>
    %497 = vector.extract_strided_slice %35 {offsets = [2, 0], sizes = [1, 32], strides = [1, 1]} : vector<8x32xf32> to vector<1x32xf32>
    %498 = vector.extract_strided_slice %42 {offsets = [2, 0], sizes = [1, 32], strides = [1, 1]} : vector<8x32xf32> to vector<1x32xf32>
    %c0_306 = arith.constant 0 : index
    %c0_307 = arith.constant 0 : index
    %c0_308 = arith.constant 0 : index
    %499 = vector.load %arg6[%c0_306, %c0_307, %c0_308] : memref<3x32x32xf32, #tpu.memory_space<vmem>>, vector<1x32x32xf32>
    %500 = vector.shape_cast %499 : vector<1x32x32xf32> to vector<32x32xf32>
    %cst_309 = arith.constant dense<0.000000e+00> : vector<1x32xf32>
    %501 = tpu.matmul %454, %500, %cst_309 {dimension_numbers = #tpu.dot_dimension_numbers<[1], [0], [0], [1], [0, 0, 1, 1], [], []>} : vector<1x32xf32>, vector<32x32xf32>, vector<1x32xf32> -> vector<1x32xf32>
    %c0_310 = arith.constant 0 : index
    %c0_311 = arith.constant 0 : index
    %c0_312 = arith.constant 0 : index
    %502 = vector.load %arg8[%c0_310, %c0_311, %c0_312] : memref<3x1x32xf32, #tpu.memory_space<vmem>>, vector<1x1x32xf32>
    %503 = vector.shape_cast %502 : vector<1x1x32xf32> to vector<1x32xf32>
    %504 = arith.addf %501, %503 : vector<1x32xf32>
    %c1_313 = arith.constant 1 : index
    %c0_314 = arith.constant 0 : index
    %c0_315 = arith.constant 0 : index
    %505 = vector.load %arg6[%c1_313, %c0_314, %c0_315] : memref<3x32x32xf32, #tpu.memory_space<vmem>>, vector<1x32x32xf32>
    %506 = vector.shape_cast %505 : vector<1x32x32xf32> to vector<32x32xf32>
    %cst_316 = arith.constant dense<0.000000e+00> : vector<1x32xf32>
    %507 = tpu.matmul %454, %506, %cst_316 {dimension_numbers = #tpu.dot_dimension_numbers<[1], [0], [0], [1], [0, 0, 1, 1], [], []>} : vector<1x32xf32>, vector<32x32xf32>, vector<1x32xf32> -> vector<1x32xf32>
    %c1_317 = arith.constant 1 : index
    %c0_318 = arith.constant 0 : index
    %c0_319 = arith.constant 0 : index
    %508 = vector.load %arg8[%c1_317, %c0_318, %c0_319] : memref<3x1x32xf32, #tpu.memory_space<vmem>>, vector<1x1x32xf32>
    %509 = vector.shape_cast %508 : vector<1x1x32xf32> to vector<1x32xf32>
    %510 = arith.addf %507, %509 : vector<1x32xf32>
    %c2_320 = arith.constant 2 : index
    %c0_321 = arith.constant 0 : index
    %c0_322 = arith.constant 0 : index
    %511 = vector.load %arg6[%c2_320, %c0_321, %c0_322] : memref<3x32x32xf32, #tpu.memory_space<vmem>>, vector<1x32x32xf32>
    %512 = vector.shape_cast %511 : vector<1x32x32xf32> to vector<32x32xf32>
    %cst_323 = arith.constant dense<0.000000e+00> : vector<1x32xf32>
    %513 = tpu.matmul %454, %512, %cst_323 {dimension_numbers = #tpu.dot_dimension_numbers<[1], [0], [0], [1], [0, 0, 1, 1], [], []>} : vector<1x32xf32>, vector<32x32xf32>, vector<1x32xf32> -> vector<1x32xf32>
    %c2_324 = arith.constant 2 : index
    %c0_325 = arith.constant 0 : index
    %c0_326 = arith.constant 0 : index
    %514 = vector.load %arg8[%c2_324, %c0_325, %c0_326] : memref<3x1x32xf32, #tpu.memory_space<vmem>>, vector<1x1x32xf32>
    %515 = vector.shape_cast %514 : vector<1x1x32xf32> to vector<1x32xf32>
    %516 = arith.addf %513, %515 : vector<1x32xf32>
    %517 = arith.addf %496, %504 : vector<1x32xf32>
    %518 = arith.negf %517 : vector<1x32xf32>
    %519 = math.exp %518 : vector<1x32xf32>
    %cst_327 = arith.constant 1.000000e+00 : f32
    %520 = vector.broadcast %cst_327 : f32 to vector<1x32xf32>
    %521 = arith.addf %520, %519 : vector<1x32xf32>
    %522 = arith.divf %520, %521 : vector<1x32xf32>
    %523 = arith.addf %497, %510 : vector<1x32xf32>
    %524 = arith.negf %523 : vector<1x32xf32>
    %525 = math.exp %524 : vector<1x32xf32>
    %cst_328 = arith.constant 1.000000e+00 : f32
    %526 = vector.broadcast %cst_328 : f32 to vector<1x32xf32>
    %527 = arith.addf %526, %525 : vector<1x32xf32>
    %528 = arith.divf %526, %527 : vector<1x32xf32>
    %529 = arith.mulf %522, %516 : vector<1x32xf32>
    %530 = arith.addf %498, %529 : vector<1x32xf32>
    %531 = math.tanh %530 : vector<1x32xf32>
    %cst_329 = arith.constant 1.000000e+00 : f32
    %532 = vector.broadcast %cst_329 : f32 to vector<1x32xf32>
    %533 = arith.subf %532, %528 : vector<1x32xf32>
    %534 = arith.mulf %533, %531 : vector<1x32xf32>
    %535 = arith.mulf %528, %454 : vector<1x32xf32>
    %536 = arith.addf %534, %535 : vector<1x32xf32>
    %537 = vector.extract_strided_slice %7 {offsets = [6, 0], sizes = [1, 32], strides = [1, 1]} : vector<8x32xf32> to vector<1x32xf32>
    %538 = vector.extract_strided_slice %14 {offsets = [6, 0], sizes = [1, 32], strides = [1, 1]} : vector<8x32xf32> to vector<1x32xf32>
    %539 = vector.extract_strided_slice %21 {offsets = [6, 0], sizes = [1, 32], strides = [1, 1]} : vector<8x32xf32> to vector<1x32xf32>
    %c0_330 = arith.constant 0 : index
    %c0_331 = arith.constant 0 : index
    %c0_332 = arith.constant 0 : index
    %540 = vector.load %arg2[%c0_330, %c0_331, %c0_332] : memref<3x32x32xf32, #tpu.memory_space<vmem>>, vector<1x32x32xf32>
    %541 = vector.shape_cast %540 : vector<1x32x32xf32> to vector<32x32xf32>
    %cst_333 = arith.constant dense<0.000000e+00> : vector<1x32xf32>
    %542 = tpu.matmul %495, %541, %cst_333 {dimension_numbers = #tpu.dot_dimension_numbers<[1], [0], [0], [1], [0, 0, 1, 1], [], []>} : vector<1x32xf32>, vector<32x32xf32>, vector<1x32xf32> -> vector<1x32xf32>
    %c0_334 = arith.constant 0 : index
    %c0_335 = arith.constant 0 : index
    %c0_336 = arith.constant 0 : index
    %543 = vector.load %arg4[%c0_334, %c0_335, %c0_336] : memref<3x1x32xf32, #tpu.memory_space<vmem>>, vector<1x1x32xf32>
    %544 = vector.shape_cast %543 : vector<1x1x32xf32> to vector<1x32xf32>
    %545 = arith.addf %542, %544 : vector<1x32xf32>
    %c1_337 = arith.constant 1 : index
    %c0_338 = arith.constant 0 : index
    %c0_339 = arith.constant 0 : index
    %546 = vector.load %arg2[%c1_337, %c0_338, %c0_339] : memref<3x32x32xf32, #tpu.memory_space<vmem>>, vector<1x32x32xf32>
    %547 = vector.shape_cast %546 : vector<1x32x32xf32> to vector<32x32xf32>
    %cst_340 = arith.constant dense<0.000000e+00> : vector<1x32xf32>
    %548 = tpu.matmul %495, %547, %cst_340 {dimension_numbers = #tpu.dot_dimension_numbers<[1], [0], [0], [1], [0, 0, 1, 1], [], []>} : vector<1x32xf32>, vector<32x32xf32>, vector<1x32xf32> -> vector<1x32xf32>
    %c1_341 = arith.constant 1 : index
    %c0_342 = arith.constant 0 : index
    %c0_343 = arith.constant 0 : index
    %549 = vector.load %arg4[%c1_341, %c0_342, %c0_343] : memref<3x1x32xf32, #tpu.memory_space<vmem>>, vector<1x1x32xf32>
    %550 = vector.shape_cast %549 : vector<1x1x32xf32> to vector<1x32xf32>
    %551 = arith.addf %548, %550 : vector<1x32xf32>
    %c2_344 = arith.constant 2 : index
    %c0_345 = arith.constant 0 : index
    %c0_346 = arith.constant 0 : index
    %552 = vector.load %arg2[%c2_344, %c0_345, %c0_346] : memref<3x32x32xf32, #tpu.memory_space<vmem>>, vector<1x32x32xf32>
    %553 = vector.shape_cast %552 : vector<1x32x32xf32> to vector<32x32xf32>
    %cst_347 = arith.constant dense<0.000000e+00> : vector<1x32xf32>
    %554 = tpu.matmul %495, %553, %cst_347 {dimension_numbers = #tpu.dot_dimension_numbers<[1], [0], [0], [1], [0, 0, 1, 1], [], []>} : vector<1x32xf32>, vector<32x32xf32>, vector<1x32xf32> -> vector<1x32xf32>
    %c2_348 = arith.constant 2 : index
    %c0_349 = arith.constant 0 : index
    %c0_350 = arith.constant 0 : index
    %555 = vector.load %arg4[%c2_348, %c0_349, %c0_350] : memref<3x1x32xf32, #tpu.memory_space<vmem>>, vector<1x1x32xf32>
    %556 = vector.shape_cast %555 : vector<1x1x32xf32> to vector<1x32xf32>
    %557 = arith.addf %554, %556 : vector<1x32xf32>
    %558 = arith.addf %537, %545 : vector<1x32xf32>
    %559 = arith.negf %558 : vector<1x32xf32>
    %560 = math.exp %559 : vector<1x32xf32>
    %cst_351 = arith.constant 1.000000e+00 : f32
    %561 = vector.broadcast %cst_351 : f32 to vector<1x32xf32>
    %562 = arith.addf %561, %560 : vector<1x32xf32>
    %563 = arith.divf %561, %562 : vector<1x32xf32>
    %564 = arith.addf %538, %551 : vector<1x32xf32>
    %565 = arith.negf %564 : vector<1x32xf32>
    %566 = math.exp %565 : vector<1x32xf32>
    %cst_352 = arith.constant 1.000000e+00 : f32
    %567 = vector.broadcast %cst_352 : f32 to vector<1x32xf32>
    %568 = arith.addf %567, %566 : vector<1x32xf32>
    %569 = arith.divf %567, %568 : vector<1x32xf32>
    %570 = arith.mulf %563, %557 : vector<1x32xf32>
    %571 = arith.addf %539, %570 : vector<1x32xf32>
    %572 = math.tanh %571 : vector<1x32xf32>
    %cst_353 = arith.constant 1.000000e+00 : f32
    %573 = vector.broadcast %cst_353 : f32 to vector<1x32xf32>
    %574 = arith.subf %573, %569 : vector<1x32xf32>
    %575 = arith.mulf %574, %572 : vector<1x32xf32>
    %576 = arith.mulf %569, %495 : vector<1x32xf32>
    %577 = arith.addf %575, %576 : vector<1x32xf32>
    %578 = vector.extract_strided_slice %28 {offsets = [1, 0], sizes = [1, 32], strides = [1, 1]} : vector<8x32xf32> to vector<1x32xf32>
    %579 = vector.extract_strided_slice %35 {offsets = [1, 0], sizes = [1, 32], strides = [1, 1]} : vector<8x32xf32> to vector<1x32xf32>
    %580 = vector.extract_strided_slice %42 {offsets = [1, 0], sizes = [1, 32], strides = [1, 1]} : vector<8x32xf32> to vector<1x32xf32>
    %c0_354 = arith.constant 0 : index
    %c0_355 = arith.constant 0 : index
    %c0_356 = arith.constant 0 : index
    %581 = vector.load %arg6[%c0_354, %c0_355, %c0_356] : memref<3x32x32xf32, #tpu.memory_space<vmem>>, vector<1x32x32xf32>
    %582 = vector.shape_cast %581 : vector<1x32x32xf32> to vector<32x32xf32>
    %cst_357 = arith.constant dense<0.000000e+00> : vector<1x32xf32>
    %583 = tpu.matmul %536, %582, %cst_357 {dimension_numbers = #tpu.dot_dimension_numbers<[1], [0], [0], [1], [0, 0, 1, 1], [], []>} : vector<1x32xf32>, vector<32x32xf32>, vector<1x32xf32> -> vector<1x32xf32>
    %c0_358 = arith.constant 0 : index
    %c0_359 = arith.constant 0 : index
    %c0_360 = arith.constant 0 : index
    %584 = vector.load %arg8[%c0_358, %c0_359, %c0_360] : memref<3x1x32xf32, #tpu.memory_space<vmem>>, vector<1x1x32xf32>
    %585 = vector.shape_cast %584 : vector<1x1x32xf32> to vector<1x32xf32>
    %586 = arith.addf %583, %585 : vector<1x32xf32>
    %c1_361 = arith.constant 1 : index
    %c0_362 = arith.constant 0 : index
    %c0_363 = arith.constant 0 : index
    %587 = vector.load %arg6[%c1_361, %c0_362, %c0_363] : memref<3x32x32xf32, #tpu.memory_space<vmem>>, vector<1x32x32xf32>
    %588 = vector.shape_cast %587 : vector<1x32x32xf32> to vector<32x32xf32>
    %cst_364 = arith.constant dense<0.000000e+00> : vector<1x32xf32>
    %589 = tpu.matmul %536, %588, %cst_364 {dimension_numbers = #tpu.dot_dimension_numbers<[1], [0], [0], [1], [0, 0, 1, 1], [], []>} : vector<1x32xf32>, vector<32x32xf32>, vector<1x32xf32> -> vector<1x32xf32>
    %c1_365 = arith.constant 1 : index
    %c0_366 = arith.constant 0 : index
    %c0_367 = arith.constant 0 : index
    %590 = vector.load %arg8[%c1_365, %c0_366, %c0_367] : memref<3x1x32xf32, #tpu.memory_space<vmem>>, vector<1x1x32xf32>
    %591 = vector.shape_cast %590 : vector<1x1x32xf32> to vector<1x32xf32>
    %592 = arith.addf %589, %591 : vector<1x32xf32>
    %c2_368 = arith.constant 2 : index
    %c0_369 = arith.constant 0 : index
    %c0_370 = arith.constant 0 : index
    %593 = vector.load %arg6[%c2_368, %c0_369, %c0_370] : memref<3x32x32xf32, #tpu.memory_space<vmem>>, vector<1x32x32xf32>
    %594 = vector.shape_cast %593 : vector<1x32x32xf32> to vector<32x32xf32>
    %cst_371 = arith.constant dense<0.000000e+00> : vector<1x32xf32>
    %595 = tpu.matmul %536, %594, %cst_371 {dimension_numbers = #tpu.dot_dimension_numbers<[1], [0], [0], [1], [0, 0, 1, 1], [], []>} : vector<1x32xf32>, vector<32x32xf32>, vector<1x32xf32> -> vector<1x32xf32>
    %c2_372 = arith.constant 2 : index
    %c0_373 = arith.constant 0 : index
    %c0_374 = arith.constant 0 : index
    %596 = vector.load %arg8[%c2_372, %c0_373, %c0_374] : memref<3x1x32xf32, #tpu.memory_space<vmem>>, vector<1x1x32xf32>
    %597 = vector.shape_cast %596 : vector<1x1x32xf32> to vector<1x32xf32>
    %598 = arith.addf %595, %597 : vector<1x32xf32>
    %599 = arith.addf %578, %586 : vector<1x32xf32>
    %600 = arith.negf %599 : vector<1x32xf32>
    %601 = math.exp %600 : vector<1x32xf32>
    %cst_375 = arith.constant 1.000000e+00 : f32
    %602 = vector.broadcast %cst_375 : f32 to vector<1x32xf32>
    %603 = arith.addf %602, %601 : vector<1x32xf32>
    %604 = arith.divf %602, %603 : vector<1x32xf32>
    %605 = arith.addf %579, %592 : vector<1x32xf32>
    %606 = arith.negf %605 : vector<1x32xf32>
    %607 = math.exp %606 : vector<1x32xf32>
    %cst_376 = arith.constant 1.000000e+00 : f32
    %608 = vector.broadcast %cst_376 : f32 to vector<1x32xf32>
    %609 = arith.addf %608, %607 : vector<1x32xf32>
    %610 = arith.divf %608, %609 : vector<1x32xf32>
    %611 = arith.mulf %604, %598 : vector<1x32xf32>
    %612 = arith.addf %580, %611 : vector<1x32xf32>
    %613 = math.tanh %612 : vector<1x32xf32>
    %cst_377 = arith.constant 1.000000e+00 : f32
    %614 = vector.broadcast %cst_377 : f32 to vector<1x32xf32>
    %615 = arith.subf %614, %610 : vector<1x32xf32>
    %616 = arith.mulf %615, %613 : vector<1x32xf32>
    %617 = arith.mulf %610, %536 : vector<1x32xf32>
    %618 = arith.addf %616, %617 : vector<1x32xf32>
    %619 = vector.extract_strided_slice %7 {offsets = [7, 0], sizes = [1, 32], strides = [1, 1]} : vector<8x32xf32> to vector<1x32xf32>
    %620 = vector.extract_strided_slice %14 {offsets = [7, 0], sizes = [1, 32], strides = [1, 1]} : vector<8x32xf32> to vector<1x32xf32>
    %621 = vector.extract_strided_slice %21 {offsets = [7, 0], sizes = [1, 32], strides = [1, 1]} : vector<8x32xf32> to vector<1x32xf32>
    %c0_378 = arith.constant 0 : index
    %c0_379 = arith.constant 0 : index
    %c0_380 = arith.constant 0 : index
    %622 = vector.load %arg2[%c0_378, %c0_379, %c0_380] : memref<3x32x32xf32, #tpu.memory_space<vmem>>, vector<1x32x32xf32>
    %623 = vector.shape_cast %622 : vector<1x32x32xf32> to vector<32x32xf32>
    %cst_381 = arith.constant dense<0.000000e+00> : vector<1x32xf32>
    %624 = tpu.matmul %577, %623, %cst_381 {dimension_numbers = #tpu.dot_dimension_numbers<[1], [0], [0], [1], [0, 0, 1, 1], [], []>} : vector<1x32xf32>, vector<32x32xf32>, vector<1x32xf32> -> vector<1x32xf32>
    %c0_382 = arith.constant 0 : index
    %c0_383 = arith.constant 0 : index
    %c0_384 = arith.constant 0 : index
    %625 = vector.load %arg4[%c0_382, %c0_383, %c0_384] : memref<3x1x32xf32, #tpu.memory_space<vmem>>, vector<1x1x32xf32>
    %626 = vector.shape_cast %625 : vector<1x1x32xf32> to vector<1x32xf32>
    %627 = arith.addf %624, %626 : vector<1x32xf32>
    %c1_385 = arith.constant 1 : index
    %c0_386 = arith.constant 0 : index
    %c0_387 = arith.constant 0 : index
    %628 = vector.load %arg2[%c1_385, %c0_386, %c0_387] : memref<3x32x32xf32, #tpu.memory_space<vmem>>, vector<1x32x32xf32>
    %629 = vector.shape_cast %628 : vector<1x32x32xf32> to vector<32x32xf32>
    %cst_388 = arith.constant dense<0.000000e+00> : vector<1x32xf32>
    %630 = tpu.matmul %577, %629, %cst_388 {dimension_numbers = #tpu.dot_dimension_numbers<[1], [0], [0], [1], [0, 0, 1, 1], [], []>} : vector<1x32xf32>, vector<32x32xf32>, vector<1x32xf32> -> vector<1x32xf32>
    %c1_389 = arith.constant 1 : index
    %c0_390 = arith.constant 0 : index
    %c0_391 = arith.constant 0 : index
    %631 = vector.load %arg4[%c1_389, %c0_390, %c0_391] : memref<3x1x32xf32, #tpu.memory_space<vmem>>, vector<1x1x32xf32>
    %632 = vector.shape_cast %631 : vector<1x1x32xf32> to vector<1x32xf32>
    %633 = arith.addf %630, %632 : vector<1x32xf32>
    %c2_392 = arith.constant 2 : index
    %c0_393 = arith.constant 0 : index
    %c0_394 = arith.constant 0 : index
    %634 = vector.load %arg2[%c2_392, %c0_393, %c0_394] : memref<3x32x32xf32, #tpu.memory_space<vmem>>, vector<1x32x32xf32>
    %635 = vector.shape_cast %634 : vector<1x32x32xf32> to vector<32x32xf32>
    %cst_395 = arith.constant dense<0.000000e+00> : vector<1x32xf32>
    %636 = tpu.matmul %577, %635, %cst_395 {dimension_numbers = #tpu.dot_dimension_numbers<[1], [0], [0], [1], [0, 0, 1, 1], [], []>} : vector<1x32xf32>, vector<32x32xf32>, vector<1x32xf32> -> vector<1x32xf32>
    %c2_396 = arith.constant 2 : index
    %c0_397 = arith.constant 0 : index
    %c0_398 = arith.constant 0 : index
    %637 = vector.load %arg4[%c2_396, %c0_397, %c0_398] : memref<3x1x32xf32, #tpu.memory_space<vmem>>, vector<1x1x32xf32>
    %638 = vector.shape_cast %637 : vector<1x1x32xf32> to vector<1x32xf32>
    %639 = arith.addf %636, %638 : vector<1x32xf32>
    %640 = arith.addf %619, %627 : vector<1x32xf32>
    %641 = arith.negf %640 : vector<1x32xf32>
    %642 = math.exp %641 : vector<1x32xf32>
    %cst_399 = arith.constant 1.000000e+00 : f32
    %643 = vector.broadcast %cst_399 : f32 to vector<1x32xf32>
    %644 = arith.addf %643, %642 : vector<1x32xf32>
    %645 = arith.divf %643, %644 : vector<1x32xf32>
    %646 = arith.addf %620, %633 : vector<1x32xf32>
    %647 = arith.negf %646 : vector<1x32xf32>
    %648 = math.exp %647 : vector<1x32xf32>
    %cst_400 = arith.constant 1.000000e+00 : f32
    %649 = vector.broadcast %cst_400 : f32 to vector<1x32xf32>
    %650 = arith.addf %649, %648 : vector<1x32xf32>
    %651 = arith.divf %649, %650 : vector<1x32xf32>
    %652 = arith.mulf %645, %639 : vector<1x32xf32>
    %653 = arith.addf %621, %652 : vector<1x32xf32>
    %654 = math.tanh %653 : vector<1x32xf32>
    %cst_401 = arith.constant 1.000000e+00 : f32
    %655 = vector.broadcast %cst_401 : f32 to vector<1x32xf32>
    %656 = arith.subf %655, %651 : vector<1x32xf32>
    %657 = arith.mulf %656, %654 : vector<1x32xf32>
    %658 = arith.mulf %651, %577 : vector<1x32xf32>
    %659 = arith.addf %657, %658 : vector<1x32xf32>
    %660 = vector.extract_strided_slice %28 {offsets = [0, 0], sizes = [1, 32], strides = [1, 1]} : vector<8x32xf32> to vector<1x32xf32>
    %661 = vector.extract_strided_slice %35 {offsets = [0, 0], sizes = [1, 32], strides = [1, 1]} : vector<8x32xf32> to vector<1x32xf32>
    %662 = vector.extract_strided_slice %42 {offsets = [0, 0], sizes = [1, 32], strides = [1, 1]} : vector<8x32xf32> to vector<1x32xf32>
    %c0_402 = arith.constant 0 : index
    %c0_403 = arith.constant 0 : index
    %c0_404 = arith.constant 0 : index
    %663 = vector.load %arg6[%c0_402, %c0_403, %c0_404] : memref<3x32x32xf32, #tpu.memory_space<vmem>>, vector<1x32x32xf32>
    %664 = vector.shape_cast %663 : vector<1x32x32xf32> to vector<32x32xf32>
    %cst_405 = arith.constant dense<0.000000e+00> : vector<1x32xf32>
    %665 = tpu.matmul %618, %664, %cst_405 {dimension_numbers = #tpu.dot_dimension_numbers<[1], [0], [0], [1], [0, 0, 1, 1], [], []>} : vector<1x32xf32>, vector<32x32xf32>, vector<1x32xf32> -> vector<1x32xf32>
    %c0_406 = arith.constant 0 : index
    %c0_407 = arith.constant 0 : index
    %c0_408 = arith.constant 0 : index
    %666 = vector.load %arg8[%c0_406, %c0_407, %c0_408] : memref<3x1x32xf32, #tpu.memory_space<vmem>>, vector<1x1x32xf32>
    %667 = vector.shape_cast %666 : vector<1x1x32xf32> to vector<1x32xf32>
    %668 = arith.addf %665, %667 : vector<1x32xf32>
    %c1_409 = arith.constant 1 : index
    %c0_410 = arith.constant 0 : index
    %c0_411 = arith.constant 0 : index
    %669 = vector.load %arg6[%c1_409, %c0_410, %c0_411] : memref<3x32x32xf32, #tpu.memory_space<vmem>>, vector<1x32x32xf32>
    %670 = vector.shape_cast %669 : vector<1x32x32xf32> to vector<32x32xf32>
    %cst_412 = arith.constant dense<0.000000e+00> : vector<1x32xf32>
    %671 = tpu.matmul %618, %670, %cst_412 {dimension_numbers = #tpu.dot_dimension_numbers<[1], [0], [0], [1], [0, 0, 1, 1], [], []>} : vector<1x32xf32>, vector<32x32xf32>, vector<1x32xf32> -> vector<1x32xf32>
    %c1_413 = arith.constant 1 : index
    %c0_414 = arith.constant 0 : index
    %c0_415 = arith.constant 0 : index
    %672 = vector.load %arg8[%c1_413, %c0_414, %c0_415] : memref<3x1x32xf32, #tpu.memory_space<vmem>>, vector<1x1x32xf32>
    %673 = vector.shape_cast %672 : vector<1x1x32xf32> to vector<1x32xf32>
    %674 = arith.addf %671, %673 : vector<1x32xf32>
    %c2_416 = arith.constant 2 : index
    %c0_417 = arith.constant 0 : index
    %c0_418 = arith.constant 0 : index
    %675 = vector.load %arg6[%c2_416, %c0_417, %c0_418] : memref<3x32x32xf32, #tpu.memory_space<vmem>>, vector<1x32x32xf32>
    %676 = vector.shape_cast %675 : vector<1x32x32xf32> to vector<32x32xf32>
    %cst_419 = arith.constant dense<0.000000e+00> : vector<1x32xf32>
    %677 = tpu.matmul %618, %676, %cst_419 {dimension_numbers = #tpu.dot_dimension_numbers<[1], [0], [0], [1], [0, 0, 1, 1], [], []>} : vector<1x32xf32>, vector<32x32xf32>, vector<1x32xf32> -> vector<1x32xf32>
    %c2_420 = arith.constant 2 : index
    %c0_421 = arith.constant 0 : index
    %c0_422 = arith.constant 0 : index
    %678 = vector.load %arg8[%c2_420, %c0_421, %c0_422] : memref<3x1x32xf32, #tpu.memory_space<vmem>>, vector<1x1x32xf32>
    %679 = vector.shape_cast %678 : vector<1x1x32xf32> to vector<1x32xf32>
    %680 = arith.addf %677, %679 : vector<1x32xf32>
    %681 = arith.addf %660, %668 : vector<1x32xf32>
    %682 = arith.negf %681 : vector<1x32xf32>
    %683 = math.exp %682 : vector<1x32xf32>
    %cst_423 = arith.constant 1.000000e+00 : f32
    %684 = vector.broadcast %cst_423 : f32 to vector<1x32xf32>
    %685 = arith.addf %684, %683 : vector<1x32xf32>
    %686 = arith.divf %684, %685 : vector<1x32xf32>
    %687 = arith.addf %661, %674 : vector<1x32xf32>
    %688 = arith.negf %687 : vector<1x32xf32>
    %689 = math.exp %688 : vector<1x32xf32>
    %cst_424 = arith.constant 1.000000e+00 : f32
    %690 = vector.broadcast %cst_424 : f32 to vector<1x32xf32>
    %691 = arith.addf %690, %689 : vector<1x32xf32>
    %692 = arith.divf %690, %691 : vector<1x32xf32>
    %693 = arith.mulf %686, %680 : vector<1x32xf32>
    %694 = arith.addf %662, %693 : vector<1x32xf32>
    %695 = math.tanh %694 : vector<1x32xf32>
    %cst_425 = arith.constant 1.000000e+00 : f32
    %696 = vector.broadcast %cst_425 : f32 to vector<1x32xf32>
    %697 = arith.subf %696, %692 : vector<1x32xf32>
    %698 = arith.mulf %697, %695 : vector<1x32xf32>
    %699 = arith.mulf %692, %618 : vector<1x32xf32>
    %700 = arith.addf %698, %699 : vector<1x32xf32>
    %701 = tpu.concatenate %85, %167, %249, %331, %413, %495, %577, %659 in 0 : vector<1x32xf32>, vector<1x32xf32>, vector<1x32xf32>, vector<1x32xf32>, vector<1x32xf32>, vector<1x32xf32>, vector<1x32xf32>, vector<1x32xf32> -> vector<8x32xf32>
    %702 = tpu.concatenate %700, %618, %536, %454, %372, %290, %208, %126 in 0 : vector<1x32xf32>, vector<1x32xf32>, vector<1x32xf32>, vector<1x32xf32>, vector<1x32xf32>, vector<1x32xf32>, vector<1x32xf32>, vector<1x32xf32> -> vector<8x32xf32>
    %703 = arith.addf %701, %702 : vector<8x32xf32>
    %c0_426 = arith.constant 0 : index
    %c0_427 = arith.constant 0 : index
    %704 = vector.load %arg9[%c0_426, %c0_427] : memref<8x32xf32, #tpu.memory_space<vmem>>, vector<8x32xf32>
    tpu.vector_store %arg9[%c0_426, %c0_427], %703 {strides = array<i32>} : memref<8x32xf32, #tpu.memory_space<vmem>>, vector<8x32xf32>,
    %c0_428 = arith.constant 0 : index
    %c0_429 = arith.constant 0 : index
    %705 = vector.load %arg10[%c0_428, %c0_429] : memref<1x32xf32, #tpu.memory_space<vmem>>, vector<1x32xf32>
    tpu.vector_store %arg10[%c0_428, %c0_429], %659 {strides = array<i32>} : memref<1x32xf32, #tpu.memory_space<vmem>>, vector<1x32xf32>,
    return
  }
}

</mosaic_0001>

<llo_original>
// kernel: greedy_search_decoder.3
$region0: #{greedy_search_decoder.3}
  #allocation0 [shape = 'u32[]', space=smem, size = 0x4, offset = 0x4, fixed_abs, tag = 'smem constant byte address 0x4 - core index']
  #allocation1 [shape = 'u32[72,128]{1,0:T(1,128)}', space=vmem, size = 0x9000, scoped, tag = 'internal scratch']
  %s0 = inlined_call_operand.vmem [shape: f32[64,32], index: 0, kind: input, shape index: {}]
  %s1 = inlined_call_operand.vmem [shape: f32[8,32], index: 1, kind: input, shape index: {}]
  %s2 = inlined_call_operand.vmem [shape: f32[32,8], index: 2, kind: input, shape index: {}]
  %s3 = inlined_call_operand.vmem [shape: f32[1,32], index: 3, kind: input, shape index: {}]
  %s4 = inlined_call_operand.vmem [shape: f32[3,32,32], index: 4, kind: input, shape index: {}]
  %s5 = inlined_call_operand.vmem [shape: f32[3,32,32], index: 5, kind: input, shape index: {}]
  %s6 = inlined_call_operand.vmem [shape: f32[3,1,32], index: 6, kind: input, shape index: {}]
  %s7 = inlined_call_operand.hbm [shape: f32[3,1,32], index: 7, kind: input, shape index: {}]
  %s8 = inlined_call_operand.hbm [shape: f32[2,32,32], index: 8, kind: input, shape index: {}]
  %s9 = inlined_call_operand.hbm [shape: f32[1,32], index: 9, kind: input, shape index: {}]
  %s10 = inlined_call_operand.vmem [shape: f32[32,64], index: 10, kind: input, shape index: {}]
  %s11 = inlined_call_operand.hbm [shape: f32[1,64], index: 11, kind: input, shape index: {}]
  %s12 = inlined_call_operand.hbm [shape: s32[1,6], index: 12, kind: output, shape index: {0}]
  %s13 = inlined_call_operand.hbm [shape: f32[1,6], index: 13, kind: output, shape index: {1}]
  %14 = xla_tuple %s12, %s13
  %s15 = sld [smem:[#allocation0]]
  $region82: #{greedy_search_decoder.3} parent=0
    _
  %s17 = ssub.s32 1, %s15
  %s18 = scalar_select 0, %s17, %s15
  $region1: #{greedy_search_decoder.3} parent=0
    #allocation2 [shape = 'u8[1536]{0}', space=vmem, size = 0x800, scoped, tag = 'input window, operand 7, single buffered']
    #allocation3 [shape = 's32[1]{0}', space=sflag, size = 0x4, scoped, tag = 'scoped memory for greedy_search_decoder.3']
    #allocation4 [shape = 's32[1]{0}', space=sflag, size = 0x4, scoped, tag = 'scoped memory for greedy_search_decoder.3']
    #allocation5 [shape = 'u8[32768]{0}', space=vmem, size = 0x8000, scoped, tag = 'input window, operand 8, single buffered']
    #allocation6 [shape = 's32[1]{0}', space=sflag, size = 0x4, scoped, tag = 'scoped memory for greedy_search_decoder.3']
    #allocation7 [shape = 'u8[512]{0}', space=vmem, size = 0x400, scoped, tag = 'input window, operand 9, single buffered']
    #allocation8 [shape = 'u8[512]{0}', space=vmem, size = 0x400, scoped, tag = 'input window, operand 11, single buffered']
    #allocation9 [shape = 's32[1]{0}', space=sflag, size = 0x4, scoped, tag = 'scoped memory for greedy_search_decoder.3']
    #allocation10 [shape = 'u8[512]{0}', space=vmem, size = 0x400, scoped, tag = 'output window, operand 0, single buffered']
    #allocation11 [shape = 'u8[512]{0}', space=vmem, size = 0x400, scoped, tag = 'output window, operand 1, single buffered']
    #allocation12 [shape = 's32[1]{0}', space=sflag, size = 0x4, scoped, tag = 'scoped memory for greedy_search_decoder.3']
    %19 = vsyncpa [#allocation3], 0
    %20 = vsyncpa [#allocation6], 0
    %21 = vsyncpa [#allocation9], 0
    %22 = vsyncpa [#allocation4], 0
    %23 = vsyncpa [#allocation12], 0
    // Predicated region
    $region2: #{greedy_search_decoder.3} parent=1 // pred_check
      _
    $region3: #{greedy_search_decoder.3} parent=1 // pred_check_branch
      %25 = sbr.rel (0) target = $region5
    $region4: #{greedy_search_decoder.3} parent=1 // pred_region
      _
    $region5: #{greedy_search_decoder.3} parent=1 // pred_fallthru
      _
    // Predicated region
    $region6: #{greedy_search_decoder.3} parent=1 // pred_check
      _
    $region7: #{greedy_search_decoder.3} parent=1 // pred_check_branch
      %27 = sbr.rel (0) target = $region9
    $region8: #{greedy_search_decoder.3} parent=1 // pred_region
      _
    $region9: #{greedy_search_decoder.3} parent=1 // pred_fallthru
      _
    // Predicated region
    $region10: #{greedy_search_decoder.3} parent=1 // pred_check
      _
    $region11: #{greedy_search_decoder.3} parent=1 // pred_check_branch
      %29 = sbr.rel (0) target = $region13
    $region12: #{greedy_search_decoder.3} parent=1 // pred_region
      _
    $region13: #{greedy_search_decoder.3} parent=1 // pred_fallthru
      _
    // Predicated region
    $region14: #{greedy_search_decoder.3} parent=1 // pred_check
      _
    $region15: #{greedy_search_decoder.3} parent=1 // pred_check_branch
      %31 = sbr.rel (0) target = $region17
    $region16: #{greedy_search_decoder.3} parent=1 // pred_region
      _
    $region17: #{greedy_search_decoder.3} parent=1 // pred_fallthru
      _
    // Predicated region
    $region18: #{greedy_search_decoder.3} parent=1 // pred_check
      _
    $region19: #{greedy_search_decoder.3} parent=1 // pred_check_branch
      %33 = sbr.rel (0) target = $region21
    $region20: #{greedy_search_decoder.3} parent=1 // pred_region
      _
    $region21: #{greedy_search_decoder.3} parent=1 // pred_fallthru
      _
    // Predicated region
    $region22: #{greedy_search_decoder.3} parent=1 // pred_check
      _
    $region23: #{greedy_search_decoder.3} parent=1 // pred_check_branch
      %35 = sbr.rel (0) target = $region25
    $region24: #{greedy_search_decoder.3} parent=1 // pred_region
      _
    $region25: #{greedy_search_decoder.3} parent=1 // pred_fallthru
      _
    // Predicated region
    $region26: #{greedy_search_decoder.3} parent=1 // pred_check
      _
    $region27: #{greedy_search_decoder.3} parent=1 // pred_check_branch
      %37 = sbr.rel (0) target = $region29
    $region28: #{greedy_search_decoder.3} parent=1 // pred_region
      _
    $region29: #{greedy_search_decoder.3} parent=1 // pred_fallthru
      _
    // Predicated region
    $region30: #{greedy_search_decoder.3} parent=1 // pred_check
      _
    $region31: #{greedy_search_decoder.3} parent=1 // pred_check_branch
      %39 = sbr.rel (0) target = $region33
    $region32: #{greedy_search_decoder.3} parent=1 // pred_region
      %41 = vsyncadd [#allocation3], 0
      %s42 = sshll.u32 %s7, 4
      %s43 = int_to_ptr.hbm [resolvable:$true] %s42
      %s44 = sshll.u32 [#allocation2], 4
      %s45 = int_to_ptr.vmem [resolvable:$true] %s44
      %50 = dma.hbm_to_vmem [thread:$0]  %s43, 48, %s45, [#allocation3], 16, 16, 1
    $region33: #{greedy_search_decoder.3} parent=1 // pred_fallthru
      _
    // Predicated region
    $region34: #{greedy_search_decoder.3} parent=1 // pred_check
      _
    $region35: #{greedy_search_decoder.3} parent=1 // pred_check_branch
      %52 = sbr.rel (0) target = $region37
    $region36: #{greedy_search_decoder.3} parent=1 // pred_region
      %54 = vsyncadd [#allocation6], 0
      %s55 = sshll.u32 %s8, 4
      %s56 = int_to_ptr.hbm [resolvable:$true] %s55
      %s57 = sshll.u32 [#allocation5], 4
      %s58 = int_to_ptr.vmem [resolvable:$true] %s57
      %63 = dma.hbm_to_vmem [thread:$0]  %s56, 1024, %s58, [#allocation6], 128, 128, 8
    $region37: #{greedy_search_decoder.3} parent=1 // pred_fallthru
      _
    // Predicated region
    $region38: #{greedy_search_decoder.3} parent=1 // pred_check
      _
    $region39: #{greedy_search_decoder.3} parent=1 // pred_check_branch
      %65 = sbr.rel (0) target = $region41
    $region40: #{greedy_search_decoder.3} parent=1 // pred_region
      %67 = vsyncadd [#allocation6], 0
      %s69 = sshll.u32 %s9, 4
      %s70 = int_to_ptr.hbm [resolvable:$true] %s69
      %s71 = sshll.u32 [#allocation7], 4
      %s72 = int_to_ptr.vmem [resolvable:$true] %s71
      %74 = dma.hbm_to_vmem [thread:$0]  %s70, 16, %s72, [#allocation6]
    $region41: #{greedy_search_decoder.3} parent=1 // pred_fallthru
      _
    // Predicated region
    $region42: #{greedy_search_decoder.3} parent=1 // pred_check
      _
    $region43: #{greedy_search_decoder.3} parent=1 // pred_check_branch
      %76 = sbr.rel (0) target = $region45
    $region44: #{greedy_search_decoder.3} parent=1 // pred_region
      _
    $region45: #{greedy_search_decoder.3} parent=1 // pred_fallthru
      _
    // Predicated region
    $region46: #{greedy_search_decoder.3} parent=1 // pred_check
      _
    $region47: #{greedy_search_decoder.3} parent=1 // pred_check_branch
      %78 = sbr.rel (0) target = $region49
    $region48: #{greedy_search_decoder.3} parent=1 // pred_region
      %80 = vsyncadd [#allocation9], 0
      %s82 = sshll.u32 %s11, 4
      %s83 = int_to_ptr.hbm [resolvable:$true] %s82
      %s84 = sshll.u32 [#allocation8], 4
      %s85 = int_to_ptr.vmem [resolvable:$true] %s84
      %87 = dma.hbm_to_vmem [thread:$0]  %s83, 16, %s85, [#allocation9]
    $region49: #{greedy_search_decoder.3} parent=1 // pred_fallthru
      _
    // Predicated region
    $region50: #{greedy_search_decoder.3} parent=1 // pred_check
      _
    $region51: #{greedy_search_decoder.3} parent=1 // pred_check_branch
      %89 = sbr.rel (0) target = $region53
    $region52: #{greedy_search_decoder.3} parent=1 // pred_region
      %91 = dma.done [#allocation3], 48
    $region53: #{greedy_search_decoder.3} parent=1 // pred_fallthru
      _
    // Predicated region
    $region54: #{greedy_search_decoder.3} parent=1 // pred_check
      _
    $region55: #{greedy_search_decoder.3} parent=1 // pred_check_branch
      %93 = sbr.rel (0) target = $region57
    $region56: #{greedy_search_decoder.3} parent=1 // pred_region
      %95 = dma.done [#allocation6], 1024
    $region57: #{greedy_search_decoder.3} parent=1 // pred_fallthru
      _
    // Predicated region
    $region58: #{greedy_search_decoder.3} parent=1 // pred_check
      _
    $region59: #{greedy_search_decoder.3} parent=1 // pred_check_branch
      %97 = sbr.rel (0) target = $region61
    $region60: #{greedy_search_decoder.3} parent=1 // pred_region
      %99 = dma.done [#allocation6], 16
    $region61: #{greedy_search_decoder.3} parent=1 // pred_fallthru
      _
    // Predicated region
    $region62: #{greedy_search_decoder.3} parent=1 // pred_check
      _
    $region63: #{greedy_search_decoder.3} parent=1 // pred_check_branch
      %101 = sbr.rel (0) target = $region65
    $region64: #{greedy_search_decoder.3} parent=1 // pred_region
      %103 = dma.done [#allocation9], 16
    $region65: #{greedy_search_decoder.3} parent=1 // pred_fallthru
      _
    %v104 = vld [vmem:[%s0] sm:$0xff]
    %v105 = vld [vmem:[%s0 + $0x8] sm:$0xff]
    %v106 = vld [vmem:[%s0 + $0x10] sm:$0xff]
    %v107 = vld [vmem:[%s0 + $0x18] sm:$0xff]
    %v108 = vld [vmem:[%s0 + $0x20] sm:$0xff]
    %v109 = vld [vmem:[%s0 + $0x28] sm:$0xff]
    %v110 = vld [vmem:[%s0 + $0x30] sm:$0xff]
    %v111 = vld [vmem:[%s0 + $0x38] sm:$0xff]
    %v112 = vld [vmem:[%s1] sm:$0xff]
    %v113 = vld [vmem:[%s2] sm:$0xff]
    %v114 = vld [vmem:[%s2 + $0x8] sm:$0xff]
    %v115 = vld [vmem:[%s2 + $0x10] sm:$0xff]
    %v116 = vld [vmem:[%s2 + $0x18] sm:$0xff]
    %v117 = vld [vmem:[#allocation5] sm:$0xff]
    %v118 = vld [vmem:[#allocation5 + $0x8] sm:$0xff]
    %v119 = vld [vmem:[#allocation5 + $0x10] sm:$0xff]
    %v120 = vld [vmem:[#allocation5 + $0x18] sm:$0xff]
    %s121 = scalar_lea.vmem [#allocation5], 32
    %v122 = vld [vmem:[%s121] sm:$0xff]
    %v123 = vld [vmem:[%s121 + $0x8] sm:$0xff]
    %v124 = vld [vmem:[%s121 + $0x10] sm:$0xff]
    %v125 = vld [vmem:[%s121 + $0x18] sm:$0xff]
    %v126 = vld [vmem:[#allocation7] sm:$0x1]
    %v127 = vld [vmem:[%s10] sm:$0xff]
    %v128 = vld [vmem:[%s10 + $0x8] sm:$0xff]
    %v129 = vld [vmem:[%s10 + $0x10] sm:$0xff]
    %v130 = vld [vmem:[%s10 + $0x18] sm:$0xff]
    %v131 = vld [vmem:[#allocation8] sm:$0x1]
    %v132 = vld [vmem:[%s4] sm:$0xff]
    %v133 = vld [vmem:[%s4 + $0x8] sm:$0xff]
    %v134 = vld [vmem:[%s4 + $0x10] sm:$0xff]
    %v135 = vld [vmem:[%s4 + $0x18] sm:$0xff]
    %v136 = vld [vmem:[%s6] sm:$0x1]
    %v138 = vperm.slane %v136, 0
    %vm140 = vcmask 261120
    %v142 = vsel %vm140, %v104, 0
    %v145 = vsel %vm140, %v105, 0
    %v148 = vsel %vm140, %v106, 0
    %v151 = vsel %vm140, %v107, 0
    %v154 = vsel %vm140, %v108, 0
    %v157 = vsel %vm140, %v109, 0
    %v160 = vsel %vm140, %v110, 0
    %v163 = vsel %vm140, %v111, 0
    %165 = vmatpush.msra.mxu0 0.0
    %166 = vmatpush.msra.mxu0 0.0
    %167 = vmatpush.msra.mxu0 0.0
    %168 = vmatpush.msra.mxu0 0.0
    %169 = vmatpush.msra.mxu0 0.0
    %170 = vmatpush.msra.mxu0 0.0
    %171 = vmatpush.msra.mxu0 0.0
    %172 = vmatpush.msra.mxu0 0.0
    %173 = vmatpush.msra.mxu0 0.0
    %174 = vmatpush.msra.mxu0 0.0
    %175 = vmatpush.msra.mxu0 0.0
    %176 = vmatpush.msra.mxu0 0.0
    %177 = vmatpush.msra.mxu0 %v135
    %178 = vmatpush.msra.mxu0 %v134
    %179 = vmatpush.msra.mxu0 %v133
    %180 = vmatpush.msra.mxu0 %v132
    %181 = vmatmul.f32.gmra.mxu0 %v142
    %v182 = vpop.f32.mrf.mxu0
    %v183 = vadd.f32 %v138, %v182
    %184 = vmatmul.f32.gmra.mxu0 %v145
    %v185 = vpop.f32.mrf.mxu0
    %v186 = vadd.f32 %v138, %v185
    %187 = vmatmul.f32.gmra.mxu0 %v148
    %v188 = vpop.f32.mrf.mxu0
    %v189 = vadd.f32 %v138, %v188
    %190 = vmatmul.f32.gmra.mxu0 %v151
    %v191 = vpop.f32.mrf.mxu0
    %v192 = vadd.f32 %v138, %v191
    %193 = vmatmul.f32.gmra.mxu0 %v154
    %v194 = vpop.f32.mrf.mxu0
    %v195 = vadd.f32 %v138, %v194
    %196 = vmatmul.f32.gmra.mxu0 %v157
    %v197 = vpop.f32.mrf.mxu0
    %v198 = vadd.f32 %v138, %v197
    %199 = vmatmul.f32.gmra.mxu0 %v160
    %v200 = vpop.f32.mrf.mxu0
    %v201 = vadd.f32 %v138, %v200
    %202 = vmatmul.f32.gmra.mxu0 %v163
    %v203 = vpop.f32.mrf.mxu0
    %v204 = vadd.f32 %v138, %v203
    %205 = vdwg.mxu0
    %s206 = scalar_lea.vmem %s4, 32
    %v207 = vld [vmem:[%s206] sm:$0xff]
    %v208 = vld [vmem:[%s206 + $0x8] sm:$0xff]
    %v209 = vld [vmem:[%s206 + $0x10] sm:$0xff]
    %v210 = vld [vmem:[%s206 + $0x18] sm:$0xff]
    %s211 = scalar_lea.vmem %s6, 1
    %v212 = vld [vmem:[%s211] sm:$0x1]
    %v214 = vperm.slane %v212, 0
    %216 = vmatpush.msra.mxu0 0.0
    %217 = vmatpush.msra.mxu0 0.0
    %218 = vmatpush.msra.mxu0 0.0
    %219 = vmatpush.msra.mxu0 0.0
    %220 = vmatpush.msra.mxu0 0.0
    %221 = vmatpush.msra.mxu0 0.0
    %222 = vmatpush.msra.mxu0 0.0
    %223 = vmatpush.msra.mxu0 0.0
    %224 = vmatpush.msra.mxu0 0.0
    %225 = vmatpush.msra.mxu0 0.0
    %226 = vmatpush.msra.mxu0 0.0
    %227 = vmatpush.msra.mxu0 0.0
    %228 = vmatpush.msra.mxu0 %v210
    %229 = vmatpush.msra.mxu0 %v209
    %230 = vmatpush.msra.mxu0 %v208
    %231 = vmatpush.msra.mxu0 %v207
    %232 = vmatmul.f32.gmra.mxu0 %v142
    %v233 = vpop.f32.mrf.mxu0
    %v234 = vadd.f32 %v214, %v233
    %235 = vmatmul.f32.gmra.mxu0 %v145
    %v236 = vpop.f32.mrf.mxu0
    %v237 = vadd.f32 %v214, %v236
    %238 = vmatmul.f32.gmra.mxu0 %v148
    %v239 = vpop.f32.mrf.mxu0
    %v240 = vadd.f32 %v214, %v239
    %241 = vmatmul.f32.gmra.mxu0 %v151
    %v242 = vpop.f32.mrf.mxu0
    %v243 = vadd.f32 %v214, %v242
    %244 = vmatmul.f32.gmra.mxu0 %v154
    %v245 = vpop.f32.mrf.mxu0
    %v246 = vadd.f32 %v214, %v245
    %247 = vmatmul.f32.gmra.mxu0 %v157
    %v248 = vpop.f32.mrf.mxu0
    %v249 = vadd.f32 %v214, %v248
    %250 = vmatmul.f32.gmra.mxu0 %v160
    %v251 = vpop.f32.mrf.mxu0
    %v252 = vadd.f32 %v214, %v251
    %253 = vmatmul.f32.gmra.mxu0 %v163
    %v254 = vpop.f32.mrf.mxu0
    %v255 = vadd.f32 %v214, %v254
    %256 = vdwg.mxu0
    %s257 = scalar_lea.vmem %s4, 64
    %v258 = vld [vmem:[%s257] sm:$0xff]
    %v259 = vld [vmem:[%s257 + $0x8] sm:$0xff]
    %v260 = vld [vmem:[%s257 + $0x10] sm:$0xff]
    %v261 = vld [vmem:[%s257 + $0x18] sm:$0xff]
    %s262 = scalar_lea.vmem %s6, 2
    %v263 = vld [vmem:[%s262] sm:$0x1]
    %v265 = vperm.slane %v263, 0
    %267 = vmatpush.msra.mxu0 0.0
    %268 = vmatpush.msra.mxu0 0.0
    %269 = vmatpush.msra.mxu0 0.0
    %270 = vmatpush.msra.mxu0 0.0
    %271 = vmatpush.msra.mxu0 0.0
    %272 = vmatpush.msra.mxu0 0.0
    %273 = vmatpush.msra.mxu0 0.0
    %274 = vmatpush.msra.mxu0 0.0
    %275 = vmatpush.msra.mxu0 0.0
    %276 = vmatpush.msra.mxu0 0.0
    %277 = vmatpush.msra.mxu0 0.0
    %278 = vmatpush.msra.mxu0 0.0
    %279 = vmatpush.msra.mxu0 %v261
    %280 = vmatpush.msra.mxu0 %v260
    %281 = vmatpush.msra.mxu0 %v259
    %282 = vmatpush.msra.mxu0 %v258
    %283 = vmatmul.f32.gmra.mxu0 %v142
    %v284 = vpop.f32.mrf.mxu0
    %v285 = vadd.f32 %v265, %v284
    %286 = vmatmul.f32.gmra.mxu0 %v145
    %v287 = vpop.f32.mrf.mxu0
    %v288 = vadd.f32 %v265, %v287
    %289 = vmatmul.f32.gmra.mxu0 %v148
    %v290 = vpop.f32.mrf.mxu0
    %v291 = vadd.f32 %v265, %v290
    %292 = vmatmul.f32.gmra.mxu0 %v151
    %v293 = vpop.f32.mrf.mxu0
    %v294 = vadd.f32 %v265, %v293
    %295 = vmatmul.f32.gmra.mxu0 %v154
    %v296 = vpop.f32.mrf.mxu0
    %v297 = vadd.f32 %v265, %v296
    %298 = vmatmul.f32.gmra.mxu0 %v157
    %v299 = vpop.f32.mrf.mxu0
    %v300 = vadd.f32 %v265, %v299
    %301 = vmatmul.f32.gmra.mxu0 %v160
    %v302 = vpop.f32.mrf.mxu0
    %v303 = vadd.f32 %v265, %v302
    %304 = vmatmul.f32.gmra.mxu0 %v163
    %v305 = vpop.f32.mrf.mxu0
    %v306 = vadd.f32 %v265, %v305
    %307 = vdwg.mxu0
    %v308 = vld [vmem:[%s3] sm:$0x1]
    %v309 = vlaneseq
    %v310 = vand.u32 %v309, 127
    %vm311 = vcmp.eq.s32.totalorder %v310, 1
    %v312 = vsel %vm311, 1, 0
    %v313 = vcvt.s32.f32 %v312
    %v314 = vld [vmem:[%s5] sm:$0xff]
    %v315 = vld [vmem:[%s5 + $0x8] sm:$0xff]
    %v316 = vld [vmem:[%s5 + $0x10] sm:$0xff]
    %v317 = vld [vmem:[%s5 + $0x18] sm:$0xff]
    %v318 = vld [vmem:[#allocation2] sm:$0x1]
    %v320 = vsel %vm140, %v308, 0
    %322 = vmatpush.msra.mxu0 0.0
    %323 = vmatpush.msra.mxu0 0.0
    %324 = vmatpush.msra.mxu0 0.0
    %325 = vmatpush.msra.mxu0 0.0
    %326 = vmatpush.msra.mxu0 0.0
    %327 = vmatpush.msra.mxu0 0.0
    %328 = vmatpush.msra.mxu0 0.0
    %329 = vmatpush.msra.mxu0 0.0
    %330 = vmatpush.msra.mxu0 0.0
    %331 = vmatpush.msra.mxu0 0.0
    %332 = vmatpush.msra.mxu0 0.0
    %333 = vmatpush.msra.mxu0 0.0
    %334 = vmatpush.msra.mxu0 %v317
    %335 = vmatpush.msra.mxu0 %v316
    %336 = vmatpush.msra.mxu0 %v315
    %337 = vmatpush.msra.mxu0 %v314
    %338 = vmatmul.f32.gmra.mxu0 %v320
    %v339 = vpop.f32.mrf.mxu0
    %v340 = vadd.f32 %v318, %v339
    %341 = vdwg.mxu0
    %s342 = scalar_lea.vmem %s5, 32
    %v343 = vld [vmem:[%s342] sm:$0xff]
    %v344 = vld [vmem:[%s342 + $0x8] sm:$0xff]
    %v345 = vld [vmem:[%s342 + $0x10] sm:$0xff]
    %v346 = vld [vmem:[%s342 + $0x18] sm:$0xff]
    %s347 = scalar_lea.vmem [#allocation2], 1
    %v348 = vld [vmem:[%s347] sm:$0x1]
    %349 = vmatpush.msra.mxu0 0.0
    %350 = vmatpush.msra.mxu0 0.0
    %351 = vmatpush.msra.mxu0 0.0
    %352 = vmatpush.msra.mxu0 0.0
    %353 = vmatpush.msra.mxu0 0.0
    %354 = vmatpush.msra.mxu0 0.0
    %355 = vmatpush.msra.mxu0 0.0
    %356 = vmatpush.msra.mxu0 0.0
    %357 = vmatpush.msra.mxu0 0.0
    %358 = vmatpush.msra.mxu0 0.0
    %359 = vmatpush.msra.mxu0 0.0
    %360 = vmatpush.msra.mxu0 0.0
    %361 = vmatpush.msra.mxu0 %v346
    %362 = vmatpush.msra.mxu0 %v345
    %363 = vmatpush.msra.mxu0 %v344
    %364 = vmatpush.msra.mxu0 %v343
    %365 = vmatmul.f32.gmra.mxu0 %v320
    %v366 = vpop.f32.mrf.mxu0
    %v367 = vadd.f32 %v348, %v366
    %368 = vdwg.mxu0
    %s369 = scalar_lea.vmem %s5, 64
    %v370 = vld [vmem:[%s369] sm:$0xff]
    %v371 = vld [vmem:[%s369 + $0x8] sm:$0xff]
    %v372 = vld [vmem:[%s369 + $0x10] sm:$0xff]
    %v373 = vld [vmem:[%s369 + $0x18] sm:$0xff]
    %s374 = scalar_lea.vmem [#allocation2], 2
    %v375 = vld [vmem:[%s374] sm:$0x1]
    %376 = vmatpush.msra.mxu0 0.0
    %377 = vmatpush.msra.mxu0 0.0
    %378 = vmatpush.msra.mxu0 0.0
    %379 = vmatpush.msra.mxu0 0.0
    %380 = vmatpush.msra.mxu0 0.0
    %381 = vmatpush.msra.mxu0 0.0
    %382 = vmatpush.msra.mxu0 0.0
    %383 = vmatpush.msra.mxu0 0.0
    %384 = vmatpush.msra.mxu0 0.0
    %385 = vmatpush.msra.mxu0 0.0
    %386 = vmatpush.msra.mxu0 0.0
    %387 = vmatpush.msra.mxu0 0.0
    %388 = vmatpush.msra.mxu0 %v373
    %389 = vmatpush.msra.mxu0 %v372
    %390 = vmatpush.msra.mxu0 %v371
    %391 = vmatpush.msra.mxu0 %v370
    %392 = vmatmul.f32.gmra.mxu0 %v320
    %v393 = vpop.f32.mrf.mxu0
    %v394 = vadd.f32 %v375, %v393
    %395 = vdwg.mxu0
    %vm396 = vcmask 523264
    %v398 = vsel %vm396, %v313, 0
    %400 = vmatpush.msra.mxu0 0.0
    %401 = vmatpush.msra.mxu0 0.0
    %402 = vmatpush.msra.mxu0 0.0
    %403 = vmatpush.msra.mxu0 0.0
    %404 = vmatpush.msra.mxu0 0.0
    %405 = vmatpush.msra.mxu0 0.0
    %406 = vmatpush.msra.mxu0 0.0
    %407 = vmatpush.msra.mxu0 0.0
    %408 = vmatpush.msra.mxu0 %v204
    %409 = vmatpush.msra.mxu0 %v201
    %410 = vmatpush.msra.mxu0 %v198
    %411 = vmatpush.msra.mxu0 %v195
    %412 = vmatpush.msra.mxu0 %v192
    %413 = vmatpush.msra.mxu0 %v189
    %414 = vmatpush.msra.mxu0 %v186
    %415 = vmatpush.msra.mxu0 %v183
    %416 = vmatmul.f32.gmra.mxu0 %v398
    %v417 = vpop.f32.mrf.mxu0
    %v418 = vadd.f32 %v340, %v417
    %419 = vdwg.mxu0
    %v420 = vxor.u32 %v418, 2147483648
    %v421 = vmul.f32 %v420, 1.442695
    %v422 = vpow.pop %v421
    %v423 = vadd.f32 %v422, 1.0
    %v424 = vrcp.pop %v423
    %v425 = vmul.f32 %v423, %v424
    %v426 = vsub.f32 1.0, %v425
    %v427 = vmul.f32 %v424, %v426
    %v428 = vadd.f32 %v424, %v427
    %vm429 = vweird.f32 %v423
    %vm430 = vweird.f32 %v424
    %vm431 = vmor %vm429, %vm430
    %v432 = vsel %vm431, %v424, %v428
    %v433 = vand.u32 2147483647, %v423
    %vm434 = vcmp.eq.f32.partialorder %v433, 8.507059e+37
    %v435 = vand.u32 %v423, 2147483648
    %v436 = vor.u32 1.1754944e-38, %v435
    %v437 = vsel %vm434, %v436, %v432
    %v438 = vmul.f32 1.0, %v437
    %439 = vmatpush.msra.mxu0 0.0
    %440 = vmatpush.msra.mxu0 0.0
    %441 = vmatpush.msra.mxu0 0.0
    %442 = vmatpush.msra.mxu0 0.0
    %443 = vmatpush.msra.mxu0 0.0
    %444 = vmatpush.msra.mxu0 0.0
    %445 = vmatpush.msra.mxu0 0.0
    %446 = vmatpush.msra.mxu0 0.0
    %447 = vmatpush.msra.mxu0 %v255
    %448 = vmatpush.msra.mxu0 %v252
    %449 = vmatpush.msra.mxu0 %v249
    %450 = vmatpush.msra.mxu0 %v246
    %451 = vmatpush.msra.mxu0 %v243
    %452 = vmatpush.msra.mxu0 %v240
    %453 = vmatpush.msra.mxu0 %v237
    %454 = vmatpush.msra.mxu0 %v234
    %455 = vmatmul.f32.gmra.mxu0 %v398
    %v456 = vpop.f32.mrf.mxu0
    %v457 = vadd.f32 %v367, %v456
    %458 = vdwg.mxu0
    %v459 = vxor.u32 %v457, 2147483648
    %v460 = vmul.f32 %v459, 1.442695
    %v461 = vpow.pop %v460
    %v462 = vadd.f32 %v461, 1.0
    %v463 = vrcp.pop %v462
    %v464 = vmul.f32 %v462, %v463
    %v465 = vsub.f32 1.0, %v464
    %v466 = vmul.f32 %v463, %v465
    %v467 = vadd.f32 %v463, %v466
    %vm468 = vweird.f32 %v462
    %vm469 = vweird.f32 %v463
    %vm470 = vmor %vm468, %vm469
    %v471 = vsel %vm470, %v463, %v467
    %v472 = vand.u32 2147483647, %v462
    %vm473 = vcmp.eq.f32.partialorder %v472, 8.507059e+37
    %v474 = vand.u32 %v462, 2147483648
    %v475 = vor.u32 1.1754944e-38, %v474
    %v476 = vsel %vm473, %v475, %v471
    %v477 = vmul.f32 1.0, %v476
    %v478 = vmul.f32 %v438, %v394
    %479 = vmatpush.msra.mxu0 0.0
    %480 = vmatpush.msra.mxu0 0.0
    %481 = vmatpush.msra.mxu0 0.0
    %482 = vmatpush.msra.mxu0 0.0
    %483 = vmatpush.msra.mxu0 0.0
    %484 = vmatpush.msra.mxu0 0.0
    %485 = vmatpush.msra.mxu0 0.0
    %486 = vmatpush.msra.mxu0 0.0
    %487 = vmatpush.msra.mxu0 %v306
    %488 = vmatpush.msra.mxu0 %v303
    %489 = vmatpush.msra.mxu0 %v300
    %490 = vmatpush.msra.mxu0 %v297
    %491 = vmatpush.msra.mxu0 %v294
    %492 = vmatpush.msra.mxu0 %v291
    %493 = vmatpush.msra.mxu0 %v288
    %494 = vmatpush.msra.mxu0 %v285
    %495 = vmatmul.f32.gmra.mxu0 %v398
    %v496 = vpop.f32.mrf.mxu0
    %v497 = vadd.f32 %v478, %v496
    %498 = vdwg.mxu0
    %v499 = vtanh.pop %v497
    %v500 = vsub.f32 1.0, %v477
    %v501 = vmul.f32 %v500, %v499
    %v502 = vmul.f32 %v477, %v308
    %v503 = vadd.f32 %v501, %v502
    %v505 = vsel %vm140, %v503, 0
    %507 = vmatpush.msra.mxu0 0.0
    %508 = vmatpush.msra.mxu0 0.0
    %509 = vmatpush.msra.mxu0 0.0
    %510 = vmatpush.msra.mxu0 0.0
    %511 = vmatpush.msra.mxu0 0.0
    %512 = vmatpush.msra.mxu0 0.0
    %513 = vmatpush.msra.mxu0 0.0
    %514 = vmatpush.msra.mxu0 0.0
    %515 = vmatpush.msra.mxu0 0.0
    %516 = vmatpush.msra.mxu0 0.0
    %517 = vmatpush.msra.mxu0 0.0
    %518 = vmatpush.msra.mxu0 0.0
    %519 = vmatpush.msra.mxu0 %v116
    %520 = vmatpush.msra.mxu0 %v115
    %521 = vmatpush.msra.mxu0 %v114
    %522 = vmatpush.msra.mxu0 %v113
    %523 = vmatmul.f32.gmra.mxu0 %v505
    %v524 = vpop.f32.mrf.mxu0
    %v525 = vadd.f32 0.0, %v524
    %526 = vdwg.mxu0
    %vm527 = vcmask 57344
    %v528 = vsel %vm527, %v525, -inf
    %529 = vmax.xlane.f32.xlu0 %v528
    %v530 = vpop.xlane.xlu0 %529
    %v531 = vsub.f32 %v525, %v530
    %v532 = vmul.f32 %v531, 1.442695
    %v533 = vpow.pop %v532
    %v534 = vsel %vm527, %v533, 0.0
    %535 = vadd.xlane.f32.xlu0 %v534
    %v536 = vpop.xlane.xlu0 %535
    %v537 = vrcp.pop %v536
    %v538 = vmul.f32 %v536, %v537
    %v539 = vsub.f32 1.0, %v538
    %v540 = vmul.f32 %v537, %v539
    %v541 = vadd.f32 %v537, %v540
    %vm542 = vweird.f32 %v536
    %vm543 = vweird.f32 %v537
    %vm544 = vmor %vm542, %vm543
    %v545 = vsel %vm544, %v537, %v541
    %v546 = vand.u32 2147483647, %v536
    %vm547 = vcmp.eq.f32.partialorder %v546, 8.507059e+37
    %v548 = vand.u32 %v536, 2147483648
    %v549 = vor.u32 1.1754944e-38, %v548
    %v550 = vsel %vm547, %v549, %v545
    %v551 = vmul.f32 %v533, %v550
    %vm552 = vcmask 64512
    %v554 = vsel %vm552, %v551, 0
    %556 = vmatpush.msra.mxu0 0.0
    %557 = vmatpush.msra.mxu0 0.0
    %558 = vmatpush.msra.mxu0 0.0
    %559 = vmatpush.msra.mxu0 0.0
    %560 = vmatpush.msra.mxu0 0.0
    %561 = vmatpush.msra.mxu0 0.0
    %562 = vmatpush.msra.mxu0 0.0
    %563 = vmatpush.msra.mxu0 0.0
    %564 = vmatpush.msra.mxu0 0.0
    %565 = vmatpush.msra.mxu0 0.0
    %566 = vmatpush.msra.mxu0 0.0
    %567 = vmatpush.msra.mxu0 0.0
    %568 = vmatpush.msra.mxu0 0.0
    %569 = vmatpush.msra.mxu0 0.0
    %570 = vmatpush.msra.mxu0 0.0
    %571 = vmatpush.msra.mxu0 %v112
    %572 = vmatmul.f32.gmra.mxu0 %v554
    %v573 = vpop.f32.mrf.mxu0
    %v574 = vadd.f32 0.0, %v573
    %575 = vdwg.mxu0
    %v577 = vsel %vm140, %v574, 0
    %579 = vmatpush.msra.mxu0 0.0
    %580 = vmatpush.msra.mxu0 0.0
    %581 = vmatpush.msra.mxu0 0.0
    %582 = vmatpush.msra.mxu0 0.0
    %583 = vmatpush.msra.mxu0 0.0
    %584 = vmatpush.msra.mxu0 0.0
    %585 = vmatpush.msra.mxu0 0.0
    %586 = vmatpush.msra.mxu0 0.0
    %587 = vmatpush.msra.mxu0 0.0
    %588 = vmatpush.msra.mxu0 0.0
    %589 = vmatpush.msra.mxu0 0.0
    %590 = vmatpush.msra.mxu0 0.0
    %591 = vmatpush.msra.mxu0 %v125
    %592 = vmatpush.msra.mxu0 %v124
    %593 = vmatpush.msra.mxu0 %v123
    %594 = vmatpush.msra.mxu0 %v122
    %595 = vmatmul.f32.gmra.mxu0 %v577
    %v596 = vpop.f32.mrf.mxu0
    %v597 = vadd.f32 0.0, %v596
    %598 = vdwg.mxu0
    %599 = vmatpush.msra.mxu0 0.0
    %600 = vmatpush.msra.mxu0 0.0
    %601 = vmatpush.msra.mxu0 0.0
    %602 = vmatpush.msra.mxu0 0.0
    %603 = vmatpush.msra.mxu0 0.0
    %604 = vmatpush.msra.mxu0 0.0
    %605 = vmatpush.msra.mxu0 0.0
    %606 = vmatpush.msra.mxu0 0.0
    %607 = vmatpush.msra.mxu0 0.0
    %608 = vmatpush.msra.mxu0 0.0
    %609 = vmatpush.msra.mxu0 0.0
    %610 = vmatpush.msra.mxu0 0.0
    %611 = vmatpush.msra.mxu0 %v120
    %612 = vmatpush.msra.mxu0 %v119
    %613 = vmatpush.msra.mxu0 %v118
    %614 = vmatpush.msra.mxu0 %v117
    %615 = vmatmul.f32.gmra.mxu0 %v505
    %v616 = vpop.f32.mrf.mxu0
    %v617 = vadd.f32 %v597, %v616
    %618 = vdwg.mxu0
    %v619 = vadd.f32 %v617, %v126
    %v620 = vtanh.pop %v619
    %v622 = vsel %vm140, %v620, 0
    %624 = vmatpush.msra.mxu0 0.0
    %625 = vmatpush.msra.mxu0 0.0
    %626 = vmatpush.msra.mxu0 0.0
    %627 = vmatpush.msra.mxu0 0.0
    %628 = vmatpush.msra.mxu0 0.0
    %629 = vmatpush.msra.mxu0 0.0
    %630 = vmatpush.msra.mxu0 0.0
    %631 = vmatpush.msra.mxu0 0.0
    %632 = vmatpush.msra.mxu0 0.0
    %633 = vmatpush.msra.mxu0 0.0
    %634 = vmatpush.msra.mxu0 0.0
    %635 = vmatpush.msra.mxu0 0.0
    %636 = vmatpush.msra.mxu0 %v130
    %637 = vmatpush.msra.mxu0 %v129
    %638 = vmatpush.msra.mxu0 %v128
    %639 = vmatpush.msra.mxu0 %v127
    %640 = vmatmul.f32.gmra.mxu0 %v622
    %v641 = vpop.f32.mrf.mxu0
    %v642 = vadd.f32 %v131, %v641
    %643 = vdwg.mxu0
    %vm644 = vcmask 516096
    %v645 = vsel %vm644, %v642, -inf
    %646 = vmax.xlane.f32.xlu0 %v645
    %v647 = vpop.xlane.xlu0 %646
    %v648 = vsub.f32 %v642, %v647
    %v649 = vmul.f32 %v648, 1.442695
    %v650 = vpow.pop %v649
    %v651 = vsel %vm644, %v650, 0.0
    %652 = vadd.xlane.f32.xlu0 %v651
    %v653 = vpop.xlane.xlu0 %652
    %v654 = vrcp.pop %v653
    %v655 = vmul.f32 %v653, %v654
    %v656 = vsub.f32 1.0, %v655
    %v657 = vmul.f32 %v654, %v656
    %v658 = vadd.f32 %v654, %v657
    %vm659 = vweird.f32 %v653
    %vm660 = vweird.f32 %v654
    %vm661 = vmor %vm659, %vm660
    %v662 = vsel %vm661, %v654, %v658
    %v663 = vand.u32 2147483647, %v653
    %vm664 = vcmp.eq.f32.partialorder %v663, 8.507059e+37
    %v665 = vand.u32 %v653, 2147483648
    %v666 = vor.u32 1.1754944e-38, %v665
    %v667 = vsel %vm664, %v666, %v662
    %v668 = vmul.f32 1.0, %v667
    %vm669 = vcmp.eq.f32.partialorder %v642, %v647
    %v670 = vsel %vm669, %v310, 64
    %v671 = vsel %vm644, %v670, 2147483647
    %v672 = vand.u32 %v671, 65535
    %v673 = vshra.s32 %v671, 16
    %v674 = vcvt.s32.f32 %v672
    %v675 = vcvt.s32.f32 %v673
    %676 = vmin.xlane.f32.xlu0 %v675
    %v677 = vpop.xlane.xlu0 %676
    %vm678 = vcmp.eq.f32.partialorder %v675, %v677
    %v679 = vsel %vm678, %v674, inf
    %680 = vmin.xlane.f32.xlu0 %v679
    %v681 = vpop.xlane.xlu0 %680
    %v682 = vcvt.f32.s32 %v681
    %v683 = vcvt.f32.s32 %v677
    %v684 = vshll.u32 %v683, 16
    %v685 = vadd.s32 %v684, %v682
    %vm686 = vcmp.eq.s32.totalorder %v310, %v685
    %v687 = vsel %vm686, 1, 0
    %v688 = vcvt.s32.f32 %v687
    %689 = vmatpush.msra.mxu0 0.0
    %690 = vmatpush.msra.mxu0 0.0
    %691 = vmatpush.msra.mxu0 0.0
    %692 = vmatpush.msra.mxu0 0.0
    %693 = vmatpush.msra.mxu0 0.0
    %694 = vmatpush.msra.mxu0 0.0
    %695 = vmatpush.msra.mxu0 0.0
    %696 = vmatpush.msra.mxu0 0.0
    %697 = vmatpush.msra.mxu0 0.0
    %698 = vmatpush.msra.mxu0 0.0
    %699 = vmatpush.msra.mxu0 0.0
    %700 = vmatpush.msra.mxu0 0.0
    %701 = vmatpush.msra.mxu0 %v317
    %702 = vmatpush.msra.mxu0 %v316
    %703 = vmatpush.msra.mxu0 %v315
    %704 = vmatpush.msra.mxu0 %v314
    %705 = vmatmul.f32.gmra.mxu0 %v505
    %v706 = vpop.f32.mrf.mxu0
    %v707 = vadd.f32 %v318, %v706
    %708 = vdwg.mxu0
    %709 = vmatpush.msra.mxu0 0.0
    %710 = vmatpush.msra.mxu0 0.0
    %711 = vmatpush.msra.mxu0 0.0
    %712 = vmatpush.msra.mxu0 0.0
    %713 = vmatpush.msra.mxu0 0.0
    %714 = vmatpush.msra.mxu0 0.0
    %715 = vmatpush.msra.mxu0 0.0
    %716 = vmatpush.msra.mxu0 0.0
    %717 = vmatpush.msra.mxu0 0.0
    %718 = vmatpush.msra.mxu0 0.0
    %719 = vmatpush.msra.mxu0 0.0
    %720 = vmatpush.msra.mxu0 0.0
    %721 = vmatpush.msra.mxu0 %v346
    %722 = vmatpush.msra.mxu0 %v345
    %723 = vmatpush.msra.mxu0 %v344
    %724 = vmatpush.msra.mxu0 %v343
    %725 = vmatmul.f32.gmra.mxu0 %v505
    %v726 = vpop.f32.mrf.mxu0
    %v727 = vadd.f32 %v348, %v726
    %728 = vdwg.mxu0
    %729 = vmatpush.msra.mxu0 0.0
    %730 = vmatpush.msra.mxu0 0.0
    %731 = vmatpush.msra.mxu0 0.0
    %732 = vmatpush.msra.mxu0 0.0
    %733 = vmatpush.msra.mxu0 0.0
    %734 = vmatpush.msra.mxu0 0.0
    %735 = vmatpush.msra.mxu0 0.0
    %736 = vmatpush.msra.mxu0 0.0
    %737 = vmatpush.msra.mxu0 0.0
    %738 = vmatpush.msra.mxu0 0.0
    %739 = vmatpush.msra.mxu0 0.0
    %740 = vmatpush.msra.mxu0 0.0
    %741 = vmatpush.msra.mxu0 %v373
    %742 = vmatpush.msra.mxu0 %v372
    %743 = vmatpush.msra.mxu0 %v371
    %744 = vmatpush.msra.mxu0 %v370
    %745 = vmatmul.f32.gmra.mxu0 %v505
    %v746 = vpop.f32.mrf.mxu0
    %v747 = vadd.f32 %v375, %v746
    %748 = vdwg.mxu0
    %v750 = vsel %vm396, %v688, 0
    %752 = vmatpush.msra.mxu0 0.0
    %753 = vmatpush.msra.mxu0 0.0
    %754 = vmatpush.msra.mxu0 0.0
    %755 = vmatpush.msra.mxu0 0.0
    %756 = vmatpush.msra.mxu0 0.0
    %757 = vmatpush.msra.mxu0 0.0
    %758 = vmatpush.msra.mxu0 0.0
    %759 = vmatpush.msra.mxu0 0.0
    %760 = vmatpush.msra.mxu0 %v204
    %761 = vmatpush.msra.mxu0 %v201
    %762 = vmatpush.msra.mxu0 %v198
    %763 = vmatpush.msra.mxu0 %v195
    %764 = vmatpush.msra.mxu0 %v192
    %765 = vmatpush.msra.mxu0 %v189
    %766 = vmatpush.msra.mxu0 %v186
    %767 = vmatpush.msra.mxu0 %v183
    %768 = vmatmul.f32.gmra.mxu0 %v750
    %v769 = vpop.f32.mrf.mxu0
    %v770 = vadd.f32 %v707, %v769
    %771 = vdwg.mxu0
    %v772 = vxor.u32 %v770, 2147483648
    %v773 = vmul.f32 %v772, 1.442695
    %v774 = vpow.pop %v773
    %v775 = vadd.f32 %v774, 1.0
    %v776 = vrcp.pop %v775
    %v777 = vmul.f32 %v775, %v776
    %v778 = vsub.f32 1.0, %v777
    %v779 = vmul.f32 %v776, %v778
    %v780 = vadd.f32 %v776, %v779
    %vm781 = vweird.f32 %v775
    %vm782 = vweird.f32 %v776
    %vm783 = vmor %vm781, %vm782
    %v784 = vsel %vm783, %v776, %v780
    %v785 = vand.u32 2147483647, %v775
    %vm786 = vcmp.eq.f32.partialorder %v785, 8.507059e+37
    %v787 = vand.u32 %v775, 2147483648
    %v788 = vor.u32 1.1754944e-38, %v787
    %v789 = vsel %vm786, %v788, %v784
    %v790 = vmul.f32 1.0, %v789
    %791 = vmatpush.msra.mxu0 0.0
    %792 = vmatpush.msra.mxu0 0.0
    %793 = vmatpush.msra.mxu0 0.0
    %794 = vmatpush.msra.mxu0 0.0
    %795 = vmatpush.msra.mxu0 0.0
    %796 = vmatpush.msra.mxu0 0.0
    %797 = vmatpush.msra.mxu0 0.0
    %798 = vmatpush.msra.mxu0 0.0
    %799 = vmatpush.msra.mxu0 %v255
    %800 = vmatpush.msra.mxu0 %v252
    %801 = vmatpush.msra.mxu0 %v249
    %802 = vmatpush.msra.mxu0 %v246
    %803 = vmatpush.msra.mxu0 %v243
    %804 = vmatpush.msra.mxu0 %v240
    %805 = vmatpush.msra.mxu0 %v237
    %806 = vmatpush.msra.mxu0 %v234
    %807 = vmatmul.f32.gmra.mxu0 %v750
    %v808 = vpop.f32.mrf.mxu0
    %v809 = vadd.f32 %v727, %v808
    %810 = vdwg.mxu0
    %v811 = vxor.u32 %v809, 2147483648
    %v812 = vmul.f32 %v811, 1.442695
    %v813 = vpow.pop %v812
    %v814 = vadd.f32 %v813, 1.0
    %v815 = vrcp.pop %v814
    %v816 = vmul.f32 %v814, %v815
    %v817 = vsub.f32 1.0, %v816
    %v818 = vmul.f32 %v815, %v817
    %v819 = vadd.f32 %v815, %v818
    %vm820 = vweird.f32 %v814
    %vm821 = vweird.f32 %v815
    %vm822 = vmor %vm820, %vm821
    %v823 = vsel %vm822, %v815, %v819
    %v824 = vand.u32 2147483647, %v814
    %vm825 = vcmp.eq.f32.partialorder %v824, 8.507059e+37
    %v826 = vand.u32 %v814, 2147483648
    %v827 = vor.u32 1.1754944e-38, %v826
    %v828 = vsel %vm825, %v827, %v823
    %v829 = vmul.f32 1.0, %v828
    %v830 = vmul.f32 %v790, %v747
    %831 = vmatpush.msra.mxu0 0.0
    %832 = vmatpush.msra.mxu0 0.0
    %833 = vmatpush.msra.mxu0 0.0
    %834 = vmatpush.msra.mxu0 0.0
    %835 = vmatpush.msra.mxu0 0.0
    %836 = vmatpush.msra.mxu0 0.0
    %837 = vmatpush.msra.mxu0 0.0
    %838 = vmatpush.msra.mxu0 0.0
    %839 = vmatpush.msra.mxu0 %v306
    %840 = vmatpush.msra.mxu0 %v303
    %841 = vmatpush.msra.mxu0 %v300
    %842 = vmatpush.msra.mxu0 %v297
    %843 = vmatpush.msra.mxu0 %v294
    %844 = vmatpush.msra.mxu0 %v291
    %845 = vmatpush.msra.mxu0 %v288
    %846 = vmatpush.msra.mxu0 %v285
    %847 = vmatmul.f32.gmra.mxu0 %v750
    %v848 = vpop.f32.mrf.mxu0
    %v849 = vadd.f32 %v830, %v848
    %850 = vdwg.mxu0
    %v851 = vtanh.pop %v849
    %v852 = vsub.f32 1.0, %v829
    %v853 = vmul.f32 %v852, %v851
    %v854 = vmul.f32 %v829, %v503
    %v855 = vadd.f32 %v853, %v854
    %v857 = vsel %vm140, %v855, 0
    %859 = vmatpush.msra.mxu0 0.0
    %860 = vmatpush.msra.mxu0 0.0
    %861 = vmatpush.msra.mxu0 0.0
    %862 = vmatpush.msra.mxu0 0.0
    %863 = vmatpush.msra.mxu0 0.0
    %864 = vmatpush.msra.mxu0 0.0
    %865 = vmatpush.msra.mxu0 0.0
    %866 = vmatpush.msra.mxu0 0.0
    %867 = vmatpush.msra.mxu0 0.0
    %868 = vmatpush.msra.mxu0 0.0
    %869 = vmatpush.msra.mxu0 0.0
    %870 = vmatpush.msra.mxu0 0.0
    %871 = vmatpush.msra.mxu0 %v116
    %872 = vmatpush.msra.mxu0 %v115
    %873 = vmatpush.msra.mxu0 %v114
    %874 = vmatpush.msra.mxu0 %v113
    %875 = vmatmul.f32.gmra.mxu0 %v857
    %v876 = vpop.f32.mrf.mxu0
    %v877 = vadd.f32 0.0, %v876
    %878 = vdwg.mxu0
    %v879 = vsel %vm527, %v877, -inf
    %880 = vmax.xlane.f32.xlu0 %v879
    %v881 = vpop.xlane.xlu0 %880
    %v882 = vsub.f32 %v877, %v881
    %v883 = vmul.f32 %v882, 1.442695
    %v884 = vpow.pop %v883
    %v885 = vsel %vm527, %v884, 0.0
    %886 = vadd.xlane.f32.xlu0 %v885
    %v887 = vpop.xlane.xlu0 %886
    %v888 = vrcp.pop %v887
    %v889 = vmul.f32 %v887, %v888
    %v890 = vsub.f32 1.0, %v889
    %v891 = vmul.f32 %v888, %v890
    %v892 = vadd.f32 %v888, %v891
    %vm893 = vweird.f32 %v887
    %vm894 = vweird.f32 %v888
    %vm895 = vmor %vm893, %vm894
    %v896 = vsel %vm895, %v888, %v892
    %v897 = vand.u32 2147483647, %v887
    %vm898 = vcmp.eq.f32.partialorder %v897, 8.507059e+37
    %v899 = vand.u32 %v887, 2147483648
    %v900 = vor.u32 1.1754944e-38, %v899
    %v901 = vsel %vm898, %v900, %v896
    %v902 = vmul.f32 %v884, %v901
    %v904 = vsel %vm552, %v902, 0
    %906 = vmatpush.msra.mxu0 0.0
    %907 = vmatpush.msra.mxu0 0.0
    %908 = vmatpush.msra.mxu0 0.0
    %909 = vmatpush.msra.mxu0 0.0
    %910 = vmatpush.msra.mxu0 0.0
    %911 = vmatpush.msra.mxu0 0.0
    %912 = vmatpush.msra.mxu0 0.0
    %913 = vmatpush.msra.mxu0 0.0
    %914 = vmatpush.msra.mxu0 0.0
    %915 = vmatpush.msra.mxu0 0.0
    %916 = vmatpush.msra.mxu0 0.0
    %917 = vmatpush.msra.mxu0 0.0
    %918 = vmatpush.msra.mxu0 0.0
    %919 = vmatpush.msra.mxu0 0.0
    %920 = vmatpush.msra.mxu0 0.0
    %921 = vmatpush.msra.mxu0 %v112
    %922 = vmatmul.f32.gmra.mxu0 %v904
    %v923 = vpop.f32.mrf.mxu0
    %v924 = vadd.f32 0.0, %v923
    %925 = vdwg.mxu0
    %v927 = vsel %vm140, %v924, 0
    %929 = vmatpush.msra.mxu0 0.0
    %930 = vmatpush.msra.mxu0 0.0
    %931 = vmatpush.msra.mxu0 0.0
    %932 = vmatpush.msra.mxu0 0.0
    %933 = vmatpush.msra.mxu0 0.0
    %934 = vmatpush.msra.mxu0 0.0
    %935 = vmatpush.msra.mxu0 0.0
    %936 = vmatpush.msra.mxu0 0.0
    %937 = vmatpush.msra.mxu0 0.0
    %938 = vmatpush.msra.mxu0 0.0
    %939 = vmatpush.msra.mxu0 0.0
    %940 = vmatpush.msra.mxu0 0.0
    %941 = vmatpush.msra.mxu0 %v125
    %942 = vmatpush.msra.mxu0 %v124
    %943 = vmatpush.msra.mxu0 %v123
    %944 = vmatpush.msra.mxu0 %v122
    %945 = vmatmul.f32.gmra.mxu0 %v927
    %v946 = vpop.f32.mrf.mxu0
    %v947 = vadd.f32 0.0, %v946
    %948 = vdwg.mxu0
    %949 = vmatpush.msra.mxu0 0.0
    %950 = vmatpush.msra.mxu0 0.0
    %951 = vmatpush.msra.mxu0 0.0
    %952 = vmatpush.msra.mxu0 0.0
    %953 = vmatpush.msra.mxu0 0.0
    %954 = vmatpush.msra.mxu0 0.0
    %955 = vmatpush.msra.mxu0 0.0
    %956 = vmatpush.msra.mxu0 0.0
    %957 = vmatpush.msra.mxu0 0.0
    %958 = vmatpush.msra.mxu0 0.0
    %959 = vmatpush.msra.mxu0 0.0
    %960 = vmatpush.msra.mxu0 0.0
    %961 = vmatpush.msra.mxu0 %v120
    %962 = vmatpush.msra.mxu0 %v119
    %963 = vmatpush.msra.mxu0 %v118
    %964 = vmatpush.msra.mxu0 %v117
    %965 = vmatmul.f32.gmra.mxu0 %v857
    %v966 = vpop.f32.mrf.mxu0
    %v967 = vadd.f32 %v947, %v966
    %968 = vdwg.mxu0
    %v969 = vadd.f32 %v967, %v126
    %v970 = vtanh.pop %v969
    %v972 = vsel %vm140, %v970, 0
    %974 = vmatpush.msra.mxu0 0.0
    %975 = vmatpush.msra.mxu0 0.0
    %976 = vmatpush.msra.mxu0 0.0
    %977 = vmatpush.msra.mxu0 0.0
    %978 = vmatpush.msra.mxu0 0.0
    %979 = vmatpush.msra.mxu0 0.0
    %980 = vmatpush.msra.mxu0 0.0
    %981 = vmatpush.msra.mxu0 0.0
    %982 = vmatpush.msra.mxu0 0.0
    %983 = vmatpush.msra.mxu0 0.0
    %984 = vmatpush.msra.mxu0 0.0
    %985 = vmatpush.msra.mxu0 0.0
    %986 = vmatpush.msra.mxu0 %v130
    %987 = vmatpush.msra.mxu0 %v129
    %988 = vmatpush.msra.mxu0 %v128
    %989 = vmatpush.msra.mxu0 %v127
    %990 = vmatmul.f32.gmra.mxu0 %v972
    %v991 = vpop.f32.mrf.mxu0
    %v992 = vadd.f32 %v131, %v991
    %993 = vdwg.mxu0
    %v994 = vsel %vm644, %v992, -inf
    %995 = vmax.xlane.f32.xlu0 %v994
    %v996 = vpop.xlane.xlu0 %995
    %v997 = vsub.f32 %v992, %v996
    %v998 = vmul.f32 %v997, 1.442695
    %v999 = vpow.pop %v998
    %v1000 = vsel %vm644, %v999, 0.0
    %1001 = vadd.xlane.f32.xlu0 %v1000
    %v1002 = vpop.xlane.xlu0 %1001
    %v1003 = vrcp.pop %v1002
    %v1004 = vmul.f32 %v1002, %v1003
    %v1005 = vsub.f32 1.0, %v1004
    %v1006 = vmul.f32 %v1003, %v1005
    %v1007 = vadd.f32 %v1003, %v1006
    %vm1008 = vweird.f32 %v1002
    %vm1009 = vweird.f32 %v1003
    %vm1010 = vmor %vm1008, %vm1009
    %v1011 = vsel %vm1010, %v1003, %v1007
    %v1012 = vand.u32 2147483647, %v1002
    %vm1013 = vcmp.eq.f32.partialorder %v1012, 8.507059e+37
    %v1014 = vand.u32 %v1002, 2147483648
    %v1015 = vor.u32 1.1754944e-38, %v1014
    %v1016 = vsel %vm1013, %v1015, %v1011
    %v1017 = vmul.f32 1.0, %v1016
    %vm1018 = vcmp.eq.f32.partialorder %v992, %v996
    %v1019 = vsel %vm1018, %v310, 64
    %v1020 = vsel %vm644, %v1019, 2147483647
    %v1021 = vand.u32 %v1020, 65535
    %v1022 = vshra.s32 %v1020, 16
    %v1023 = vcvt.s32.f32 %v1021
    %v1024 = vcvt.s32.f32 %v1022
    %1025 = vmin.xlane.f32.xlu0 %v1024
    %v1026 = vpop.xlane.xlu0 %1025
    %vm1027 = vcmp.eq.f32.partialorder %v1024, %v1026
    %v1028 = vsel %vm1027, %v1023, inf
    %1029 = vmin.xlane.f32.xlu0 %v1028
    %v1030 = vpop.xlane.xlu0 %1029
    %v1031 = vcvt.f32.s32 %v1030
    %v1032 = vcvt.f32.s32 %v1026
    %v1033 = vshll.u32 %v1032, 16
    %v1034 = vadd.s32 %v1033, %v1031
    %vm1035 = vcmp.eq.s32.totalorder %v310, %v1034
    %v1036 = vsel %vm1035, 1, 0
    %v1037 = vcvt.s32.f32 %v1036
    %1038 = vmatpush.msra.mxu0 0.0
    %1039 = vmatpush.msra.mxu0 0.0
    %1040 = vmatpush.msra.mxu0 0.0
    %1041 = vmatpush.msra.mxu0 0.0
    %1042 = vmatpush.msra.mxu0 0.0
    %1043 = vmatpush.msra.mxu0 0.0
    %1044 = vmatpush.msra.mxu0 0.0
    %1045 = vmatpush.msra.mxu0 0.0
    %1046 = vmatpush.msra.mxu0 0.0
    %1047 = vmatpush.msra.mxu0 0.0
    %1048 = vmatpush.msra.mxu0 0.0
    %1049 = vmatpush.msra.mxu0 0.0
    %1050 = vmatpush.msra.mxu0 %v317
    %1051 = vmatpush.msra.mxu0 %v316
    %1052 = vmatpush.msra.mxu0 %v315
    %1053 = vmatpush.msra.mxu0 %v314
    %1054 = vmatmul.f32.gmra.mxu0 %v857
    %v1055 = vpop.f32.mrf.mxu0
    %v1056 = vadd.f32 %v318, %v1055
    %1057 = vdwg.mxu0
    %1058 = vmatpush.msra.mxu0 0.0
    %1059 = vmatpush.msra.mxu0 0.0
    %1060 = vmatpush.msra.mxu0 0.0
    %1061 = vmatpush.msra.mxu0 0.0
    %1062 = vmatpush.msra.mxu0 0.0
    %1063 = vmatpush.msra.mxu0 0.0
    %1064 = vmatpush.msra.mxu0 0.0
    %1065 = vmatpush.msra.mxu0 0.0
    %1066 = vmatpush.msra.mxu0 0.0
    %1067 = vmatpush.msra.mxu0 0.0
    %1068 = vmatpush.msra.mxu0 0.0
    %1069 = vmatpush.msra.mxu0 0.0
    %1070 = vmatpush.msra.mxu0 %v346
    %1071 = vmatpush.msra.mxu0 %v345
    %1072 = vmatpush.msra.mxu0 %v344
    %1073 = vmatpush.msra.mxu0 %v343
    %1074 = vmatmul.f32.gmra.mxu0 %v857
    %v1075 = vpop.f32.mrf.mxu0
    %v1076 = vadd.f32 %v348, %v1075
    %1077 = vdwg.mxu0
    %1078 = vmatpush.msra.mxu0 0.0
    %1079 = vmatpush.msra.mxu0 0.0
    %1080 = vmatpush.msra.mxu0 0.0
    %1081 = vmatpush.msra.mxu0 0.0
    %1082 = vmatpush.msra.mxu0 0.0
    %1083 = vmatpush.msra.mxu0 0.0
    %1084 = vmatpush.msra.mxu0 0.0
    %1085 = vmatpush.msra.mxu0 0.0
    %1086 = vmatpush.msra.mxu0 0.0
    %1087 = vmatpush.msra.mxu0 0.0
    %1088 = vmatpush.msra.mxu0 0.0
    %1089 = vmatpush.msra.mxu0 0.0
    %1090 = vmatpush.msra.mxu0 %v373
    %1091 = vmatpush.msra.mxu0 %v372
    %1092 = vmatpush.msra.mxu0 %v371
    %1093 = vmatpush.msra.mxu0 %v370
    %1094 = vmatmul.f32.gmra.mxu0 %v857
    %v1095 = vpop.f32.mrf.mxu0
    %v1096 = vadd.f32 %v375, %v1095
    %1097 = vdwg.mxu0
    %v1099 = vsel %vm396, %v1037, 0
    %1101 = vmatpush.msra.mxu0 0.0
    %1102 = vmatpush.msra.mxu0 0.0
    %1103 = vmatpush.msra.mxu0 0.0
    %1104 = vmatpush.msra.mxu0 0.0
    %1105 = vmatpush.msra.mxu0 0.0
    %1106 = vmatpush.msra.mxu0 0.0
    %1107 = vmatpush.msra.mxu0 0.0
    %1108 = vmatpush.msra.mxu0 0.0
    %1109 = vmatpush.msra.mxu0 %v204
    %1110 = vmatpush.msra.mxu0 %v201
    %1111 = vmatpush.msra.mxu0 %v198
    %1112 = vmatpush.msra.mxu0 %v195
    %1113 = vmatpush.msra.mxu0 %v192
    %1114 = vmatpush.msra.mxu0 %v189
    %1115 = vmatpush.msra.mxu0 %v186
    %1116 = vmatpush.msra.mxu0 %v183
    %1117 = vmatmul.f32.gmra.mxu0 %v1099
    %v1118 = vpop.f32.mrf.mxu0
    %v1119 = vadd.f32 %v1056, %v1118
    %1120 = vdwg.mxu0
    %v1121 = vxor.u32 %v1119, 2147483648
    %v1122 = vmul.f32 %v1121, 1.442695
    %v1123 = vpow.pop %v1122
    %v1124 = vadd.f32 %v1123, 1.0
    %v1125 = vrcp.pop %v1124
    %v1126 = vmul.f32 %v1124, %v1125
    %v1127 = vsub.f32 1.0, %v1126
    %v1128 = vmul.f32 %v1125, %v1127
    %v1129 = vadd.f32 %v1125, %v1128
    %vm1130 = vweird.f32 %v1124
    %vm1131 = vweird.f32 %v1125
    %vm1132 = vmor %vm1130, %vm1131
    %v1133 = vsel %vm1132, %v1125, %v1129
    %v1134 = vand.u32 2147483647, %v1124
    %vm1135 = vcmp.eq.f32.partialorder %v1134, 8.507059e+37
    %v1136 = vand.u32 %v1124, 2147483648
    %v1137 = vor.u32 1.1754944e-38, %v1136
    %v1138 = vsel %vm1135, %v1137, %v1133
    %v1139 = vmul.f32 1.0, %v1138
    %1140 = vmatpush.msra.mxu0 0.0
    %1141 = vmatpush.msra.mxu0 0.0
    %1142 = vmatpush.msra.mxu0 0.0
    %1143 = vmatpush.msra.mxu0 0.0
    %1144 = vmatpush.msra.mxu0 0.0
    %1145 = vmatpush.msra.mxu0 0.0
    %1146 = vmatpush.msra.mxu0 0.0
    %1147 = vmatpush.msra.mxu0 0.0
    %1148 = vmatpush.msra.mxu0 %v255
    %1149 = vmatpush.msra.mxu0 %v252
    %1150 = vmatpush.msra.mxu0 %v249
    %1151 = vmatpush.msra.mxu0 %v246
    %1152 = vmatpush.msra.mxu0 %v243
    %1153 = vmatpush.msra.mxu0 %v240
    %1154 = vmatpush.msra.mxu0 %v237
    %1155 = vmatpush.msra.mxu0 %v234
    %1156 = vmatmul.f32.gmra.mxu0 %v1099
    %v1157 = vpop.f32.mrf.mxu0
    %v1158 = vadd.f32 %v1076, %v1157
    %1159 = vdwg.mxu0
    %v1160 = vxor.u32 %v1158, 2147483648
    %v1161 = vmul.f32 %v1160, 1.442695
    %v1162 = vpow.pop %v1161
    %v1163 = vadd.f32 %v1162, 1.0
    %v1164 = vrcp.pop %v1163
    %v1165 = vmul.f32 %v1163, %v1164
    %v1166 = vsub.f32 1.0, %v1165
    %v1167 = vmul.f32 %v1164, %v1166
    %v1168 = vadd.f32 %v1164, %v1167
    %vm1169 = vweird.f32 %v1163
    %vm1170 = vweird.f32 %v1164
    %vm1171 = vmor %vm1169, %vm1170
    %v1172 = vsel %vm1171, %v1164, %v1168
    %v1173 = vand.u32 2147483647, %v1163
    %vm1174 = vcmp.eq.f32.partialorder %v1173, 8.507059e+37
    %v1175 = vand.u32 %v1163, 2147483648
    %v1176 = vor.u32 1.1754944e-38, %v1175
    %v1177 = vsel %vm1174, %v1176, %v1172
    %v1178 = vmul.f32 1.0, %v1177
    %v1179 = vmul.f32 %v1139, %v1096
    %1180 = vmatpush.msra.mxu0 0.0
    %1181 = vmatpush.msra.mxu0 0.0
    %1182 = vmatpush.msra.mxu0 0.0
    %1183 = vmatpush.msra.mxu0 0.0
    %1184 = vmatpush.msra.mxu0 0.0
    %1185 = vmatpush.msra.mxu0 0.0
    %1186 = vmatpush.msra.mxu0 0.0
    %1187 = vmatpush.msra.mxu0 0.0
    %1188 = vmatpush.msra.mxu0 %v306
    %1189 = vmatpush.msra.mxu0 %v303
    %1190 = vmatpush.msra.mxu0 %v300
    %1191 = vmatpush.msra.mxu0 %v297
    %1192 = vmatpush.msra.mxu0 %v294
    %1193 = vmatpush.msra.mxu0 %v291
    %1194 = vmatpush.msra.mxu0 %v288
    %1195 = vmatpush.msra.mxu0 %v285
    %1196 = vmatmul.f32.gmra.mxu0 %v1099
    %v1197 = vpop.f32.mrf.mxu0
    %v1198 = vadd.f32 %v1179, %v1197
    %1199 = vdwg.mxu0
    %v1200 = vtanh.pop %v1198
    %v1201 = vsub.f32 1.0, %v1178
    %v1202 = vmul.f32 %v1201, %v1200
    %v1203 = vmul.f32 %v1178, %v855
    %v1204 = vadd.f32 %v1202, %v1203
    %v1206 = vsel %vm140, %v1204, 0
    %1208 = vmatpush.msra.mxu0 0.0
    %1209 = vmatpush.msra.mxu0 0.0
    %1210 = vmatpush.msra.mxu0 0.0
    %1211 = vmatpush.msra.mxu0 0.0
    %1212 = vmatpush.msra.mxu0 0.0
    %1213 = vmatpush.msra.mxu0 0.0
    %1214 = vmatpush.msra.mxu0 0.0
    %1215 = vmatpush.msra.mxu0 0.0
    %1216 = vmatpush.msra.mxu0 0.0
    %1217 = vmatpush.msra.mxu0 0.0
    %1218 = vmatpush.msra.mxu0 0.0
    %1219 = vmatpush.msra.mxu0 0.0
    %1220 = vmatpush.msra.mxu0 %v116
    %1221 = vmatpush.msra.mxu0 %v115
    %1222 = vmatpush.msra.mxu0 %v114
    %1223 = vmatpush.msra.mxu0 %v113
    %1224 = vmatmul.f32.gmra.mxu0 %v1206
    %v1225 = vpop.f32.mrf.mxu0
    %v1226 = vadd.f32 0.0, %v1225
    %1227 = vdwg.mxu0
    %v1228 = vsel %vm527, %v1226, -inf
    %1229 = vmax.xlane.f32.xlu0 %v1228
    %v1230 = vpop.xlane.xlu0 %1229
    %v1231 = vsub.f32 %v1226, %v1230
    %v1232 = vmul.f32 %v1231, 1.442695
    %v1233 = vpow.pop %v1232
    %v1234 = vsel %vm527, %v1233, 0.0
    %1235 = vadd.xlane.f32.xlu0 %v1234
    %v1236 = vpop.xlane.xlu0 %1235
    %v1237 = vrcp.pop %v1236
    %v1238 = vmul.f32 %v1236, %v1237
    %v1239 = vsub.f32 1.0, %v1238
    %v1240 = vmul.f32 %v1237, %v1239
    %v1241 = vadd.f32 %v1237, %v1240
    %vm1242 = vweird.f32 %v1236
    %vm1243 = vweird.f32 %v1237
    %vm1244 = vmor %vm1242, %vm1243
    %v1245 = vsel %vm1244, %v1237, %v1241
    %v1246 = vand.u32 2147483647, %v1236
    %vm1247 = vcmp.eq.f32.partialorder %v1246, 8.507059e+37
    %v1248 = vand.u32 %v1236, 2147483648
    %v1249 = vor.u32 1.1754944e-38, %v1248
    %v1250 = vsel %vm1247, %v1249, %v1245
    %v1251 = vmul.f32 %v1233, %v1250
    %v1253 = vsel %vm552, %v1251, 0
    %1255 = vmatpush.msra.mxu0 0.0
    %1256 = vmatpush.msra.mxu0 0.0
    %1257 = vmatpush.msra.mxu0 0.0
    %1258 = vmatpush.msra.mxu0 0.0
    %1259 = vmatpush.msra.mxu0 0.0
    %1260 = vmatpush.msra.mxu0 0.0
    %1261 = vmatpush.msra.mxu0 0.0
    %1262 = vmatpush.msra.mxu0 0.0
    %1263 = vmatpush.msra.mxu0 0.0
    %1264 = vmatpush.msra.mxu0 0.0
    %1265 = vmatpush.msra.mxu0 0.0
    %1266 = vmatpush.msra.mxu0 0.0
    %1267 = vmatpush.msra.mxu0 0.0
    %1268 = vmatpush.msra.mxu0 0.0
    %1269 = vmatpush.msra.mxu0 0.0
    %1270 = vmatpush.msra.mxu0 %v112
    %1271 = vmatmul.f32.gmra.mxu0 %v1253
    %v1272 = vpop.f32.mrf.mxu0
    %v1273 = vadd.f32 0.0, %v1272
    %1274 = vdwg.mxu0
    %v1276 = vsel %vm140, %v1273, 0
    %1278 = vmatpush.msra.mxu0 0.0
    %1279 = vmatpush.msra.mxu0 0.0
    %1280 = vmatpush.msra.mxu0 0.0
    %1281 = vmatpush.msra.mxu0 0.0
    %1282 = vmatpush.msra.mxu0 0.0
    %1283 = vmatpush.msra.mxu0 0.0
    %1284 = vmatpush.msra.mxu0 0.0
    %1285 = vmatpush.msra.mxu0 0.0
    %1286 = vmatpush.msra.mxu0 0.0
    %1287 = vmatpush.msra.mxu0 0.0
    %1288 = vmatpush.msra.mxu0 0.0
    %1289 = vmatpush.msra.mxu0 0.0
    %1290 = vmatpush.msra.mxu0 %v125
    %1291 = vmatpush.msra.mxu0 %v124
    %1292 = vmatpush.msra.mxu0 %v123
    %1293 = vmatpush.msra.mxu0 %v122
    %1294 = vmatmul.f32.gmra.mxu0 %v1276
    %v1295 = vpop.f32.mrf.mxu0
    %v1296 = vadd.f32 0.0, %v1295
    %1297 = vdwg.mxu0
    %1298 = vmatpush.msra.mxu0 0.0
    %1299 = vmatpush.msra.mxu0 0.0
    %1300 = vmatpush.msra.mxu0 0.0
    %1301 = vmatpush.msra.mxu0 0.0
    %1302 = vmatpush.msra.mxu0 0.0
    %1303 = vmatpush.msra.mxu0 0.0
    %1304 = vmatpush.msra.mxu0 0.0
    %1305 = vmatpush.msra.mxu0 0.0
    %1306 = vmatpush.msra.mxu0 0.0
    %1307 = vmatpush.msra.mxu0 0.0
    %1308 = vmatpush.msra.mxu0 0.0
    %1309 = vmatpush.msra.mxu0 0.0
    %1310 = vmatpush.msra.mxu0 %v120
    %1311 = vmatpush.msra.mxu0 %v119
    %1312 = vmatpush.msra.mxu0 %v118
    %1313 = vmatpush.msra.mxu0 %v117
    %1314 = vmatmul.f32.gmra.mxu0 %v1206
    %v1315 = vpop.f32.mrf.mxu0
    %v1316 = vadd.f32 %v1296, %v1315
    %1317 = vdwg.mxu0
    %v1318 = vadd.f32 %v1316, %v126
    %v1319 = vtanh.pop %v1318
    %v1321 = vsel %vm140, %v1319, 0
    %1323 = vmatpush.msra.mxu0 0.0
    %1324 = vmatpush.msra.mxu0 0.0
    %1325 = vmatpush.msra.mxu0 0.0
    %1326 = vmatpush.msra.mxu0 0.0
    %1327 = vmatpush.msra.mxu0 0.0
    %1328 = vmatpush.msra.mxu0 0.0
    %1329 = vmatpush.msra.mxu0 0.0
    %1330 = vmatpush.msra.mxu0 0.0
    %1331 = vmatpush.msra.mxu0 0.0
    %1332 = vmatpush.msra.mxu0 0.0
    %1333 = vmatpush.msra.mxu0 0.0
    %1334 = vmatpush.msra.mxu0 0.0
    %1335 = vmatpush.msra.mxu0 %v130
    %1336 = vmatpush.msra.mxu0 %v129
    %1337 = vmatpush.msra.mxu0 %v128
    %1338 = vmatpush.msra.mxu0 %v127
    %1339 = vmatmul.f32.gmra.mxu0 %v1321
    %v1340 = vpop.f32.mrf.mxu0
    %v1341 = vadd.f32 %v131, %v1340
    %1342 = vdwg.mxu0
    %v1343 = vsel %vm644, %v1341, -inf
    %1344 = vmax.xlane.f32.xlu0 %v1343
    %v1345 = vpop.xlane.xlu0 %1344
    %v1346 = vsub.f32 %v1341, %v1345
    %v1347 = vmul.f32 %v1346, 1.442695
    %v1348 = vpow.pop %v1347
    %v1349 = vsel %vm644, %v1348, 0.0
    %1350 = vadd.xlane.f32.xlu0 %v1349
    %v1351 = vpop.xlane.xlu0 %1350
    %v1352 = vrcp.pop %v1351
    %v1353 = vmul.f32 %v1351, %v1352
    %v1354 = vsub.f32 1.0, %v1353
    %v1355 = vmul.f32 %v1352, %v1354
    %v1356 = vadd.f32 %v1352, %v1355
    %vm1357 = vweird.f32 %v1351
    %vm1358 = vweird.f32 %v1352
    %vm1359 = vmor %vm1357, %vm1358
    %v1360 = vsel %vm1359, %v1352, %v1356
    %v1361 = vand.u32 2147483647, %v1351
    %vm1362 = vcmp.eq.f32.partialorder %v1361, 8.507059e+37
    %v1363 = vand.u32 %v1351, 2147483648
    %v1364 = vor.u32 1.1754944e-38, %v1363
    %v1365 = vsel %vm1362, %v1364, %v1360
    %v1366 = vmul.f32 1.0, %v1365
    %vm1367 = vcmp.eq.f32.partialorder %v1341, %v1345
    %v1368 = vsel %vm1367, %v310, 64
    %v1369 = vsel %vm644, %v1368, 2147483647
    %v1370 = vand.u32 %v1369, 65535
    %v1371 = vshra.s32 %v1369, 16
    %v1372 = vcvt.s32.f32 %v1370
    %v1373 = vcvt.s32.f32 %v1371
    %1374 = vmin.xlane.f32.xlu0 %v1373
    %v1375 = vpop.xlane.xlu0 %1374
    %vm1376 = vcmp.eq.f32.partialorder %v1373, %v1375
    %v1377 = vsel %vm1376, %v1372, inf
    %1378 = vmin.xlane.f32.xlu0 %v1377
    %v1379 = vpop.xlane.xlu0 %1378
    %v1380 = vcvt.f32.s32 %v1379
    %v1381 = vcvt.f32.s32 %v1375
    %v1382 = vshll.u32 %v1381, 16
    %v1383 = vadd.s32 %v1382, %v1380
    %vm1384 = vcmp.eq.s32.totalorder %v310, %v1383
    %v1385 = vsel %vm1384, 1, 0
    %v1386 = vcvt.s32.f32 %v1385
    %1387 = vmatpush.msra.mxu0 0.0
    %1388 = vmatpush.msra.mxu0 0.0
    %1389 = vmatpush.msra.mxu0 0.0
    %1390 = vmatpush.msra.mxu0 0.0
    %1391 = vmatpush.msra.mxu0 0.0
    %1392 = vmatpush.msra.mxu0 0.0
    %1393 = vmatpush.msra.mxu0 0.0
    %1394 = vmatpush.msra.mxu0 0.0
    %1395 = vmatpush.msra.mxu0 0.0
    %1396 = vmatpush.msra.mxu0 0.0
    %1397 = vmatpush.msra.mxu0 0.0
    %1398 = vmatpush.msra.mxu0 0.0
    %1399 = vmatpush.msra.mxu0 %v317
    %1400 = vmatpush.msra.mxu0 %v316
    %1401 = vmatpush.msra.mxu0 %v315
    %1402 = vmatpush.msra.mxu0 %v314
    %1403 = vmatmul.f32.gmra.mxu0 %v1206
    %v1404 = vpop.f32.mrf.mxu0
    %v1405 = vadd.f32 %v318, %v1404
    %1406 = vdwg.mxu0
    %1407 = vmatpush.msra.mxu0 0.0
    %1408 = vmatpush.msra.mxu0 0.0
    %1409 = vmatpush.msra.mxu0 0.0
    %1410 = vmatpush.msra.mxu0 0.0
    %1411 = vmatpush.msra.mxu0 0.0
    %1412 = vmatpush.msra.mxu0 0.0
    %1413 = vmatpush.msra.mxu0 0.0
    %1414 = vmatpush.msra.mxu0 0.0
    %1415 = vmatpush.msra.mxu0 0.0
    %1416 = vmatpush.msra.mxu0 0.0
    %1417 = vmatpush.msra.mxu0 0.0
    %1418 = vmatpush.msra.mxu0 0.0
    %1419 = vmatpush.msra.mxu0 %v346
    %1420 = vmatpush.msra.mxu0 %v345
    %1421 = vmatpush.msra.mxu0 %v344
    %1422 = vmatpush.msra.mxu0 %v343
    %1423 = vmatmul.f32.gmra.mxu0 %v1206
    %v1424 = vpop.f32.mrf.mxu0
    %v1425 = vadd.f32 %v348, %v1424
    %1426 = vdwg.mxu0
    %1427 = vmatpush.msra.mxu0 0.0
    %1428 = vmatpush.msra.mxu0 0.0
    %1429 = vmatpush.msra.mxu0 0.0
    %1430 = vmatpush.msra.mxu0 0.0
    %1431 = vmatpush.msra.mxu0 0.0
    %1432 = vmatpush.msra.mxu0 0.0
    %1433 = vmatpush.msra.mxu0 0.0
    %1434 = vmatpush.msra.mxu0 0.0
    %1435 = vmatpush.msra.mxu0 0.0
    %1436 = vmatpush.msra.mxu0 0.0
    %1437 = vmatpush.msra.mxu0 0.0
    %1438 = vmatpush.msra.mxu0 0.0
    %1439 = vmatpush.msra.mxu0 %v373
    %1440 = vmatpush.msra.mxu0 %v372
    %1441 = vmatpush.msra.mxu0 %v371
    %1442 = vmatpush.msra.mxu0 %v370
    %1443 = vmatmul.f32.gmra.mxu0 %v1206
    %v1444 = vpop.f32.mrf.mxu0
    %v1445 = vadd.f32 %v375, %v1444
    %1446 = vdwg.mxu0
    %v1448 = vsel %vm396, %v1386, 0
    %1450 = vmatpush.msra.mxu0 0.0
    %1451 = vmatpush.msra.mxu0 0.0
    %1452 = vmatpush.msra.mxu0 0.0
    %1453 = vmatpush.msra.mxu0 0.0
    %1454 = vmatpush.msra.mxu0 0.0
    %1455 = vmatpush.msra.mxu0 0.0
    %1456 = vmatpush.msra.mxu0 0.0
    %1457 = vmatpush.msra.mxu0 0.0
    %1458 = vmatpush.msra.mxu0 %v204
    %1459 = vmatpush.msra.mxu0 %v201
    %1460 = vmatpush.msra.mxu0 %v198
    %1461 = vmatpush.msra.mxu0 %v195
    %1462 = vmatpush.msra.mxu0 %v192
    %1463 = vmatpush.msra.mxu0 %v189
    %1464 = vmatpush.msra.mxu0 %v186
    %1465 = vmatpush.msra.mxu0 %v183
    %1466 = vmatmul.f32.gmra.mxu0 %v1448
    %v1467 = vpop.f32.mrf.mxu0
    %v1468 = vadd.f32 %v1405, %v1467
    %1469 = vdwg.mxu0
    %v1470 = vxor.u32 %v1468, 2147483648
    %v1471 = vmul.f32 %v1470, 1.442695
    %v1472 = vpow.pop %v1471
    %v1473 = vadd.f32 %v1472, 1.0
    %v1474 = vrcp.pop %v1473
    %v1475 = vmul.f32 %v1473, %v1474
    %v1476 = vsub.f32 1.0, %v1475
    %v1477 = vmul.f32 %v1474, %v1476
    %v1478 = vadd.f32 %v1474, %v1477
    %vm1479 = vweird.f32 %v1473
    %vm1480 = vweird.f32 %v1474
    %vm1481 = vmor %vm1479, %vm1480
    %v1482 = vsel %vm1481, %v1474, %v1478
    %v1483 = vand.u32 2147483647, %v1473
    %vm1484 = vcmp.eq.f32.partialorder %v1483, 8.507059e+37
    %v1485 = vand.u32 %v1473, 2147483648
    %v1486 = vor.u32 1.1754944e-38, %v1485
    %v1487 = vsel %vm1484, %v1486, %v1482
    %v1488 = vmul.f32 1.0, %v1487
    %1489 = vmatpush.msra.mxu0 0.0
    %1490 = vmatpush.msra.mxu0 0.0
    %1491 = vmatpush.msra.mxu0 0.0
    %1492 = vmatpush.msra.mxu0 0.0
    %1493 = vmatpush.msra.mxu0 0.0
    %1494 = vmatpush.msra.mxu0 0.0
    %1495 = vmatpush.msra.mxu0 0.0
    %1496 = vmatpush.msra.mxu0 0.0
    %1497 = vmatpush.msra.mxu0 %v255
    %1498 = vmatpush.msra.mxu0 %v252
    %1499 = vmatpush.msra.mxu0 %v249
    %1500 = vmatpush.msra.mxu0 %v246
    %1501 = vmatpush.msra.mxu0 %v243
    %1502 = vmatpush.msra.mxu0 %v240
    %1503 = vmatpush.msra.mxu0 %v237
    %1504 = vmatpush.msra.mxu0 %v234
    %1505 = vmatmul.f32.gmra.mxu0 %v1448
    %v1506 = vpop.f32.mrf.mxu0
    %v1507 = vadd.f32 %v1425, %v1506
    %1508 = vdwg.mxu0
    %v1509 = vxor.u32 %v1507, 2147483648
    %v1510 = vmul.f32 %v1509, 1.442695
    %v1511 = vpow.pop %v1510
    %v1512 = vadd.f32 %v1511, 1.0
    %v1513 = vrcp.pop %v1512
    %v1514 = vmul.f32 %v1512, %v1513
    %v1515 = vsub.f32 1.0, %v1514
    %v1516 = vmul.f32 %v1513, %v1515
    %v1517 = vadd.f32 %v1513, %v1516
    %vm1518 = vweird.f32 %v1512
    %vm1519 = vweird.f32 %v1513
    %vm1520 = vmor %vm1518, %vm1519
    %v1521 = vsel %vm1520, %v1513, %v1517
    %v1522 = vand.u32 2147483647, %v1512
    %vm1523 = vcmp.eq.f32.partialorder %v1522, 8.507059e+37
    %v1524 = vand.u32 %v1512, 2147483648
    %v1525 = vor.u32 1.1754944e-38, %v1524
    %v1526 = vsel %vm1523, %v1525, %v1521
    %v1527 = vmul.f32 1.0, %v1526
    %v1528 = vmul.f32 %v1488, %v1445
    %1529 = vmatpush.msra.mxu0 0.0
    %1530 = vmatpush.msra.mxu0 0.0
    %1531 = vmatpush.msra.mxu0 0.0
    %1532 = vmatpush.msra.mxu0 0.0
    %1533 = vmatpush.msra.mxu0 0.0
    %1534 = vmatpush.msra.mxu0 0.0
    %1535 = vmatpush.msra.mxu0 0.0
    %1536 = vmatpush.msra.mxu0 0.0
    %1537 = vmatpush.msra.mxu0 %v306
    %1538 = vmatpush.msra.mxu0 %v303
    %1539 = vmatpush.msra.mxu0 %v300
    %1540 = vmatpush.msra.mxu0 %v297
    %1541 = vmatpush.msra.mxu0 %v294
    %1542 = vmatpush.msra.mxu0 %v291
    %1543 = vmatpush.msra.mxu0 %v288
    %1544 = vmatpush.msra.mxu0 %v285
    %1545 = vmatmul.f32.gmra.mxu0 %v1448
    %v1546 = vpop.f32.mrf.mxu0
    %v1547 = vadd.f32 %v1528, %v1546
    %1548 = vdwg.mxu0
    %v1549 = vtanh.pop %v1547
    %v1550 = vsub.f32 1.0, %v1527
    %v1551 = vmul.f32 %v1550, %v1549
    %v1552 = vmul.f32 %v1527, %v1204
    %v1553 = vadd.f32 %v1551, %v1552
    %v1555 = vsel %vm140, %v1553, 0
    %1557 = vmatpush.msra.mxu0 0.0
    %1558 = vmatpush.msra.mxu0 0.0
    %1559 = vmatpush.msra.mxu0 0.0
    %1560 = vmatpush.msra.mxu0 0.0
    %1561 = vmatpush.msra.mxu0 0.0
    %1562 = vmatpush.msra.mxu0 0.0
    %1563 = vmatpush.msra.mxu0 0.0
    %1564 = vmatpush.msra.mxu0 0.0
    %1565 = vmatpush.msra.mxu0 0.0
    %1566 = vmatpush.msra.mxu0 0.0
    %1567 = vmatpush.msra.mxu0 0.0
    %1568 = vmatpush.msra.mxu0 0.0
    %1569 = vmatpush.msra.mxu0 %v116
    %1570 = vmatpush.msra.mxu0 %v115
    %1571 = vmatpush.msra.mxu0 %v114
    %1572 = vmatpush.msra.mxu0 %v113
    %1573 = vmatmul.f32.gmra.mxu0 %v1555
    %v1574 = vpop.f32.mrf.mxu0
    %v1575 = vadd.f32 0.0, %v1574
    %1576 = vdwg.mxu0
    %v1577 = vsel %vm527, %v1575, -inf
    %1578 = vmax.xlane.f32.xlu0 %v1577
    %v1579 = vpop.xlane.xlu0 %1578
    %v1580 = vsub.f32 %v1575, %v1579
    %v1581 = vmul.f32 %v1580, 1.442695
    %v1582 = vpow.pop %v1581
    %v1583 = vsel %vm527, %v1582, 0.0
    %1584 = vadd.xlane.f32.xlu0 %v1583
    %v1585 = vpop.xlane.xlu0 %1584
    %v1586 = vrcp.pop %v1585
    %v1587 = vmul.f32 %v1585, %v1586
    %v1588 = vsub.f32 1.0, %v1587
    %v1589 = vmul.f32 %v1586, %v1588
    %v1590 = vadd.f32 %v1586, %v1589
    %vm1591 = vweird.f32 %v1585
    %vm1592 = vweird.f32 %v1586
    %vm1593 = vmor %vm1591, %vm1592
    %v1594 = vsel %vm1593, %v1586, %v1590
    %v1595 = vand.u32 2147483647, %v1585
    %vm1596 = vcmp.eq.f32.partialorder %v1595, 8.507059e+37
    %v1597 = vand.u32 %v1585, 2147483648
    %v1598 = vor.u32 1.1754944e-38, %v1597
    %v1599 = vsel %vm1596, %v1598, %v1594
    %v1600 = vmul.f32 %v1582, %v1599
    %v1602 = vsel %vm552, %v1600, 0
    %1604 = vmatpush.msra.mxu0 0.0
    %1605 = vmatpush.msra.mxu0 0.0
    %1606 = vmatpush.msra.mxu0 0.0
    %1607 = vmatpush.msra.mxu0 0.0
    %1608 = vmatpush.msra.mxu0 0.0
    %1609 = vmatpush.msra.mxu0 0.0
    %1610 = vmatpush.msra.mxu0 0.0
    %1611 = vmatpush.msra.mxu0 0.0
    %1612 = vmatpush.msra.mxu0 0.0
    %1613 = vmatpush.msra.mxu0 0.0
    %1614 = vmatpush.msra.mxu0 0.0
    %1615 = vmatpush.msra.mxu0 0.0
    %1616 = vmatpush.msra.mxu0 0.0
    %1617 = vmatpush.msra.mxu0 0.0
    %1618 = vmatpush.msra.mxu0 0.0
    %1619 = vmatpush.msra.mxu0 %v112
    %1620 = vmatmul.f32.gmra.mxu0 %v1602
    %v1621 = vpop.f32.mrf.mxu0
    %v1622 = vadd.f32 0.0, %v1621
    %1623 = vdwg.mxu0
    %v1625 = vsel %vm140, %v1622, 0
    %1627 = vmatpush.msra.mxu0 0.0
    %1628 = vmatpush.msra.mxu0 0.0
    %1629 = vmatpush.msra.mxu0 0.0
    %1630 = vmatpush.msra.mxu0 0.0
    %1631 = vmatpush.msra.mxu0 0.0
    %1632 = vmatpush.msra.mxu0 0.0
    %1633 = vmatpush.msra.mxu0 0.0
    %1634 = vmatpush.msra.mxu0 0.0
    %1635 = vmatpush.msra.mxu0 0.0
    %1636 = vmatpush.msra.mxu0 0.0
    %1637 = vmatpush.msra.mxu0 0.0
    %1638 = vmatpush.msra.mxu0 0.0
    %1639 = vmatpush.msra.mxu0 %v125
    %1640 = vmatpush.msra.mxu0 %v124
    %1641 = vmatpush.msra.mxu0 %v123
    %1642 = vmatpush.msra.mxu0 %v122
    %1643 = vmatmul.f32.gmra.mxu0 %v1625
    %v1644 = vpop.f32.mrf.mxu0
    %v1645 = vadd.f32 0.0, %v1644
    %1646 = vdwg.mxu0
    %1647 = vmatpush.msra.mxu0 0.0
    %1648 = vmatpush.msra.mxu0 0.0
    %1649 = vmatpush.msra.mxu0 0.0
    %1650 = vmatpush.msra.mxu0 0.0
    %1651 = vmatpush.msra.mxu0 0.0
    %1652 = vmatpush.msra.mxu0 0.0
    %1653 = vmatpush.msra.mxu0 0.0
    %1654 = vmatpush.msra.mxu0 0.0
    %1655 = vmatpush.msra.mxu0 0.0
    %1656 = vmatpush.msra.mxu0 0.0
    %1657 = vmatpush.msra.mxu0 0.0
    %1658 = vmatpush.msra.mxu0 0.0
    %1659 = vmatpush.msra.mxu0 %v120
    %1660 = vmatpush.msra.mxu0 %v119
    %1661 = vmatpush.msra.mxu0 %v118
    %1662 = vmatpush.msra.mxu0 %v117
    %1663 = vmatmul.f32.gmra.mxu0 %v1555
    %v1664 = vpop.f32.mrf.mxu0
    %v1665 = vadd.f32 %v1645, %v1664
    %1666 = vdwg.mxu0
    %v1667 = vadd.f32 %v1665, %v126
    %v1668 = vtanh.pop %v1667
    %v1670 = vsel %vm140, %v1668, 0
    %1672 = vmatpush.msra.mxu0 0.0
    %1673 = vmatpush.msra.mxu0 0.0
    %1674 = vmatpush.msra.mxu0 0.0
    %1675 = vmatpush.msra.mxu0 0.0
    %1676 = vmatpush.msra.mxu0 0.0
    %1677 = vmatpush.msra.mxu0 0.0
    %1678 = vmatpush.msra.mxu0 0.0
    %1679 = vmatpush.msra.mxu0 0.0
    %1680 = vmatpush.msra.mxu0 0.0
    %1681 = vmatpush.msra.mxu0 0.0
    %1682 = vmatpush.msra.mxu0 0.0
    %1683 = vmatpush.msra.mxu0 0.0
    %1684 = vmatpush.msra.mxu0 %v130
    %1685 = vmatpush.msra.mxu0 %v129
    %1686 = vmatpush.msra.mxu0 %v128
    %1687 = vmatpush.msra.mxu0 %v127
    %1688 = vmatmul.f32.gmra.mxu0 %v1670
    %v1689 = vpop.f32.mrf.mxu0
    %v1690 = vadd.f32 %v131, %v1689
    %1691 = vdwg.mxu0
    %v1692 = vsel %vm644, %v1690, -inf
    %1693 = vmax.xlane.f32.xlu0 %v1692
    %v1694 = vpop.xlane.xlu0 %1693
    %v1695 = vsub.f32 %v1690, %v1694
    %v1696 = vmul.f32 %v1695, 1.442695
    %v1697 = vpow.pop %v1696
    %v1698 = vsel %vm644, %v1697, 0.0
    %1699 = vadd.xlane.f32.xlu0 %v1698
    %v1700 = vpop.xlane.xlu0 %1699
    %v1701 = vrcp.pop %v1700
    %v1702 = vmul.f32 %v1700, %v1701
    %v1703 = vsub.f32 1.0, %v1702
    %v1704 = vmul.f32 %v1701, %v1703
    %v1705 = vadd.f32 %v1701, %v1704
    %vm1706 = vweird.f32 %v1700
    %vm1707 = vweird.f32 %v1701
    %vm1708 = vmor %vm1706, %vm1707
    %v1709 = vsel %vm1708, %v1701, %v1705
    %v1710 = vand.u32 2147483647, %v1700
    %vm1711 = vcmp.eq.f32.partialorder %v1710, 8.507059e+37
    %v1712 = vand.u32 %v1700, 2147483648
    %v1713 = vor.u32 1.1754944e-38, %v1712
    %v1714 = vsel %vm1711, %v1713, %v1709
    %v1715 = vmul.f32 1.0, %v1714
    %vm1716 = vcmp.eq.f32.partialorder %v1690, %v1694
    %v1717 = vsel %vm1716, %v310, 64
    %v1718 = vsel %vm644, %v1717, 2147483647
    %v1719 = vand.u32 %v1718, 65535
    %v1720 = vshra.s32 %v1718, 16
    %v1721 = vcvt.s32.f32 %v1719
    %v1722 = vcvt.s32.f32 %v1720
    %1723 = vmin.xlane.f32.xlu0 %v1722
    %v1724 = vpop.xlane.xlu0 %1723
    %vm1725 = vcmp.eq.f32.partialorder %v1722, %v1724
    %v1726 = vsel %vm1725, %v1721, inf
    %1727 = vmin.xlane.f32.xlu0 %v1726
    %v1728 = vpop.xlane.xlu0 %1727
    %v1729 = vcvt.f32.s32 %v1728
    %v1730 = vcvt.f32.s32 %v1724
    %v1731 = vshll.u32 %v1730, 16
    %v1732 = vadd.s32 %v1731, %v1729
    %vm1733 = vcmp.eq.s32.totalorder %v310, %v1732
    %v1734 = vsel %vm1733, 1, 0
    %v1735 = vcvt.s32.f32 %v1734
    %1736 = vmatpush.msra.mxu0 0.0
    %1737 = vmatpush.msra.mxu0 0.0
    %1738 = vmatpush.msra.mxu0 0.0
    %1739 = vmatpush.msra.mxu0 0.0
    %1740 = vmatpush.msra.mxu0 0.0
    %1741 = vmatpush.msra.mxu0 0.0
    %1742 = vmatpush.msra.mxu0 0.0
    %1743 = vmatpush.msra.mxu0 0.0
    %1744 = vmatpush.msra.mxu0 0.0
    %1745 = vmatpush.msra.mxu0 0.0
    %1746 = vmatpush.msra.mxu0 0.0
    %1747 = vmatpush.msra.mxu0 0.0
    %1748 = vmatpush.msra.mxu0 %v317
    %1749 = vmatpush.msra.mxu0 %v316
    %1750 = vmatpush.msra.mxu0 %v315
    %1751 = vmatpush.msra.mxu0 %v314
    %1752 = vmatmul.f32.gmra.mxu0 %v1555
    %v1753 = vpop.f32.mrf.mxu0
    %v1754 = vadd.f32 %v318, %v1753
    %1755 = vdwg.mxu0
    %1756 = vmatpush.msra.mxu0 0.0
    %1757 = vmatpush.msra.mxu0 0.0
    %1758 = vmatpush.msra.mxu0 0.0
    %1759 = vmatpush.msra.mxu0 0.0
    %1760 = vmatpush.msra.mxu0 0.0
    %1761 = vmatpush.msra.mxu0 0.0
    %1762 = vmatpush.msra.mxu0 0.0
    %1763 = vmatpush.msra.mxu0 0.0
    %1764 = vmatpush.msra.mxu0 0.0
    %1765 = vmatpush.msra.mxu0 0.0
    %1766 = vmatpush.msra.mxu0 0.0
    %1767 = vmatpush.msra.mxu0 0.0
    %1768 = vmatpush.msra.mxu0 %v346
    %1769 = vmatpush.msra.mxu0 %v345
    %1770 = vmatpush.msra.mxu0 %v344
    %1771 = vmatpush.msra.mxu0 %v343
    %1772 = vmatmul.f32.gmra.mxu0 %v1555
    %v1773 = vpop.f32.mrf.mxu0
    %v1774 = vadd.f32 %v348, %v1773
    %1775 = vdwg.mxu0
    %1776 = vmatpush.msra.mxu0 0.0
    %1777 = vmatpush.msra.mxu0 0.0
    %1778 = vmatpush.msra.mxu0 0.0
    %1779 = vmatpush.msra.mxu0 0.0
    %1780 = vmatpush.msra.mxu0 0.0
    %1781 = vmatpush.msra.mxu0 0.0
    %1782 = vmatpush.msra.mxu0 0.0
    %1783 = vmatpush.msra.mxu0 0.0
    %1784 = vmatpush.msra.mxu0 0.0
    %1785 = vmatpush.msra.mxu0 0.0
    %1786 = vmatpush.msra.mxu0 0.0
    %1787 = vmatpush.msra.mxu0 0.0
    %1788 = vmatpush.msra.mxu0 %v373
    %1789 = vmatpush.msra.mxu0 %v372
    %1790 = vmatpush.msra.mxu0 %v371
    %1791 = vmatpush.msra.mxu0 %v370
    %1792 = vmatmul.f32.gmra.mxu0 %v1555
    %v1793 = vpop.f32.mrf.mxu0
    %v1794 = vadd.f32 %v375, %v1793
    %1795 = vdwg.mxu0
    %v1797 = vsel %vm396, %v1735, 0
    %1799 = vmatpush.msra.mxu0 0.0
    %1800 = vmatpush.msra.mxu0 0.0
    %1801 = vmatpush.msra.mxu0 0.0
    %1802 = vmatpush.msra.mxu0 0.0
    %1803 = vmatpush.msra.mxu0 0.0
    %1804 = vmatpush.msra.mxu0 0.0
    %1805 = vmatpush.msra.mxu0 0.0
    %1806 = vmatpush.msra.mxu0 0.0
    %1807 = vmatpush.msra.mxu0 %v204
    %1808 = vmatpush.msra.mxu0 %v201
    %1809 = vmatpush.msra.mxu0 %v198
    %1810 = vmatpush.msra.mxu0 %v195
    %1811 = vmatpush.msra.mxu0 %v192
    %1812 = vmatpush.msra.mxu0 %v189
    %1813 = vmatpush.msra.mxu0 %v186
    %1814 = vmatpush.msra.mxu0 %v183
    %1815 = vmatmul.f32.gmra.mxu0 %v1797
    %v1816 = vpop.f32.mrf.mxu0
    %v1817 = vadd.f32 %v1754, %v1816
    %1818 = vdwg.mxu0
    %v1819 = vxor.u32 %v1817, 2147483648
    %v1820 = vmul.f32 %v1819, 1.442695
    %v1821 = vpow.pop %v1820
    %v1822 = vadd.f32 %v1821, 1.0
    %v1823 = vrcp.pop %v1822
    %v1824 = vmul.f32 %v1822, %v1823
    %v1825 = vsub.f32 1.0, %v1824
    %v1826 = vmul.f32 %v1823, %v1825
    %v1827 = vadd.f32 %v1823, %v1826
    %vm1828 = vweird.f32 %v1822
    %vm1829 = vweird.f32 %v1823
    %vm1830 = vmor %vm1828, %vm1829
    %v1831 = vsel %vm1830, %v1823, %v1827
    %v1832 = vand.u32 2147483647, %v1822
    %vm1833 = vcmp.eq.f32.partialorder %v1832, 8.507059e+37
    %v1834 = vand.u32 %v1822, 2147483648
    %v1835 = vor.u32 1.1754944e-38, %v1834
    %v1836 = vsel %vm1833, %v1835, %v1831
    %v1837 = vmul.f32 1.0, %v1836
    %1838 = vmatpush.msra.mxu0 0.0
    %1839 = vmatpush.msra.mxu0 0.0
    %1840 = vmatpush.msra.mxu0 0.0
    %1841 = vmatpush.msra.mxu0 0.0
    %1842 = vmatpush.msra.mxu0 0.0
    %1843 = vmatpush.msra.mxu0 0.0
    %1844 = vmatpush.msra.mxu0 0.0
    %1845 = vmatpush.msra.mxu0 0.0
    %1846 = vmatpush.msra.mxu0 %v255
    %1847 = vmatpush.msra.mxu0 %v252
    %1848 = vmatpush.msra.mxu0 %v249
    %1849 = vmatpush.msra.mxu0 %v246
    %1850 = vmatpush.msra.mxu0 %v243
    %1851 = vmatpush.msra.mxu0 %v240
    %1852 = vmatpush.msra.mxu0 %v237
    %1853 = vmatpush.msra.mxu0 %v234
    %1854 = vmatmul.f32.gmra.mxu0 %v1797
    %v1855 = vpop.f32.mrf.mxu0
    %v1856 = vadd.f32 %v1774, %v1855
    %1857 = vdwg.mxu0
    %v1858 = vxor.u32 %v1856, 2147483648
    %v1859 = vmul.f32 %v1858, 1.442695
    %v1860 = vpow.pop %v1859
    %v1861 = vadd.f32 %v1860, 1.0
    %v1862 = vrcp.pop %v1861
    %v1863 = vmul.f32 %v1861, %v1862
    %v1864 = vsub.f32 1.0, %v1863
    %v1865 = vmul.f32 %v1862, %v1864
    %v1866 = vadd.f32 %v1862, %v1865
    %vm1867 = vweird.f32 %v1861
    %vm1868 = vweird.f32 %v1862
    %vm1869 = vmor %vm1867, %vm1868
    %v1870 = vsel %vm1869, %v1862, %v1866
    %v1871 = vand.u32 2147483647, %v1861
    %vm1872 = vcmp.eq.f32.partialorder %v1871, 8.507059e+37
    %v1873 = vand.u32 %v1861, 2147483648
    %v1874 = vor.u32 1.1754944e-38, %v1873
    %v1875 = vsel %vm1872, %v1874, %v1870
    %v1876 = vmul.f32 1.0, %v1875
    %v1877 = vmul.f32 %v1837, %v1794
    %1878 = vmatpush.msra.mxu0 0.0
    %1879 = vmatpush.msra.mxu0 0.0
    %1880 = vmatpush.msra.mxu0 0.0
    %1881 = vmatpush.msra.mxu0 0.0
    %1882 = vmatpush.msra.mxu0 0.0
    %1883 = vmatpush.msra.mxu0 0.0
    %1884 = vmatpush.msra.mxu0 0.0
    %1885 = vmatpush.msra.mxu0 0.0
    %1886 = vmatpush.msra.mxu0 %v306
    %1887 = vmatpush.msra.mxu0 %v303
    %1888 = vmatpush.msra.mxu0 %v300
    %1889 = vmatpush.msra.mxu0 %v297
    %1890 = vmatpush.msra.mxu0 %v294
    %1891 = vmatpush.msra.mxu0 %v291
    %1892 = vmatpush.msra.mxu0 %v288
    %1893 = vmatpush.msra.mxu0 %v285
    %1894 = vmatmul.f32.gmra.mxu0 %v1797
    %v1895 = vpop.f32.mrf.mxu0
    %v1896 = vadd.f32 %v1877, %v1895
    %1897 = vdwg.mxu0
    %v1898 = vtanh.pop %v1896
    %v1899 = vsub.f32 1.0, %v1876
    %v1900 = vmul.f32 %v1899, %v1898
    %v1901 = vmul.f32 %v1876, %v1553
    %v1902 = vadd.f32 %v1900, %v1901
    %v1904 = vsel %vm140, %v1902, 0
    %1906 = vmatpush.msra.mxu0 0.0
    %1907 = vmatpush.msra.mxu0 0.0
    %1908 = vmatpush.msra.mxu0 0.0
    %1909 = vmatpush.msra.mxu0 0.0
    %1910 = vmatpush.msra.mxu0 0.0
    %1911 = vmatpush.msra.mxu0 0.0
    %1912 = vmatpush.msra.mxu0 0.0
    %1913 = vmatpush.msra.mxu0 0.0
    %1914 = vmatpush.msra.mxu0 0.0
    %1915 = vmatpush.msra.mxu0 0.0
    %1916 = vmatpush.msra.mxu0 0.0
    %1917 = vmatpush.msra.mxu0 0.0
    %1918 = vmatpush.msra.mxu0 %v116
    %1919 = vmatpush.msra.mxu0 %v115
    %1920 = vmatpush.msra.mxu0 %v114
    %1921 = vmatpush.msra.mxu0 %v113
    %1922 = vmatmul.f32.gmra.mxu0 %v1904
    %v1923 = vpop.f32.mrf.mxu0
    %v1924 = vadd.f32 0.0, %v1923
    %1925 = vdwg.mxu0
    %v1926 = vsel %vm527, %v1924, -inf
    %1927 = vmax.xlane.f32.xlu0 %v1926
    %v1928 = vpop.xlane.xlu0 %1927
    %v1929 = vsub.f32 %v1924, %v1928
    %v1930 = vmul.f32 %v1929, 1.442695
    %v1931 = vpow.pop %v1930
    %v1932 = vsel %vm527, %v1931, 0.0
    %1933 = vadd.xlane.f32.xlu0 %v1932
    %v1934 = vpop.xlane.xlu0 %1933
    %v1935 = vrcp.pop %v1934
    %v1936 = vmul.f32 %v1934, %v1935
    %v1937 = vsub.f32 1.0, %v1936
    %v1938 = vmul.f32 %v1935, %v1937
    %v1939 = vadd.f32 %v1935, %v1938
    %vm1940 = vweird.f32 %v1934
    %vm1941 = vweird.f32 %v1935
    %vm1942 = vmor %vm1940, %vm1941
    %v1943 = vsel %vm1942, %v1935, %v1939
    %v1944 = vand.u32 2147483647, %v1934
    %vm1945 = vcmp.eq.f32.partialorder %v1944, 8.507059e+37
    %v1946 = vand.u32 %v1934, 2147483648
    %v1947 = vor.u32 1.1754944e-38, %v1946
    %v1948 = vsel %vm1945, %v1947, %v1943
    %v1949 = vmul.f32 %v1931, %v1948
    %v1951 = vsel %vm552, %v1949, 0
    %1953 = vmatpush.msra.mxu0 0.0
    %1954 = vmatpush.msra.mxu0 0.0
    %1955 = vmatpush.msra.mxu0 0.0
    %1956 = vmatpush.msra.mxu0 0.0
    %1957 = vmatpush.msra.mxu0 0.0
    %1958 = vmatpush.msra.mxu0 0.0
    %1959 = vmatpush.msra.mxu0 0.0
    %1960 = vmatpush.msra.mxu0 0.0
    %1961 = vmatpush.msra.mxu0 0.0
    %1962 = vmatpush.msra.mxu0 0.0
    %1963 = vmatpush.msra.mxu0 0.0
    %1964 = vmatpush.msra.mxu0 0.0
    %1965 = vmatpush.msra.mxu0 0.0
    %1966 = vmatpush.msra.mxu0 0.0
    %1967 = vmatpush.msra.mxu0 0.0
    %1968 = vmatpush.msra.mxu0 %v112
    %1969 = vmatmul.f32.gmra.mxu0 %v1951
    %v1970 = vpop.f32.mrf.mxu0
    %v1971 = vadd.f32 0.0, %v1970
    %1972 = vdwg.mxu0
    %v1974 = vsel %vm140, %v1971, 0
    %1976 = vmatpush.msra.mxu0 0.0
    %1977 = vmatpush.msra.mxu0 0.0
    %1978 = vmatpush.msra.mxu0 0.0
    %1979 = vmatpush.msra.mxu0 0.0
    %1980 = vmatpush.msra.mxu0 0.0
    %1981 = vmatpush.msra.mxu0 0.0
    %1982 = vmatpush.msra.mxu0 0.0
    %1983 = vmatpush.msra.mxu0 0.0
    %1984 = vmatpush.msra.mxu0 0.0
    %1985 = vmatpush.msra.mxu0 0.0
    %1986 = vmatpush.msra.mxu0 0.0
    %1987 = vmatpush.msra.mxu0 0.0
    %1988 = vmatpush.msra.mxu0 %v125
    %1989 = vmatpush.msra.mxu0 %v124
    %1990 = vmatpush.msra.mxu0 %v123
    %1991 = vmatpush.msra.mxu0 %v122
    %1992 = vmatmul.f32.gmra.mxu0 %v1974
    %v1993 = vpop.f32.mrf.mxu0
    %v1994 = vadd.f32 0.0, %v1993
    %1995 = vdwg.mxu0
    %1996 = vmatpush.msra.mxu0 0.0
    %1997 = vmatpush.msra.mxu0 0.0
    %1998 = vmatpush.msra.mxu0 0.0
    %1999 = vmatpush.msra.mxu0 0.0
    %2000 = vmatpush.msra.mxu0 0.0
    %2001 = vmatpush.msra.mxu0 0.0
    %2002 = vmatpush.msra.mxu0 0.0
    %2003 = vmatpush.msra.mxu0 0.0
    %2004 = vmatpush.msra.mxu0 0.0
    %2005 = vmatpush.msra.mxu0 0.0
    %2006 = vmatpush.msra.mxu0 0.0
    %2007 = vmatpush.msra.mxu0 0.0
    %2008 = vmatpush.msra.mxu0 %v120
    %2009 = vmatpush.msra.mxu0 %v119
    %2010 = vmatpush.msra.mxu0 %v118
    %2011 = vmatpush.msra.mxu0 %v117
    %2012 = vmatmul.f32.gmra.mxu0 %v1904
    %v2013 = vpop.f32.mrf.mxu0
    %v2014 = vadd.f32 %v1994, %v2013
    %2015 = vdwg.mxu0
    %v2016 = vadd.f32 %v2014, %v126
    %v2017 = vtanh.pop %v2016
    %v2019 = vsel %vm140, %v2017, 0
    %2021 = vmatpush.msra.mxu0 0.0
    %2022 = vmatpush.msra.mxu0 0.0
    %2023 = vmatpush.msra.mxu0 0.0
    %2024 = vmatpush.msra.mxu0 0.0
    %2025 = vmatpush.msra.mxu0 0.0
    %2026 = vmatpush.msra.mxu0 0.0
    %2027 = vmatpush.msra.mxu0 0.0
    %2028 = vmatpush.msra.mxu0 0.0
    %2029 = vmatpush.msra.mxu0 0.0
    %2030 = vmatpush.msra.mxu0 0.0
    %2031 = vmatpush.msra.mxu0 0.0
    %2032 = vmatpush.msra.mxu0 0.0
    %2033 = vmatpush.msra.mxu0 %v130
    %2034 = vmatpush.msra.mxu0 %v129
    %2035 = vmatpush.msra.mxu0 %v128
    %2036 = vmatpush.msra.mxu0 %v127
    %2037 = vmatmul.f32.gmra.mxu0 %v2019
    %v2038 = vpop.f32.mrf.mxu0
    %v2039 = vadd.f32 %v131, %v2038
    %2040 = vdwg.mxu0
    %v2041 = vsel %vm644, %v2039, -inf
    %2042 = vmax.xlane.f32.xlu0 %v2041
    %v2043 = vpop.xlane.xlu0 %2042
    %v2044 = vsub.f32 %v2039, %v2043
    %v2045 = vmul.f32 %v2044, 1.442695
    %v2046 = vpow.pop %v2045
    %v2047 = vsel %vm644, %v2046, 0.0
    %2048 = vadd.xlane.f32.xlu0 %v2047
    %v2049 = vpop.xlane.xlu0 %2048
    %v2050 = vrcp.pop %v2049
    %v2051 = vmul.f32 %v2049, %v2050
    %v2052 = vsub.f32 1.0, %v2051
    %v2053 = vmul.f32 %v2050, %v2052
    %v2054 = vadd.f32 %v2050, %v2053
    %vm2055 = vweird.f32 %v2049
    %vm2056 = vweird.f32 %v2050
    %vm2057 = vmor %vm2055, %vm2056
    %v2058 = vsel %vm2057, %v2050, %v2054
    %v2059 = vand.u32 2147483647, %v2049
    %vm2060 = vcmp.eq.f32.partialorder %v2059, 8.507059e+37
    %v2061 = vand.u32 %v2049, 2147483648
    %v2062 = vor.u32 1.1754944e-38, %v2061
    %v2063 = vsel %vm2060, %v2062, %v2058
    %v2064 = vmul.f32 1.0, %v2063
    %vm2065 = vcmp.eq.f32.partialorder %v2039, %v2043
    %v2066 = vsel %vm2065, %v310, 64
    %v2067 = vsel %vm644, %v2066, 2147483647
    %v2068 = vand.u32 %v2067, 65535
    %v2069 = vshra.s32 %v2067, 16
    %v2070 = vcvt.s32.f32 %v2068
    %v2071 = vcvt.s32.f32 %v2069
    %2072 = vmin.xlane.f32.xlu0 %v2071
    %v2073 = vpop.xlane.xlu0 %2072
    %vm2074 = vcmp.eq.f32.partialorder %v2071, %v2073
    %v2075 = vsel %vm2074, %v2070, inf
    %2076 = vmin.xlane.f32.xlu0 %v2075
    %v2077 = vpop.xlane.xlu0 %2076
    %v2078 = vcvt.f32.s32 %v2077
    %v2079 = vcvt.f32.s32 %v2073
    %v2080 = vshll.u32 %v2079, 16
    %v2081 = vadd.s32 %v2080, %v2078
    %vm2082 = vcmp.eq.s32.totalorder %v310, %v2081
    %v2083 = vsel %vm2082, 1, 0
    %v2084 = vcvt.s32.f32 %v2083
    %2085 = vmatpush.msra.mxu0 0.0
    %2086 = vmatpush.msra.mxu0 0.0
    %2087 = vmatpush.msra.mxu0 0.0
    %2088 = vmatpush.msra.mxu0 0.0
    %2089 = vmatpush.msra.mxu0 0.0
    %2090 = vmatpush.msra.mxu0 0.0
    %2091 = vmatpush.msra.mxu0 0.0
    %2092 = vmatpush.msra.mxu0 0.0
    %2093 = vmatpush.msra.mxu0 0.0
    %2094 = vmatpush.msra.mxu0 0.0
    %2095 = vmatpush.msra.mxu0 0.0
    %2096 = vmatpush.msra.mxu0 0.0
    %2097 = vmatpush.msra.mxu0 %v317
    %2098 = vmatpush.msra.mxu0 %v316
    %2099 = vmatpush.msra.mxu0 %v315
    %2100 = vmatpush.msra.mxu0 %v314
    %2101 = vmatmul.f32.gmra.mxu0 %v1904
    %v2102 = vpop.f32.mrf.mxu0
    %v2103 = vadd.f32 %v318, %v2102
    %2104 = vdwg.mxu0
    %2105 = vmatpush.msra.mxu0 0.0
    %2106 = vmatpush.msra.mxu0 0.0
    %2107 = vmatpush.msra.mxu0 0.0
    %2108 = vmatpush.msra.mxu0 0.0
    %2109 = vmatpush.msra.mxu0 0.0
    %2110 = vmatpush.msra.mxu0 0.0
    %2111 = vmatpush.msra.mxu0 0.0
    %2112 = vmatpush.msra.mxu0 0.0
    %2113 = vmatpush.msra.mxu0 0.0
    %2114 = vmatpush.msra.mxu0 0.0
    %2115 = vmatpush.msra.mxu0 0.0
    %2116 = vmatpush.msra.mxu0 0.0
    %2117 = vmatpush.msra.mxu0 %v346
    %2118 = vmatpush.msra.mxu0 %v345
    %2119 = vmatpush.msra.mxu0 %v344
    %2120 = vmatpush.msra.mxu0 %v343
    %2121 = vmatmul.f32.gmra.mxu0 %v1904
    %v2122 = vpop.f32.mrf.mxu0
    %v2123 = vadd.f32 %v348, %v2122
    %2124 = vdwg.mxu0
    %2125 = vmatpush.msra.mxu0 0.0
    %2126 = vmatpush.msra.mxu0 0.0
    %2127 = vmatpush.msra.mxu0 0.0
    %2128 = vmatpush.msra.mxu0 0.0
    %2129 = vmatpush.msra.mxu0 0.0
    %2130 = vmatpush.msra.mxu0 0.0
    %2131 = vmatpush.msra.mxu0 0.0
    %2132 = vmatpush.msra.mxu0 0.0
    %2133 = vmatpush.msra.mxu0 0.0
    %2134 = vmatpush.msra.mxu0 0.0
    %2135 = vmatpush.msra.mxu0 0.0
    %2136 = vmatpush.msra.mxu0 0.0
    %2137 = vmatpush.msra.mxu0 %v373
    %2138 = vmatpush.msra.mxu0 %v372
    %2139 = vmatpush.msra.mxu0 %v371
    %2140 = vmatpush.msra.mxu0 %v370
    %2141 = vmatmul.f32.gmra.mxu0 %v1904
    %v2142 = vpop.f32.mrf.mxu0
    %v2143 = vadd.f32 %v375, %v2142
    %2144 = vdwg.mxu0
    %v2146 = vsel %vm396, %v2084, 0
    %2148 = vmatpush.msra.mxu0 0.0
    %2149 = vmatpush.msra.mxu0 0.0
    %2150 = vmatpush.msra.mxu0 0.0
    %2151 = vmatpush.msra.mxu0 0.0
    %2152 = vmatpush.msra.mxu0 0.0
    %2153 = vmatpush.msra.mxu0 0.0
    %2154 = vmatpush.msra.mxu0 0.0
    %2155 = vmatpush.msra.mxu0 0.0
    %2156 = vmatpush.msra.mxu0 %v204
    %2157 = vmatpush.msra.mxu0 %v201
    %2158 = vmatpush.msra.mxu0 %v198
    %2159 = vmatpush.msra.mxu0 %v195
    %2160 = vmatpush.msra.mxu0 %v192
    %2161 = vmatpush.msra.mxu0 %v189
    %2162 = vmatpush.msra.mxu0 %v186
    %2163 = vmatpush.msra.mxu0 %v183
    %2164 = vmatmul.f32.gmra.mxu0 %v2146
    %v2165 = vpop.f32.mrf.mxu0
    %v2166 = vadd.f32 %v2103, %v2165
    %2167 = vdwg.mxu0
    %v2168 = vxor.u32 %v2166, 2147483648
    %v2169 = vmul.f32 %v2168, 1.442695
    %v2170 = vpow.pop %v2169
    %v2171 = vadd.f32 %v2170, 1.0
    %v2172 = vrcp.pop %v2171
    %v2173 = vmul.f32 %v2171, %v2172
    %v2174 = vsub.f32 1.0, %v2173
    %v2175 = vmul.f32 %v2172, %v2174
    %v2176 = vadd.f32 %v2172, %v2175
    %vm2177 = vweird.f32 %v2171
    %vm2178 = vweird.f32 %v2172
    %vm2179 = vmor %vm2177, %vm2178
    %v2180 = vsel %vm2179, %v2172, %v2176
    %v2181 = vand.u32 2147483647, %v2171
    %vm2182 = vcmp.eq.f32.partialorder %v2181, 8.507059e+37
    %v2183 = vand.u32 %v2171, 2147483648
    %v2184 = vor.u32 1.1754944e-38, %v2183
    %v2185 = vsel %vm2182, %v2184, %v2180
    %v2186 = vmul.f32 1.0, %v2185
    %2187 = vmatpush.msra.mxu0 0.0
    %2188 = vmatpush.msra.mxu0 0.0
    %2189 = vmatpush.msra.mxu0 0.0
    %2190 = vmatpush.msra.mxu0 0.0
    %2191 = vmatpush.msra.mxu0 0.0
    %2192 = vmatpush.msra.mxu0 0.0
    %2193 = vmatpush.msra.mxu0 0.0
    %2194 = vmatpush.msra.mxu0 0.0
    %2195 = vmatpush.msra.mxu0 %v255
    %2196 = vmatpush.msra.mxu0 %v252
    %2197 = vmatpush.msra.mxu0 %v249
    %2198 = vmatpush.msra.mxu0 %v246
    %2199 = vmatpush.msra.mxu0 %v243
    %2200 = vmatpush.msra.mxu0 %v240
    %2201 = vmatpush.msra.mxu0 %v237
    %2202 = vmatpush.msra.mxu0 %v234
    %2203 = vmatmul.f32.gmra.mxu0 %v2146
    %v2204 = vpop.f32.mrf.mxu0
    %v2205 = vadd.f32 %v2123, %v2204
    %2206 = vdwg.mxu0
    %v2207 = vxor.u32 %v2205, 2147483648
    %v2208 = vmul.f32 %v2207, 1.442695
    %v2209 = vpow.pop %v2208
    %v2210 = vadd.f32 %v2209, 1.0
    %v2211 = vrcp.pop %v2210
    %v2212 = vmul.f32 %v2210, %v2211
    %v2213 = vsub.f32 1.0, %v2212
    %v2214 = vmul.f32 %v2211, %v2213
    %v2215 = vadd.f32 %v2211, %v2214
    %vm2216 = vweird.f32 %v2210
    %vm2217 = vweird.f32 %v2211
    %vm2218 = vmor %vm2216, %vm2217
    %v2219 = vsel %vm2218, %v2211, %v2215
    %v2220 = vand.u32 2147483647, %v2210
    %vm2221 = vcmp.eq.f32.partialorder %v2220, 8.507059e+37
    %v2222 = vand.u32 %v2210, 2147483648
    %v2223 = vor.u32 1.1754944e-38, %v2222
    %v2224 = vsel %vm2221, %v2223, %v2219
    %v2225 = vmul.f32 1.0, %v2224
    %v2226 = vmul.f32 %v2186, %v2143
    %2227 = vmatpush.msra.mxu0 0.0
    %2228 = vmatpush.msra.mxu0 0.0
    %2229 = vmatpush.msra.mxu0 0.0
    %2230 = vmatpush.msra.mxu0 0.0
    %2231 = vmatpush.msra.mxu0 0.0
    %2232 = vmatpush.msra.mxu0 0.0
    %2233 = vmatpush.msra.mxu0 0.0
    %2234 = vmatpush.msra.mxu0 0.0
    %2235 = vmatpush.msra.mxu0 %v306
    %2236 = vmatpush.msra.mxu0 %v303
    %2237 = vmatpush.msra.mxu0 %v300
    %2238 = vmatpush.msra.mxu0 %v297
    %2239 = vmatpush.msra.mxu0 %v294
    %2240 = vmatpush.msra.mxu0 %v291
    %2241 = vmatpush.msra.mxu0 %v288
    %2242 = vmatpush.msra.mxu0 %v285
    %2243 = vmatmul.f32.gmra.mxu0 %v2146
    %v2244 = vpop.f32.mrf.mxu0
    %v2245 = vadd.f32 %v2226, %v2244
    %2246 = vdwg.mxu0
    %v2247 = vtanh.pop %v2245
    %v2248 = vsub.f32 1.0, %v2225
    %v2249 = vmul.f32 %v2248, %v2247
    %v2250 = vmul.f32 %v2225, %v1902
    %v2251 = vadd.f32 %v2249, %v2250
    %v2253 = vsel %vm140, %v2251, 0
    %2255 = vmatpush.msra.mxu0 0.0
    %2256 = vmatpush.msra.mxu0 0.0
    %2257 = vmatpush.msra.mxu0 0.0
    %2258 = vmatpush.msra.mxu0 0.0
    %2259 = vmatpush.msra.mxu0 0.0
    %2260 = vmatpush.msra.mxu0 0.0
    %2261 = vmatpush.msra.mxu0 0.0
    %2262 = vmatpush.msra.mxu0 0.0
    %2263 = vmatpush.msra.mxu0 0.0
    %2264 = vmatpush.msra.mxu0 0.0
    %2265 = vmatpush.msra.mxu0 0.0
    %2266 = vmatpush.msra.mxu0 0.0
    %2267 = vmatpush.msra.mxu0 %v116
    %2268 = vmatpush.msra.mxu0 %v115
    %2269 = vmatpush.msra.mxu0 %v114
    %2270 = vmatpush.msra.mxu0 %v113
    %2271 = vmatmul.f32.gmra.mxu0 %v2253
    %v2272 = vpop.f32.mrf.mxu0
    %v2273 = vadd.f32 0.0, %v2272
    %2274 = vdwg.mxu0
    %v2275 = vsel %vm527, %v2273, -inf
    %2276 = vmax.xlane.f32.xlu0 %v2275
    %v2277 = vpop.xlane.xlu0 %2276
    %v2278 = vsub.f32 %v2273, %v2277
    %v2279 = vmul.f32 %v2278, 1.442695
    %v2280 = vpow.pop %v2279
    %v2281 = vsel %vm527, %v2280, 0.0
    %2282 = vadd.xlane.f32.xlu0 %v2281
    %v2283 = vpop.xlane.xlu0 %2282
    %v2284 = vrcp.pop %v2283
    %v2285 = vmul.f32 %v2283, %v2284
    %v2286 = vsub.f32 1.0, %v2285
    %v2287 = vmul.f32 %v2284, %v2286
    %v2288 = vadd.f32 %v2284, %v2287
    %vm2289 = vweird.f32 %v2283
    %vm2290 = vweird.f32 %v2284
    %vm2291 = vmor %vm2289, %vm2290
    %v2292 = vsel %vm2291, %v2284, %v2288
    %v2293 = vand.u32 2147483647, %v2283
    %vm2294 = vcmp.eq.f32.partialorder %v2293, 8.507059e+37
    %v2295 = vand.u32 %v2283, 2147483648
    %v2296 = vor.u32 1.1754944e-38, %v2295
    %v2297 = vsel %vm2294, %v2296, %v2292
    %v2298 = vmul.f32 %v2280, %v2297
    %v2300 = vsel %vm552, %v2298, 0
    %2302 = vmatpush.msra.mxu0 0.0
    %2303 = vmatpush.msra.mxu0 0.0
    %2304 = vmatpush.msra.mxu0 0.0
    %2305 = vmatpush.msra.mxu0 0.0
    %2306 = vmatpush.msra.mxu0 0.0
    %2307 = vmatpush.msra.mxu0 0.0
    %2308 = vmatpush.msra.mxu0 0.0
    %2309 = vmatpush.msra.mxu0 0.0
    %2310 = vmatpush.msra.mxu0 0.0
    %2311 = vmatpush.msra.mxu0 0.0
    %2312 = vmatpush.msra.mxu0 0.0
    %2313 = vmatpush.msra.mxu0 0.0
    %2314 = vmatpush.msra.mxu0 0.0
    %2315 = vmatpush.msra.mxu0 0.0
    %2316 = vmatpush.msra.mxu0 0.0
    %2317 = vmatpush.msra.mxu0 %v112
    %2318 = vmatmul.f32.gmra.mxu0 %v2300
    %v2319 = vpop.f32.mrf.mxu0
    %v2320 = vadd.f32 0.0, %v2319
    %2321 = vdwg.mxu0
    %v2323 = vsel %vm140, %v2320, 0
    %2325 = vmatpush.msra.mxu0 0.0
    %2326 = vmatpush.msra.mxu0 0.0
    %2327 = vmatpush.msra.mxu0 0.0
    %2328 = vmatpush.msra.mxu0 0.0
    %2329 = vmatpush.msra.mxu0 0.0
    %2330 = vmatpush.msra.mxu0 0.0
    %2331 = vmatpush.msra.mxu0 0.0
    %2332 = vmatpush.msra.mxu0 0.0
    %2333 = vmatpush.msra.mxu0 0.0
    %2334 = vmatpush.msra.mxu0 0.0
    %2335 = vmatpush.msra.mxu0 0.0
    %2336 = vmatpush.msra.mxu0 0.0
    %2337 = vmatpush.msra.mxu0 %v125
    %2338 = vmatpush.msra.mxu0 %v124
    %2339 = vmatpush.msra.mxu0 %v123
    %2340 = vmatpush.msra.mxu0 %v122
    %2341 = vmatmul.f32.gmra.mxu0 %v2323
    %v2342 = vpop.f32.mrf.mxu0
    %v2343 = vadd.f32 0.0, %v2342
    %2344 = vdwg.mxu0
    %2345 = vmatpush.msra.mxu0 0.0
    %2346 = vmatpush.msra.mxu0 0.0
    %2347 = vmatpush.msra.mxu0 0.0
    %2348 = vmatpush.msra.mxu0 0.0
    %2349 = vmatpush.msra.mxu0 0.0
    %2350 = vmatpush.msra.mxu0 0.0
    %2351 = vmatpush.msra.mxu0 0.0
    %2352 = vmatpush.msra.mxu0 0.0
    %2353 = vmatpush.msra.mxu0 0.0
    %2354 = vmatpush.msra.mxu0 0.0
    %2355 = vmatpush.msra.mxu0 0.0
    %2356 = vmatpush.msra.mxu0 0.0
    %2357 = vmatpush.msra.mxu0 %v120
    %2358 = vmatpush.msra.mxu0 %v119
    %2359 = vmatpush.msra.mxu0 %v118
    %2360 = vmatpush.msra.mxu0 %v117
    %2361 = vmatmul.f32.gmra.mxu0 %v2253
    %v2362 = vpop.f32.mrf.mxu0
    %v2363 = vadd.f32 %v2343, %v2362
    %2364 = vdwg.mxu0
    %v2365 = vadd.f32 %v2363, %v126
    %v2366 = vtanh.pop %v2365
    %v2368 = vsel %vm140, %v2366, 0
    %2370 = vmatpush.msra.mxu0 0.0
    %2371 = vmatpush.msra.mxu0 0.0
    %2372 = vmatpush.msra.mxu0 0.0
    %2373 = vmatpush.msra.mxu0 0.0
    %2374 = vmatpush.msra.mxu0 0.0
    %2375 = vmatpush.msra.mxu0 0.0
    %2376 = vmatpush.msra.mxu0 0.0
    %2377 = vmatpush.msra.mxu0 0.0
    %2378 = vmatpush.msra.mxu0 0.0
    %2379 = vmatpush.msra.mxu0 0.0
    %2380 = vmatpush.msra.mxu0 0.0
    %2381 = vmatpush.msra.mxu0 0.0
    %2382 = vmatpush.msra.mxu0 %v130
    %2383 = vmatpush.msra.mxu0 %v129
    %2384 = vmatpush.msra.mxu0 %v128
    %2385 = vmatpush.msra.mxu0 %v127
    %2386 = vmatmul.f32.gmra.mxu0 %v2368
    %v2387 = vpop.f32.mrf.mxu0
    %v2388 = vadd.f32 %v131, %v2387
    %2389 = vdwg.mxu0
    %v2390 = vsel %vm644, %v2388, -inf
    %2391 = vmax.xlane.f32.xlu0 %v2390
    %v2392 = vpop.xlane.xlu0 %2391
    %v2393 = vsub.f32 %v2388, %v2392
    %v2394 = vmul.f32 %v2393, 1.442695
    %v2395 = vpow.pop %v2394
    %v2396 = vsel %vm644, %v2395, 0.0
    %2397 = vadd.xlane.f32.xlu0 %v2396
    %v2398 = vpop.xlane.xlu0 %2397
    %v2399 = vrcp.pop %v2398
    %v2400 = vmul.f32 %v2398, %v2399
    %v2401 = vsub.f32 1.0, %v2400
    %v2402 = vmul.f32 %v2399, %v2401
    %v2403 = vadd.f32 %v2399, %v2402
    %vm2404 = vweird.f32 %v2398
    %vm2405 = vweird.f32 %v2399
    %vm2406 = vmor %vm2404, %vm2405
    %v2407 = vsel %vm2406, %v2399, %v2403
    %v2408 = vand.u32 2147483647, %v2398
    %vm2409 = vcmp.eq.f32.partialorder %v2408, 8.507059e+37
    %v2410 = vand.u32 %v2398, 2147483648
    %v2411 = vor.u32 1.1754944e-38, %v2410
    %v2412 = vsel %vm2409, %v2411, %v2407
    %v2413 = vmul.f32 1.0, %v2412
    %vm2414 = vcmp.eq.f32.partialorder %v2388, %v2392
    %v2415 = vsel %vm2414, %v310, 64
    %v2416 = vsel %vm644, %v2415, 2147483647
    %v2417 = vand.u32 %v2416, 65535
    %v2418 = vshra.s32 %v2416, 16
    %v2419 = vcvt.s32.f32 %v2417
    %v2420 = vcvt.s32.f32 %v2418
    %2421 = vmin.xlane.f32.xlu0 %v2420
    %v2422 = vpop.xlane.xlu0 %2421
    %vm2423 = vcmp.eq.f32.partialorder %v2420, %v2422
    %v2424 = vsel %vm2423, %v2419, inf
    %2425 = vmin.xlane.f32.xlu0 %v2424
    %v2426 = vpop.xlane.xlu0 %2425
    %v2427 = vcvt.f32.s32 %v2426
    %v2428 = vcvt.f32.s32 %v2422
    %v2429 = vshll.u32 %v2428, 16
    %v2430 = vadd.s32 %v2429, %v2427
    %vm2431 = vcmask 7168
    %v2432 = vsel %vm2431, %v685, %v1034
    %vm2433 = vcmask 15360
    %v2434 = vsel %vm2433, %v2432, %v1383
    %vm2435 = vcmask 23552
    %v2436 = vsel %vm2435, %v2434, %v1732
    %vm2437 = vcmask 31744
    %v2438 = vsel %vm2437, %v2436, %v2081
    %vm2439 = vcmask 39936
    %v2440 = vsel %vm2439, %v2438, %v2430
    %vm2441 = vcmask 40960
    %2442 = vst.msk [vmem:[#allocation10] sm:$0x1] %vm2441, %v2440
    %v2443 = vsel %vm2431, %v668, %v1017
    %v2444 = vsel %vm2433, %v2443, %v1366
    %v2445 = vsel %vm2435, %v2444, %v1715
    %v2446 = vsel %vm2437, %v2445, %v2064
    %v2447 = vsel %vm2439, %v2446, %v2413
    %2448 = vst.msk [vmem:[#allocation11] sm:$0x1] %vm2441, %v2447
    // Predicated region
    $region66: #{greedy_search_decoder.3} parent=1 // pred_check
      _
    $region67: #{greedy_search_decoder.3} parent=1 // pred_check_branch
      %2450 = sbr.rel (0) target = $region69
    $region68: #{greedy_search_decoder.3} parent=1 // pred_region
      %2452 = vsyncadd [#allocation4], 0
      %s2454 = sshll.u32 [#allocation10], 4
      %s2455 = int_to_ptr.vmem [resolvable:$true] %s2454
      %s2456 = sshll.u32 %s12, 4
      %s2457 = int_to_ptr.hbm [resolvable:$true] %s2456
      %2459 = dma.vmem_to_hbm [thread:$0]  %s2455, 16, %s2457, [#allocation4]
    $region69: #{greedy_search_decoder.3} parent=1 // pred_fallthru
      _
    // Predicated region
    $region70: #{greedy_search_decoder.3} parent=1 // pred_check
      _
    $region71: #{greedy_search_decoder.3} parent=1 // pred_check_branch
      %2461 = sbr.rel (0) target = $region73
    $region72: #{greedy_search_decoder.3} parent=1 // pred_region
      %2463 = vsyncadd [#allocation12], 0
      %s2465 = sshll.u32 [#allocation11], 4
      %s2466 = int_to_ptr.vmem [resolvable:$true] %s2465
      %s2467 = sshll.u32 %s13, 4
      %s2468 = int_to_ptr.hbm [resolvable:$true] %s2467
      %2470 = dma.vmem_to_hbm [thread:$0]  %s2466, 16, %s2468, [#allocation12]
    $region73: #{greedy_search_decoder.3} parent=1 // pred_fallthru
      _
    // Predicated region
    $region74: #{greedy_search_decoder.3} parent=1 // pred_check
      _
    $region75: #{greedy_search_decoder.3} parent=1 // pred_check_branch
      %2472 = sbr.rel (0) target = $region77
    $region76: #{greedy_search_decoder.3} parent=1 // pred_region
      %2474 = dma.done [#allocation4], 16
    $region77: #{greedy_search_decoder.3} parent=1 // pred_fallthru
      _
    // Predicated region
    $region78: #{greedy_search_decoder.3} parent=1 // pred_check
      _
    $region79: #{greedy_search_decoder.3} parent=1 // pred_check_branch
      %2476 = sbr.rel (0) target = $region81
    $region80: #{greedy_search_decoder.3} parent=1 // pred_region
      %2478 = dma.done [#allocation12], 16
    $region81: #{greedy_search_decoder.3} parent=1 // pred_fallthru
      _
    %2479 = vsyncpa [#allocation3], 1
    %2480 = vsyncpa [#allocation6], 1
    %2481 = vsyncpa [#allocation9], 1
    %2482 = vsyncpa [#allocation4], 1
    %2483 = vsyncpa [#allocation12], 1

// kernel: greedy_search_decoder.2
$region0: #{greedy_search_decoder.2}
  #allocation0 [shape = 'u32[]', space=smem, size = 0x4, offset = 0x4, fixed_abs, tag = 'smem constant byte address 0x4 - core index']
  #allocation1 [shape = 'u32[72,128]{1,0:T(1,128)}', space=vmem, size = 0x9000, scoped, tag = 'internal scratch']
  %s0 = inlined_call_operand.vmem [shape: f32[8,32], index: 0, kind: input, shape index: {}]
  %s1 = inlined_call_operand.hbm [shape: f32[3,32,32], index: 1, kind: input, shape index: {}]
  %s2 = inlined_call_operand.hbm [shape: f32[3,32,32], index: 2, kind: input, shape index: {}]
  %s3 = inlined_call_operand.vmem [shape: f32[3,1,32], index: 3, kind: input, shape index: {}]
  %s4 = inlined_call_operand.vmem [shape: f32[3,1,32], index: 4, kind: input, shape index: {}]
  %s5 = inlined_call_operand.hbm [shape: f32[3,32,32], index: 5, kind: input, shape index: {}]
  %s6 = inlined_call_operand.hbm [shape: f32[3,32,32], index: 6, kind: input, shape index: {}]
  %s7 = inlined_call_operand.hbm [shape: f32[3,1,32], index: 7, kind: input, shape index: {}]
  %s8 = inlined_call_operand.hbm [shape: f32[3,1,32], index: 8, kind: input, shape index: {}]
  %s9 = inlined_call_operand.vmem [shape: f32[8,32], index: 9, kind: output, shape index: {0}]
  %s10 = inlined_call_operand.vmem [shape: f32[1,32], index: 10, kind: output, shape index: {1}]
  %11 = xla_tuple %s9, %s10
  %s12 = sld [smem:[#allocation0]]
  $region78: #{greedy_search_decoder.2} parent=0
    _
  %s14 = ssub.s32 1, %s12
  %s15 = scalar_select 0, %s14, %s12
  $region1: #{greedy_search_decoder.2} parent=0
    #allocation2 [shape = 'u8[49152]{0}', space=vmem, size = 0xc000, scoped, tag = 'input window, operand 1, single buffered']
    #allocation3 [shape = 's32[1]{0}', space=sflag, size = 0x4, scoped, tag = 'scoped memory for greedy_search_decoder.2']
    #allocation4 [shape = 'u8[49152]{0}', space=vmem, size = 0xc000, scoped, tag = 'input window, operand 2, single buffered']
    #allocation5 [shape = 's32[1]{0}', space=sflag, size = 0x4, scoped, tag = 'scoped memory for greedy_search_decoder.2']
    #allocation6 [shape = 'u8[49152]{0}', space=vmem, size = 0xc000, scoped, tag = 'input window, operand 5, single buffered']
    #allocation7 [shape = 'u8[49152]{0}', space=vmem, size = 0xc000, scoped, tag = 'input window, operand 6, single buffered']
    #allocation8 [shape = 's32[1]{0}', space=sflag, size = 0x4, scoped, tag = 'scoped memory for greedy_search_decoder.2']
    #allocation9 [shape = 'u8[1536]{0}', space=vmem, size = 0x800, scoped, tag = 'input window, operand 7, single buffered']
    #allocation10 [shape = 'u8[1536]{0}', space=vmem, size = 0x800, scoped, tag = 'input window, operand 8, single buffered']
    #allocation11 [shape = 's32[1]{0}', space=sflag, size = 0x4, scoped, tag = 'scoped memory for greedy_search_decoder.2']
    %16 = vsyncpa [#allocation3], 0
    %17 = vsyncpa [#allocation5], 0
    %18 = vsyncpa [#allocation8], 0
    %19 = vsyncpa [#allocation11], 0
    // Predicated region
    $region2: #{greedy_search_decoder.2} parent=1 // pred_check
      _
    $region3: #{greedy_search_decoder.2} parent=1 // pred_check_branch
      %21 = sbr.rel (0) target = $region5
    $region4: #{greedy_search_decoder.2} parent=1 // pred_region
      _
    $region5: #{greedy_search_decoder.2} parent=1 // pred_fallthru
      _
    // Predicated region
    $region6: #{greedy_search_decoder.2} parent=1 // pred_check
      _
    $region7: #{greedy_search_decoder.2} parent=1 // pred_check_branch
      %23 = sbr.rel (0) target = $region9
    $region8: #{greedy_search_decoder.2} parent=1 // pred_region
      %25 = vsyncadd [#allocation3], 0
      %s26 = sshll.u32 %s1, 4
      %s27 = int_to_ptr.hbm [resolvable:$true] %s26
      %s28 = sshll.u32 [#allocation2], 4
      %s29 = int_to_ptr.vmem [resolvable:$true] %s28
      %34 = dma.hbm_to_vmem [thread:$0]  %s27, 1536, %s29, [#allocation3], 128, 128, 8
    $region9: #{greedy_search_decoder.2} parent=1 // pred_fallthru
      _
    // Predicated region
    $region10: #{greedy_search_decoder.2} parent=1 // pred_check
      _
    $region11: #{greedy_search_decoder.2} parent=1 // pred_check_branch
      %36 = sbr.rel (0) target = $region13
    $region12: #{greedy_search_decoder.2} parent=1 // pred_region
      %38 = vsyncadd [#allocation5], 0
      %s39 = sshll.u32 %s2, 4
      %s40 = int_to_ptr.hbm [resolvable:$true] %s39
      %s41 = sshll.u32 [#allocation4], 4
      %s42 = int_to_ptr.vmem [resolvable:$true] %s41
      %47 = dma.hbm_to_vmem [thread:$0]  %s40, 1536, %s42, [#allocation5], 128, 128, 8
    $region13: #{greedy_search_decoder.2} parent=1 // pred_fallthru
      _
    // Predicated region
    $region14: #{greedy_search_decoder.2} parent=1 // pred_check
      _
    $region15: #{greedy_search_decoder.2} parent=1 // pred_check_branch
      %49 = sbr.rel (0) target = $region17
    $region16: #{greedy_search_decoder.2} parent=1 // pred_region
      _
    $region17: #{greedy_search_decoder.2} parent=1 // pred_fallthru
      _
    // Predicated region
    $region18: #{greedy_search_decoder.2} parent=1 // pred_check
      _
    $region19: #{greedy_search_decoder.2} parent=1 // pred_check_branch
      %51 = sbr.rel (0) target = $region21
    $region20: #{greedy_search_decoder.2} parent=1 // pred_region
      _
    $region21: #{greedy_search_decoder.2} parent=1 // pred_fallthru
      _
    // Predicated region
    $region22: #{greedy_search_decoder.2} parent=1 // pred_check
      _
    $region23: #{greedy_search_decoder.2} parent=1 // pred_check_branch
      %53 = sbr.rel (0) target = $region25
    $region24: #{greedy_search_decoder.2} parent=1 // pred_region
      %55 = vsyncadd [#allocation5], 0
      %s56 = sshll.u32 %s5, 4
      %s57 = int_to_ptr.hbm [resolvable:$true] %s56
      %s58 = sshll.u32 [#allocation6], 4
      %s59 = int_to_ptr.vmem [resolvable:$true] %s58
      %64 = dma.hbm_to_vmem [thread:$0]  %s57, 1536, %s59, [#allocation5], 128, 128, 8
    $region25: #{greedy_search_decoder.2} parent=1 // pred_fallthru
      _
    // Predicated region
    $region26: #{greedy_search_decoder.2} parent=1 // pred_check
      _
    $region27: #{greedy_search_decoder.2} parent=1 // pred_check_branch
      %66 = sbr.rel (0) target = $region29
    $region28: #{greedy_search_decoder.2} parent=1 // pred_region
      %68 = vsyncadd [#allocation8], 0
      %s69 = sshll.u32 %s6, 4
      %s70 = int_to_ptr.hbm [resolvable:$true] %s69
      %s71 = sshll.u32 [#allocation7], 4
      %s72 = int_to_ptr.vmem [resolvable:$true] %s71
      %77 = dma.hbm_to_vmem [thread:$0]  %s70, 1536, %s72, [#allocation8], 128, 128, 8
    $region29: #{greedy_search_decoder.2} parent=1 // pred_fallthru
      _
    // Predicated region
    $region30: #{greedy_search_decoder.2} parent=1 // pred_check
      _
    $region31: #{greedy_search_decoder.2} parent=1 // pred_check_branch
      %79 = sbr.rel (0) target = $region33
    $region32: #{greedy_search_decoder.2} parent=1 // pred_region
      %81 = vsyncadd [#allocation8], 0
      %s82 = sshll.u32 %s7, 4
      %s83 = int_to_ptr.hbm [resolvable:$true] %s82
      %s84 = sshll.u32 [#allocation9], 4
      %s85 = int_to_ptr.vmem [resolvable:$true] %s84
      %90 = dma.hbm_to_vmem [thread:$0]  %s83, 48, %s85, [#allocation8], 16, 16, 1
    $region33: #{greedy_search_decoder.2} parent=1 // pred_fallthru
      _
    // Predicated region
    $region34: #{greedy_search_decoder.2} parent=1 // pred_check
      _
    $region35: #{greedy_search_decoder.2} parent=1 // pred_check_branch
      %92 = sbr.rel (0) target = $region37
    $region36: #{greedy_search_decoder.2} parent=1 // pred_region
      %94 = vsyncadd [#allocation11], 0
      %s95 = sshll.u32 %s8, 4
      %s96 = int_to_ptr.hbm [resolvable:$true] %s95
      %s97 = sshll.u32 [#allocation10], 4
      %s98 = int_to_ptr.vmem [resolvable:$true] %s97
      %103 = dma.hbm_to_vmem [thread:$0]  %s96, 48, %s98, [#allocation11], 16, 16, 1
    $region37: #{greedy_search_decoder.2} parent=1 // pred_fallthru
      _
    // Predicated region
    $region38: #{greedy_search_decoder.2} parent=1 // pred_check
      _
    $region39: #{greedy_search_decoder.2} parent=1 // pred_check_branch
      %105 = sbr.rel (0) target = $region41
    $region40: #{greedy_search_decoder.2} parent=1 // pred_region
      %107 = dma.done [#allocation3], 1536
    $region41: #{greedy_search_decoder.2} parent=1 // pred_fallthru
      _
    // Predicated region
    $region42: #{greedy_search_decoder.2} parent=1 // pred_check
      _
    $region43: #{greedy_search_decoder.2} parent=1 // pred_check_branch
      %109 = sbr.rel (0) target = $region45
    $region44: #{greedy_search_decoder.2} parent=1 // pred_region
      %111 = dma.done [#allocation5], 1536
    $region45: #{greedy_search_decoder.2} parent=1 // pred_fallthru
      _
    // Predicated region
    $region46: #{greedy_search_decoder.2} parent=1 // pred_check
      _
    $region47: #{greedy_search_decoder.2} parent=1 // pred_check_branch
      %113 = sbr.rel (0) target = $region49
    $region48: #{greedy_search_decoder.2} parent=1 // pred_region
      %115 = dma.done [#allocation5], 1536
    $region49: #{greedy_search_decoder.2} parent=1 // pred_fallthru
      _
    // Predicated region
    $region50: #{greedy_search_decoder.2} parent=1 // pred_check
      _
    $region51: #{greedy_search_decoder.2} parent=1 // pred_check_branch
      %117 = sbr.rel (0) target = $region53
    $region52: #{greedy_search_decoder.2} parent=1 // pred_region
      %119 = dma.done [#allocation8], 1536
    $region53: #{greedy_search_decoder.2} parent=1 // pred_fallthru
      _
    // Predicated region
    $region54: #{greedy_search_decoder.2} parent=1 // pred_check
      _
    $region55: #{greedy_search_decoder.2} parent=1 // pred_check_branch
      %121 = sbr.rel (0) target = $region57
    $region56: #{greedy_search_decoder.2} parent=1 // pred_region
      %123 = dma.done [#allocation8], 48
    $region57: #{greedy_search_decoder.2} parent=1 // pred_fallthru
      _
    // Predicated region
    $region58: #{greedy_search_decoder.2} parent=1 // pred_check
      _
    $region59: #{greedy_search_decoder.2} parent=1 // pred_check_branch
      %125 = sbr.rel (0) target = $region61
    $region60: #{greedy_search_decoder.2} parent=1 // pred_region
      %127 = dma.done [#allocation11], 48
    $region61: #{greedy_search_decoder.2} parent=1 // pred_fallthru
      _
    %v128 = vld [vmem:[%s0] sm:$0xff]
    %v129 = vld [vmem:[#allocation2] sm:$0xff]
    %v130 = vld [vmem:[#allocation2 + $0x8] sm:$0xff]
    %v131 = vld [vmem:[#allocation2 + $0x10] sm:$0xff]
    %v132 = vld [vmem:[#allocation2 + $0x18] sm:$0xff]
    %v133 = vld [vmem:[%s3] sm:$0x1]
    %v135 = vperm.slane %v133, 0
    %vm137 = vcmask 261120
    %v139 = vsel %vm137, %v128, 0
    %141 = vmatpush.msra.mxu0 0.0
    %142 = vmatpush.msra.mxu0 0.0
    %143 = vmatpush.msra.mxu0 0.0
    %144 = vmatpush.msra.mxu0 0.0
    %145 = vmatpush.msra.mxu0 0.0
    %146 = vmatpush.msra.mxu0 0.0
    %147 = vmatpush.msra.mxu0 0.0
    %148 = vmatpush.msra.mxu0 0.0
    %149 = vmatpush.msra.mxu0 0.0
    %150 = vmatpush.msra.mxu0 0.0
    %151 = vmatpush.msra.mxu0 0.0
    %152 = vmatpush.msra.mxu0 0.0
    %153 = vmatpush.msra.mxu0 %v132
    %154 = vmatpush.msra.mxu0 %v131
    %155 = vmatpush.msra.mxu0 %v130
    %156 = vmatpush.msra.mxu0 %v129
    %157 = vmatmul.f32.gmra.mxu0 %v139
    %v158 = vpop.f32.mrf.mxu0
    %v159 = vadd.f32 %v135, %v158
    %160 = vdwg.mxu0
    %s161 = scalar_lea.vmem [#allocation2], 32
    %v162 = vld [vmem:[%s161] sm:$0xff]
    %v163 = vld [vmem:[%s161 + $0x8] sm:$0xff]
    %v164 = vld [vmem:[%s161 + $0x10] sm:$0xff]
    %v165 = vld [vmem:[%s161 + $0x18] sm:$0xff]
    %s166 = scalar_lea.vmem %s3, 1
    %v167 = vld [vmem:[%s166] sm:$0x1]
    %v169 = vperm.slane %v167, 0
    %171 = vmatpush.msra.mxu0 0.0
    %172 = vmatpush.msra.mxu0 0.0
    %173 = vmatpush.msra.mxu0 0.0
    %174 = vmatpush.msra.mxu0 0.0
    %175 = vmatpush.msra.mxu0 0.0
    %176 = vmatpush.msra.mxu0 0.0
    %177 = vmatpush.msra.mxu0 0.0
    %178 = vmatpush.msra.mxu0 0.0
    %179 = vmatpush.msra.mxu0 0.0
    %180 = vmatpush.msra.mxu0 0.0
    %181 = vmatpush.msra.mxu0 0.0
    %182 = vmatpush.msra.mxu0 0.0
    %183 = vmatpush.msra.mxu0 %v165
    %184 = vmatpush.msra.mxu0 %v164
    %185 = vmatpush.msra.mxu0 %v163
    %186 = vmatpush.msra.mxu0 %v162
    %187 = vmatmul.f32.gmra.mxu0 %v139
    %v188 = vpop.f32.mrf.mxu0
    %v189 = vadd.f32 %v169, %v188
    %190 = vdwg.mxu0
    %s191 = scalar_lea.vmem [#allocation2], 64
    %v192 = vld [vmem:[%s191] sm:$0xff]
    %v193 = vld [vmem:[%s191 + $0x8] sm:$0xff]
    %v194 = vld [vmem:[%s191 + $0x10] sm:$0xff]
    %v195 = vld [vmem:[%s191 + $0x18] sm:$0xff]
    %s196 = scalar_lea.vmem %s3, 2
    %v197 = vld [vmem:[%s196] sm:$0x1]
    %v199 = vperm.slane %v197, 0
    %201 = vmatpush.msra.mxu0 0.0
    %202 = vmatpush.msra.mxu0 0.0
    %203 = vmatpush.msra.mxu0 0.0
    %204 = vmatpush.msra.mxu0 0.0
    %205 = vmatpush.msra.mxu0 0.0
    %206 = vmatpush.msra.mxu0 0.0
    %207 = vmatpush.msra.mxu0 0.0
    %208 = vmatpush.msra.mxu0 0.0
    %209 = vmatpush.msra.mxu0 0.0
    %210 = vmatpush.msra.mxu0 0.0
    %211 = vmatpush.msra.mxu0 0.0
    %212 = vmatpush.msra.mxu0 0.0
    %213 = vmatpush.msra.mxu0 %v195
    %214 = vmatpush.msra.mxu0 %v194
    %215 = vmatpush.msra.mxu0 %v193
    %216 = vmatpush.msra.mxu0 %v192
    %217 = vmatmul.f32.gmra.mxu0 %v139
    %v218 = vpop.f32.mrf.mxu0
    %v219 = vadd.f32 %v199, %v218
    %220 = vdwg.mxu0
    %v221 = vld [vmem:[#allocation6] sm:$0xff]
    %v222 = vld [vmem:[#allocation6 + $0x8] sm:$0xff]
    %v223 = vld [vmem:[#allocation6 + $0x10] sm:$0xff]
    %v224 = vld [vmem:[#allocation6 + $0x18] sm:$0xff]
    %v225 = vld [vmem:[#allocation9] sm:$0x1]
    %v227 = vperm.slane %v225, 0
    %229 = vmatpush.msra.mxu0 0.0
    %230 = vmatpush.msra.mxu0 0.0
    %231 = vmatpush.msra.mxu0 0.0
    %232 = vmatpush.msra.mxu0 0.0
    %233 = vmatpush.msra.mxu0 0.0
    %234 = vmatpush.msra.mxu0 0.0
    %235 = vmatpush.msra.mxu0 0.0
    %236 = vmatpush.msra.mxu0 0.0
    %237 = vmatpush.msra.mxu0 0.0
    %238 = vmatpush.msra.mxu0 0.0
    %239 = vmatpush.msra.mxu0 0.0
    %240 = vmatpush.msra.mxu0 0.0
    %241 = vmatpush.msra.mxu0 %v224
    %242 = vmatpush.msra.mxu0 %v223
    %243 = vmatpush.msra.mxu0 %v222
    %244 = vmatpush.msra.mxu0 %v221
    %245 = vmatmul.f32.gmra.mxu0 %v139
    %v246 = vpop.f32.mrf.mxu0
    %v247 = vadd.f32 %v227, %v246
    %248 = vdwg.mxu0
    %s249 = scalar_lea.vmem [#allocation6], 32
    %v250 = vld [vmem:[%s249] sm:$0xff]
    %v251 = vld [vmem:[%s249 + $0x8] sm:$0xff]
    %v252 = vld [vmem:[%s249 + $0x10] sm:$0xff]
    %v253 = vld [vmem:[%s249 + $0x18] sm:$0xff]
    %s254 = scalar_lea.vmem [#allocation9], 1
    %v255 = vld [vmem:[%s254] sm:$0x1]
    %v257 = vperm.slane %v255, 0
    %259 = vmatpush.msra.mxu0 0.0
    %260 = vmatpush.msra.mxu0 0.0
    %261 = vmatpush.msra.mxu0 0.0
    %262 = vmatpush.msra.mxu0 0.0
    %263 = vmatpush.msra.mxu0 0.0
    %264 = vmatpush.msra.mxu0 0.0
    %265 = vmatpush.msra.mxu0 0.0
    %266 = vmatpush.msra.mxu0 0.0
    %267 = vmatpush.msra.mxu0 0.0
    %268 = vmatpush.msra.mxu0 0.0
    %269 = vmatpush.msra.mxu0 0.0
    %270 = vmatpush.msra.mxu0 0.0
    %271 = vmatpush.msra.mxu0 %v253
    %272 = vmatpush.msra.mxu0 %v252
    %273 = vmatpush.msra.mxu0 %v251
    %274 = vmatpush.msra.mxu0 %v250
    %275 = vmatmul.f32.gmra.mxu0 %v139
    %v276 = vpop.f32.mrf.mxu0
    %v277 = vadd.f32 %v257, %v276
    %278 = vdwg.mxu0
    %s279 = scalar_lea.vmem [#allocation6], 64
    %v280 = vld [vmem:[%s279] sm:$0xff]
    %v281 = vld [vmem:[%s279 + $0x8] sm:$0xff]
    %v282 = vld [vmem:[%s279 + $0x10] sm:$0xff]
    %v283 = vld [vmem:[%s279 + $0x18] sm:$0xff]
    %s284 = scalar_lea.vmem [#allocation9], 2
    %v285 = vld [vmem:[%s284] sm:$0x1]
    %v287 = vperm.slane %v285, 0
    %289 = vmatpush.msra.mxu0 0.0
    %290 = vmatpush.msra.mxu0 0.0
    %291 = vmatpush.msra.mxu0 0.0
    %292 = vmatpush.msra.mxu0 0.0
    %293 = vmatpush.msra.mxu0 0.0
    %294 = vmatpush.msra.mxu0 0.0
    %295 = vmatpush.msra.mxu0 0.0
    %296 = vmatpush.msra.mxu0 0.0
    %297 = vmatpush.msra.mxu0 0.0
    %298 = vmatpush.msra.mxu0 0.0
    %299 = vmatpush.msra.mxu0 0.0
    %300 = vmatpush.msra.mxu0 0.0
    %301 = vmatpush.msra.mxu0 %v283
    %302 = vmatpush.msra.mxu0 %v282
    %303 = vmatpush.msra.mxu0 %v281
    %304 = vmatpush.msra.mxu0 %v280
    %305 = vmatmul.f32.gmra.mxu0 %v139
    %v306 = vpop.f32.mrf.mxu0
    %v307 = vadd.f32 %v287, %v306
    %308 = vdwg.mxu0
    %v309 = vld [vmem:[#allocation4] sm:$0xff]
    %v310 = vld [vmem:[#allocation4 + $0x8] sm:$0xff]
    %v311 = vld [vmem:[#allocation4 + $0x10] sm:$0xff]
    %v312 = vld [vmem:[#allocation4 + $0x18] sm:$0xff]
    %v313 = vld [vmem:[%s4] sm:$0x1]
    %v315 = vsel %vm137, 0.0, 0
    %317 = vmatpush.msra.mxu0 0.0
    %318 = vmatpush.msra.mxu0 0.0
    %319 = vmatpush.msra.mxu0 0.0
    %320 = vmatpush.msra.mxu0 0.0
    %321 = vmatpush.msra.mxu0 0.0
    %322 = vmatpush.msra.mxu0 0.0
    %323 = vmatpush.msra.mxu0 0.0
    %324 = vmatpush.msra.mxu0 0.0
    %325 = vmatpush.msra.mxu0 0.0
    %326 = vmatpush.msra.mxu0 0.0
    %327 = vmatpush.msra.mxu0 0.0
    %328 = vmatpush.msra.mxu0 0.0
    %329 = vmatpush.msra.mxu0 %v312
    %330 = vmatpush.msra.mxu0 %v311
    %331 = vmatpush.msra.mxu0 %v310
    %332 = vmatpush.msra.mxu0 %v309
    %333 = vmatmul.f32.gmra.mxu0 %v315
    %v334 = vpop.f32.mrf.mxu0
    %v335 = vadd.f32 %v313, %v334
    %336 = vdwg.mxu0
    %s337 = scalar_lea.vmem [#allocation4], 32
    %v338 = vld [vmem:[%s337] sm:$0xff]
    %v339 = vld [vmem:[%s337 + $0x8] sm:$0xff]
    %v340 = vld [vmem:[%s337 + $0x10] sm:$0xff]
    %v341 = vld [vmem:[%s337 + $0x18] sm:$0xff]
    %s342 = scalar_lea.vmem %s4, 1
    %v343 = vld [vmem:[%s342] sm:$0x1]
    %344 = vmatpush.msra.mxu0 0.0
    %345 = vmatpush.msra.mxu0 0.0
    %346 = vmatpush.msra.mxu0 0.0
    %347 = vmatpush.msra.mxu0 0.0
    %348 = vmatpush.msra.mxu0 0.0
    %349 = vmatpush.msra.mxu0 0.0
    %350 = vmatpush.msra.mxu0 0.0
    %351 = vmatpush.msra.mxu0 0.0
    %352 = vmatpush.msra.mxu0 0.0
    %353 = vmatpush.msra.mxu0 0.0
    %354 = vmatpush.msra.mxu0 0.0
    %355 = vmatpush.msra.mxu0 0.0
    %356 = vmatpush.msra.mxu0 %v341
    %357 = vmatpush.msra.mxu0 %v340
    %358 = vmatpush.msra.mxu0 %v339
    %359 = vmatpush.msra.mxu0 %v338
    %360 = vmatmul.f32.gmra.mxu0 %v315
    %v361 = vpop.f32.mrf.mxu0
    %v362 = vadd.f32 %v343, %v361
    %363 = vdwg.mxu0
    %s364 = scalar_lea.vmem [#allocation4], 64
    %v365 = vld [vmem:[%s364] sm:$0xff]
    %v366 = vld [vmem:[%s364 + $0x8] sm:$0xff]
    %v367 = vld [vmem:[%s364 + $0x10] sm:$0xff]
    %v368 = vld [vmem:[%s364 + $0x18] sm:$0xff]
    %s369 = scalar_lea.vmem %s4, 2
    %v370 = vld [vmem:[%s369] sm:$0x1]
    %371 = vmatpush.msra.mxu0 0.0
    %372 = vmatpush.msra.mxu0 0.0
    %373 = vmatpush.msra.mxu0 0.0
    %374 = vmatpush.msra.mxu0 0.0
    %375 = vmatpush.msra.mxu0 0.0
    %376 = vmatpush.msra.mxu0 0.0
    %377 = vmatpush.msra.mxu0 0.0
    %378 = vmatpush.msra.mxu0 0.0
    %379 = vmatpush.msra.mxu0 0.0
    %380 = vmatpush.msra.mxu0 0.0
    %381 = vmatpush.msra.mxu0 0.0
    %382 = vmatpush.msra.mxu0 0.0
    %383 = vmatpush.msra.mxu0 %v368
    %384 = vmatpush.msra.mxu0 %v367
    %385 = vmatpush.msra.mxu0 %v366
    %386 = vmatpush.msra.mxu0 %v365
    %387 = vmatmul.f32.gmra.mxu0 %v315
    %v388 = vpop.f32.mrf.mxu0
    %v389 = vadd.f32 %v370, %v388
    %390 = vdwg.mxu0
    %v391 = vadd.f32 %v159, %v335
    %v392 = vxor.u32 %v391, 2147483648
    %v393 = vmul.f32 %v392, 1.442695
    %v394 = vpow.pop %v393
    %v395 = vadd.f32 %v394, 1.0
    %v396 = vrcp.pop %v395
    %v397 = vmul.f32 %v395, %v396
    %v398 = vsub.f32 1.0, %v397
    %v399 = vmul.f32 %v396, %v398
    %v400 = vadd.f32 %v396, %v399
    %vm401 = vweird.f32 %v395
    %vm402 = vweird.f32 %v396
    %vm403 = vmor %vm401, %vm402
    %v404 = vsel %vm403, %v396, %v400
    %v405 = vand.u32 2147483647, %v395
    %vm406 = vcmp.eq.f32.partialorder %v405, 8.507059e+37
    %v407 = vand.u32 %v395, 2147483648
    %v408 = vor.u32 1.1754944e-38, %v407
    %v409 = vsel %vm406, %v408, %v404
    %v410 = vmul.f32 1.0, %v409
    %v411 = vadd.f32 %v189, %v362
    %v412 = vxor.u32 %v411, 2147483648
    %v413 = vmul.f32 %v412, 1.442695
    %v414 = vpow.pop %v413
    %v415 = vadd.f32 %v414, 1.0
    %v416 = vrcp.pop %v415
    %v417 = vmul.f32 %v415, %v416
    %v418 = vsub.f32 1.0, %v417
    %v419 = vmul.f32 %v416, %v418
    %v420 = vadd.f32 %v416, %v419
    %vm421 = vweird.f32 %v415
    %vm422 = vweird.f32 %v416
    %vm423 = vmor %vm421, %vm422
    %v424 = vsel %vm423, %v416, %v420
    %v425 = vand.u32 2147483647, %v415
    %vm426 = vcmp.eq.f32.partialorder %v425, 8.507059e+37
    %v427 = vand.u32 %v415, 2147483648
    %v428 = vor.u32 1.1754944e-38, %v427
    %v429 = vsel %vm426, %v428, %v424
    %v430 = vmul.f32 1.0, %v429
    %v431 = vmul.f32 %v410, %v389
    %v432 = vadd.f32 %v219, %v431
    %v433 = vtanh.pop %v432
    %v434 = vsub.f32 1.0, %v430
    %v435 = vmul.f32 %v434, %v433
    %v436 = vmul.f32 %v430, 0.0
    %v437 = vadd.f32 %v435, %v436
    %v438 = vld [vmem:[#allocation7] sm:$0xff]
    %v439 = vld [vmem:[#allocation7 + $0x8] sm:$0xff]
    %v440 = vld [vmem:[#allocation7 + $0x10] sm:$0xff]
    %v441 = vld [vmem:[#allocation7 + $0x18] sm:$0xff]
    %v442 = vld [vmem:[#allocation10] sm:$0x1]
    %443 = vmatpush.msra.mxu0 0.0
    %444 = vmatpush.msra.mxu0 0.0
    %445 = vmatpush.msra.mxu0 0.0
    %446 = vmatpush.msra.mxu0 0.0
    %447 = vmatpush.msra.mxu0 0.0
    %448 = vmatpush.msra.mxu0 0.0
    %449 = vmatpush.msra.mxu0 0.0
    %450 = vmatpush.msra.mxu0 0.0
    %451 = vmatpush.msra.mxu0 0.0
    %452 = vmatpush.msra.mxu0 0.0
    %453 = vmatpush.msra.mxu0 0.0
    %454 = vmatpush.msra.mxu0 0.0
    %455 = vmatpush.msra.mxu0 %v441
    %456 = vmatpush.msra.mxu0 %v440
    %457 = vmatpush.msra.mxu0 %v439
    %458 = vmatpush.msra.mxu0 %v438
    %459 = vmatmul.f32.gmra.mxu0 %v315
    %v460 = vpop.f32.mrf.mxu0
    %v461 = vadd.f32 %v442, %v460
    %462 = vdwg.mxu0
    %s463 = scalar_lea.vmem [#allocation7], 32
    %v464 = vld [vmem:[%s463] sm:$0xff]
    %v465 = vld [vmem:[%s463 + $0x8] sm:$0xff]
    %v466 = vld [vmem:[%s463 + $0x10] sm:$0xff]
    %v467 = vld [vmem:[%s463 + $0x18] sm:$0xff]
    %s468 = scalar_lea.vmem [#allocation10], 1
    %v469 = vld [vmem:[%s468] sm:$0x1]
    %470 = vmatpush.msra.mxu0 0.0
    %471 = vmatpush.msra.mxu0 0.0
    %472 = vmatpush.msra.mxu0 0.0
    %473 = vmatpush.msra.mxu0 0.0
    %474 = vmatpush.msra.mxu0 0.0
    %475 = vmatpush.msra.mxu0 0.0
    %476 = vmatpush.msra.mxu0 0.0
    %477 = vmatpush.msra.mxu0 0.0
    %478 = vmatpush.msra.mxu0 0.0
    %479 = vmatpush.msra.mxu0 0.0
    %480 = vmatpush.msra.mxu0 0.0
    %481 = vmatpush.msra.mxu0 0.0
    %482 = vmatpush.msra.mxu0 %v467
    %483 = vmatpush.msra.mxu0 %v466
    %484 = vmatpush.msra.mxu0 %v465
    %485 = vmatpush.msra.mxu0 %v464
    %486 = vmatmul.f32.gmra.mxu0 %v315
    %v487 = vpop.f32.mrf.mxu0
    %v488 = vadd.f32 %v469, %v487
    %489 = vdwg.mxu0
    %s490 = scalar_lea.vmem [#allocation7], 64
    %v491 = vld [vmem:[%s490] sm:$0xff]
    %v492 = vld [vmem:[%s490 + $0x8] sm:$0xff]
    %v493 = vld [vmem:[%s490 + $0x10] sm:$0xff]
    %v494 = vld [vmem:[%s490 + $0x18] sm:$0xff]
    %s495 = scalar_lea.vmem [#allocation10], 2
    %v496 = vld [vmem:[%s495] sm:$0x1]
    %497 = vmatpush.msra.mxu0 0.0
    %498 = vmatpush.msra.mxu0 0.0
    %499 = vmatpush.msra.mxu0 0.0
    %500 = vmatpush.msra.mxu0 0.0
    %501 = vmatpush.msra.mxu0 0.0
    %502 = vmatpush.msra.mxu0 0.0
    %503 = vmatpush.msra.mxu0 0.0
    %504 = vmatpush.msra.mxu0 0.0
    %505 = vmatpush.msra.mxu0 0.0
    %506 = vmatpush.msra.mxu0 0.0
    %507 = vmatpush.msra.mxu0 0.0
    %508 = vmatpush.msra.mxu0 0.0
    %509 = vmatpush.msra.mxu0 %v494
    %510 = vmatpush.msra.mxu0 %v493
    %511 = vmatpush.msra.mxu0 %v492
    %512 = vmatpush.msra.mxu0 %v491
    %513 = vmatmul.f32.gmra.mxu0 %v315
    %v514 = vpop.f32.mrf.mxu0
    %v515 = vadd.f32 %v496, %v514
    %516 = vdwg.mxu0
    %v518 = vrot.slane %v461, 1
    %v520 = vadd.f32 %v247, %v518
    %v521 = vxor.u32 %v520, 2147483648
    %v522 = vmul.f32 %v521, 1.442695
    %v523 = vpow.pop %v522
    %v524 = vadd.f32 %v523, 1.0
    %v525 = vrcp.pop %v524
    %v526 = vmul.f32 %v524, %v525
    %v527 = vsub.f32 1.0, %v526
    %v528 = vmul.f32 %v525, %v527
    %v529 = vadd.f32 %v525, %v528
    %vm530 = vweird.f32 %v524
    %vm531 = vweird.f32 %v525
    %vm532 = vmor %vm530, %vm531
    %v533 = vsel %vm532, %v525, %v529
    %v534 = vand.u32 2147483647, %v524
    %vm535 = vcmp.eq.f32.partialorder %v534, 8.507059e+37
    %v536 = vand.u32 %v524, 2147483648
    %v537 = vor.u32 1.1754944e-38, %v536
    %v538 = vsel %vm535, %v537, %v533
    %v539 = vmul.f32 1.0, %v538
    %v541 = vrot.slane %v488, 1
    %v543 = vadd.f32 %v277, %v541
    %v544 = vxor.u32 %v543, 2147483648
    %v545 = vmul.f32 %v544, 1.442695
    %v546 = vpow.pop %v545
    %v547 = vadd.f32 %v546, 1.0
    %v548 = vrcp.pop %v547
    %v549 = vmul.f32 %v547, %v548
    %v550 = vsub.f32 1.0, %v549
    %v551 = vmul.f32 %v548, %v550
    %v552 = vadd.f32 %v548, %v551
    %vm553 = vweird.f32 %v547
    %vm554 = vweird.f32 %v548
    %vm555 = vmor %vm553, %vm554
    %v556 = vsel %vm555, %v548, %v552
    %v557 = vand.u32 2147483647, %v547
    %vm558 = vcmp.eq.f32.partialorder %v557, 8.507059e+37
    %v559 = vand.u32 %v547, 2147483648
    %v560 = vor.u32 1.1754944e-38, %v559
    %v561 = vsel %vm558, %v560, %v556
    %v562 = vmul.f32 1.0, %v561
    %v564 = vrot.slane %v515, 1
    %v566 = vmul.f32 %v539, %v564
    %v567 = vadd.f32 %v307, %v566
    %v568 = vtanh.pop %v567
    %v569 = vsub.f32 1.0, %v562
    %v570 = vmul.f32 %v569, %v568
    %v571 = vmul.f32 %v562, 0.0
    %v572 = vadd.f32 %v570, %v571
    %v574 = vsel %vm137, %v437, 0
    %576 = vmatpush.msra.mxu0 0.0
    %577 = vmatpush.msra.mxu0 0.0
    %578 = vmatpush.msra.mxu0 0.0
    %579 = vmatpush.msra.mxu0 0.0
    %580 = vmatpush.msra.mxu0 0.0
    %581 = vmatpush.msra.mxu0 0.0
    %582 = vmatpush.msra.mxu0 0.0
    %583 = vmatpush.msra.mxu0 0.0
    %584 = vmatpush.msra.mxu0 0.0
    %585 = vmatpush.msra.mxu0 0.0
    %586 = vmatpush.msra.mxu0 0.0
    %587 = vmatpush.msra.mxu0 0.0
    %588 = vmatpush.msra.mxu0 %v312
    %589 = vmatpush.msra.mxu0 %v311
    %590 = vmatpush.msra.mxu0 %v310
    %591 = vmatpush.msra.mxu0 %v309
    %592 = vmatmul.f32.gmra.mxu0 %v574
    %v593 = vpop.f32.mrf.mxu0
    %v594 = vadd.f32 %v313, %v593
    %595 = vdwg.mxu0
    %596 = vmatpush.msra.mxu0 0.0
    %597 = vmatpush.msra.mxu0 0.0
    %598 = vmatpush.msra.mxu0 0.0
    %599 = vmatpush.msra.mxu0 0.0
    %600 = vmatpush.msra.mxu0 0.0
    %601 = vmatpush.msra.mxu0 0.0
    %602 = vmatpush.msra.mxu0 0.0
    %603 = vmatpush.msra.mxu0 0.0
    %604 = vmatpush.msra.mxu0 0.0
    %605 = vmatpush.msra.mxu0 0.0
    %606 = vmatpush.msra.mxu0 0.0
    %607 = vmatpush.msra.mxu0 0.0
    %608 = vmatpush.msra.mxu0 %v341
    %609 = vmatpush.msra.mxu0 %v340
    %610 = vmatpush.msra.mxu0 %v339
    %611 = vmatpush.msra.mxu0 %v338
    %612 = vmatmul.f32.gmra.mxu0 %v574
    %v613 = vpop.f32.mrf.mxu0
    %v614 = vadd.f32 %v343, %v613
    %615 = vdwg.mxu0
    %616 = vmatpush.msra.mxu0 0.0
    %617 = vmatpush.msra.mxu0 0.0
    %618 = vmatpush.msra.mxu0 0.0
    %619 = vmatpush.msra.mxu0 0.0
    %620 = vmatpush.msra.mxu0 0.0
    %621 = vmatpush.msra.mxu0 0.0
    %622 = vmatpush.msra.mxu0 0.0
    %623 = vmatpush.msra.mxu0 0.0
    %624 = vmatpush.msra.mxu0 0.0
    %625 = vmatpush.msra.mxu0 0.0
    %626 = vmatpush.msra.mxu0 0.0
    %627 = vmatpush.msra.mxu0 0.0
    %628 = vmatpush.msra.mxu0 %v368
    %629 = vmatpush.msra.mxu0 %v367
    %630 = vmatpush.msra.mxu0 %v366
    %631 = vmatpush.msra.mxu0 %v365
    %632 = vmatmul.f32.gmra.mxu0 %v574
    %v633 = vpop.f32.mrf.mxu0
    %v634 = vadd.f32 %v370, %v633
    %635 = vdwg.mxu0
    %v637 = vrot.slane %v594, 7
    %v639 = vadd.f32 %v159, %v637
    %v640 = vxor.u32 %v639, 2147483648
    %v641 = vmul.f32 %v640, 1.442695
    %v642 = vpow.pop %v641
    %v643 = vadd.f32 %v642, 1.0
    %v644 = vrcp.pop %v643
    %v645 = vmul.f32 %v643, %v644
    %v646 = vsub.f32 1.0, %v645
    %v647 = vmul.f32 %v644, %v646
    %v648 = vadd.f32 %v644, %v647
    %vm649 = vweird.f32 %v643
    %vm650 = vweird.f32 %v644
    %vm651 = vmor %vm649, %vm650
    %v652 = vsel %vm651, %v644, %v648
    %v653 = vand.u32 2147483647, %v643
    %vm654 = vcmp.eq.f32.partialorder %v653, 8.507059e+37
    %v655 = vand.u32 %v643, 2147483648
    %v656 = vor.u32 1.1754944e-38, %v655
    %v657 = vsel %vm654, %v656, %v652
    %v658 = vmul.f32 1.0, %v657
    %v660 = vrot.slane %v614, 7
    %v662 = vadd.f32 %v189, %v660
    %v663 = vxor.u32 %v662, 2147483648
    %v664 = vmul.f32 %v663, 1.442695
    %v665 = vpow.pop %v664
    %v666 = vadd.f32 %v665, 1.0
    %v667 = vrcp.pop %v666
    %v668 = vmul.f32 %v666, %v667
    %v669 = vsub.f32 1.0, %v668
    %v670 = vmul.f32 %v667, %v669
    %v671 = vadd.f32 %v667, %v670
    %vm672 = vweird.f32 %v666
    %vm673 = vweird.f32 %v667
    %vm674 = vmor %vm672, %vm673
    %v675 = vsel %vm674, %v667, %v671
    %v676 = vand.u32 2147483647, %v666
    %vm677 = vcmp.eq.f32.partialorder %v676, 8.507059e+37
    %v678 = vand.u32 %v666, 2147483648
    %v679 = vor.u32 1.1754944e-38, %v678
    %v680 = vsel %vm677, %v679, %v675
    %v681 = vmul.f32 1.0, %v680
    %v683 = vrot.slane %v634, 7
    %v685 = vmul.f32 %v658, %v683
    %v686 = vadd.f32 %v219, %v685
    %v687 = vtanh.pop %v686
    %v688 = vsub.f32 1.0, %v681
    %v689 = vmul.f32 %v688, %v687
    %v690 = vrot.slane %v437, 7
    %v692 = vmul.f32 %v681, %v690
    %v693 = vadd.f32 %v689, %v692
    %v695 = vrot.slane %v572, 7
    %v696 = vsel %vm137, %v695, 0
    %698 = vmatpush.msra.mxu0 0.0
    %699 = vmatpush.msra.mxu0 0.0
    %700 = vmatpush.msra.mxu0 0.0
    %701 = vmatpush.msra.mxu0 0.0
    %702 = vmatpush.msra.mxu0 0.0
    %703 = vmatpush.msra.mxu0 0.0
    %704 = vmatpush.msra.mxu0 0.0
    %705 = vmatpush.msra.mxu0 0.0
    %706 = vmatpush.msra.mxu0 0.0
    %707 = vmatpush.msra.mxu0 0.0
    %708 = vmatpush.msra.mxu0 0.0
    %709 = vmatpush.msra.mxu0 0.0
    %710 = vmatpush.msra.mxu0 %v441
    %711 = vmatpush.msra.mxu0 %v440
    %712 = vmatpush.msra.mxu0 %v439
    %713 = vmatpush.msra.mxu0 %v438
    %714 = vmatmul.f32.gmra.mxu0 %v696
    %v715 = vpop.f32.mrf.mxu0
    %v716 = vadd.f32 %v442, %v715
    %717 = vdwg.mxu0
    %718 = vmatpush.msra.mxu0 0.0
    %719 = vmatpush.msra.mxu0 0.0
    %720 = vmatpush.msra.mxu0 0.0
    %721 = vmatpush.msra.mxu0 0.0
    %722 = vmatpush.msra.mxu0 0.0
    %723 = vmatpush.msra.mxu0 0.0
    %724 = vmatpush.msra.mxu0 0.0
    %725 = vmatpush.msra.mxu0 0.0
    %726 = vmatpush.msra.mxu0 0.0
    %727 = vmatpush.msra.mxu0 0.0
    %728 = vmatpush.msra.mxu0 0.0
    %729 = vmatpush.msra.mxu0 0.0
    %730 = vmatpush.msra.mxu0 %v467
    %731 = vmatpush.msra.mxu0 %v466
    %732 = vmatpush.msra.mxu0 %v465
    %733 = vmatpush.msra.mxu0 %v464
    %734 = vmatmul.f32.gmra.mxu0 %v696
    %v735 = vpop.f32.mrf.mxu0
    %v736 = vadd.f32 %v469, %v735
    %737 = vdwg.mxu0
    %738 = vmatpush.msra.mxu0 0.0
    %739 = vmatpush.msra.mxu0 0.0
    %740 = vmatpush.msra.mxu0 0.0
    %741 = vmatpush.msra.mxu0 0.0
    %742 = vmatpush.msra.mxu0 0.0
    %743 = vmatpush.msra.mxu0 0.0
    %744 = vmatpush.msra.mxu0 0.0
    %745 = vmatpush.msra.mxu0 0.0
    %746 = vmatpush.msra.mxu0 0.0
    %747 = vmatpush.msra.mxu0 0.0
    %748 = vmatpush.msra.mxu0 0.0
    %749 = vmatpush.msra.mxu0 0.0
    %750 = vmatpush.msra.mxu0 %v494
    %751 = vmatpush.msra.mxu0 %v493
    %752 = vmatpush.msra.mxu0 %v492
    %753 = vmatpush.msra.mxu0 %v491
    %754 = vmatmul.f32.gmra.mxu0 %v696
    %v755 = vpop.f32.mrf.mxu0
    %v756 = vadd.f32 %v496, %v755
    %757 = vdwg.mxu0
    %v759 = vrot.slane %v716, 2
    %v761 = vadd.f32 %v247, %v759
    %v762 = vxor.u32 %v761, 2147483648
    %v763 = vmul.f32 %v762, 1.442695
    %v764 = vpow.pop %v763
    %v765 = vadd.f32 %v764, 1.0
    %v766 = vrcp.pop %v765
    %v767 = vmul.f32 %v765, %v766
    %v768 = vsub.f32 1.0, %v767
    %v769 = vmul.f32 %v766, %v768
    %v770 = vadd.f32 %v766, %v769
    %vm771 = vweird.f32 %v765
    %vm772 = vweird.f32 %v766
    %vm773 = vmor %vm771, %vm772
    %v774 = vsel %vm773, %v766, %v770
    %v775 = vand.u32 2147483647, %v765
    %vm776 = vcmp.eq.f32.partialorder %v775, 8.507059e+37
    %v777 = vand.u32 %v765, 2147483648
    %v778 = vor.u32 1.1754944e-38, %v777
    %v779 = vsel %vm776, %v778, %v774
    %v780 = vmul.f32 1.0, %v779
    %v782 = vrot.slane %v736, 2
    %v784 = vadd.f32 %v277, %v782
    %v785 = vxor.u32 %v784, 2147483648
    %v786 = vmul.f32 %v785, 1.442695
    %v787 = vpow.pop %v786
    %v788 = vadd.f32 %v787, 1.0
    %v789 = vrcp.pop %v788
    %v790 = vmul.f32 %v788, %v789
    %v791 = vsub.f32 1.0, %v790
    %v792 = vmul.f32 %v789, %v791
    %v793 = vadd.f32 %v789, %v792
    %vm794 = vweird.f32 %v788
    %vm795 = vweird.f32 %v789
    %vm796 = vmor %vm794, %vm795
    %v797 = vsel %vm796, %v789, %v793
    %v798 = vand.u32 2147483647, %v788
    %vm799 = vcmp.eq.f32.partialorder %v798, 8.507059e+37
    %v800 = vand.u32 %v788, 2147483648
    %v801 = vor.u32 1.1754944e-38, %v800
    %v802 = vsel %vm799, %v801, %v797
    %v803 = vmul.f32 1.0, %v802
    %v805 = vrot.slane %v756, 2
    %v807 = vmul.f32 %v780, %v805
    %v808 = vadd.f32 %v307, %v807
    %v809 = vtanh.pop %v808
    %v810 = vsub.f32 1.0, %v803
    %v811 = vmul.f32 %v810, %v809
    %v812 = vrot.slane %v572, 1
    %v814 = vmul.f32 %v803, %v812
    %v815 = vadd.f32 %v811, %v814
    %v817 = vrot.slane %v693, 1
    %v818 = vsel %vm137, %v817, 0
    %820 = vmatpush.msra.mxu0 0.0
    %821 = vmatpush.msra.mxu0 0.0
    %822 = vmatpush.msra.mxu0 0.0
    %823 = vmatpush.msra.mxu0 0.0
    %824 = vmatpush.msra.mxu0 0.0
    %825 = vmatpush.msra.mxu0 0.0
    %826 = vmatpush.msra.mxu0 0.0
    %827 = vmatpush.msra.mxu0 0.0
    %828 = vmatpush.msra.mxu0 0.0
    %829 = vmatpush.msra.mxu0 0.0
    %830 = vmatpush.msra.mxu0 0.0
    %831 = vmatpush.msra.mxu0 0.0
    %832 = vmatpush.msra.mxu0 %v312
    %833 = vmatpush.msra.mxu0 %v311
    %834 = vmatpush.msra.mxu0 %v310
    %835 = vmatpush.msra.mxu0 %v309
    %836 = vmatmul.f32.gmra.mxu0 %v818
    %v837 = vpop.f32.mrf.mxu0
    %v838 = vadd.f32 %v313, %v837
    %839 = vdwg.mxu0
    %840 = vmatpush.msra.mxu0 0.0
    %841 = vmatpush.msra.mxu0 0.0
    %842 = vmatpush.msra.mxu0 0.0
    %843 = vmatpush.msra.mxu0 0.0
    %844 = vmatpush.msra.mxu0 0.0
    %845 = vmatpush.msra.mxu0 0.0
    %846 = vmatpush.msra.mxu0 0.0
    %847 = vmatpush.msra.mxu0 0.0
    %848 = vmatpush.msra.mxu0 0.0
    %849 = vmatpush.msra.mxu0 0.0
    %850 = vmatpush.msra.mxu0 0.0
    %851 = vmatpush.msra.mxu0 0.0
    %852 = vmatpush.msra.mxu0 %v341
    %853 = vmatpush.msra.mxu0 %v340
    %854 = vmatpush.msra.mxu0 %v339
    %855 = vmatpush.msra.mxu0 %v338
    %856 = vmatmul.f32.gmra.mxu0 %v818
    %v857 = vpop.f32.mrf.mxu0
    %v858 = vadd.f32 %v343, %v857
    %859 = vdwg.mxu0
    %860 = vmatpush.msra.mxu0 0.0
    %861 = vmatpush.msra.mxu0 0.0
    %862 = vmatpush.msra.mxu0 0.0
    %863 = vmatpush.msra.mxu0 0.0
    %864 = vmatpush.msra.mxu0 0.0
    %865 = vmatpush.msra.mxu0 0.0
    %866 = vmatpush.msra.mxu0 0.0
    %867 = vmatpush.msra.mxu0 0.0
    %868 = vmatpush.msra.mxu0 0.0
    %869 = vmatpush.msra.mxu0 0.0
    %870 = vmatpush.msra.mxu0 0.0
    %871 = vmatpush.msra.mxu0 0.0
    %872 = vmatpush.msra.mxu0 %v368
    %873 = vmatpush.msra.mxu0 %v367
    %874 = vmatpush.msra.mxu0 %v366
    %875 = vmatpush.msra.mxu0 %v365
    %876 = vmatmul.f32.gmra.mxu0 %v818
    %v877 = vpop.f32.mrf.mxu0
    %v878 = vadd.f32 %v370, %v877
    %879 = vdwg.mxu0
    %v881 = vrot.slane %v838, 6
    %v883 = vadd.f32 %v159, %v881
    %v884 = vxor.u32 %v883, 2147483648
    %v885 = vmul.f32 %v884, 1.442695
    %v886 = vpow.pop %v885
    %v887 = vadd.f32 %v886, 1.0
    %v888 = vrcp.pop %v887
    %v889 = vmul.f32 %v887, %v888
    %v890 = vsub.f32 1.0, %v889
    %v891 = vmul.f32 %v888, %v890
    %v892 = vadd.f32 %v888, %v891
    %vm893 = vweird.f32 %v887
    %vm894 = vweird.f32 %v888
    %vm895 = vmor %vm893, %vm894
    %v896 = vsel %vm895, %v888, %v892
    %v897 = vand.u32 2147483647, %v887
    %vm898 = vcmp.eq.f32.partialorder %v897, 8.507059e+37
    %v899 = vand.u32 %v887, 2147483648
    %v900 = vor.u32 1.1754944e-38, %v899
    %v901 = vsel %vm898, %v900, %v896
    %v902 = vmul.f32 1.0, %v901
    %v904 = vrot.slane %v858, 6
    %v906 = vadd.f32 %v189, %v904
    %v907 = vxor.u32 %v906, 2147483648
    %v908 = vmul.f32 %v907, 1.442695
    %v909 = vpow.pop %v908
    %v910 = vadd.f32 %v909, 1.0
    %v911 = vrcp.pop %v910
    %v912 = vmul.f32 %v910, %v911
    %v913 = vsub.f32 1.0, %v912
    %v914 = vmul.f32 %v911, %v913
    %v915 = vadd.f32 %v911, %v914
    %vm916 = vweird.f32 %v910
    %vm917 = vweird.f32 %v911
    %vm918 = vmor %vm916, %vm917
    %v919 = vsel %vm918, %v911, %v915
    %v920 = vand.u32 2147483647, %v910
    %vm921 = vcmp.eq.f32.partialorder %v920, 8.507059e+37
    %v922 = vand.u32 %v910, 2147483648
    %v923 = vor.u32 1.1754944e-38, %v922
    %v924 = vsel %vm921, %v923, %v919
    %v925 = vmul.f32 1.0, %v924
    %v927 = vrot.slane %v878, 6
    %v929 = vmul.f32 %v902, %v927
    %v930 = vadd.f32 %v219, %v929
    %v931 = vtanh.pop %v930
    %v932 = vsub.f32 1.0, %v925
    %v933 = vmul.f32 %v932, %v931
    %v934 = vrot.slane %v693, 7
    %v936 = vmul.f32 %v925, %v934
    %v937 = vadd.f32 %v933, %v936
    %v939 = vrot.slane %v815, 6
    %v940 = vsel %vm137, %v939, 0
    %942 = vmatpush.msra.mxu0 0.0
    %943 = vmatpush.msra.mxu0 0.0
    %944 = vmatpush.msra.mxu0 0.0
    %945 = vmatpush.msra.mxu0 0.0
    %946 = vmatpush.msra.mxu0 0.0
    %947 = vmatpush.msra.mxu0 0.0
    %948 = vmatpush.msra.mxu0 0.0
    %949 = vmatpush.msra.mxu0 0.0
    %950 = vmatpush.msra.mxu0 0.0
    %951 = vmatpush.msra.mxu0 0.0
    %952 = vmatpush.msra.mxu0 0.0
    %953 = vmatpush.msra.mxu0 0.0
    %954 = vmatpush.msra.mxu0 %v441
    %955 = vmatpush.msra.mxu0 %v440
    %956 = vmatpush.msra.mxu0 %v439
    %957 = vmatpush.msra.mxu0 %v438
    %958 = vmatmul.f32.gmra.mxu0 %v940
    %v959 = vpop.f32.mrf.mxu0
    %v960 = vadd.f32 %v442, %v959
    %961 = vdwg.mxu0
    %962 = vmatpush.msra.mxu0 0.0
    %963 = vmatpush.msra.mxu0 0.0
    %964 = vmatpush.msra.mxu0 0.0
    %965 = vmatpush.msra.mxu0 0.0
    %966 = vmatpush.msra.mxu0 0.0
    %967 = vmatpush.msra.mxu0 0.0
    %968 = vmatpush.msra.mxu0 0.0
    %969 = vmatpush.msra.mxu0 0.0
    %970 = vmatpush.msra.mxu0 0.0
    %971 = vmatpush.msra.mxu0 0.0
    %972 = vmatpush.msra.mxu0 0.0
    %973 = vmatpush.msra.mxu0 0.0
    %974 = vmatpush.msra.mxu0 %v467
    %975 = vmatpush.msra.mxu0 %v466
    %976 = vmatpush.msra.mxu0 %v465
    %977 = vmatpush.msra.mxu0 %v464
    %978 = vmatmul.f32.gmra.mxu0 %v940
    %v979 = vpop.f32.mrf.mxu0
    %v980 = vadd.f32 %v469, %v979
    %981 = vdwg.mxu0
    %982 = vmatpush.msra.mxu0 0.0
    %983 = vmatpush.msra.mxu0 0.0
    %984 = vmatpush.msra.mxu0 0.0
    %985 = vmatpush.msra.mxu0 0.0
    %986 = vmatpush.msra.mxu0 0.0
    %987 = vmatpush.msra.mxu0 0.0
    %988 = vmatpush.msra.mxu0 0.0
    %989 = vmatpush.msra.mxu0 0.0
    %990 = vmatpush.msra.mxu0 0.0
    %991 = vmatpush.msra.mxu0 0.0
    %992 = vmatpush.msra.mxu0 0.0
    %993 = vmatpush.msra.mxu0 0.0
    %994 = vmatpush.msra.mxu0 %v494
    %995 = vmatpush.msra.mxu0 %v493
    %996 = vmatpush.msra.mxu0 %v492
    %997 = vmatpush.msra.mxu0 %v491
    %998 = vmatmul.f32.gmra.mxu0 %v940
    %v999 = vpop.f32.mrf.mxu0
    %v1000 = vadd.f32 %v496, %v999
    %1001 = vdwg.mxu0
    %v1003 = vrot.slane %v960, 3
    %v1005 = vadd.f32 %v247, %v1003
    %v1006 = vxor.u32 %v1005, 2147483648
    %v1007 = vmul.f32 %v1006, 1.442695
    %v1008 = vpow.pop %v1007
    %v1009 = vadd.f32 %v1008, 1.0
    %v1010 = vrcp.pop %v1009
    %v1011 = vmul.f32 %v1009, %v1010
    %v1012 = vsub.f32 1.0, %v1011
    %v1013 = vmul.f32 %v1010, %v1012
    %v1014 = vadd.f32 %v1010, %v1013
    %vm1015 = vweird.f32 %v1009
    %vm1016 = vweird.f32 %v1010
    %vm1017 = vmor %vm1015, %vm1016
    %v1018 = vsel %vm1017, %v1010, %v1014
    %v1019 = vand.u32 2147483647, %v1009
    %vm1020 = vcmp.eq.f32.partialorder %v1019, 8.507059e+37
    %v1021 = vand.u32 %v1009, 2147483648
    %v1022 = vor.u32 1.1754944e-38, %v1021
    %v1023 = vsel %vm1020, %v1022, %v1018
    %v1024 = vmul.f32 1.0, %v1023
    %v1026 = vrot.slane %v980, 3
    %v1028 = vadd.f32 %v277, %v1026
    %v1029 = vxor.u32 %v1028, 2147483648
    %v1030 = vmul.f32 %v1029, 1.442695
    %v1031 = vpow.pop %v1030
    %v1032 = vadd.f32 %v1031, 1.0
    %v1033 = vrcp.pop %v1032
    %v1034 = vmul.f32 %v1032, %v1033
    %v1035 = vsub.f32 1.0, %v1034
    %v1036 = vmul.f32 %v1033, %v1035
    %v1037 = vadd.f32 %v1033, %v1036
    %vm1038 = vweird.f32 %v1032
    %vm1039 = vweird.f32 %v1033
    %vm1040 = vmor %vm1038, %vm1039
    %v1041 = vsel %vm1040, %v1033, %v1037
    %v1042 = vand.u32 2147483647, %v1032
    %vm1043 = vcmp.eq.f32.partialorder %v1042, 8.507059e+37
    %v1044 = vand.u32 %v1032, 2147483648
    %v1045 = vor.u32 1.1754944e-38, %v1044
    %v1046 = vsel %vm1043, %v1045, %v1041
    %v1047 = vmul.f32 1.0, %v1046
    %v1049 = vrot.slane %v1000, 3
    %v1051 = vmul.f32 %v1024, %v1049
    %v1052 = vadd.f32 %v307, %v1051
    %v1053 = vtanh.pop %v1052
    %v1054 = vsub.f32 1.0, %v1047
    %v1055 = vmul.f32 %v1054, %v1053
    %v1056 = vrot.slane %v815, 1
    %v1058 = vmul.f32 %v1047, %v1056
    %v1059 = vadd.f32 %v1055, %v1058
    %v1061 = vrot.slane %v937, 2
    %v1062 = vsel %vm137, %v1061, 0
    %1064 = vmatpush.msra.mxu0 0.0
    %1065 = vmatpush.msra.mxu0 0.0
    %1066 = vmatpush.msra.mxu0 0.0
    %1067 = vmatpush.msra.mxu0 0.0
    %1068 = vmatpush.msra.mxu0 0.0
    %1069 = vmatpush.msra.mxu0 0.0
    %1070 = vmatpush.msra.mxu0 0.0
    %1071 = vmatpush.msra.mxu0 0.0
    %1072 = vmatpush.msra.mxu0 0.0
    %1073 = vmatpush.msra.mxu0 0.0
    %1074 = vmatpush.msra.mxu0 0.0
    %1075 = vmatpush.msra.mxu0 0.0
    %1076 = vmatpush.msra.mxu0 %v312
    %1077 = vmatpush.msra.mxu0 %v311
    %1078 = vmatpush.msra.mxu0 %v310
    %1079 = vmatpush.msra.mxu0 %v309
    %1080 = vmatmul.f32.gmra.mxu0 %v1062
    %v1081 = vpop.f32.mrf.mxu0
    %v1082 = vadd.f32 %v313, %v1081
    %1083 = vdwg.mxu0
    %1084 = vmatpush.msra.mxu0 0.0
    %1085 = vmatpush.msra.mxu0 0.0
    %1086 = vmatpush.msra.mxu0 0.0
    %1087 = vmatpush.msra.mxu0 0.0
    %1088 = vmatpush.msra.mxu0 0.0
    %1089 = vmatpush.msra.mxu0 0.0
    %1090 = vmatpush.msra.mxu0 0.0
    %1091 = vmatpush.msra.mxu0 0.0
    %1092 = vmatpush.msra.mxu0 0.0
    %1093 = vmatpush.msra.mxu0 0.0
    %1094 = vmatpush.msra.mxu0 0.0
    %1095 = vmatpush.msra.mxu0 0.0
    %1096 = vmatpush.msra.mxu0 %v341
    %1097 = vmatpush.msra.mxu0 %v340
    %1098 = vmatpush.msra.mxu0 %v339
    %1099 = vmatpush.msra.mxu0 %v338
    %1100 = vmatmul.f32.gmra.mxu0 %v1062
    %v1101 = vpop.f32.mrf.mxu0
    %v1102 = vadd.f32 %v343, %v1101
    %1103 = vdwg.mxu0
    %1104 = vmatpush.msra.mxu0 0.0
    %1105 = vmatpush.msra.mxu0 0.0
    %1106 = vmatpush.msra.mxu0 0.0
    %1107 = vmatpush.msra.mxu0 0.0
    %1108 = vmatpush.msra.mxu0 0.0
    %1109 = vmatpush.msra.mxu0 0.0
    %1110 = vmatpush.msra.mxu0 0.0
    %1111 = vmatpush.msra.mxu0 0.0
    %1112 = vmatpush.msra.mxu0 0.0
    %1113 = vmatpush.msra.mxu0 0.0
    %1114 = vmatpush.msra.mxu0 0.0
    %1115 = vmatpush.msra.mxu0 0.0
    %1116 = vmatpush.msra.mxu0 %v368
    %1117 = vmatpush.msra.mxu0 %v367
    %1118 = vmatpush.msra.mxu0 %v366
    %1119 = vmatpush.msra.mxu0 %v365
    %1120 = vmatmul.f32.gmra.mxu0 %v1062
    %v1121 = vpop.f32.mrf.mxu0
    %v1122 = vadd.f32 %v370, %v1121
    %1123 = vdwg.mxu0
    %v1125 = vrot.slane %v1082, 5
    %v1127 = vadd.f32 %v159, %v1125
    %v1128 = vxor.u32 %v1127, 2147483648
    %v1129 = vmul.f32 %v1128, 1.442695
    %v1130 = vpow.pop %v1129
    %v1131 = vadd.f32 %v1130, 1.0
    %v1132 = vrcp.pop %v1131
    %v1133 = vmul.f32 %v1131, %v1132
    %v1134 = vsub.f32 1.0, %v1133
    %v1135 = vmul.f32 %v1132, %v1134
    %v1136 = vadd.f32 %v1132, %v1135
    %vm1137 = vweird.f32 %v1131
    %vm1138 = vweird.f32 %v1132
    %vm1139 = vmor %vm1137, %vm1138
    %v1140 = vsel %vm1139, %v1132, %v1136
    %v1141 = vand.u32 2147483647, %v1131
    %vm1142 = vcmp.eq.f32.partialorder %v1141, 8.507059e+37
    %v1143 = vand.u32 %v1131, 2147483648
    %v1144 = vor.u32 1.1754944e-38, %v1143
    %v1145 = vsel %vm1142, %v1144, %v1140
    %v1146 = vmul.f32 1.0, %v1145
    %v1148 = vrot.slane %v1102, 5
    %v1150 = vadd.f32 %v189, %v1148
    %v1151 = vxor.u32 %v1150, 2147483648
    %v1152 = vmul.f32 %v1151, 1.442695
    %v1153 = vpow.pop %v1152
    %v1154 = vadd.f32 %v1153, 1.0
    %v1155 = vrcp.pop %v1154
    %v1156 = vmul.f32 %v1154, %v1155
    %v1157 = vsub.f32 1.0, %v1156
    %v1158 = vmul.f32 %v1155, %v1157
    %v1159 = vadd.f32 %v1155, %v1158
    %vm1160 = vweird.f32 %v1154
    %vm1161 = vweird.f32 %v1155
    %vm1162 = vmor %vm1160, %vm1161
    %v1163 = vsel %vm1162, %v1155, %v1159
    %v1164 = vand.u32 2147483647, %v1154
    %vm1165 = vcmp.eq.f32.partialorder %v1164, 8.507059e+37
    %v1166 = vand.u32 %v1154, 2147483648
    %v1167 = vor.u32 1.1754944e-38, %v1166
    %v1168 = vsel %vm1165, %v1167, %v1163
    %v1169 = vmul.f32 1.0, %v1168
    %v1171 = vrot.slane %v1122, 5
    %v1173 = vmul.f32 %v1146, %v1171
    %v1174 = vadd.f32 %v219, %v1173
    %v1175 = vtanh.pop %v1174
    %v1176 = vsub.f32 1.0, %v1169
    %v1177 = vmul.f32 %v1176, %v1175
    %v1178 = vrot.slane %v937, 7
    %v1180 = vmul.f32 %v1169, %v1178
    %v1181 = vadd.f32 %v1177, %v1180
    %v1183 = vrot.slane %v1059, 5
    %v1184 = vsel %vm137, %v1183, 0
    %1186 = vmatpush.msra.mxu0 0.0
    %1187 = vmatpush.msra.mxu0 0.0
    %1188 = vmatpush.msra.mxu0 0.0
    %1189 = vmatpush.msra.mxu0 0.0
    %1190 = vmatpush.msra.mxu0 0.0
    %1191 = vmatpush.msra.mxu0 0.0
    %1192 = vmatpush.msra.mxu0 0.0
    %1193 = vmatpush.msra.mxu0 0.0
    %1194 = vmatpush.msra.mxu0 0.0
    %1195 = vmatpush.msra.mxu0 0.0
    %1196 = vmatpush.msra.mxu0 0.0
    %1197 = vmatpush.msra.mxu0 0.0
    %1198 = vmatpush.msra.mxu0 %v441
    %1199 = vmatpush.msra.mxu0 %v440
    %1200 = vmatpush.msra.mxu0 %v439
    %1201 = vmatpush.msra.mxu0 %v438
    %1202 = vmatmul.f32.gmra.mxu0 %v1184
    %v1203 = vpop.f32.mrf.mxu0
    %v1204 = vadd.f32 %v442, %v1203
    %1205 = vdwg.mxu0
    %1206 = vmatpush.msra.mxu0 0.0
    %1207 = vmatpush.msra.mxu0 0.0
    %1208 = vmatpush.msra.mxu0 0.0
    %1209 = vmatpush.msra.mxu0 0.0
    %1210 = vmatpush.msra.mxu0 0.0
    %1211 = vmatpush.msra.mxu0 0.0
    %1212 = vmatpush.msra.mxu0 0.0
    %1213 = vmatpush.msra.mxu0 0.0
    %1214 = vmatpush.msra.mxu0 0.0
    %1215 = vmatpush.msra.mxu0 0.0
    %1216 = vmatpush.msra.mxu0 0.0
    %1217 = vmatpush.msra.mxu0 0.0
    %1218 = vmatpush.msra.mxu0 %v467
    %1219 = vmatpush.msra.mxu0 %v466
    %1220 = vmatpush.msra.mxu0 %v465
    %1221 = vmatpush.msra.mxu0 %v464
    %1222 = vmatmul.f32.gmra.mxu0 %v1184
    %v1223 = vpop.f32.mrf.mxu0
    %v1224 = vadd.f32 %v469, %v1223
    %1225 = vdwg.mxu0
    %1226 = vmatpush.msra.mxu0 0.0
    %1227 = vmatpush.msra.mxu0 0.0
    %1228 = vmatpush.msra.mxu0 0.0
    %1229 = vmatpush.msra.mxu0 0.0
    %1230 = vmatpush.msra.mxu0 0.0
    %1231 = vmatpush.msra.mxu0 0.0
    %1232 = vmatpush.msra.mxu0 0.0
    %1233 = vmatpush.msra.mxu0 0.0
    %1234 = vmatpush.msra.mxu0 0.0
    %1235 = vmatpush.msra.mxu0 0.0
    %1236 = vmatpush.msra.mxu0 0.0
    %1237 = vmatpush.msra.mxu0 0.0
    %1238 = vmatpush.msra.mxu0 %v494
    %1239 = vmatpush.msra.mxu0 %v493
    %1240 = vmatpush.msra.mxu0 %v492
    %1241 = vmatpush.msra.mxu0 %v491
    %1242 = vmatmul.f32.gmra.mxu0 %v1184
    %v1243 = vpop.f32.mrf.mxu0
    %v1244 = vadd.f32 %v496, %v1243
    %1245 = vdwg.mxu0
    %v1247 = vrot.slane %v1204, 4
    %v1249 = vadd.f32 %v247, %v1247
    %v1250 = vxor.u32 %v1249, 2147483648
    %v1251 = vmul.f32 %v1250, 1.442695
    %v1252 = vpow.pop %v1251
    %v1253 = vadd.f32 %v1252, 1.0
    %v1254 = vrcp.pop %v1253
    %v1255 = vmul.f32 %v1253, %v1254
    %v1256 = vsub.f32 1.0, %v1255
    %v1257 = vmul.f32 %v1254, %v1256
    %v1258 = vadd.f32 %v1254, %v1257
    %vm1259 = vweird.f32 %v1253
    %vm1260 = vweird.f32 %v1254
    %vm1261 = vmor %vm1259, %vm1260
    %v1262 = vsel %vm1261, %v1254, %v1258
    %v1263 = vand.u32 2147483647, %v1253
    %vm1264 = vcmp.eq.f32.partialorder %v1263, 8.507059e+37
    %v1265 = vand.u32 %v1253, 2147483648
    %v1266 = vor.u32 1.1754944e-38, %v1265
    %v1267 = vsel %vm1264, %v1266, %v1262
    %v1268 = vmul.f32 1.0, %v1267
    %v1270 = vrot.slane %v1224, 4
    %v1272 = vadd.f32 %v277, %v1270
    %v1273 = vxor.u32 %v1272, 2147483648
    %v1274 = vmul.f32 %v1273, 1.442695
    %v1275 = vpow.pop %v1274
    %v1276 = vadd.f32 %v1275, 1.0
    %v1277 = vrcp.pop %v1276
    %v1278 = vmul.f32 %v1276, %v1277
    %v1279 = vsub.f32 1.0, %v1278
    %v1280 = vmul.f32 %v1277, %v1279
    %v1281 = vadd.f32 %v1277, %v1280
    %vm1282 = vweird.f32 %v1276
    %vm1283 = vweird.f32 %v1277
    %vm1284 = vmor %vm1282, %vm1283
    %v1285 = vsel %vm1284, %v1277, %v1281
    %v1286 = vand.u32 2147483647, %v1276
    %vm1287 = vcmp.eq.f32.partialorder %v1286, 8.507059e+37
    %v1288 = vand.u32 %v1276, 2147483648
    %v1289 = vor.u32 1.1754944e-38, %v1288
    %v1290 = vsel %vm1287, %v1289, %v1285
    %v1291 = vmul.f32 1.0, %v1290
    %v1293 = vrot.slane %v1244, 4
    %v1295 = vmul.f32 %v1268, %v1293
    %v1296 = vadd.f32 %v307, %v1295
    %v1297 = vtanh.pop %v1296
    %v1298 = vsub.f32 1.0, %v1291
    %v1299 = vmul.f32 %v1298, %v1297
    %v1300 = vrot.slane %v1059, 1
    %v1302 = vmul.f32 %v1291, %v1300
    %v1303 = vadd.f32 %v1299, %v1302
    %v1305 = vrot.slane %v1181, 3
    %v1306 = vsel %vm137, %v1305, 0
    %1308 = vmatpush.msra.mxu0 0.0
    %1309 = vmatpush.msra.mxu0 0.0
    %1310 = vmatpush.msra.mxu0 0.0
    %1311 = vmatpush.msra.mxu0 0.0
    %1312 = vmatpush.msra.mxu0 0.0
    %1313 = vmatpush.msra.mxu0 0.0
    %1314 = vmatpush.msra.mxu0 0.0
    %1315 = vmatpush.msra.mxu0 0.0
    %1316 = vmatpush.msra.mxu0 0.0
    %1317 = vmatpush.msra.mxu0 0.0
    %1318 = vmatpush.msra.mxu0 0.0
    %1319 = vmatpush.msra.mxu0 0.0
    %1320 = vmatpush.msra.mxu0 %v312
    %1321 = vmatpush.msra.mxu0 %v311
    %1322 = vmatpush.msra.mxu0 %v310
    %1323 = vmatpush.msra.mxu0 %v309
    %1324 = vmatmul.f32.gmra.mxu0 %v1306
    %v1325 = vpop.f32.mrf.mxu0
    %v1326 = vadd.f32 %v313, %v1325
    %1327 = vdwg.mxu0
    %1328 = vmatpush.msra.mxu0 0.0
    %1329 = vmatpush.msra.mxu0 0.0
    %1330 = vmatpush.msra.mxu0 0.0
    %1331 = vmatpush.msra.mxu0 0.0
    %1332 = vmatpush.msra.mxu0 0.0
    %1333 = vmatpush.msra.mxu0 0.0
    %1334 = vmatpush.msra.mxu0 0.0
    %1335 = vmatpush.msra.mxu0 0.0
    %1336 = vmatpush.msra.mxu0 0.0
    %1337 = vmatpush.msra.mxu0 0.0
    %1338 = vmatpush.msra.mxu0 0.0
    %1339 = vmatpush.msra.mxu0 0.0
    %1340 = vmatpush.msra.mxu0 %v341
    %1341 = vmatpush.msra.mxu0 %v340
    %1342 = vmatpush.msra.mxu0 %v339
    %1343 = vmatpush.msra.mxu0 %v338
    %1344 = vmatmul.f32.gmra.mxu0 %v1306
    %v1345 = vpop.f32.mrf.mxu0
    %v1346 = vadd.f32 %v343, %v1345
    %1347 = vdwg.mxu0
    %1348 = vmatpush.msra.mxu0 0.0
    %1349 = vmatpush.msra.mxu0 0.0
    %1350 = vmatpush.msra.mxu0 0.0
    %1351 = vmatpush.msra.mxu0 0.0
    %1352 = vmatpush.msra.mxu0 0.0
    %1353 = vmatpush.msra.mxu0 0.0
    %1354 = vmatpush.msra.mxu0 0.0
    %1355 = vmatpush.msra.mxu0 0.0
    %1356 = vmatpush.msra.mxu0 0.0
    %1357 = vmatpush.msra.mxu0 0.0
    %1358 = vmatpush.msra.mxu0 0.0
    %1359 = vmatpush.msra.mxu0 0.0
    %1360 = vmatpush.msra.mxu0 %v368
    %1361 = vmatpush.msra.mxu0 %v367
    %1362 = vmatpush.msra.mxu0 %v366
    %1363 = vmatpush.msra.mxu0 %v365
    %1364 = vmatmul.f32.gmra.mxu0 %v1306
    %v1365 = vpop.f32.mrf.mxu0
    %v1366 = vadd.f32 %v370, %v1365
    %1367 = vdwg.mxu0
    %v1369 = vrot.slane %v1326, 4
    %v1371 = vadd.f32 %v159, %v1369
    %v1372 = vxor.u32 %v1371, 2147483648
    %v1373 = vmul.f32 %v1372, 1.442695
    %v1374 = vpow.pop %v1373
    %v1375 = vadd.f32 %v1374, 1.0
    %v1376 = vrcp.pop %v1375
    %v1377 = vmul.f32 %v1375, %v1376
    %v1378 = vsub.f32 1.0, %v1377
    %v1379 = vmul.f32 %v1376, %v1378
    %v1380 = vadd.f32 %v1376, %v1379
    %vm1381 = vweird.f32 %v1375
    %vm1382 = vweird.f32 %v1376
    %vm1383 = vmor %vm1381, %vm1382
    %v1384 = vsel %vm1383, %v1376, %v1380
    %v1385 = vand.u32 2147483647, %v1375
    %vm1386 = vcmp.eq.f32.partialorder %v1385, 8.507059e+37
    %v1387 = vand.u32 %v1375, 2147483648
    %v1388 = vor.u32 1.1754944e-38, %v1387
    %v1389 = vsel %vm1386, %v1388, %v1384
    %v1390 = vmul.f32 1.0, %v1389
    %v1392 = vrot.slane %v1346, 4
    %v1394 = vadd.f32 %v189, %v1392
    %v1395 = vxor.u32 %v1394, 2147483648
    %v1396 = vmul.f32 %v1395, 1.442695
    %v1397 = vpow.pop %v1396
    %v1398 = vadd.f32 %v1397, 1.0
    %v1399 = vrcp.pop %v1398
    %v1400 = vmul.f32 %v1398, %v1399
    %v1401 = vsub.f32 1.0, %v1400
    %v1402 = vmul.f32 %v1399, %v1401
    %v1403 = vadd.f32 %v1399, %v1402
    %vm1404 = vweird.f32 %v1398
    %vm1405 = vweird.f32 %v1399
    %vm1406 = vmor %vm1404, %vm1405
    %v1407 = vsel %vm1406, %v1399, %v1403
    %v1408 = vand.u32 2147483647, %v1398
    %vm1409 = vcmp.eq.f32.partialorder %v1408, 8.507059e+37
    %v1410 = vand.u32 %v1398, 2147483648
    %v1411 = vor.u32 1.1754944e-38, %v1410
    %v1412 = vsel %vm1409, %v1411, %v1407
    %v1413 = vmul.f32 1.0, %v1412
    %v1415 = vrot.slane %v1366, 4
    %v1417 = vmul.f32 %v1390, %v1415
    %v1418 = vadd.f32 %v219, %v1417
    %v1419 = vtanh.pop %v1418
    %v1420 = vsub.f32 1.0, %v1413
    %v1421 = vmul.f32 %v1420, %v1419
    %v1422 = vrot.slane %v1181, 7
    %v1424 = vmul.f32 %v1413, %v1422
    %v1425 = vadd.f32 %v1421, %v1424
    %v1427 = vrot.slane %v1303, 4
    %v1428 = vsel %vm137, %v1427, 0
    %1430 = vmatpush.msra.mxu0 0.0
    %1431 = vmatpush.msra.mxu0 0.0
    %1432 = vmatpush.msra.mxu0 0.0
    %1433 = vmatpush.msra.mxu0 0.0
    %1434 = vmatpush.msra.mxu0 0.0
    %1435 = vmatpush.msra.mxu0 0.0
    %1436 = vmatpush.msra.mxu0 0.0
    %1437 = vmatpush.msra.mxu0 0.0
    %1438 = vmatpush.msra.mxu0 0.0
    %1439 = vmatpush.msra.mxu0 0.0
    %1440 = vmatpush.msra.mxu0 0.0
    %1441 = vmatpush.msra.mxu0 0.0
    %1442 = vmatpush.msra.mxu0 %v441
    %1443 = vmatpush.msra.mxu0 %v440
    %1444 = vmatpush.msra.mxu0 %v439
    %1445 = vmatpush.msra.mxu0 %v438
    %1446 = vmatmul.f32.gmra.mxu0 %v1428
    %v1447 = vpop.f32.mrf.mxu0
    %v1448 = vadd.f32 %v442, %v1447
    %1449 = vdwg.mxu0
    %1450 = vmatpush.msra.mxu0 0.0
    %1451 = vmatpush.msra.mxu0 0.0
    %1452 = vmatpush.msra.mxu0 0.0
    %1453 = vmatpush.msra.mxu0 0.0
    %1454 = vmatpush.msra.mxu0 0.0
    %1455 = vmatpush.msra.mxu0 0.0
    %1456 = vmatpush.msra.mxu0 0.0
    %1457 = vmatpush.msra.mxu0 0.0
    %1458 = vmatpush.msra.mxu0 0.0
    %1459 = vmatpush.msra.mxu0 0.0
    %1460 = vmatpush.msra.mxu0 0.0
    %1461 = vmatpush.msra.mxu0 0.0
    %1462 = vmatpush.msra.mxu0 %v467
    %1463 = vmatpush.msra.mxu0 %v466
    %1464 = vmatpush.msra.mxu0 %v465
    %1465 = vmatpush.msra.mxu0 %v464
    %1466 = vmatmul.f32.gmra.mxu0 %v1428
    %v1467 = vpop.f32.mrf.mxu0
    %v1468 = vadd.f32 %v469, %v1467
    %1469 = vdwg.mxu0
    %1470 = vmatpush.msra.mxu0 0.0
    %1471 = vmatpush.msra.mxu0 0.0
    %1472 = vmatpush.msra.mxu0 0.0
    %1473 = vmatpush.msra.mxu0 0.0
    %1474 = vmatpush.msra.mxu0 0.0
    %1475 = vmatpush.msra.mxu0 0.0
    %1476 = vmatpush.msra.mxu0 0.0
    %1477 = vmatpush.msra.mxu0 0.0
    %1478 = vmatpush.msra.mxu0 0.0
    %1479 = vmatpush.msra.mxu0 0.0
    %1480 = vmatpush.msra.mxu0 0.0
    %1481 = vmatpush.msra.mxu0 0.0
    %1482 = vmatpush.msra.mxu0 %v494
    %1483 = vmatpush.msra.mxu0 %v493
    %1484 = vmatpush.msra.mxu0 %v492
    %1485 = vmatpush.msra.mxu0 %v491
    %1486 = vmatmul.f32.gmra.mxu0 %v1428
    %v1487 = vpop.f32.mrf.mxu0
    %v1488 = vadd.f32 %v496, %v1487
    %1489 = vdwg.mxu0
    %v1491 = vrot.slane %v1448, 5
    %v1493 = vadd.f32 %v247, %v1491
    %v1494 = vxor.u32 %v1493, 2147483648
    %v1495 = vmul.f32 %v1494, 1.442695
    %v1496 = vpow.pop %v1495
    %v1497 = vadd.f32 %v1496, 1.0
    %v1498 = vrcp.pop %v1497
    %v1499 = vmul.f32 %v1497, %v1498
    %v1500 = vsub.f32 1.0, %v1499
    %v1501 = vmul.f32 %v1498, %v1500
    %v1502 = vadd.f32 %v1498, %v1501
    %vm1503 = vweird.f32 %v1497
    %vm1504 = vweird.f32 %v1498
    %vm1505 = vmor %vm1503, %vm1504
    %v1506 = vsel %vm1505, %v1498, %v1502
    %v1507 = vand.u32 2147483647, %v1497
    %vm1508 = vcmp.eq.f32.partialorder %v1507, 8.507059e+37
    %v1509 = vand.u32 %v1497, 2147483648
    %v1510 = vor.u32 1.1754944e-38, %v1509
    %v1511 = vsel %vm1508, %v1510, %v1506
    %v1512 = vmul.f32 1.0, %v1511
    %v1514 = vrot.slane %v1468, 5
    %v1516 = vadd.f32 %v277, %v1514
    %v1517 = vxor.u32 %v1516, 2147483648
    %v1518 = vmul.f32 %v1517, 1.442695
    %v1519 = vpow.pop %v1518
    %v1520 = vadd.f32 %v1519, 1.0
    %v1521 = vrcp.pop %v1520
    %v1522 = vmul.f32 %v1520, %v1521
    %v1523 = vsub.f32 1.0, %v1522
    %v1524 = vmul.f32 %v1521, %v1523
    %v1525 = vadd.f32 %v1521, %v1524
    %vm1526 = vweird.f32 %v1520
    %vm1527 = vweird.f32 %v1521
    %vm1528 = vmor %vm1526, %vm1527
    %v1529 = vsel %vm1528, %v1521, %v1525
    %v1530 = vand.u32 2147483647, %v1520
    %vm1531 = vcmp.eq.f32.partialorder %v1530, 8.507059e+37
    %v1532 = vand.u32 %v1520, 2147483648
    %v1533 = vor.u32 1.1754944e-38, %v1532
    %v1534 = vsel %vm1531, %v1533, %v1529
    %v1535 = vmul.f32 1.0, %v1534
    %v1537 = vrot.slane %v1488, 5
    %v1539 = vmul.f32 %v1512, %v1537
    %v1540 = vadd.f32 %v307, %v1539
    %v1541 = vtanh.pop %v1540
    %v1542 = vsub.f32 1.0, %v1535
    %v1543 = vmul.f32 %v1542, %v1541
    %v1544 = vrot.slane %v1303, 1
    %v1546 = vmul.f32 %v1535, %v1544
    %v1547 = vadd.f32 %v1543, %v1546
    %v1549 = vrot.slane %v1425, 4
    %v1550 = vsel %vm137, %v1549, 0
    %1552 = vmatpush.msra.mxu0 0.0
    %1553 = vmatpush.msra.mxu0 0.0
    %1554 = vmatpush.msra.mxu0 0.0
    %1555 = vmatpush.msra.mxu0 0.0
    %1556 = vmatpush.msra.mxu0 0.0
    %1557 = vmatpush.msra.mxu0 0.0
    %1558 = vmatpush.msra.mxu0 0.0
    %1559 = vmatpush.msra.mxu0 0.0
    %1560 = vmatpush.msra.mxu0 0.0
    %1561 = vmatpush.msra.mxu0 0.0
    %1562 = vmatpush.msra.mxu0 0.0
    %1563 = vmatpush.msra.mxu0 0.0
    %1564 = vmatpush.msra.mxu0 %v312
    %1565 = vmatpush.msra.mxu0 %v311
    %1566 = vmatpush.msra.mxu0 %v310
    %1567 = vmatpush.msra.mxu0 %v309
    %1568 = vmatmul.f32.gmra.mxu0 %v1550
    %v1569 = vpop.f32.mrf.mxu0
    %v1570 = vadd.f32 %v313, %v1569
    %1571 = vdwg.mxu0
    %1572 = vmatpush.msra.mxu0 0.0
    %1573 = vmatpush.msra.mxu0 0.0
    %1574 = vmatpush.msra.mxu0 0.0
    %1575 = vmatpush.msra.mxu0 0.0
    %1576 = vmatpush.msra.mxu0 0.0
    %1577 = vmatpush.msra.mxu0 0.0
    %1578 = vmatpush.msra.mxu0 0.0
    %1579 = vmatpush.msra.mxu0 0.0
    %1580 = vmatpush.msra.mxu0 0.0
    %1581 = vmatpush.msra.mxu0 0.0
    %1582 = vmatpush.msra.mxu0 0.0
    %1583 = vmatpush.msra.mxu0 0.0
    %1584 = vmatpush.msra.mxu0 %v341
    %1585 = vmatpush.msra.mxu0 %v340
    %1586 = vmatpush.msra.mxu0 %v339
    %1587 = vmatpush.msra.mxu0 %v338
    %1588 = vmatmul.f32.gmra.mxu0 %v1550
    %v1589 = vpop.f32.mrf.mxu0
    %v1590 = vadd.f32 %v343, %v1589
    %1591 = vdwg.mxu0
    %1592 = vmatpush.msra.mxu0 0.0
    %1593 = vmatpush.msra.mxu0 0.0
    %1594 = vmatpush.msra.mxu0 0.0
    %1595 = vmatpush.msra.mxu0 0.0
    %1596 = vmatpush.msra.mxu0 0.0
    %1597 = vmatpush.msra.mxu0 0.0
    %1598 = vmatpush.msra.mxu0 0.0
    %1599 = vmatpush.msra.mxu0 0.0
    %1600 = vmatpush.msra.mxu0 0.0
    %1601 = vmatpush.msra.mxu0 0.0
    %1602 = vmatpush.msra.mxu0 0.0
    %1603 = vmatpush.msra.mxu0 0.0
    %1604 = vmatpush.msra.mxu0 %v368
    %1605 = vmatpush.msra.mxu0 %v367
    %1606 = vmatpush.msra.mxu0 %v366
    %1607 = vmatpush.msra.mxu0 %v365
    %1608 = vmatmul.f32.gmra.mxu0 %v1550
    %v1609 = vpop.f32.mrf.mxu0
    %v1610 = vadd.f32 %v370, %v1609
    %1611 = vdwg.mxu0
    %v1613 = vrot.slane %v1570, 3
    %v1615 = vadd.f32 %v159, %v1613
    %v1616 = vxor.u32 %v1615, 2147483648
    %v1617 = vmul.f32 %v1616, 1.442695
    %v1618 = vpow.pop %v1617
    %v1619 = vadd.f32 %v1618, 1.0
    %v1620 = vrcp.pop %v1619
    %v1621 = vmul.f32 %v1619, %v1620
    %v1622 = vsub.f32 1.0, %v1621
    %v1623 = vmul.f32 %v1620, %v1622
    %v1624 = vadd.f32 %v1620, %v1623
    %vm1625 = vweird.f32 %v1619
    %vm1626 = vweird.f32 %v1620
    %vm1627 = vmor %vm1625, %vm1626
    %v1628 = vsel %vm1627, %v1620, %v1624
    %v1629 = vand.u32 2147483647, %v1619
    %vm1630 = vcmp.eq.f32.partialorder %v1629, 8.507059e+37
    %v1631 = vand.u32 %v1619, 2147483648
    %v1632 = vor.u32 1.1754944e-38, %v1631
    %v1633 = vsel %vm1630, %v1632, %v1628
    %v1634 = vmul.f32 1.0, %v1633
    %v1636 = vrot.slane %v1590, 3
    %v1638 = vadd.f32 %v189, %v1636
    %v1639 = vxor.u32 %v1638, 2147483648
    %v1640 = vmul.f32 %v1639, 1.442695
    %v1641 = vpow.pop %v1640
    %v1642 = vadd.f32 %v1641, 1.0
    %v1643 = vrcp.pop %v1642
    %v1644 = vmul.f32 %v1642, %v1643
    %v1645 = vsub.f32 1.0, %v1644
    %v1646 = vmul.f32 %v1643, %v1645
    %v1647 = vadd.f32 %v1643, %v1646
    %vm1648 = vweird.f32 %v1642
    %vm1649 = vweird.f32 %v1643
    %vm1650 = vmor %vm1648, %vm1649
    %v1651 = vsel %vm1650, %v1643, %v1647
    %v1652 = vand.u32 2147483647, %v1642
    %vm1653 = vcmp.eq.f32.partialorder %v1652, 8.507059e+37
    %v1654 = vand.u32 %v1642, 2147483648
    %v1655 = vor.u32 1.1754944e-38, %v1654
    %v1656 = vsel %vm1653, %v1655, %v1651
    %v1657 = vmul.f32 1.0, %v1656
    %v1659 = vrot.slane %v1610, 3
    %v1661 = vmul.f32 %v1634, %v1659
    %v1662 = vadd.f32 %v219, %v1661
    %v1663 = vtanh.pop %v1662
    %v1664 = vsub.f32 1.0, %v1657
    %v1665 = vmul.f32 %v1664, %v1663
    %v1666 = vrot.slane %v1425, 7
    %v1668 = vmul.f32 %v1657, %v1666
    %v1669 = vadd.f32 %v1665, %v1668
    %v1671 = vrot.slane %v1547, 3
    %v1672 = vsel %vm137, %v1671, 0
    %1674 = vmatpush.msra.mxu0 0.0
    %1675 = vmatpush.msra.mxu0 0.0
    %1676 = vmatpush.msra.mxu0 0.0
    %1677 = vmatpush.msra.mxu0 0.0
    %1678 = vmatpush.msra.mxu0 0.0
    %1679 = vmatpush.msra.mxu0 0.0
    %1680 = vmatpush.msra.mxu0 0.0
    %1681 = vmatpush.msra.mxu0 0.0
    %1682 = vmatpush.msra.mxu0 0.0
    %1683 = vmatpush.msra.mxu0 0.0
    %1684 = vmatpush.msra.mxu0 0.0
    %1685 = vmatpush.msra.mxu0 0.0
    %1686 = vmatpush.msra.mxu0 %v441
    %1687 = vmatpush.msra.mxu0 %v440
    %1688 = vmatpush.msra.mxu0 %v439
    %1689 = vmatpush.msra.mxu0 %v438
    %1690 = vmatmul.f32.gmra.mxu0 %v1672
    %v1691 = vpop.f32.mrf.mxu0
    %v1692 = vadd.f32 %v442, %v1691
    %1693 = vdwg.mxu0
    %1694 = vmatpush.msra.mxu0 0.0
    %1695 = vmatpush.msra.mxu0 0.0
    %1696 = vmatpush.msra.mxu0 0.0
    %1697 = vmatpush.msra.mxu0 0.0
    %1698 = vmatpush.msra.mxu0 0.0
    %1699 = vmatpush.msra.mxu0 0.0
    %1700 = vmatpush.msra.mxu0 0.0
    %1701 = vmatpush.msra.mxu0 0.0
    %1702 = vmatpush.msra.mxu0 0.0
    %1703 = vmatpush.msra.mxu0 0.0
    %1704 = vmatpush.msra.mxu0 0.0
    %1705 = vmatpush.msra.mxu0 0.0
    %1706 = vmatpush.msra.mxu0 %v467
    %1707 = vmatpush.msra.mxu0 %v466
    %1708 = vmatpush.msra.mxu0 %v465
    %1709 = vmatpush.msra.mxu0 %v464
    %1710 = vmatmul.f32.gmra.mxu0 %v1672
    %v1711 = vpop.f32.mrf.mxu0
    %v1712 = vadd.f32 %v469, %v1711
    %1713 = vdwg.mxu0
    %1714 = vmatpush.msra.mxu0 0.0
    %1715 = vmatpush.msra.mxu0 0.0
    %1716 = vmatpush.msra.mxu0 0.0
    %1717 = vmatpush.msra.mxu0 0.0
    %1718 = vmatpush.msra.mxu0 0.0
    %1719 = vmatpush.msra.mxu0 0.0
    %1720 = vmatpush.msra.mxu0 0.0
    %1721 = vmatpush.msra.mxu0 0.0
    %1722 = vmatpush.msra.mxu0 0.0
    %1723 = vmatpush.msra.mxu0 0.0
    %1724 = vmatpush.msra.mxu0 0.0
    %1725 = vmatpush.msra.mxu0 0.0
    %1726 = vmatpush.msra.mxu0 %v494
    %1727 = vmatpush.msra.mxu0 %v493
    %1728 = vmatpush.msra.mxu0 %v492
    %1729 = vmatpush.msra.mxu0 %v491
    %1730 = vmatmul.f32.gmra.mxu0 %v1672
    %v1731 = vpop.f32.mrf.mxu0
    %v1732 = vadd.f32 %v496, %v1731
    %1733 = vdwg.mxu0
    %v1735 = vrot.slane %v1692, 6
    %v1737 = vadd.f32 %v247, %v1735
    %v1738 = vxor.u32 %v1737, 2147483648
    %v1739 = vmul.f32 %v1738, 1.442695
    %v1740 = vpow.pop %v1739
    %v1741 = vadd.f32 %v1740, 1.0
    %v1742 = vrcp.pop %v1741
    %v1743 = vmul.f32 %v1741, %v1742
    %v1744 = vsub.f32 1.0, %v1743
    %v1745 = vmul.f32 %v1742, %v1744
    %v1746 = vadd.f32 %v1742, %v1745
    %vm1747 = vweird.f32 %v1741
    %vm1748 = vweird.f32 %v1742
    %vm1749 = vmor %vm1747, %vm1748
    %v1750 = vsel %vm1749, %v1742, %v1746
    %v1751 = vand.u32 2147483647, %v1741
    %vm1752 = vcmp.eq.f32.partialorder %v1751, 8.507059e+37
    %v1753 = vand.u32 %v1741, 2147483648
    %v1754 = vor.u32 1.1754944e-38, %v1753
    %v1755 = vsel %vm1752, %v1754, %v1750
    %v1756 = vmul.f32 1.0, %v1755
    %v1758 = vrot.slane %v1712, 6
    %v1760 = vadd.f32 %v277, %v1758
    %v1761 = vxor.u32 %v1760, 2147483648
    %v1762 = vmul.f32 %v1761, 1.442695
    %v1763 = vpow.pop %v1762
    %v1764 = vadd.f32 %v1763, 1.0
    %v1765 = vrcp.pop %v1764
    %v1766 = vmul.f32 %v1764, %v1765
    %v1767 = vsub.f32 1.0, %v1766
    %v1768 = vmul.f32 %v1765, %v1767
    %v1769 = vadd.f32 %v1765, %v1768
    %vm1770 = vweird.f32 %v1764
    %vm1771 = vweird.f32 %v1765
    %vm1772 = vmor %vm1770, %vm1771
    %v1773 = vsel %vm1772, %v1765, %v1769
    %v1774 = vand.u32 2147483647, %v1764
    %vm1775 = vcmp.eq.f32.partialorder %v1774, 8.507059e+37
    %v1776 = vand.u32 %v1764, 2147483648
    %v1777 = vor.u32 1.1754944e-38, %v1776
    %v1778 = vsel %vm1775, %v1777, %v1773
    %v1779 = vmul.f32 1.0, %v1778
    %v1781 = vrot.slane %v1732, 6
    %v1783 = vmul.f32 %v1756, %v1781
    %v1784 = vadd.f32 %v307, %v1783
    %v1785 = vtanh.pop %v1784
    %v1786 = vsub.f32 1.0, %v1779
    %v1787 = vmul.f32 %v1786, %v1785
    %v1788 = vrot.slane %v1547, 1
    %v1790 = vmul.f32 %v1779, %v1788
    %v1791 = vadd.f32 %v1787, %v1790
    %v1793 = vrot.slane %v1669, 5
    %v1794 = vsel %vm137, %v1793, 0
    %1796 = vmatpush.msra.mxu0 0.0
    %1797 = vmatpush.msra.mxu0 0.0
    %1798 = vmatpush.msra.mxu0 0.0
    %1799 = vmatpush.msra.mxu0 0.0
    %1800 = vmatpush.msra.mxu0 0.0
    %1801 = vmatpush.msra.mxu0 0.0
    %1802 = vmatpush.msra.mxu0 0.0
    %1803 = vmatpush.msra.mxu0 0.0
    %1804 = vmatpush.msra.mxu0 0.0
    %1805 = vmatpush.msra.mxu0 0.0
    %1806 = vmatpush.msra.mxu0 0.0
    %1807 = vmatpush.msra.mxu0 0.0
    %1808 = vmatpush.msra.mxu0 %v312
    %1809 = vmatpush.msra.mxu0 %v311
    %1810 = vmatpush.msra.mxu0 %v310
    %1811 = vmatpush.msra.mxu0 %v309
    %1812 = vmatmul.f32.gmra.mxu0 %v1794
    %v1813 = vpop.f32.mrf.mxu0
    %v1814 = vadd.f32 %v313, %v1813
    %1815 = vdwg.mxu0
    %1816 = vmatpush.msra.mxu0 0.0
    %1817 = vmatpush.msra.mxu0 0.0
    %1818 = vmatpush.msra.mxu0 0.0
    %1819 = vmatpush.msra.mxu0 0.0
    %1820 = vmatpush.msra.mxu0 0.0
    %1821 = vmatpush.msra.mxu0 0.0
    %1822 = vmatpush.msra.mxu0 0.0
    %1823 = vmatpush.msra.mxu0 0.0
    %1824 = vmatpush.msra.mxu0 0.0
    %1825 = vmatpush.msra.mxu0 0.0
    %1826 = vmatpush.msra.mxu0 0.0
    %1827 = vmatpush.msra.mxu0 0.0
    %1828 = vmatpush.msra.mxu0 %v341
    %1829 = vmatpush.msra.mxu0 %v340
    %1830 = vmatpush.msra.mxu0 %v339
    %1831 = vmatpush.msra.mxu0 %v338
    %1832 = vmatmul.f32.gmra.mxu0 %v1794
    %v1833 = vpop.f32.mrf.mxu0
    %v1834 = vadd.f32 %v343, %v1833
    %1835 = vdwg.mxu0
    %1836 = vmatpush.msra.mxu0 0.0
    %1837 = vmatpush.msra.mxu0 0.0
    %1838 = vmatpush.msra.mxu0 0.0
    %1839 = vmatpush.msra.mxu0 0.0
    %1840 = vmatpush.msra.mxu0 0.0
    %1841 = vmatpush.msra.mxu0 0.0
    %1842 = vmatpush.msra.mxu0 0.0
    %1843 = vmatpush.msra.mxu0 0.0
    %1844 = vmatpush.msra.mxu0 0.0
    %1845 = vmatpush.msra.mxu0 0.0
    %1846 = vmatpush.msra.mxu0 0.0
    %1847 = vmatpush.msra.mxu0 0.0
    %1848 = vmatpush.msra.mxu0 %v368
    %1849 = vmatpush.msra.mxu0 %v367
    %1850 = vmatpush.msra.mxu0 %v366
    %1851 = vmatpush.msra.mxu0 %v365
    %1852 = vmatmul.f32.gmra.mxu0 %v1794
    %v1853 = vpop.f32.mrf.mxu0
    %v1854 = vadd.f32 %v370, %v1853
    %1855 = vdwg.mxu0
    %v1857 = vrot.slane %v1814, 2
    %v1859 = vadd.f32 %v159, %v1857
    %v1860 = vxor.u32 %v1859, 2147483648
    %v1861 = vmul.f32 %v1860, 1.442695
    %v1862 = vpow.pop %v1861
    %v1863 = vadd.f32 %v1862, 1.0
    %v1864 = vrcp.pop %v1863
    %v1865 = vmul.f32 %v1863, %v1864
    %v1866 = vsub.f32 1.0, %v1865
    %v1867 = vmul.f32 %v1864, %v1866
    %v1868 = vadd.f32 %v1864, %v1867
    %vm1869 = vweird.f32 %v1863
    %vm1870 = vweird.f32 %v1864
    %vm1871 = vmor %vm1869, %vm1870
    %v1872 = vsel %vm1871, %v1864, %v1868
    %v1873 = vand.u32 2147483647, %v1863
    %vm1874 = vcmp.eq.f32.partialorder %v1873, 8.507059e+37
    %v1875 = vand.u32 %v1863, 2147483648
    %v1876 = vor.u32 1.1754944e-38, %v1875
    %v1877 = vsel %vm1874, %v1876, %v1872
    %v1878 = vmul.f32 1.0, %v1877
    %v1880 = vrot.slane %v1834, 2
    %v1882 = vadd.f32 %v189, %v1880
    %v1883 = vxor.u32 %v1882, 2147483648
    %v1884 = vmul.f32 %v1883, 1.442695
    %v1885 = vpow.pop %v1884
    %v1886 = vadd.f32 %v1885, 1.0
    %v1887 = vrcp.pop %v1886
    %v1888 = vmul.f32 %v1886, %v1887
    %v1889 = vsub.f32 1.0, %v1888
    %v1890 = vmul.f32 %v1887, %v1889
    %v1891 = vadd.f32 %v1887, %v1890
    %vm1892 = vweird.f32 %v1886
    %vm1893 = vweird.f32 %v1887
    %vm1894 = vmor %vm1892, %vm1893
    %v1895 = vsel %vm1894, %v1887, %v1891
    %v1896 = vand.u32 2147483647, %v1886
    %vm1897 = vcmp.eq.f32.partialorder %v1896, 8.507059e+37
    %v1898 = vand.u32 %v1886, 2147483648
    %v1899 = vor.u32 1.1754944e-38, %v1898
    %v1900 = vsel %vm1897, %v1899, %v1895
    %v1901 = vmul.f32 1.0, %v1900
    %v1903 = vrot.slane %v1854, 2
    %v1905 = vmul.f32 %v1878, %v1903
    %v1906 = vadd.f32 %v219, %v1905
    %v1907 = vtanh.pop %v1906
    %v1908 = vsub.f32 1.0, %v1901
    %v1909 = vmul.f32 %v1908, %v1907
    %v1910 = vrot.slane %v1669, 7
    %v1912 = vmul.f32 %v1901, %v1910
    %v1913 = vadd.f32 %v1909, %v1912
    %v1915 = vrot.slane %v1791, 2
    %v1916 = vsel %vm137, %v1915, 0
    %1918 = vmatpush.msra.mxu0 0.0
    %1919 = vmatpush.msra.mxu0 0.0
    %1920 = vmatpush.msra.mxu0 0.0
    %1921 = vmatpush.msra.mxu0 0.0
    %1922 = vmatpush.msra.mxu0 0.0
    %1923 = vmatpush.msra.mxu0 0.0
    %1924 = vmatpush.msra.mxu0 0.0
    %1925 = vmatpush.msra.mxu0 0.0
    %1926 = vmatpush.msra.mxu0 0.0
    %1927 = vmatpush.msra.mxu0 0.0
    %1928 = vmatpush.msra.mxu0 0.0
    %1929 = vmatpush.msra.mxu0 0.0
    %1930 = vmatpush.msra.mxu0 %v441
    %1931 = vmatpush.msra.mxu0 %v440
    %1932 = vmatpush.msra.mxu0 %v439
    %1933 = vmatpush.msra.mxu0 %v438
    %1934 = vmatmul.f32.gmra.mxu0 %v1916
    %v1935 = vpop.f32.mrf.mxu0
    %v1936 = vadd.f32 %v442, %v1935
    %1937 = vdwg.mxu0
    %1938 = vmatpush.msra.mxu0 0.0
    %1939 = vmatpush.msra.mxu0 0.0
    %1940 = vmatpush.msra.mxu0 0.0
    %1941 = vmatpush.msra.mxu0 0.0
    %1942 = vmatpush.msra.mxu0 0.0
    %1943 = vmatpush.msra.mxu0 0.0
    %1944 = vmatpush.msra.mxu0 0.0
    %1945 = vmatpush.msra.mxu0 0.0
    %1946 = vmatpush.msra.mxu0 0.0
    %1947 = vmatpush.msra.mxu0 0.0
    %1948 = vmatpush.msra.mxu0 0.0
    %1949 = vmatpush.msra.mxu0 0.0
    %1950 = vmatpush.msra.mxu0 %v467
    %1951 = vmatpush.msra.mxu0 %v466
    %1952 = vmatpush.msra.mxu0 %v465
    %1953 = vmatpush.msra.mxu0 %v464
    %1954 = vmatmul.f32.gmra.mxu0 %v1916
    %v1955 = vpop.f32.mrf.mxu0
    %v1956 = vadd.f32 %v469, %v1955
    %1957 = vdwg.mxu0
    %1958 = vmatpush.msra.mxu0 0.0
    %1959 = vmatpush.msra.mxu0 0.0
    %1960 = vmatpush.msra.mxu0 0.0
    %1961 = vmatpush.msra.mxu0 0.0
    %1962 = vmatpush.msra.mxu0 0.0
    %1963 = vmatpush.msra.mxu0 0.0
    %1964 = vmatpush.msra.mxu0 0.0
    %1965 = vmatpush.msra.mxu0 0.0
    %1966 = vmatpush.msra.mxu0 0.0
    %1967 = vmatpush.msra.mxu0 0.0
    %1968 = vmatpush.msra.mxu0 0.0
    %1969 = vmatpush.msra.mxu0 0.0
    %1970 = vmatpush.msra.mxu0 %v494
    %1971 = vmatpush.msra.mxu0 %v493
    %1972 = vmatpush.msra.mxu0 %v492
    %1973 = vmatpush.msra.mxu0 %v491
    %1974 = vmatmul.f32.gmra.mxu0 %v1916
    %v1975 = vpop.f32.mrf.mxu0
    %v1976 = vadd.f32 %v496, %v1975
    %1977 = vdwg.mxu0
    %v1979 = vrot.slane %v1936, 7
    %v1981 = vadd.f32 %v247, %v1979
    %v1982 = vxor.u32 %v1981, 2147483648
    %v1983 = vmul.f32 %v1982, 1.442695
    %v1984 = vpow.pop %v1983
    %v1985 = vadd.f32 %v1984, 1.0
    %v1986 = vrcp.pop %v1985
    %v1987 = vmul.f32 %v1985, %v1986
    %v1988 = vsub.f32 1.0, %v1987
    %v1989 = vmul.f32 %v1986, %v1988
    %v1990 = vadd.f32 %v1986, %v1989
    %vm1991 = vweird.f32 %v1985
    %vm1992 = vweird.f32 %v1986
    %vm1993 = vmor %vm1991, %vm1992
    %v1994 = vsel %vm1993, %v1986, %v1990
    %v1995 = vand.u32 2147483647, %v1985
    %vm1996 = vcmp.eq.f32.partialorder %v1995, 8.507059e+37
    %v1997 = vand.u32 %v1985, 2147483648
    %v1998 = vor.u32 1.1754944e-38, %v1997
    %v1999 = vsel %vm1996, %v1998, %v1994
    %v2000 = vmul.f32 1.0, %v1999
    %v2002 = vrot.slane %v1956, 7
    %v2004 = vadd.f32 %v277, %v2002
    %v2005 = vxor.u32 %v2004, 2147483648
    %v2006 = vmul.f32 %v2005, 1.442695
    %v2007 = vpow.pop %v2006
    %v2008 = vadd.f32 %v2007, 1.0
    %v2009 = vrcp.pop %v2008
    %v2010 = vmul.f32 %v2008, %v2009
    %v2011 = vsub.f32 1.0, %v2010
    %v2012 = vmul.f32 %v2009, %v2011
    %v2013 = vadd.f32 %v2009, %v2012
    %vm2014 = vweird.f32 %v2008
    %vm2015 = vweird.f32 %v2009
    %vm2016 = vmor %vm2014, %vm2015
    %v2017 = vsel %vm2016, %v2009, %v2013
    %v2018 = vand.u32 2147483647, %v2008
    %vm2019 = vcmp.eq.f32.partialorder %v2018, 8.507059e+37
    %v2020 = vand.u32 %v2008, 2147483648
    %v2021 = vor.u32 1.1754944e-38, %v2020
    %v2022 = vsel %vm2019, %v2021, %v2017
    %v2023 = vmul.f32 1.0, %v2022
    %v2025 = vrot.slane %v1976, 7
    %v2027 = vmul.f32 %v2000, %v2025
    %v2028 = vadd.f32 %v307, %v2027
    %v2029 = vtanh.pop %v2028
    %v2030 = vsub.f32 1.0, %v2023
    %v2031 = vmul.f32 %v2030, %v2029
    %v2032 = vrot.slane %v1791, 1
    %v2034 = vmul.f32 %v2023, %v2032
    %v2035 = vadd.f32 %v2031, %v2034
    %v2037 = vrot.slane %v1913, 6
    %v2038 = vsel %vm137, %v2037, 0
    %2040 = vmatpush.msra.mxu0 0.0
    %2041 = vmatpush.msra.mxu0 0.0
    %2042 = vmatpush.msra.mxu0 0.0
    %2043 = vmatpush.msra.mxu0 0.0
    %2044 = vmatpush.msra.mxu0 0.0
    %2045 = vmatpush.msra.mxu0 0.0
    %2046 = vmatpush.msra.mxu0 0.0
    %2047 = vmatpush.msra.mxu0 0.0
    %2048 = vmatpush.msra.mxu0 0.0
    %2049 = vmatpush.msra.mxu0 0.0
    %2050 = vmatpush.msra.mxu0 0.0
    %2051 = vmatpush.msra.mxu0 0.0
    %2052 = vmatpush.msra.mxu0 %v312
    %2053 = vmatpush.msra.mxu0 %v311
    %2054 = vmatpush.msra.mxu0 %v310
    %2055 = vmatpush.msra.mxu0 %v309
    %2056 = vmatmul.f32.gmra.mxu0 %v2038
    %v2057 = vpop.f32.mrf.mxu0
    %v2058 = vadd.f32 %v313, %v2057
    %2059 = vdwg.mxu0
    %2060 = vmatpush.msra.mxu0 0.0
    %2061 = vmatpush.msra.mxu0 0.0
    %2062 = vmatpush.msra.mxu0 0.0
    %2063 = vmatpush.msra.mxu0 0.0
    %2064 = vmatpush.msra.mxu0 0.0
    %2065 = vmatpush.msra.mxu0 0.0
    %2066 = vmatpush.msra.mxu0 0.0
    %2067 = vmatpush.msra.mxu0 0.0
    %2068 = vmatpush.msra.mxu0 0.0
    %2069 = vmatpush.msra.mxu0 0.0
    %2070 = vmatpush.msra.mxu0 0.0
    %2071 = vmatpush.msra.mxu0 0.0
    %2072 = vmatpush.msra.mxu0 %v341
    %2073 = vmatpush.msra.mxu0 %v340
    %2074 = vmatpush.msra.mxu0 %v339
    %2075 = vmatpush.msra.mxu0 %v338
    %2076 = vmatmul.f32.gmra.mxu0 %v2038
    %v2077 = vpop.f32.mrf.mxu0
    %v2078 = vadd.f32 %v343, %v2077
    %2079 = vdwg.mxu0
    %2080 = vmatpush.msra.mxu0 0.0
    %2081 = vmatpush.msra.mxu0 0.0
    %2082 = vmatpush.msra.mxu0 0.0
    %2083 = vmatpush.msra.mxu0 0.0
    %2084 = vmatpush.msra.mxu0 0.0
    %2085 = vmatpush.msra.mxu0 0.0
    %2086 = vmatpush.msra.mxu0 0.0
    %2087 = vmatpush.msra.mxu0 0.0
    %2088 = vmatpush.msra.mxu0 0.0
    %2089 = vmatpush.msra.mxu0 0.0
    %2090 = vmatpush.msra.mxu0 0.0
    %2091 = vmatpush.msra.mxu0 0.0
    %2092 = vmatpush.msra.mxu0 %v368
    %2093 = vmatpush.msra.mxu0 %v367
    %2094 = vmatpush.msra.mxu0 %v366
    %2095 = vmatpush.msra.mxu0 %v365
    %2096 = vmatmul.f32.gmra.mxu0 %v2038
    %v2097 = vpop.f32.mrf.mxu0
    %v2098 = vadd.f32 %v370, %v2097
    %2099 = vdwg.mxu0
    %v2101 = vrot.slane %v2058, 1
    %v2103 = vadd.f32 %v159, %v2101
    %v2104 = vxor.u32 %v2103, 2147483648
    %v2105 = vmul.f32 %v2104, 1.442695
    %v2106 = vpow.pop %v2105
    %v2107 = vadd.f32 %v2106, 1.0
    %v2108 = vrcp.pop %v2107
    %v2109 = vmul.f32 %v2107, %v2108
    %v2110 = vsub.f32 1.0, %v2109
    %v2111 = vmul.f32 %v2108, %v2110
    %v2112 = vadd.f32 %v2108, %v2111
    %vm2113 = vweird.f32 %v2107
    %vm2114 = vweird.f32 %v2108
    %vm2115 = vmor %vm2113, %vm2114
    %v2116 = vsel %vm2115, %v2108, %v2112
    %v2117 = vand.u32 2147483647, %v2107
    %vm2118 = vcmp.eq.f32.partialorder %v2117, 8.507059e+37
    %v2119 = vand.u32 %v2107, 2147483648
    %v2120 = vor.u32 1.1754944e-38, %v2119
    %v2121 = vsel %vm2118, %v2120, %v2116
    %v2122 = vmul.f32 1.0, %v2121
    %v2124 = vrot.slane %v2078, 1
    %v2126 = vadd.f32 %v189, %v2124
    %v2127 = vxor.u32 %v2126, 2147483648
    %v2128 = vmul.f32 %v2127, 1.442695
    %v2129 = vpow.pop %v2128
    %v2130 = vadd.f32 %v2129, 1.0
    %v2131 = vrcp.pop %v2130
    %v2132 = vmul.f32 %v2130, %v2131
    %v2133 = vsub.f32 1.0, %v2132
    %v2134 = vmul.f32 %v2131, %v2133
    %v2135 = vadd.f32 %v2131, %v2134
    %vm2136 = vweird.f32 %v2130
    %vm2137 = vweird.f32 %v2131
    %vm2138 = vmor %vm2136, %vm2137
    %v2139 = vsel %vm2138, %v2131, %v2135
    %v2140 = vand.u32 2147483647, %v2130
    %vm2141 = vcmp.eq.f32.partialorder %v2140, 8.507059e+37
    %v2142 = vand.u32 %v2130, 2147483648
    %v2143 = vor.u32 1.1754944e-38, %v2142
    %v2144 = vsel %vm2141, %v2143, %v2139
    %v2145 = vmul.f32 1.0, %v2144
    %v2147 = vrot.slane %v2098, 1
    %v2149 = vmul.f32 %v2122, %v2147
    %v2150 = vadd.f32 %v219, %v2149
    %v2151 = vtanh.pop %v2150
    %v2152 = vsub.f32 1.0, %v2145
    %v2153 = vmul.f32 %v2152, %v2151
    %v2154 = vrot.slane %v1913, 7
    %v2156 = vmul.f32 %v2145, %v2154
    %v2157 = vadd.f32 %v2153, %v2156
    %v2159 = vrot.slane %v2035, 1
    %v2160 = vsel %vm137, %v2159, 0
    %2162 = vmatpush.msra.mxu0 0.0
    %2163 = vmatpush.msra.mxu0 0.0
    %2164 = vmatpush.msra.mxu0 0.0
    %2165 = vmatpush.msra.mxu0 0.0
    %2166 = vmatpush.msra.mxu0 0.0
    %2167 = vmatpush.msra.mxu0 0.0
    %2168 = vmatpush.msra.mxu0 0.0
    %2169 = vmatpush.msra.mxu0 0.0
    %2170 = vmatpush.msra.mxu0 0.0
    %2171 = vmatpush.msra.mxu0 0.0
    %2172 = vmatpush.msra.mxu0 0.0
    %2173 = vmatpush.msra.mxu0 0.0
    %2174 = vmatpush.msra.mxu0 %v441
    %2175 = vmatpush.msra.mxu0 %v440
    %2176 = vmatpush.msra.mxu0 %v439
    %2177 = vmatpush.msra.mxu0 %v438
    %2178 = vmatmul.f32.gmra.mxu0 %v2160
    %v2179 = vpop.f32.mrf.mxu0
    %v2180 = vadd.f32 %v442, %v2179
    %2181 = vdwg.mxu0
    %2182 = vmatpush.msra.mxu0 0.0
    %2183 = vmatpush.msra.mxu0 0.0
    %2184 = vmatpush.msra.mxu0 0.0
    %2185 = vmatpush.msra.mxu0 0.0
    %2186 = vmatpush.msra.mxu0 0.0
    %2187 = vmatpush.msra.mxu0 0.0
    %2188 = vmatpush.msra.mxu0 0.0
    %2189 = vmatpush.msra.mxu0 0.0
    %2190 = vmatpush.msra.mxu0 0.0
    %2191 = vmatpush.msra.mxu0 0.0
    %2192 = vmatpush.msra.mxu0 0.0
    %2193 = vmatpush.msra.mxu0 0.0
    %2194 = vmatpush.msra.mxu0 %v467
    %2195 = vmatpush.msra.mxu0 %v466
    %2196 = vmatpush.msra.mxu0 %v465
    %2197 = vmatpush.msra.mxu0 %v464
    %2198 = vmatmul.f32.gmra.mxu0 %v2160
    %v2199 = vpop.f32.mrf.mxu0
    %v2200 = vadd.f32 %v469, %v2199
    %2201 = vdwg.mxu0
    %2202 = vmatpush.msra.mxu0 0.0
    %2203 = vmatpush.msra.mxu0 0.0
    %2204 = vmatpush.msra.mxu0 0.0
    %2205 = vmatpush.msra.mxu0 0.0
    %2206 = vmatpush.msra.mxu0 0.0
    %2207 = vmatpush.msra.mxu0 0.0
    %2208 = vmatpush.msra.mxu0 0.0
    %2209 = vmatpush.msra.mxu0 0.0
    %2210 = vmatpush.msra.mxu0 0.0
    %2211 = vmatpush.msra.mxu0 0.0
    %2212 = vmatpush.msra.mxu0 0.0
    %2213 = vmatpush.msra.mxu0 0.0
    %2214 = vmatpush.msra.mxu0 %v494
    %2215 = vmatpush.msra.mxu0 %v493
    %2216 = vmatpush.msra.mxu0 %v492
    %2217 = vmatpush.msra.mxu0 %v491
    %2218 = vmatmul.f32.gmra.mxu0 %v2160
    %v2219 = vpop.f32.mrf.mxu0
    %v2220 = vadd.f32 %v496, %v2219
    %2221 = vdwg.mxu0
    %v2222 = vadd.f32 %v247, %v2180
    %v2223 = vxor.u32 %v2222, 2147483648
    %v2224 = vmul.f32 %v2223, 1.442695
    %v2225 = vpow.pop %v2224
    %v2226 = vadd.f32 %v2225, 1.0
    %v2227 = vrcp.pop %v2226
    %v2228 = vmul.f32 %v2226, %v2227
    %v2229 = vsub.f32 1.0, %v2228
    %v2230 = vmul.f32 %v2227, %v2229
    %v2231 = vadd.f32 %v2227, %v2230
    %vm2232 = vweird.f32 %v2226
    %vm2233 = vweird.f32 %v2227
    %vm2234 = vmor %vm2232, %vm2233
    %v2235 = vsel %vm2234, %v2227, %v2231
    %v2236 = vand.u32 2147483647, %v2226
    %vm2237 = vcmp.eq.f32.partialorder %v2236, 8.507059e+37
    %v2238 = vand.u32 %v2226, 2147483648
    %v2239 = vor.u32 1.1754944e-38, %v2238
    %v2240 = vsel %vm2237, %v2239, %v2235
    %v2241 = vmul.f32 1.0, %v2240
    %v2242 = vadd.f32 %v277, %v2200
    %v2243 = vxor.u32 %v2242, 2147483648
    %v2244 = vmul.f32 %v2243, 1.442695
    %v2245 = vpow.pop %v2244
    %v2246 = vadd.f32 %v2245, 1.0
    %v2247 = vrcp.pop %v2246
    %v2248 = vmul.f32 %v2246, %v2247
    %v2249 = vsub.f32 1.0, %v2248
    %v2250 = vmul.f32 %v2247, %v2249
    %v2251 = vadd.f32 %v2247, %v2250
    %vm2252 = vweird.f32 %v2246
    %vm2253 = vweird.f32 %v2247
    %vm2254 = vmor %vm2252, %vm2253
    %v2255 = vsel %vm2254, %v2247, %v2251
    %v2256 = vand.u32 2147483647, %v2246
    %vm2257 = vcmp.eq.f32.partialorder %v2256, 8.507059e+37
    %v2258 = vand.u32 %v2246, 2147483648
    %v2259 = vor.u32 1.1754944e-38, %v2258
    %v2260 = vsel %vm2257, %v2259, %v2255
    %v2261 = vmul.f32 1.0, %v2260
    %v2262 = vmul.f32 %v2241, %v2220
    %v2263 = vadd.f32 %v307, %v2262
    %v2264 = vtanh.pop %v2263
    %v2265 = vsub.f32 1.0, %v2261
    %v2266 = vmul.f32 %v2265, %v2264
    %v2268 = vmul.f32 %v2261, %v2159
    %v2269 = vadd.f32 %v2266, %v2268
    %vm2270 = vcmask 1040384
    %v2271 = vsel %vm2270, %v437, %v693
    %vm2272 = vcmask 1041408
    %v2273 = vsel %vm2272, %v2271, %v937
    %vm2274 = vcmask 1042432
    %v2275 = vsel %vm2274, %v2273, %v1181
    %vm2276 = vcmask 1043456
    %v2277 = vsel %vm2276, %v2275, %v1425
    %vm2278 = vcmask 1044480
    %v2279 = vsel %vm2278, %v2277, %v1669
    %vm2280 = vcmask 1045504
    %v2281 = vsel %vm2280, %v2279, %v1913
    %vm2282 = vcmask 1046528
    %v2283 = vsel %vm2282, %v2281, %v2157
    %v2284 = vsel %vm2270, %v2269, %v2035
    %v2285 = vsel %vm2272, %v2284, %v1791
    %v2286 = vsel %vm2274, %v2285, %v1547
    %v2287 = vsel %vm2276, %v2286, %v1303
    %v2288 = vsel %vm2278, %v2287, %v1059
    %v2289 = vsel %vm2280, %v2288, %v815
    %v2290 = vsel %vm2282, %v2289, %v572
    %v2291 = vadd.f32 %v2283, %v2290
    %2292 = vst.msk [vmem:[%s9] sm:$0xff] %vm137, %v2291
    %vm2293 = vcmask 261127
    %2294 = vst.msk [vmem:[%s10 - $0x7] sm:$0x80] %vm2293, %v2157
    // Predicated region
    $region62: #{greedy_search_decoder.2} parent=1 // pred_check
      _
    $region63: #{greedy_search_decoder.2} parent=1 // pred_check_branch
      %2296 = sbr.rel (0) target = $region65
    $region64: #{greedy_search_decoder.2} parent=1 // pred_region
      _
    $region65: #{greedy_search_decoder.2} parent=1 // pred_fallthru
      _
    // Predicated region
    $region66: #{greedy_search_decoder.2} parent=1 // pred_check
      _
    $region67: #{greedy_search_decoder.2} parent=1 // pred_check_branch
      %2298 = sbr.rel (0) target = $region69
    $region68: #{greedy_search_decoder.2} parent=1 // pred_region
      _
    $region69: #{greedy_search_decoder.2} parent=1 // pred_fallthru
      _
    // Predicated region
    $region70: #{greedy_search_decoder.2} parent=1 // pred_check
      _
    $region71: #{greedy_search_decoder.2} parent=1 // pred_check_branch
      %2300 = sbr.rel (0) target = $region73
    $region72: #{greedy_search_decoder.2} parent=1 // pred_region
      _
    $region73: #{greedy_search_decoder.2} parent=1 // pred_fallthru
      _
    // Predicated region
    $region74: #{greedy_search_decoder.2} parent=1 // pred_check
      _
    $region75: #{greedy_search_decoder.2} parent=1 // pred_check_branch
      %2302 = sbr.rel (0) target = $region77
    $region76: #{greedy_search_decoder.2} parent=1 // pred_region
      _
    $region77: #{greedy_search_decoder.2} parent=1 // pred_fallthru
      _
    %2303 = vsyncpa [#allocation3], 1
    %2304 = vsyncpa [#allocation5], 1
    %2305 = vsyncpa [#allocation8], 1
    %2306 = vsyncpa [#allocation11], 1

</llo_original>
